<compile_context>
chip_gen: v7x
topology: tpu7x:2x2x1
jax: 0.10.0
libtpu: 0.0.40
codegen_flags: <defaults>
</compile_context>

<pallas_src>
import functools

import jax
import jax.numpy as jnp
import numpy as np
from jax import lax
from jax.experimental import pallas as pl
from jax.experimental.pallas import tpu as pltpu

EPS = 1e-3      # BatchNorm eps from the PyTorch module
LANE = 128


# ------------------------------ fused kernel --------------------------------

def _inception_a_kernel(x_ref, mask_ref, recip_ref,
                        w_in_ref, b_in_ref,       # fused 1x1s  (384, 384) bf16
                        w1b_ref, b1b_ref,         # branch1 3x3 (1152, 96) bf16
                        w2b_ref, b2b_ref,         # branch2 3x3 (1152, 128) bf16
                        w2c_ref, b2c_ref,         # branch2 3x3 (1152, 96) bf16
                        w3_ref, b3_ref,           # branch3 1x1 (384, 96) bf16
                        o_ref,                    # (M, 384) f32
                        patch_ref,                # VMEM (M, 1152) bf16
                        *, W):
    M, C_in = x_ref.shape
    # Tap order matches the host-side mask columns and im2col weight packing.
    shifts = [(dy - 1) * W + (dx - 1) for dy in range(3) for dx in range(3)]

    def shift_rows(a, s):
        # result[m] = a[m + s] when in range, else 0.  Pure slice+concat so the
        # semantics are unambiguous; boundary masks handle intra-image edges.
        if s == 0:
            return a
        z = jnp.zeros((abs(s), a.shape[1]), a.dtype)
        if s > 0:
            return jnp.concatenate([a[s:, :], z], axis=0)
        return jnp.concatenate([z, a[:a.shape[0] + s, :]], axis=0)

    def conv3x3(act_f32, w_ref, b_ref):
        # act_f32: (M, 128) with zero-padded channels.  Build the (M, 9*128)
        # im2col slab in VMEM (lane-aligned 128-wide tap blocks), then run ONE
        # bf16 MXU matmul with K = 1152; bias + ReLU in f32.
        for t, s in enumerate(shifts):
            mcol = mask_ref[:, t:t + 1]
            piece = shift_rows(act_f32, s) * mcol
            patch_ref[:, t * LANE:(t + 1) * LANE] = piece.astype(jnp.bfloat16)
        y = jnp.dot(patch_ref[...], w_ref[...],
                    preferred_element_type=jnp.float32)
        return jnp.maximum(y + b_ref[...], 0.0)

    # ---- fused 1x1s: (M,384)@(384,384) bf16, 128-aligned output groups ----
    xbf = x_ref[...].astype(jnp.bfloat16)
    yin = jnp.dot(xbf, w_in_ref[...], preferred_element_type=jnp.float32)
    yin = jnp.maximum(yin + b_in_ref[...], 0.0)

    # branch0 is ready: store immediately (short live range).
    o_ref[:, 0:96] = yin[:, 256:352]

    t1 = yin[:, 0:128]      # branch1 1x1 out, channels 64..127 are exact zeros
    t2 = yin[:, 128:256]    # branch2 1x1 out, channels 64..127 are exact zeros

    # ---- branch1: 3x3 ----
    x1 = conv3x3(t1, w1b_ref, b1b_ref)
    o_ref[:, 96:192] = x1

    # ---- branch2: 3x3 -> 3x3 (first conv's out channels padded to 128) ----
    u = conv3x3(t2, w2b_ref, b2b_ref)        # (M, 128), channels 96..127 zero
    x2 = conv3x3(u, w2c_ref, b2c_ref)
    o_ref[:, 192:288] = x2

    # ---- branch3: AvgPool2d(3,1,1,count_include_pad=False) + 1x1 ----
    # Masked shifted sums per 128-channel chunk (keeps vreg pressure low);
    # the per-pixel 1/count is applied after the matmul (row-wise commute).
    z3 = jnp.zeros((M, 96), jnp.float32)
    for c0 in range(0, C_in, LANE):
        xc = x_ref[:, c0:c0 + LANE]
        sc = jnp.zeros((M, LANE), jnp.float32)
        for t, s in enumerate(shifts):
            sc = sc + shift_rows(xc, s) * mask_ref[:, t:t + 1]
        z3 = z3 + jnp.dot(sc.astype(jnp.bfloat16), w3_ref[c0:c0 + LANE, :],
                          preferred_element_type=jnp.float32)
    o_ref[:, 288:384] = jnp.maximum(z3 * recip_ref[...] + b3_ref[...], 0.0)


# ------------------------------- wrapper -------------------------------------

def _fold(p):
    """Fold the BN scale into the conv weight; return (w_scaled, bias)."""
    w, s, b = p
    return w * s[0], b


def inception_a(x_nchw, params, *, nb=2):
    N, C, H, W = x_nchw.shape
    assert C == 384 and N % nb == 0
    HW = H * W
    M = nb * HW
    x = jnp.transpose(x_nchw, (0, 2, 3, 1)).reshape(N * HW, C)   # flat NHWC slab

    w0, b0 = _fold(params["b0_0"])     # (1,1,384,96)
    w1a, b1a = _fold(params["b1_0"])   # (1,1,384,64)
    w1b, b1b = _fold(params["b1_1"])   # (3,3,64,96)
    w2a, b2a = _fold(params["b2_0"])   # (1,1,384,64)
    w2b, b2b = _fold(params["b2_1"])   # (3,3,64,96)
    w2c, b2c = _fold(params["b2_2"])   # (3,3,96,96)
    w3, b3 = _fold(params["b3_1"])     # (1,1,384,96)

    # Fused 1x1 weight with 128-aligned column groups:
    #   [branch1_0 (64)|pad | branch2_0 (64)|pad | branch0 (96)|pad]
    w_in = jnp.zeros((C, 384), jnp.float32)
    w_in = (w_in.at[:, 0:64].set(w1a[0, 0])
                 .at[:, 128:192].set(w2a[0, 0])
                 .at[:, 256:352].set(w0[0, 0]))
    b_in = jnp.zeros((1, 384), jnp.float32)
    b_in = (b_in.at[:, 0:64].set(b1a)
                 .at[:, 128:192].set(b2a)
                 .at[:, 256:352].set(b0))

    def pack3x3(w, cin_pad, cout_pad=None):
        kh, kw, cin, cout = w.shape
        cp = cout if cout_pad is None else cout_pad
        wp = jnp.zeros((kh, kw, cin_pad, cp), jnp.float32)
        wp = wp.at[:, :, :cin, :cout].set(w)
        return wp.reshape(kh * kw * cin_pad, cp).astype(jnp.bfloat16)

    w1b_p = pack3x3(w1b, LANE)                  # (1152, 96)
    w2b_p = pack3x3(w2b, LANE, LANE)            # (1152, 128) out-padded
    b2b_p = jnp.zeros((1, LANE), jnp.float32).at[:, :96].set(b2b)
    w2c_p = pack3x3(w2c, LANE)                  # (1152, 96)
    w3_b = w3[0, 0].astype(jnp.bfloat16)        # (384, 96)

    # Host-precomputed 3x3 tap validity masks and avg-pool 1/count map.
    rr = np.arange(HW) // W
    cc = np.arange(HW) % W
    masks = np.zeros((HW, 9), np.float32)
    for t, (dy, dx) in enumerate([(a, b) for a in range(3) for b in range(3)]):
        oy, ox = dy - 1, dx - 1
        masks[:, t] = ((rr + oy >= 0) & (rr + oy < H)
                       & (cc + ox >= 0) & (cc + ox < W))
    recip = (1.0 / masks.sum(axis=1, keepdims=True)).astype(np.float32)
    masks_m = jnp.asarray(np.tile(masks, (nb, 1)))      # (M, 9)
    recip_m = jnp.asarray(np.tile(recip, (nb, 1)))      # (M, 1)

    kern = functools.partial(_inception_a_kernel, W=W)
    const = lambda n: (0, 0)
    out = pl.pallas_call(
        kern,
        out_shape=jax.ShapeDtypeStruct((N * HW, 4 * 96), jnp.float32),
        grid=(N // nb,),
        in_specs=[
            pl.BlockSpec((M, C), lambda n: (n, 0)),
            pl.BlockSpec(masks_m.shape, const),
            pl.BlockSpec(recip_m.shape, const),
            pl.BlockSpec(w_in.shape, const),
            pl.BlockSpec(b_in.shape, const),
            pl.BlockSpec(w1b_p.shape, const),
            pl.BlockSpec(b1b.shape, const),
            pl.BlockSpec(w2b_p.shape, const),
            pl.BlockSpec(b2b_p.shape, const),
            pl.BlockSpec(w2c_p.shape, const),
            pl.BlockSpec(b2c.shape, const),
            pl.BlockSpec(w3_b.shape, const),
            pl.BlockSpec(b3.shape, const),
        ],
        out_specs=pl.BlockSpec((M, 4 * 96), lambda n: (n, 0)),
        scratch_shapes=[pltpu.VMEM((M, 9 * LANE), jnp.bfloat16)],  # im2col slab
        compiler_params=pltpu.CompilerParams(
            dimension_semantics=("parallel",),
            vmem_limit_bytes=32 * 1024 * 1024),
    )(x, masks_m, recip_m, w_in.astype(jnp.bfloat16), b_in,
      w1b_p, b1b, w2b_p, b2b_p, w2c_p, b2c, w3_b, b3)

    return jnp.transpose(out.reshape(N, H, W, 4 * 96), (0, 3, 1, 2))


# ------------------------ deterministic parameters ---------------------------

def make_basic_conv(key, cin, cout, k):
    """Synthetic BasicConv2d params: conv weight (HWIO) + folded BN scale/bias."""
    k1, k2, k3, k4, k5 = jax.random.split(key, 5)
    w = jax.random.normal(k1, (k, k, cin, cout), jnp.float32) * (0.05 / (k * k))
    gamma = 1.0 + 0.1 * jax.random.normal(k2, (cout,), jnp.float32)
    beta = 0.1 * jax.random.normal(k3, (cout,), jnp.float32)
    mean = 0.05 * jax.random.normal(k4, (cout,), jnp.float32)
    var = jnp.abs(jax.random.normal(k5, (cout,), jnp.float32)) * 0.1 + 0.9
    scale = gamma * lax.rsqrt(var + EPS)
    bias = beta - mean * scale
    return w, scale.reshape(1, cout), bias.reshape(1, cout)


def make_inception_a_params(key):
    keys = jax.random.split(key, 7)
    return {
        "b0_0": make_basic_conv(keys[0], 384, 96, 1),
        "b1_0": make_basic_conv(keys[1], 384, 64, 1),
        "b1_1": make_basic_conv(keys[2], 64, 96, 3),
        "b2_0": make_basic_conv(keys[3], 384, 64, 1),
        "b2_1": make_basic_conv(keys[4], 64, 96, 3),
        "b2_2": make_basic_conv(keys[5], 96, 96, 3),
        "b3_1": make_basic_conv(keys[6], 384, 96, 1),
    }


# --------------------------- pure-JAX reference ------------------------------

def _ref_basic(x_nhwc, w, scale, bias, pad):
    y = lax.conv_general_dilated(
        x_nhwc, w, (1, 1), ((pad, pad), (pad, pad)),
        dimension_numbers=("NHWC", "HWIO", "NHWC"))
    return jnp.maximum(y * scale.reshape(1, 1, 1, -1)
                       + bias.reshape(1, 1, 1, -1), 0.0)


def _ref_avgpool(x_nhwc):
    pads = [(0, 0), (1, 1), (1, 1), (0, 0)]
    s = lax.reduce_window(x_nhwc, 0.0, lax.add, (1, 3, 3, 1), (1, 1, 1, 1), pads)
    c = lax.reduce_window(jnp.ones_like(x_nhwc), 0.0, lax.add,
                          (1, 3, 3, 1), (1, 1, 1, 1), pads)
    return s / c


def inception_a_ref(x_nchw, params):
    x = jnp.transpose(x_nchw, (0, 2, 3, 1))
    w, s, b = params["b0_0"]; x0 = _ref_basic(x, w, s, b, 0)
    w, s, b = params["b1_0"]; t = _ref_basic(x, w, s, b, 0)
    w, s, b = params["b1_1"]; x1 = _ref_basic(t, w, s, b, 1)
    w, s, b = params["b2_0"]; t = _ref_basic(x, w, s, b, 0)
    w, s, b = params["b2_1"]; t = _ref_basic(t, w, s, b, 1)
    w, s, b = params["b2_2"]; x2 = _ref_basic(t, w, s, b, 1)
    w, s, b = params["b3_1"]; x3 = _ref_basic(_ref_avgpool(x), w, s, b, 0)
    out = jnp.concatenate([x0, x1, x2, x3], axis=-1)
    return jnp.transpose(out, (0, 3, 1, 2))


# ----------------------------------- main ------------------------------------

if __name__ == "__main__":
    key = jax.random.PRNGKey(0)
    kx, kp = jax.random.split(key)

    # Inception_A hardcodes 384 input channels; small batch/spatial test size.
    N, C, H, W = 4, 384, 8, 8
    x = jax.random.normal(kx, (N, C, H, W), jnp.float32)
    params = make_inception_a_params(kp)

    out = jax.block_until_ready(inception_a(x, params, nb=2))
    assert out.shape == (N, 384, H, W), out.shape

    ref = jax.block_until_ready(inception_a_ref(x, params))
    np.testing.assert_allclose(np.asarray(out), np.asarray(ref),
                               rtol=2e-2, atol=2e-2)

    print("KERNEL_OK")
</pallas_src>

<mosaic_0001>
module attributes {stable_mosaic.version = 11 : i64} {
  func.func @_inception_a_kernel(%arg0: i32, %arg1: memref<128x384xf32, #tpu.memory_space<vmem>>, %arg2: memref<128x9xf32, #tpu.memory_space<vmem>>, %arg3: memref<128x1xf32, #tpu.memory_space<vmem>>, %arg4: memref<384x384xbf16, #tpu.memory_space<vmem>>, %arg5: memref<1x384xf32, #tpu.memory_space<vmem>>, %arg6: memref<1152x96xbf16, #tpu.memory_space<vmem>>, %arg7: memref<1x96xf32, #tpu.memory_space<vmem>>, %arg8: memref<1152x128xbf16, #tpu.memory_space<vmem>>, %arg9: memref<1x128xf32, #tpu.memory_space<vmem>>, %arg10: memref<1152x96xbf16, #tpu.memory_space<vmem>>, %arg11: memref<1x96xf32, #tpu.memory_space<vmem>>, %arg12: memref<384x96xbf16, #tpu.memory_space<vmem>>, %arg13: memref<1x96xf32, #tpu.memory_space<vmem>>, %arg14: memref<128x384xf32, #tpu.memory_space<vmem>>, %arg15: memref<128x1152xbf16, #tpu.memory_space<vmem>>) attributes {dimension_semantics = [#tpu.dimension_semantics<parallel>], iteration_bounds = array<i64: 2>, scalar_prefetch = 0 : i64, scratch_operands = 1 : i64, tpu.core_type = #tpu.core_type<tc>, window_params = [{transform_indices = @transform_0, window_bounds = array<i64: 128, 384>}, {pipeline_mode = #tpu.pipeline_mode<synchronous>, transform_indices = @transform_1, window_bounds = array<i64: 128, 9>}, {pipeline_mode = #tpu.pipeline_mode<synchronous>, transform_indices = @transform_2, window_bounds = array<i64: 128, 1>}, {pipeline_mode = #tpu.pipeline_mode<synchronous>, transform_indices = @transform_3, window_bounds = array<i64: 384, 384>}, {pipeline_mode = #tpu.pipeline_mode<synchronous>, transform_indices = @transform_4, window_bounds = array<i64: 1, 384>}, {pipeline_mode = #tpu.pipeline_mode<synchronous>, transform_indices = @transform_5, window_bounds = array<i64: 1152, 96>}, {pipeline_mode = #tpu.pipeline_mode<synchronous>, transform_indices = @transform_6, window_bounds = array<i64: 1, 96>}, {pipeline_mode = #tpu.pipeline_mode<synchronous>, transform_indices = @transform_7, window_bounds = array<i64: 1152, 128>}, {pipeline_mode = #tpu.pipeline_mode<synchronous>, transform_indices = @transform_8, window_bounds = array<i64: 1, 128>}, {pipeline_mode = #tpu.pipeline_mode<synchronous>, transform_indices = @transform_9, window_bounds = array<i64: 1152, 96>}, {pipeline_mode = #tpu.pipeline_mode<synchronous>, transform_indices = @transform_10, window_bounds = array<i64: 1, 96>}, {pipeline_mode = #tpu.pipeline_mode<synchronous>, transform_indices = @transform_11, window_bounds = array<i64: 384, 96>}, {pipeline_mode = #tpu.pipeline_mode<synchronous>, transform_indices = @transform_12, window_bounds = array<i64: 1, 96>}, {transform_indices = @transform_13, window_bounds = array<i64: 128, 384>}]} {
    %c0 = arith.constant 0 : index
    %c0_0 = arith.constant 0 : index
    %0 = vector.load %arg1[%c0, %c0_0] : memref<128x384xf32, #tpu.memory_space<vmem>>, vector<128x384xf32>
    %1 = arith.truncf %0 : vector<128x384xf32> to vector<128x384xbf16>
    %c0_1 = arith.constant 0 : index
    %c0_2 = arith.constant 0 : index
    %2 = vector.load %arg4[%c0_1, %c0_2] : memref<384x384xbf16, #tpu.memory_space<vmem>>, vector<384x384xbf16>
    %cst = arith.constant dense<0.000000e+00> : vector<128x384xf32>
    %3 = tpu.matmul %1, %2, %cst {dimension_numbers = #tpu.dot_dimension_numbers<[1], [0], [0], [1], [0, 0, 1, 1], [], []>} : vector<128x384xbf16>, vector<384x384xbf16>, vector<128x384xf32> -> vector<128x384xf32>
    %c0_3 = arith.constant 0 : index
    %c0_4 = arith.constant 0 : index
    %4 = vector.load %arg5[%c0_3, %c0_4] : memref<1x384xf32, #tpu.memory_space<vmem>>, vector<1x384xf32>
    %5 = vector.broadcast %4 : vector<1x384xf32> to vector<128x384xf32>
    %6 = arith.addf %3, %5 : vector<128x384xf32>
    %cst_5 = arith.constant 0.000000e+00 : f32
    %7 = vector.broadcast %cst_5 : f32 to vector<128x384xf32>
    %8 = arith.maximumf %6, %7 : vector<128x384xf32>
    %9 = vector.extract_strided_slice %8 {offsets = [0, 256], sizes = [128, 96], strides = [1, 1]} : vector<128x384xf32> to vector<128x96xf32>
    %c0_6 = arith.constant 0 : index
    %c0_7 = arith.constant 0 : index
    %10 = vector.load %arg14[%c0_6, %c0_7] : memref<128x384xf32, #tpu.memory_space<vmem>>, vector<128x96xf32>
    tpu.vector_store %arg14[%c0_6, %c0_7], %9 {strides = array<i32>} : memref<128x384xf32, #tpu.memory_space<vmem>>, vector<128x96xf32>,
    %11 = vector.extract_strided_slice %8 {offsets = [0, 0], sizes = [128, 128], strides = [1, 1]} : vector<128x384xf32> to vector<128x128xf32>
    %12 = vector.extract_strided_slice %8 {offsets = [0, 128], sizes = [128, 128], strides = [1, 1]} : vector<128x384xf32> to vector<128x128xf32>
    %c0_8 = arith.constant 0 : index
    %c0_9 = arith.constant 0 : index
    %13 = vector.load %arg2[%c0_8, %c0_9] : memref<128x9xf32, #tpu.memory_space<vmem>>, vector<128x1xf32>
    %cst_10 = arith.constant 0.000000e+00 : f32
    %14 = vector.broadcast %cst_10 : f32 to vector<9x128xf32>
    %15 = vector.extract_strided_slice %11 {offsets = [0, 0], sizes = [119, 128], strides = [1, 1]} : vector<128x128xf32> to vector<119x128xf32>
    %16 = tpu.concatenate %14, %15 in 0 : vector<9x128xf32>, vector<119x128xf32> -> vector<128x128xf32>
    %17 = vector.broadcast %13 : vector<128x1xf32> to vector<128x128xf32>
    %18 = arith.mulf %16, %17 : vector<128x128xf32>
    %19 = arith.truncf %18 : vector<128x128xf32> to vector<128x128xbf16>
    %c0_11 = arith.constant 0 : index
    %c0_12 = arith.constant 0 : index
    %20 = vector.load %arg15[%c0_11, %c0_12] : memref<128x1152xbf16, #tpu.memory_space<vmem>>, vector<128x128xbf16>
    tpu.vector_store %arg15[%c0_11, %c0_12], %19 {strides = array<i32>} : memref<128x1152xbf16, #tpu.memory_space<vmem>>, vector<128x128xbf16>,
    %c0_13 = arith.constant 0 : index
    %c1 = arith.constant 1 : index
    %21 = vector.load %arg2[%c0_13, %c1] : memref<128x9xf32, #tpu.memory_space<vmem>>, vector<128x1xf32>
    %cst_14 = arith.constant 0.000000e+00 : f32
    %22 = vector.broadcast %cst_14 : f32 to vector<8x128xf32>
    %23 = vector.extract_strided_slice %11 {offsets = [0, 0], sizes = [120, 128], strides = [1, 1]} : vector<128x128xf32> to vector<120x128xf32>
    %24 = tpu.concatenate %22, %23 in 0 : vector<8x128xf32>, vector<120x128xf32> -> vector<128x128xf32>
    %25 = vector.broadcast %21 : vector<128x1xf32> to vector<128x128xf32>
    %26 = arith.mulf %24, %25 : vector<128x128xf32>
    %27 = arith.truncf %26 : vector<128x128xf32> to vector<128x128xbf16>
    %c0_15 = arith.constant 0 : index
    %c128 = arith.constant 128 : index
    %28 = vector.load %arg15[%c0_15, %c128] : memref<128x1152xbf16, #tpu.memory_space<vmem>>, vector<128x128xbf16>
    tpu.vector_store %arg15[%c0_15, %c128], %27 {strides = array<i32>} : memref<128x1152xbf16, #tpu.memory_space<vmem>>, vector<128x128xbf16>,
    %c0_16 = arith.constant 0 : index
    %c2 = arith.constant 2 : index
    %29 = vector.load %arg2[%c0_16, %c2] : memref<128x9xf32, #tpu.memory_space<vmem>>, vector<128x1xf32>
    %cst_17 = arith.constant 0.000000e+00 : f32
    %30 = vector.broadcast %cst_17 : f32 to vector<7x128xf32>
    %31 = vector.extract_strided_slice %11 {offsets = [0, 0], sizes = [121, 128], strides = [1, 1]} : vector<128x128xf32> to vector<121x128xf32>
    %32 = tpu.concatenate %30, %31 in 0 : vector<7x128xf32>, vector<121x128xf32> -> vector<128x128xf32>
    %33 = vector.broadcast %29 : vector<128x1xf32> to vector<128x128xf32>
    %34 = arith.mulf %32, %33 : vector<128x128xf32>
    %35 = arith.truncf %34 : vector<128x128xf32> to vector<128x128xbf16>
    %c0_18 = arith.constant 0 : index
    %c256 = arith.constant 256 : index
    %36 = vector.load %arg15[%c0_18, %c256] : memref<128x1152xbf16, #tpu.memory_space<vmem>>, vector<128x128xbf16>
    tpu.vector_store %arg15[%c0_18, %c256], %35 {strides = array<i32>} : memref<128x1152xbf16, #tpu.memory_space<vmem>>, vector<128x128xbf16>,
    %c0_19 = arith.constant 0 : index
    %c3 = arith.constant 3 : index
    %37 = vector.load %arg2[%c0_19, %c3] : memref<128x9xf32, #tpu.memory_space<vmem>>, vector<128x1xf32>
    %cst_20 = arith.constant 0.000000e+00 : f32
    %38 = vector.broadcast %cst_20 : f32 to vector<1x128xf32>
    %39 = vector.extract_strided_slice %11 {offsets = [0, 0], sizes = [127, 128], strides = [1, 1]} : vector<128x128xf32> to vector<127x128xf32>
    %40 = tpu.concatenate %38, %39 in 0 : vector<1x128xf32>, vector<127x128xf32> -> vector<128x128xf32>
    %41 = vector.broadcast %37 : vector<128x1xf32> to vector<128x128xf32>
    %42 = arith.mulf %40, %41 : vector<128x128xf32>
    %43 = arith.truncf %42 : vector<128x128xf32> to vector<128x128xbf16>
    %c0_21 = arith.constant 0 : index
    %c384 = arith.constant 384 : index
    %44 = vector.load %arg15[%c0_21, %c384] : memref<128x1152xbf16, #tpu.memory_space<vmem>>, vector<128x128xbf16>
    tpu.vector_store %arg15[%c0_21, %c384], %43 {strides = array<i32>} : memref<128x1152xbf16, #tpu.memory_space<vmem>>, vector<128x128xbf16>,
    %c0_22 = arith.constant 0 : index
    %c4 = arith.constant 4 : index
    %45 = vector.load %arg2[%c0_22, %c4] : memref<128x9xf32, #tpu.memory_space<vmem>>, vector<128x1xf32>
    %46 = vector.broadcast %45 : vector<128x1xf32> to vector<128x128xf32>
    %47 = arith.mulf %11, %46 : vector<128x128xf32>
    %48 = arith.truncf %47 : vector<128x128xf32> to vector<128x128xbf16>
    %c0_23 = arith.constant 0 : index
    %c512 = arith.constant 512 : index
    %49 = vector.load %arg15[%c0_23, %c512] : memref<128x1152xbf16, #tpu.memory_space<vmem>>, vector<128x128xbf16>
    tpu.vector_store %arg15[%c0_23, %c512], %48 {strides = array<i32>} : memref<128x1152xbf16, #tpu.memory_space<vmem>>, vector<128x128xbf16>,
    %c0_24 = arith.constant 0 : index
    %c5 = arith.constant 5 : index
    %50 = vector.load %arg2[%c0_24, %c5] : memref<128x9xf32, #tpu.memory_space<vmem>>, vector<128x1xf32>
    %cst_25 = arith.constant 0.000000e+00 : f32
    %51 = vector.broadcast %cst_25 : f32 to vector<1x128xf32>
    %52 = vector.extract_strided_slice %11 {offsets = [1, 0], sizes = [127, 128], strides = [1, 1]} : vector<128x128xf32> to vector<127x128xf32>
    %53 = tpu.concatenate %52, %51 in 0 : vector<127x128xf32>, vector<1x128xf32> -> vector<128x128xf32>
    %54 = vector.broadcast %50 : vector<128x1xf32> to vector<128x128xf32>
    %55 = arith.mulf %53, %54 : vector<128x128xf32>
    %56 = arith.truncf %55 : vector<128x128xf32> to vector<128x128xbf16>
    %c0_26 = arith.constant 0 : index
    %c640 = arith.constant 640 : index
    %57 = vector.load %arg15[%c0_26, %c640] : memref<128x1152xbf16, #tpu.memory_space<vmem>>, vector<128x128xbf16>
    tpu.vector_store %arg15[%c0_26, %c640], %56 {strides = array<i32>} : memref<128x1152xbf16, #tpu.memory_space<vmem>>, vector<128x128xbf16>,
    %c0_27 = arith.constant 0 : index
    %c6 = arith.constant 6 : index
    %58 = vector.load %arg2[%c0_27, %c6] : memref<128x9xf32, #tpu.memory_space<vmem>>, vector<128x1xf32>
    %cst_28 = arith.constant 0.000000e+00 : f32
    %59 = vector.broadcast %cst_28 : f32 to vector<7x128xf32>
    %60 = vector.extract_strided_slice %11 {offsets = [7, 0], sizes = [121, 128], strides = [1, 1]} : vector<128x128xf32> to vector<121x128xf32>
    %61 = tpu.concatenate %60, %59 in 0 : vector<121x128xf32>, vector<7x128xf32> -> vector<128x128xf32>
    %62 = vector.broadcast %58 : vector<128x1xf32> to vector<128x128xf32>
    %63 = arith.mulf %61, %62 : vector<128x128xf32>
    %64 = arith.truncf %63 : vector<128x128xf32> to vector<128x128xbf16>
    %c0_29 = arith.constant 0 : index
    %c768 = arith.constant 768 : index
    %65 = vector.load %arg15[%c0_29, %c768] : memref<128x1152xbf16, #tpu.memory_space<vmem>>, vector<128x128xbf16>
    tpu.vector_store %arg15[%c0_29, %c768], %64 {strides = array<i32>} : memref<128x1152xbf16, #tpu.memory_space<vmem>>, vector<128x128xbf16>,
    %c0_30 = arith.constant 0 : index
    %c7 = arith.constant 7 : index
    %66 = vector.load %arg2[%c0_30, %c7] : memref<128x9xf32, #tpu.memory_space<vmem>>, vector<128x1xf32>
    %cst_31 = arith.constant 0.000000e+00 : f32
    %67 = vector.broadcast %cst_31 : f32 to vector<8x128xf32>
    %68 = vector.extract_strided_slice %11 {offsets = [8, 0], sizes = [120, 128], strides = [1, 1]} : vector<128x128xf32> to vector<120x128xf32>
    %69 = tpu.concatenate %68, %67 in 0 : vector<120x128xf32>, vector<8x128xf32> -> vector<128x128xf32>
    %70 = vector.broadcast %66 : vector<128x1xf32> to vector<128x128xf32>
    %71 = arith.mulf %69, %70 : vector<128x128xf32>
    %72 = arith.truncf %71 : vector<128x128xf32> to vector<128x128xbf16>
    %c0_32 = arith.constant 0 : index
    %c896 = arith.constant 896 : index
    %73 = vector.load %arg15[%c0_32, %c896] : memref<128x1152xbf16, #tpu.memory_space<vmem>>, vector<128x128xbf16>
    tpu.vector_store %arg15[%c0_32, %c896], %72 {strides = array<i32>} : memref<128x1152xbf16, #tpu.memory_space<vmem>>, vector<128x128xbf16>,
    %c0_33 = arith.constant 0 : index
    %c8 = arith.constant 8 : index
    %74 = vector.load %arg2[%c0_33, %c8] : memref<128x9xf32, #tpu.memory_space<vmem>>, vector<128x1xf32>
    %cst_34 = arith.constant 0.000000e+00 : f32
    %75 = vector.broadcast %cst_34 : f32 to vector<9x128xf32>
    %76 = vector.extract_strided_slice %11 {offsets = [9, 0], sizes = [119, 128], strides = [1, 1]} : vector<128x128xf32> to vector<119x128xf32>
    %77 = tpu.concatenate %76, %75 in 0 : vector<119x128xf32>, vector<9x128xf32> -> vector<128x128xf32>
    %78 = vector.broadcast %74 : vector<128x1xf32> to vector<128x128xf32>
    %79 = arith.mulf %77, %78 : vector<128x128xf32>
    %80 = arith.truncf %79 : vector<128x128xf32> to vector<128x128xbf16>
    %c0_35 = arith.constant 0 : index
    %c1024 = arith.constant 1024 : index
    %81 = vector.load %arg15[%c0_35, %c1024] : memref<128x1152xbf16, #tpu.memory_space<vmem>>, vector<128x128xbf16>
    tpu.vector_store %arg15[%c0_35, %c1024], %80 {strides = array<i32>} : memref<128x1152xbf16, #tpu.memory_space<vmem>>, vector<128x128xbf16>,
    %c0_36 = arith.constant 0 : index
    %c0_37 = arith.constant 0 : index
    %82 = vector.load %arg15[%c0_36, %c0_37] : memref<128x1152xbf16, #tpu.memory_space<vmem>>, vector<128x1152xbf16>
    %c0_38 = arith.constant 0 : index
    %c0_39 = arith.constant 0 : index
    %83 = vector.load %arg6[%c0_38, %c0_39] : memref<1152x96xbf16, #tpu.memory_space<vmem>>, vector<1152x96xbf16>
    %cst_40 = arith.constant dense<0.000000e+00> : vector<128x96xf32>
    %84 = tpu.matmul %82, %83, %cst_40 {dimension_numbers = #tpu.dot_dimension_numbers<[1], [0], [0], [1], [0, 0, 1, 1], [], []>} : vector<128x1152xbf16>, vector<1152x96xbf16>, vector<128x96xf32> -> vector<128x96xf32>
    %c0_41 = arith.constant 0 : index
    %c0_42 = arith.constant 0 : index
    %85 = vector.load %arg7[%c0_41, %c0_42] : memref<1x96xf32, #tpu.memory_space<vmem>>, vector<1x96xf32>
    %86 = vector.broadcast %85 : vector<1x96xf32> to vector<128x96xf32>
    %87 = arith.addf %84, %86 : vector<128x96xf32>
    %cst_43 = arith.constant 0.000000e+00 : f32
    %88 = vector.broadcast %cst_43 : f32 to vector<128x96xf32>
    %89 = arith.maximumf %87, %88 : vector<128x96xf32>
    %c0_44 = arith.constant 0 : index
    %c96 = arith.constant 96 : index
    %90 = vector.load %arg14[%c0_44, %c96] : memref<128x384xf32, #tpu.memory_space<vmem>>, vector<128x96xf32>
    tpu.vector_store %arg14[%c0_44, %c96], %89 {strides = array<i32>} : memref<128x384xf32, #tpu.memory_space<vmem>>, vector<128x96xf32>,
    %c0_45 = arith.constant 0 : index
    %c0_46 = arith.constant 0 : index
    %91 = vector.load %arg2[%c0_45, %c0_46] : memref<128x9xf32, #tpu.memory_space<vmem>>, vector<128x1xf32>
    %cst_47 = arith.constant 0.000000e+00 : f32
    %92 = vector.broadcast %cst_47 : f32 to vector<9x128xf32>
    %93 = vector.extract_strided_slice %12 {offsets = [0, 0], sizes = [119, 128], strides = [1, 1]} : vector<128x128xf32> to vector<119x128xf32>
    %94 = tpu.concatenate %92, %93 in 0 : vector<9x128xf32>, vector<119x128xf32> -> vector<128x128xf32>
    %95 = vector.broadcast %91 : vector<128x1xf32> to vector<128x128xf32>
    %96 = arith.mulf %94, %95 : vector<128x128xf32>
    %97 = arith.truncf %96 : vector<128x128xf32> to vector<128x128xbf16>
    %c0_48 = arith.constant 0 : index
    %c0_49 = arith.constant 0 : index
    %98 = vector.load %arg15[%c0_48, %c0_49] : memref<128x1152xbf16, #tpu.memory_space<vmem>>, vector<128x128xbf16>
    tpu.vector_store %arg15[%c0_48, %c0_49], %97 {strides = array<i32>} : memref<128x1152xbf16, #tpu.memory_space<vmem>>, vector<128x128xbf16>,
    %c0_50 = arith.constant 0 : index
    %c1_51 = arith.constant 1 : index
    %99 = vector.load %arg2[%c0_50, %c1_51] : memref<128x9xf32, #tpu.memory_space<vmem>>, vector<128x1xf32>
    %cst_52 = arith.constant 0.000000e+00 : f32
    %100 = vector.broadcast %cst_52 : f32 to vector<8x128xf32>
    %101 = vector.extract_strided_slice %12 {offsets = [0, 0], sizes = [120, 128], strides = [1, 1]} : vector<128x128xf32> to vector<120x128xf32>
    %102 = tpu.concatenate %100, %101 in 0 : vector<8x128xf32>, vector<120x128xf32> -> vector<128x128xf32>
    %103 = vector.broadcast %99 : vector<128x1xf32> to vector<128x128xf32>
    %104 = arith.mulf %102, %103 : vector<128x128xf32>
    %105 = arith.truncf %104 : vector<128x128xf32> to vector<128x128xbf16>
    %c0_53 = arith.constant 0 : index
    %c128_54 = arith.constant 128 : index
    %106 = vector.load %arg15[%c0_53, %c128_54] : memref<128x1152xbf16, #tpu.memory_space<vmem>>, vector<128x128xbf16>
    tpu.vector_store %arg15[%c0_53, %c128_54], %105 {strides = array<i32>} : memref<128x1152xbf16, #tpu.memory_space<vmem>>, vector<128x128xbf16>,
    %c0_55 = arith.constant 0 : index
    %c2_56 = arith.constant 2 : index
    %107 = vector.load %arg2[%c0_55, %c2_56] : memref<128x9xf32, #tpu.memory_space<vmem>>, vector<128x1xf32>
    %cst_57 = arith.constant 0.000000e+00 : f32
    %108 = vector.broadcast %cst_57 : f32 to vector<7x128xf32>
    %109 = vector.extract_strided_slice %12 {offsets = [0, 0], sizes = [121, 128], strides = [1, 1]} : vector<128x128xf32> to vector<121x128xf32>
    %110 = tpu.concatenate %108, %109 in 0 : vector<7x128xf32>, vector<121x128xf32> -> vector<128x128xf32>
    %111 = vector.broadcast %107 : vector<128x1xf32> to vector<128x128xf32>
    %112 = arith.mulf %110, %111 : vector<128x128xf32>
    %113 = arith.truncf %112 : vector<128x128xf32> to vector<128x128xbf16>
    %c0_58 = arith.constant 0 : index
    %c256_59 = arith.constant 256 : index
    %114 = vector.load %arg15[%c0_58, %c256_59] : memref<128x1152xbf16, #tpu.memory_space<vmem>>, vector<128x128xbf16>
    tpu.vector_store %arg15[%c0_58, %c256_59], %113 {strides = array<i32>} : memref<128x1152xbf16, #tpu.memory_space<vmem>>, vector<128x128xbf16>,
    %c0_60 = arith.constant 0 : index
    %c3_61 = arith.constant 3 : index
    %115 = vector.load %arg2[%c0_60, %c3_61] : memref<128x9xf32, #tpu.memory_space<vmem>>, vector<128x1xf32>
    %cst_62 = arith.constant 0.000000e+00 : f32
    %116 = vector.broadcast %cst_62 : f32 to vector<1x128xf32>
    %117 = vector.extract_strided_slice %12 {offsets = [0, 0], sizes = [127, 128], strides = [1, 1]} : vector<128x128xf32> to vector<127x128xf32>
    %118 = tpu.concatenate %116, %117 in 0 : vector<1x128xf32>, vector<127x128xf32> -> vector<128x128xf32>
    %119 = vector.broadcast %115 : vector<128x1xf32> to vector<128x128xf32>
    %120 = arith.mulf %118, %119 : vector<128x128xf32>
    %121 = arith.truncf %120 : vector<128x128xf32> to vector<128x128xbf16>
    %c0_63 = arith.constant 0 : index
    %c384_64 = arith.constant 384 : index
    %122 = vector.load %arg15[%c0_63, %c384_64] : memref<128x1152xbf16, #tpu.memory_space<vmem>>, vector<128x128xbf16>
    tpu.vector_store %arg15[%c0_63, %c384_64], %121 {strides = array<i32>} : memref<128x1152xbf16, #tpu.memory_space<vmem>>, vector<128x128xbf16>,
    %c0_65 = arith.constant 0 : index
    %c4_66 = arith.constant 4 : index
    %123 = vector.load %arg2[%c0_65, %c4_66] : memref<128x9xf32, #tpu.memory_space<vmem>>, vector<128x1xf32>
    %124 = vector.broadcast %123 : vector<128x1xf32> to vector<128x128xf32>
    %125 = arith.mulf %12, %124 : vector<128x128xf32>
    %126 = arith.truncf %125 : vector<128x128xf32> to vector<128x128xbf16>
    %c0_67 = arith.constant 0 : index
    %c512_68 = arith.constant 512 : index
    %127 = vector.load %arg15[%c0_67, %c512_68] : memref<128x1152xbf16, #tpu.memory_space<vmem>>, vector<128x128xbf16>
    tpu.vector_store %arg15[%c0_67, %c512_68], %126 {strides = array<i32>} : memref<128x1152xbf16, #tpu.memory_space<vmem>>, vector<128x128xbf16>,
    %c0_69 = arith.constant 0 : index
    %c5_70 = arith.constant 5 : index
    %128 = vector.load %arg2[%c0_69, %c5_70] : memref<128x9xf32, #tpu.memory_space<vmem>>, vector<128x1xf32>
    %cst_71 = arith.constant 0.000000e+00 : f32
    %129 = vector.broadcast %cst_71 : f32 to vector<1x128xf32>
    %130 = vector.extract_strided_slice %12 {offsets = [1, 0], sizes = [127, 128], strides = [1, 1]} : vector<128x128xf32> to vector<127x128xf32>
    %131 = tpu.concatenate %130, %129 in 0 : vector<127x128xf32>, vector<1x128xf32> -> vector<128x128xf32>
    %132 = vector.broadcast %128 : vector<128x1xf32> to vector<128x128xf32>
    %133 = arith.mulf %131, %132 : vector<128x128xf32>
    %134 = arith.truncf %133 : vector<128x128xf32> to vector<128x128xbf16>
    %c0_72 = arith.constant 0 : index
    %c640_73 = arith.constant 640 : index
    %135 = vector.load %arg15[%c0_72, %c640_73] : memref<128x1152xbf16, #tpu.memory_space<vmem>>, vector<128x128xbf16>
    tpu.vector_store %arg15[%c0_72, %c640_73], %134 {strides = array<i32>} : memref<128x1152xbf16, #tpu.memory_space<vmem>>, vector<128x128xbf16>,
    %c0_74 = arith.constant 0 : index
    %c6_75 = arith.constant 6 : index
    %136 = vector.load %arg2[%c0_74, %c6_75] : memref<128x9xf32, #tpu.memory_space<vmem>>, vector<128x1xf32>
    %cst_76 = arith.constant 0.000000e+00 : f32
    %137 = vector.broadcast %cst_76 : f32 to vector<7x128xf32>
    %138 = vector.extract_strided_slice %12 {offsets = [7, 0], sizes = [121, 128], strides = [1, 1]} : vector<128x128xf32> to vector<121x128xf32>
    %139 = tpu.concatenate %138, %137 in 0 : vector<121x128xf32>, vector<7x128xf32> -> vector<128x128xf32>
    %140 = vector.broadcast %136 : vector<128x1xf32> to vector<128x128xf32>
    %141 = arith.mulf %139, %140 : vector<128x128xf32>
    %142 = arith.truncf %141 : vector<128x128xf32> to vector<128x128xbf16>
    %c0_77 = arith.constant 0 : index
    %c768_78 = arith.constant 768 : index
    %143 = vector.load %arg15[%c0_77, %c768_78] : memref<128x1152xbf16, #tpu.memory_space<vmem>>, vector<128x128xbf16>
    tpu.vector_store %arg15[%c0_77, %c768_78], %142 {strides = array<i32>} : memref<128x1152xbf16, #tpu.memory_space<vmem>>, vector<128x128xbf16>,
    %c0_79 = arith.constant 0 : index
    %c7_80 = arith.constant 7 : index
    %144 = vector.load %arg2[%c0_79, %c7_80] : memref<128x9xf32, #tpu.memory_space<vmem>>, vector<128x1xf32>
    %cst_81 = arith.constant 0.000000e+00 : f32
    %145 = vector.broadcast %cst_81 : f32 to vector<8x128xf32>
    %146 = vector.extract_strided_slice %12 {offsets = [8, 0], sizes = [120, 128], strides = [1, 1]} : vector<128x128xf32> to vector<120x128xf32>
    %147 = tpu.concatenate %146, %145 in 0 : vector<120x128xf32>, vector<8x128xf32> -> vector<128x128xf32>
    %148 = vector.broadcast %144 : vector<128x1xf32> to vector<128x128xf32>
    %149 = arith.mulf %147, %148 : vector<128x128xf32>
    %150 = arith.truncf %149 : vector<128x128xf32> to vector<128x128xbf16>
    %c0_82 = arith.constant 0 : index
    %c896_83 = arith.constant 896 : index
    %151 = vector.load %arg15[%c0_82, %c896_83] : memref<128x1152xbf16, #tpu.memory_space<vmem>>, vector<128x128xbf16>
    tpu.vector_store %arg15[%c0_82, %c896_83], %150 {strides = array<i32>} : memref<128x1152xbf16, #tpu.memory_space<vmem>>, vector<128x128xbf16>,
    %c0_84 = arith.constant 0 : index
    %c8_85 = arith.constant 8 : index
    %152 = vector.load %arg2[%c0_84, %c8_85] : memref<128x9xf32, #tpu.memory_space<vmem>>, vector<128x1xf32>
    %cst_86 = arith.constant 0.000000e+00 : f32
    %153 = vector.broadcast %cst_86 : f32 to vector<9x128xf32>
    %154 = vector.extract_strided_slice %12 {offsets = [9, 0], sizes = [119, 128], strides = [1, 1]} : vector<128x128xf32> to vector<119x128xf32>
    %155 = tpu.concatenate %154, %153 in 0 : vector<119x128xf32>, vector<9x128xf32> -> vector<128x128xf32>
    %156 = vector.broadcast %152 : vector<128x1xf32> to vector<128x128xf32>
    %157 = arith.mulf %155, %156 : vector<128x128xf32>
    %158 = arith.truncf %157 : vector<128x128xf32> to vector<128x128xbf16>
    %c0_87 = arith.constant 0 : index
    %c1024_88 = arith.constant 1024 : index
    %159 = vector.load %arg15[%c0_87, %c1024_88] : memref<128x1152xbf16, #tpu.memory_space<vmem>>, vector<128x128xbf16>
    tpu.vector_store %arg15[%c0_87, %c1024_88], %158 {strides = array<i32>} : memref<128x1152xbf16, #tpu.memory_space<vmem>>, vector<128x128xbf16>,
    %c0_89 = arith.constant 0 : index
    %c0_90 = arith.constant 0 : index
    %160 = vector.load %arg15[%c0_89, %c0_90] : memref<128x1152xbf16, #tpu.memory_space<vmem>>, vector<128x1152xbf16>
    %c0_91 = arith.constant 0 : index
    %c0_92 = arith.constant 0 : index
    %161 = vector.load %arg8[%c0_91, %c0_92] : memref<1152x128xbf16, #tpu.memory_space<vmem>>, vector<1152x128xbf16>
    %cst_93 = arith.constant dense<0.000000e+00> : vector<128x128xf32>
    %162 = tpu.matmul %160, %161, %cst_93 {dimension_numbers = #tpu.dot_dimension_numbers<[1], [0], [0], [1], [0, 0, 1, 1], [], []>} : vector<128x1152xbf16>, vector<1152x128xbf16>, vector<128x128xf32> -> vector<128x128xf32>
    %c0_94 = arith.constant 0 : index
    %c0_95 = arith.constant 0 : index
    %163 = vector.load %arg9[%c0_94, %c0_95] : memref<1x128xf32, #tpu.memory_space<vmem>>, vector<1x128xf32>
    %164 = vector.broadcast %163 : vector<1x128xf32> to vector<128x128xf32>
    %165 = arith.addf %162, %164 : vector<128x128xf32>
    %cst_96 = arith.constant 0.000000e+00 : f32
    %166 = vector.broadcast %cst_96 : f32 to vector<128x128xf32>
    %167 = arith.maximumf %165, %166 : vector<128x128xf32>
    %c0_97 = arith.constant 0 : index
    %c0_98 = arith.constant 0 : index
    %168 = vector.load %arg2[%c0_97, %c0_98] : memref<128x9xf32, #tpu.memory_space<vmem>>, vector<128x1xf32>
    %cst_99 = arith.constant 0.000000e+00 : f32
    %169 = vector.broadcast %cst_99 : f32 to vector<9x128xf32>
    %170 = vector.extract_strided_slice %167 {offsets = [0, 0], sizes = [119, 128], strides = [1, 1]} : vector<128x128xf32> to vector<119x128xf32>
    %171 = tpu.concatenate %169, %170 in 0 : vector<9x128xf32>, vector<119x128xf32> -> vector<128x128xf32>
    %172 = vector.broadcast %168 : vector<128x1xf32> to vector<128x128xf32>
    %173 = arith.mulf %171, %172 : vector<128x128xf32>
    %174 = arith.truncf %173 : vector<128x128xf32> to vector<128x128xbf16>
    %c0_100 = arith.constant 0 : index
    %c0_101 = arith.constant 0 : index
    %175 = vector.load %arg15[%c0_100, %c0_101] : memref<128x1152xbf16, #tpu.memory_space<vmem>>, vector<128x128xbf16>
    tpu.vector_store %arg15[%c0_100, %c0_101], %174 {strides = array<i32>} : memref<128x1152xbf16, #tpu.memory_space<vmem>>, vector<128x128xbf16>,
    %c0_102 = arith.constant 0 : index
    %c1_103 = arith.constant 1 : index
    %176 = vector.load %arg2[%c0_102, %c1_103] : memref<128x9xf32, #tpu.memory_space<vmem>>, vector<128x1xf32>
    %cst_104 = arith.constant 0.000000e+00 : f32
    %177 = vector.broadcast %cst_104 : f32 to vector<8x128xf32>
    %178 = vector.extract_strided_slice %167 {offsets = [0, 0], sizes = [120, 128], strides = [1, 1]} : vector<128x128xf32> to vector<120x128xf32>
    %179 = tpu.concatenate %177, %178 in 0 : vector<8x128xf32>, vector<120x128xf32> -> vector<128x128xf32>
    %180 = vector.broadcast %176 : vector<128x1xf32> to vector<128x128xf32>
    %181 = arith.mulf %179, %180 : vector<128x128xf32>
    %182 = arith.truncf %181 : vector<128x128xf32> to vector<128x128xbf16>
    %c0_105 = arith.constant 0 : index
    %c128_106 = arith.constant 128 : index
    %183 = vector.load %arg15[%c0_105, %c128_106] : memref<128x1152xbf16, #tpu.memory_space<vmem>>, vector<128x128xbf16>
    tpu.vector_store %arg15[%c0_105, %c128_106], %182 {strides = array<i32>} : memref<128x1152xbf16, #tpu.memory_space<vmem>>, vector<128x128xbf16>,
    %c0_107 = arith.constant 0 : index
    %c2_108 = arith.constant 2 : index
    %184 = vector.load %arg2[%c0_107, %c2_108] : memref<128x9xf32, #tpu.memory_space<vmem>>, vector<128x1xf32>
    %cst_109 = arith.constant 0.000000e+00 : f32
    %185 = vector.broadcast %cst_109 : f32 to vector<7x128xf32>
    %186 = vector.extract_strided_slice %167 {offsets = [0, 0], sizes = [121, 128], strides = [1, 1]} : vector<128x128xf32> to vector<121x128xf32>
    %187 = tpu.concatenate %185, %186 in 0 : vector<7x128xf32>, vector<121x128xf32> -> vector<128x128xf32>
    %188 = vector.broadcast %184 : vector<128x1xf32> to vector<128x128xf32>
    %189 = arith.mulf %187, %188 : vector<128x128xf32>
    %190 = arith.truncf %189 : vector<128x128xf32> to vector<128x128xbf16>
    %c0_110 = arith.constant 0 : index
    %c256_111 = arith.constant 256 : index
    %191 = vector.load %arg15[%c0_110, %c256_111] : memref<128x1152xbf16, #tpu.memory_space<vmem>>, vector<128x128xbf16>
    tpu.vector_store %arg15[%c0_110, %c256_111], %190 {strides = array<i32>} : memref<128x1152xbf16, #tpu.memory_space<vmem>>, vector<128x128xbf16>,
    %c0_112 = arith.constant 0 : index
    %c3_113 = arith.constant 3 : index
    %192 = vector.load %arg2[%c0_112, %c3_113] : memref<128x9xf32, #tpu.memory_space<vmem>>, vector<128x1xf32>
    %cst_114 = arith.constant 0.000000e+00 : f32
    %193 = vector.broadcast %cst_114 : f32 to vector<1x128xf32>
    %194 = vector.extract_strided_slice %167 {offsets = [0, 0], sizes = [127, 128], strides = [1, 1]} : vector<128x128xf32> to vector<127x128xf32>
    %195 = tpu.concatenate %193, %194 in 0 : vector<1x128xf32>, vector<127x128xf32> -> vector<128x128xf32>
    %196 = vector.broadcast %192 : vector<128x1xf32> to vector<128x128xf32>
    %197 = arith.mulf %195, %196 : vector<128x128xf32>
    %198 = arith.truncf %197 : vector<128x128xf32> to vector<128x128xbf16>
    %c0_115 = arith.constant 0 : index
    %c384_116 = arith.constant 384 : index
    %199 = vector.load %arg15[%c0_115, %c384_116] : memref<128x1152xbf16, #tpu.memory_space<vmem>>, vector<128x128xbf16>
    tpu.vector_store %arg15[%c0_115, %c384_116], %198 {strides = array<i32>} : memref<128x1152xbf16, #tpu.memory_space<vmem>>, vector<128x128xbf16>,
    %c0_117 = arith.constant 0 : index
    %c4_118 = arith.constant 4 : index
    %200 = vector.load %arg2[%c0_117, %c4_118] : memref<128x9xf32, #tpu.memory_space<vmem>>, vector<128x1xf32>
    %201 = vector.broadcast %200 : vector<128x1xf32> to vector<128x128xf32>
    %202 = arith.mulf %167, %201 : vector<128x128xf32>
    %203 = arith.truncf %202 : vector<128x128xf32> to vector<128x128xbf16>
    %c0_119 = arith.constant 0 : index
    %c512_120 = arith.constant 512 : index
    %204 = vector.load %arg15[%c0_119, %c512_120] : memref<128x1152xbf16, #tpu.memory_space<vmem>>, vector<128x128xbf16>
    tpu.vector_store %arg15[%c0_119, %c512_120], %203 {strides = array<i32>} : memref<128x1152xbf16, #tpu.memory_space<vmem>>, vector<128x128xbf16>,
    %c0_121 = arith.constant 0 : index
    %c5_122 = arith.constant 5 : index
    %205 = vector.load %arg2[%c0_121, %c5_122] : memref<128x9xf32, #tpu.memory_space<vmem>>, vector<128x1xf32>
    %cst_123 = arith.constant 0.000000e+00 : f32
    %206 = vector.broadcast %cst_123 : f32 to vector<1x128xf32>
    %207 = vector.extract_strided_slice %167 {offsets = [1, 0], sizes = [127, 128], strides = [1, 1]} : vector<128x128xf32> to vector<127x128xf32>
    %208 = tpu.concatenate %207, %206 in 0 : vector<127x128xf32>, vector<1x128xf32> -> vector<128x128xf32>
    %209 = vector.broadcast %205 : vector<128x1xf32> to vector<128x128xf32>
    %210 = arith.mulf %208, %209 : vector<128x128xf32>
    %211 = arith.truncf %210 : vector<128x128xf32> to vector<128x128xbf16>
    %c0_124 = arith.constant 0 : index
    %c640_125 = arith.constant 640 : index
    %212 = vector.load %arg15[%c0_124, %c640_125] : memref<128x1152xbf16, #tpu.memory_space<vmem>>, vector<128x128xbf16>
    tpu.vector_store %arg15[%c0_124, %c640_125], %211 {strides = array<i32>} : memref<128x1152xbf16, #tpu.memory_space<vmem>>, vector<128x128xbf16>,
    %c0_126 = arith.constant 0 : index
    %c6_127 = arith.constant 6 : index
    %213 = vector.load %arg2[%c0_126, %c6_127] : memref<128x9xf32, #tpu.memory_space<vmem>>, vector<128x1xf32>
    %cst_128 = arith.constant 0.000000e+00 : f32
    %214 = vector.broadcast %cst_128 : f32 to vector<7x128xf32>
    %215 = vector.extract_strided_slice %167 {offsets = [7, 0], sizes = [121, 128], strides = [1, 1]} : vector<128x128xf32> to vector<121x128xf32>
    %216 = tpu.concatenate %215, %214 in 0 : vector<121x128xf32>, vector<7x128xf32> -> vector<128x128xf32>
    %217 = vector.broadcast %213 : vector<128x1xf32> to vector<128x128xf32>
    %218 = arith.mulf %216, %217 : vector<128x128xf32>
    %219 = arith.truncf %218 : vector<128x128xf32> to vector<128x128xbf16>
    %c0_129 = arith.constant 0 : index
    %c768_130 = arith.constant 768 : index
    %220 = vector.load %arg15[%c0_129, %c768_130] : memref<128x1152xbf16, #tpu.memory_space<vmem>>, vector<128x128xbf16>
    tpu.vector_store %arg15[%c0_129, %c768_130], %219 {strides = array<i32>} : memref<128x1152xbf16, #tpu.memory_space<vmem>>, vector<128x128xbf16>,
    %c0_131 = arith.constant 0 : index
    %c7_132 = arith.constant 7 : index
    %221 = vector.load %arg2[%c0_131, %c7_132] : memref<128x9xf32, #tpu.memory_space<vmem>>, vector<128x1xf32>
    %cst_133 = arith.constant 0.000000e+00 : f32
    %222 = vector.broadcast %cst_133 : f32 to vector<8x128xf32>
    %223 = vector.extract_strided_slice %167 {offsets = [8, 0], sizes = [120, 128], strides = [1, 1]} : vector<128x128xf32> to vector<120x128xf32>
    %224 = tpu.concatenate %223, %222 in 0 : vector<120x128xf32>, vector<8x128xf32> -> vector<128x128xf32>
    %225 = vector.broadcast %221 : vector<128x1xf32> to vector<128x128xf32>
    %226 = arith.mulf %224, %225 : vector<128x128xf32>
    %227 = arith.truncf %226 : vector<128x128xf32> to vector<128x128xbf16>
    %c0_134 = arith.constant 0 : index
    %c896_135 = arith.constant 896 : index
    %228 = vector.load %arg15[%c0_134, %c896_135] : memref<128x1152xbf16, #tpu.memory_space<vmem>>, vector<128x128xbf16>
    tpu.vector_store %arg15[%c0_134, %c896_135], %227 {strides = array<i32>} : memref<128x1152xbf16, #tpu.memory_space<vmem>>, vector<128x128xbf16>,
    %c0_136 = arith.constant 0 : index
    %c8_137 = arith.constant 8 : index
    %229 = vector.load %arg2[%c0_136, %c8_137] : memref<128x9xf32, #tpu.memory_space<vmem>>, vector<128x1xf32>
    %cst_138 = arith.constant 0.000000e+00 : f32
    %230 = vector.broadcast %cst_138 : f32 to vector<9x128xf32>
    %231 = vector.extract_strided_slice %167 {offsets = [9, 0], sizes = [119, 128], strides = [1, 1]} : vector<128x128xf32> to vector<119x128xf32>
    %232 = tpu.concatenate %231, %230 in 0 : vector<119x128xf32>, vector<9x128xf32> -> vector<128x128xf32>
    %233 = vector.broadcast %229 : vector<128x1xf32> to vector<128x128xf32>
    %234 = arith.mulf %232, %233 : vector<128x128xf32>
    %235 = arith.truncf %234 : vector<128x128xf32> to vector<128x128xbf16>
    %c0_139 = arith.constant 0 : index
    %c1024_140 = arith.constant 1024 : index
    %236 = vector.load %arg15[%c0_139, %c1024_140] : memref<128x1152xbf16, #tpu.memory_space<vmem>>, vector<128x128xbf16>
    tpu.vector_store %arg15[%c0_139, %c1024_140], %235 {strides = array<i32>} : memref<128x1152xbf16, #tpu.memory_space<vmem>>, vector<128x128xbf16>,
    %c0_141 = arith.constant 0 : index
    %c0_142 = arith.constant 0 : index
    %237 = vector.load %arg15[%c0_141, %c0_142] : memref<128x1152xbf16, #tpu.memory_space<vmem>>, vector<128x1152xbf16>
    %c0_143 = arith.constant 0 : index
    %c0_144 = arith.constant 0 : index
    %238 = vector.load %arg10[%c0_143, %c0_144] : memref<1152x96xbf16, #tpu.memory_space<vmem>>, vector<1152x96xbf16>
    %cst_145 = arith.constant dense<0.000000e+00> : vector<128x96xf32>
    %239 = tpu.matmul %237, %238, %cst_145 {dimension_numbers = #tpu.dot_dimension_numbers<[1], [0], [0], [1], [0, 0, 1, 1], [], []>} : vector<128x1152xbf16>, vector<1152x96xbf16>, vector<128x96xf32> -> vector<128x96xf32>
    %c0_146 = arith.constant 0 : index
    %c0_147 = arith.constant 0 : index
    %240 = vector.load %arg11[%c0_146, %c0_147] : memref<1x96xf32, #tpu.memory_space<vmem>>, vector<1x96xf32>
    %241 = vector.broadcast %240 : vector<1x96xf32> to vector<128x96xf32>
    %242 = arith.addf %239, %241 : vector<128x96xf32>
    %cst_148 = arith.constant 0.000000e+00 : f32
    %243 = vector.broadcast %cst_148 : f32 to vector<128x96xf32>
    %244 = arith.maximumf %242, %243 : vector<128x96xf32>
    %c0_149 = arith.constant 0 : index
    %c192 = arith.constant 192 : index
    %245 = vector.load %arg14[%c0_149, %c192] : memref<128x384xf32, #tpu.memory_space<vmem>>, vector<128x96xf32>
    tpu.vector_store %arg14[%c0_149, %c192], %244 {strides = array<i32>} : memref<128x384xf32, #tpu.memory_space<vmem>>, vector<128x96xf32>,
    %cst_150 = arith.constant 0.000000e+00 : f32
    %246 = vector.broadcast %cst_150 : f32 to vector<128x96xf32>
    %c0_151 = arith.constant 0 : index
    %c0_152 = arith.constant 0 : index
    %247 = vector.load %arg1[%c0_151, %c0_152] : memref<128x384xf32, #tpu.memory_space<vmem>>, vector<128x128xf32>
    %cst_153 = arith.constant 0.000000e+00 : f32
    %248 = vector.broadcast %cst_153 : f32 to vector<128x128xf32>
    %cst_154 = arith.constant 0.000000e+00 : f32
    %249 = vector.broadcast %cst_154 : f32 to vector<9x128xf32>
    %250 = vector.extract_strided_slice %247 {offsets = [0, 0], sizes = [119, 128], strides = [1, 1]} : vector<128x128xf32> to vector<119x128xf32>
    %251 = tpu.concatenate %249, %250 in 0 : vector<9x128xf32>, vector<119x128xf32> -> vector<128x128xf32>
    %c0_155 = arith.constant 0 : index
    %c0_156 = arith.constant 0 : index
    %252 = vector.load %arg2[%c0_155, %c0_156] : memref<128x9xf32, #tpu.memory_space<vmem>>, vector<128x1xf32>
    %253 = vector.broadcast %252 : vector<128x1xf32> to vector<128x128xf32>
    %254 = arith.mulf %251, %253 : vector<128x128xf32>
    %255 = arith.addf %248, %254 : vector<128x128xf32>
    %cst_157 = arith.constant 0.000000e+00 : f32
    %256 = vector.broadcast %cst_157 : f32 to vector<8x128xf32>
    %257 = vector.extract_strided_slice %247 {offsets = [0, 0], sizes = [120, 128], strides = [1, 1]} : vector<128x128xf32> to vector<120x128xf32>
    %258 = tpu.concatenate %256, %257 in 0 : vector<8x128xf32>, vector<120x128xf32> -> vector<128x128xf32>
    %c0_158 = arith.constant 0 : index
    %c1_159 = arith.constant 1 : index
    %259 = vector.load %arg2[%c0_158, %c1_159] : memref<128x9xf32, #tpu.memory_space<vmem>>, vector<128x1xf32>
    %260 = vector.broadcast %259 : vector<128x1xf32> to vector<128x128xf32>
    %261 = arith.mulf %258, %260 : vector<128x128xf32>
    %262 = arith.addf %255, %261 : vector<128x128xf32>
    %cst_160 = arith.constant 0.000000e+00 : f32
    %263 = vector.broadcast %cst_160 : f32 to vector<7x128xf32>
    %264 = vector.extract_strided_slice %247 {offsets = [0, 0], sizes = [121, 128], strides = [1, 1]} : vector<128x128xf32> to vector<121x128xf32>
    %265 = tpu.concatenate %263, %264 in 0 : vector<7x128xf32>, vector<121x128xf32> -> vector<128x128xf32>
    %c0_161 = arith.constant 0 : index
    %c2_162 = arith.constant 2 : index
    %266 = vector.load %arg2[%c0_161, %c2_162] : memref<128x9xf32, #tpu.memory_space<vmem>>, vector<128x1xf32>
    %267 = vector.broadcast %266 : vector<128x1xf32> to vector<128x128xf32>
    %268 = arith.mulf %265, %267 : vector<128x128xf32>
    %269 = arith.addf %262, %268 : vector<128x128xf32>
    %cst_163 = arith.constant 0.000000e+00 : f32
    %270 = vector.broadcast %cst_163 : f32 to vector<1x128xf32>
    %271 = vector.extract_strided_slice %247 {offsets = [0, 0], sizes = [127, 128], strides = [1, 1]} : vector<128x128xf32> to vector<127x128xf32>
    %272 = tpu.concatenate %270, %271 in 0 : vector<1x128xf32>, vector<127x128xf32> -> vector<128x128xf32>
    %c0_164 = arith.constant 0 : index
    %c3_165 = arith.constant 3 : index
    %273 = vector.load %arg2[%c0_164, %c3_165] : memref<128x9xf32, #tpu.memory_space<vmem>>, vector<128x1xf32>
    %274 = vector.broadcast %273 : vector<128x1xf32> to vector<128x128xf32>
    %275 = arith.mulf %272, %274 : vector<128x128xf32>
    %276 = arith.addf %269, %275 : vector<128x128xf32>
    %c0_166 = arith.constant 0 : index
    %c4_167 = arith.constant 4 : index
    %277 = vector.load %arg2[%c0_166, %c4_167] : memref<128x9xf32, #tpu.memory_space<vmem>>, vector<128x1xf32>
    %278 = vector.broadcast %277 : vector<128x1xf32> to vector<128x128xf32>
    %279 = arith.mulf %247, %278 : vector<128x128xf32>
    %280 = arith.addf %276, %279 : vector<128x128xf32>
    %cst_168 = arith.constant 0.000000e+00 : f32
    %281 = vector.broadcast %cst_168 : f32 to vector<1x128xf32>
    %282 = vector.extract_strided_slice %247 {offsets = [1, 0], sizes = [127, 128], strides = [1, 1]} : vector<128x128xf32> to vector<127x128xf32>
    %283 = tpu.concatenate %282, %281 in 0 : vector<127x128xf32>, vector<1x128xf32> -> vector<128x128xf32>
    %c0_169 = arith.constant 0 : index
    %c5_170 = arith.constant 5 : index
    %284 = vector.load %arg2[%c0_169, %c5_170] : memref<128x9xf32, #tpu.memory_space<vmem>>, vector<128x1xf32>
    %285 = vector.broadcast %284 : vector<128x1xf32> to vector<128x128xf32>
    %286 = arith.mulf %283, %285 : vector<128x128xf32>
    %287 = arith.addf %280, %286 : vector<128x128xf32>
    %cst_171 = arith.constant 0.000000e+00 : f32
    %288 = vector.broadcast %cst_171 : f32 to vector<7x128xf32>
    %289 = vector.extract_strided_slice %247 {offsets = [7, 0], sizes = [121, 128], strides = [1, 1]} : vector<128x128xf32> to vector<121x128xf32>
    %290 = tpu.concatenate %289, %288 in 0 : vector<121x128xf32>, vector<7x128xf32> -> vector<128x128xf32>
    %c0_172 = arith.constant 0 : index
    %c6_173 = arith.constant 6 : index
    %291 = vector.load %arg2[%c0_172, %c6_173] : memref<128x9xf32, #tpu.memory_space<vmem>>, vector<128x1xf32>
    %292 = vector.broadcast %291 : vector<128x1xf32> to vector<128x128xf32>
    %293 = arith.mulf %290, %292 : vector<128x128xf32>
    %294 = arith.addf %287, %293 : vector<128x128xf32>
    %cst_174 = arith.constant 0.000000e+00 : f32
    %295 = vector.broadcast %cst_174 : f32 to vector<8x128xf32>
    %296 = vector.extract_strided_slice %247 {offsets = [8, 0], sizes = [120, 128], strides = [1, 1]} : vector<128x128xf32> to vector<120x128xf32>
    %297 = tpu.concatenate %296, %295 in 0 : vector<120x128xf32>, vector<8x128xf32> -> vector<128x128xf32>
    %c0_175 = arith.constant 0 : index
    %c7_176 = arith.constant 7 : index
    %298 = vector.load %arg2[%c0_175, %c7_176] : memref<128x9xf32, #tpu.memory_space<vmem>>, vector<128x1xf32>
    %299 = vector.broadcast %298 : vector<128x1xf32> to vector<128x128xf32>
    %300 = arith.mulf %297, %299 : vector<128x128xf32>
    %301 = arith.addf %294, %300 : vector<128x128xf32>
    %cst_177 = arith.constant 0.000000e+00 : f32
    %302 = vector.broadcast %cst_177 : f32 to vector<9x128xf32>
    %303 = vector.extract_strided_slice %247 {offsets = [9, 0], sizes = [119, 128], strides = [1, 1]} : vector<128x128xf32> to vector<119x128xf32>
    %304 = tpu.concatenate %303, %302 in 0 : vector<119x128xf32>, vector<9x128xf32> -> vector<128x128xf32>
    %c0_178 = arith.constant 0 : index
    %c8_179 = arith.constant 8 : index
    %305 = vector.load %arg2[%c0_178, %c8_179] : memref<128x9xf32, #tpu.memory_space<vmem>>, vector<128x1xf32>
    %306 = vector.broadcast %305 : vector<128x1xf32> to vector<128x128xf32>
    %307 = arith.mulf %304, %306 : vector<128x128xf32>
    %308 = arith.addf %301, %307 : vector<128x128xf32>
    %309 = arith.truncf %308 : vector<128x128xf32> to vector<128x128xbf16>
    %c0_180 = arith.constant 0 : index
    %c0_181 = arith.constant 0 : index
    %310 = vector.load %arg12[%c0_180, %c0_181] : memref<384x96xbf16, #tpu.memory_space<vmem>>, vector<128x96xbf16>
    %cst_182 = arith.constant dense<0.000000e+00> : vector<128x96xf32>
    %311 = tpu.matmul %309, %310, %cst_182 {dimension_numbers = #tpu.dot_dimension_numbers<[1], [0], [0], [1], [0, 0, 1, 1], [], []>} : vector<128x128xbf16>, vector<128x96xbf16>, vector<128x96xf32> -> vector<128x96xf32>
    %312 = arith.addf %246, %311 : vector<128x96xf32>
    %c0_183 = arith.constant 0 : index
    %c128_184 = arith.constant 128 : index
    %313 = vector.load %arg1[%c0_183, %c128_184] : memref<128x384xf32, #tpu.memory_space<vmem>>, vector<128x128xf32>
    %cst_185 = arith.constant 0.000000e+00 : f32
    %314 = vector.broadcast %cst_185 : f32 to vector<128x128xf32>
    %cst_186 = arith.constant 0.000000e+00 : f32
    %315 = vector.broadcast %cst_186 : f32 to vector<9x128xf32>
    %316 = vector.extract_strided_slice %313 {offsets = [0, 0], sizes = [119, 128], strides = [1, 1]} : vector<128x128xf32> to vector<119x128xf32>
    %317 = tpu.concatenate %315, %316 in 0 : vector<9x128xf32>, vector<119x128xf32> -> vector<128x128xf32>
    %c0_187 = arith.constant 0 : index
    %c0_188 = arith.constant 0 : index
    %318 = vector.load %arg2[%c0_187, %c0_188] : memref<128x9xf32, #tpu.memory_space<vmem>>, vector<128x1xf32>
    %319 = vector.broadcast %318 : vector<128x1xf32> to vector<128x128xf32>
    %320 = arith.mulf %317, %319 : vector<128x128xf32>
    %321 = arith.addf %314, %320 : vector<128x128xf32>
    %cst_189 = arith.constant 0.000000e+00 : f32
    %322 = vector.broadcast %cst_189 : f32 to vector<8x128xf32>
    %323 = vector.extract_strided_slice %313 {offsets = [0, 0], sizes = [120, 128], strides = [1, 1]} : vector<128x128xf32> to vector<120x128xf32>
    %324 = tpu.concatenate %322, %323 in 0 : vector<8x128xf32>, vector<120x128xf32> -> vector<128x128xf32>
    %c0_190 = arith.constant 0 : index
    %c1_191 = arith.constant 1 : index
    %325 = vector.load %arg2[%c0_190, %c1_191] : memref<128x9xf32, #tpu.memory_space<vmem>>, vector<128x1xf32>
    %326 = vector.broadcast %325 : vector<128x1xf32> to vector<128x128xf32>
    %327 = arith.mulf %324, %326 : vector<128x128xf32>
    %328 = arith.addf %321, %327 : vector<128x128xf32>
    %cst_192 = arith.constant 0.000000e+00 : f32
    %329 = vector.broadcast %cst_192 : f32 to vector<7x128xf32>
    %330 = vector.extract_strided_slice %313 {offsets = [0, 0], sizes = [121, 128], strides = [1, 1]} : vector<128x128xf32> to vector<121x128xf32>
    %331 = tpu.concatenate %329, %330 in 0 : vector<7x128xf32>, vector<121x128xf32> -> vector<128x128xf32>
    %c0_193 = arith.constant 0 : index
    %c2_194 = arith.constant 2 : index
    %332 = vector.load %arg2[%c0_193, %c2_194] : memref<128x9xf32, #tpu.memory_space<vmem>>, vector<128x1xf32>
    %333 = vector.broadcast %332 : vector<128x1xf32> to vector<128x128xf32>
    %334 = arith.mulf %331, %333 : vector<128x128xf32>
    %335 = arith.addf %328, %334 : vector<128x128xf32>
    %cst_195 = arith.constant 0.000000e+00 : f32
    %336 = vector.broadcast %cst_195 : f32 to vector<1x128xf32>
    %337 = vector.extract_strided_slice %313 {offsets = [0, 0], sizes = [127, 128], strides = [1, 1]} : vector<128x128xf32> to vector<127x128xf32>
    %338 = tpu.concatenate %336, %337 in 0 : vector<1x128xf32>, vector<127x128xf32> -> vector<128x128xf32>
    %c0_196 = arith.constant 0 : index
    %c3_197 = arith.constant 3 : index
    %339 = vector.load %arg2[%c0_196, %c3_197] : memref<128x9xf32, #tpu.memory_space<vmem>>, vector<128x1xf32>
    %340 = vector.broadcast %339 : vector<128x1xf32> to vector<128x128xf32>
    %341 = arith.mulf %338, %340 : vector<128x128xf32>
    %342 = arith.addf %335, %341 : vector<128x128xf32>
    %c0_198 = arith.constant 0 : index
    %c4_199 = arith.constant 4 : index
    %343 = vector.load %arg2[%c0_198, %c4_199] : memref<128x9xf32, #tpu.memory_space<vmem>>, vector<128x1xf32>
    %344 = vector.broadcast %343 : vector<128x1xf32> to vector<128x128xf32>
    %345 = arith.mulf %313, %344 : vector<128x128xf32>
    %346 = arith.addf %342, %345 : vector<128x128xf32>
    %cst_200 = arith.constant 0.000000e+00 : f32
    %347 = vector.broadcast %cst_200 : f32 to vector<1x128xf32>
    %348 = vector.extract_strided_slice %313 {offsets = [1, 0], sizes = [127, 128], strides = [1, 1]} : vector<128x128xf32> to vector<127x128xf32>
    %349 = tpu.concatenate %348, %347 in 0 : vector<127x128xf32>, vector<1x128xf32> -> vector<128x128xf32>
    %c0_201 = arith.constant 0 : index
    %c5_202 = arith.constant 5 : index
    %350 = vector.load %arg2[%c0_201, %c5_202] : memref<128x9xf32, #tpu.memory_space<vmem>>, vector<128x1xf32>
    %351 = vector.broadcast %350 : vector<128x1xf32> to vector<128x128xf32>
    %352 = arith.mulf %349, %351 : vector<128x128xf32>
    %353 = arith.addf %346, %352 : vector<128x128xf32>
    %cst_203 = arith.constant 0.000000e+00 : f32
    %354 = vector.broadcast %cst_203 : f32 to vector<7x128xf32>
    %355 = vector.extract_strided_slice %313 {offsets = [7, 0], sizes = [121, 128], strides = [1, 1]} : vector<128x128xf32> to vector<121x128xf32>
    %356 = tpu.concatenate %355, %354 in 0 : vector<121x128xf32>, vector<7x128xf32> -> vector<128x128xf32>
    %c0_204 = arith.constant 0 : index
    %c6_205 = arith.constant 6 : index
    %357 = vector.load %arg2[%c0_204, %c6_205] : memref<128x9xf32, #tpu.memory_space<vmem>>, vector<128x1xf32>
    %358 = vector.broadcast %357 : vector<128x1xf32> to vector<128x128xf32>
    %359 = arith.mulf %356, %358 : vector<128x128xf32>
    %360 = arith.addf %353, %359 : vector<128x128xf32>
    %cst_206 = arith.constant 0.000000e+00 : f32
    %361 = vector.broadcast %cst_206 : f32 to vector<8x128xf32>
    %362 = vector.extract_strided_slice %313 {offsets = [8, 0], sizes = [120, 128], strides = [1, 1]} : vector<128x128xf32> to vector<120x128xf32>
    %363 = tpu.concatenate %362, %361 in 0 : vector<120x128xf32>, vector<8x128xf32> -> vector<128x128xf32>
    %c0_207 = arith.constant 0 : index
    %c7_208 = arith.constant 7 : index
    %364 = vector.load %arg2[%c0_207, %c7_208] : memref<128x9xf32, #tpu.memory_space<vmem>>, vector<128x1xf32>
    %365 = vector.broadcast %364 : vector<128x1xf32> to vector<128x128xf32>
    %366 = arith.mulf %363, %365 : vector<128x128xf32>
    %367 = arith.addf %360, %366 : vector<128x128xf32>
    %cst_209 = arith.constant 0.000000e+00 : f32
    %368 = vector.broadcast %cst_209 : f32 to vector<9x128xf32>
    %369 = vector.extract_strided_slice %313 {offsets = [9, 0], sizes = [119, 128], strides = [1, 1]} : vector<128x128xf32> to vector<119x128xf32>
    %370 = tpu.concatenate %369, %368 in 0 : vector<119x128xf32>, vector<9x128xf32> -> vector<128x128xf32>
    %c0_210 = arith.constant 0 : index
    %c8_211 = arith.constant 8 : index
    %371 = vector.load %arg2[%c0_210, %c8_211] : memref<128x9xf32, #tpu.memory_space<vmem>>, vector<128x1xf32>
    %372 = vector.broadcast %371 : vector<128x1xf32> to vector<128x128xf32>
    %373 = arith.mulf %370, %372 : vector<128x128xf32>
    %374 = arith.addf %367, %373 : vector<128x128xf32>
    %375 = arith.truncf %374 : vector<128x128xf32> to vector<128x128xbf16>
    %c128_212 = arith.constant 128 : index
    %c0_213 = arith.constant 0 : index
    %376 = vector.load %arg12[%c128_212, %c0_213] : memref<384x96xbf16, #tpu.memory_space<vmem>>, vector<128x96xbf16>
    %cst_214 = arith.constant dense<0.000000e+00> : vector<128x96xf32>
    %377 = tpu.matmul %375, %376, %cst_214 {dimension_numbers = #tpu.dot_dimension_numbers<[1], [0], [0], [1], [0, 0, 1, 1], [], []>} : vector<128x128xbf16>, vector<128x96xbf16>, vector<128x96xf32> -> vector<128x96xf32>
    %378 = arith.addf %312, %377 : vector<128x96xf32>
    %c0_215 = arith.constant 0 : index
    %c256_216 = arith.constant 256 : index
    %379 = vector.load %arg1[%c0_215, %c256_216] : memref<128x384xf32, #tpu.memory_space<vmem>>, vector<128x128xf32>
    %cst_217 = arith.constant 0.000000e+00 : f32
    %380 = vector.broadcast %cst_217 : f32 to vector<128x128xf32>
    %cst_218 = arith.constant 0.000000e+00 : f32
    %381 = vector.broadcast %cst_218 : f32 to vector<9x128xf32>
    %382 = vector.extract_strided_slice %379 {offsets = [0, 0], sizes = [119, 128], strides = [1, 1]} : vector<128x128xf32> to vector<119x128xf32>
    %383 = tpu.concatenate %381, %382 in 0 : vector<9x128xf32>, vector<119x128xf32> -> vector<128x128xf32>
    %c0_219 = arith.constant 0 : index
    %c0_220 = arith.constant 0 : index
    %384 = vector.load %arg2[%c0_219, %c0_220] : memref<128x9xf32, #tpu.memory_space<vmem>>, vector<128x1xf32>
    %385 = vector.broadcast %384 : vector<128x1xf32> to vector<128x128xf32>
    %386 = arith.mulf %383, %385 : vector<128x128xf32>
    %387 = arith.addf %380, %386 : vector<128x128xf32>
    %cst_221 = arith.constant 0.000000e+00 : f32
    %388 = vector.broadcast %cst_221 : f32 to vector<8x128xf32>
    %389 = vector.extract_strided_slice %379 {offsets = [0, 0], sizes = [120, 128], strides = [1, 1]} : vector<128x128xf32> to vector<120x128xf32>
    %390 = tpu.concatenate %388, %389 in 0 : vector<8x128xf32>, vector<120x128xf32> -> vector<128x128xf32>
    %c0_222 = arith.constant 0 : index
    %c1_223 = arith.constant 1 : index
    %391 = vector.load %arg2[%c0_222, %c1_223] : memref<128x9xf32, #tpu.memory_space<vmem>>, vector<128x1xf32>
    %392 = vector.broadcast %391 : vector<128x1xf32> to vector<128x128xf32>
    %393 = arith.mulf %390, %392 : vector<128x128xf32>
    %394 = arith.addf %387, %393 : vector<128x128xf32>
    %cst_224 = arith.constant 0.000000e+00 : f32
    %395 = vector.broadcast %cst_224 : f32 to vector<7x128xf32>
    %396 = vector.extract_strided_slice %379 {offsets = [0, 0], sizes = [121, 128], strides = [1, 1]} : vector<128x128xf32> to vector<121x128xf32>
    %397 = tpu.concatenate %395, %396 in 0 : vector<7x128xf32>, vector<121x128xf32> -> vector<128x128xf32>
    %c0_225 = arith.constant 0 : index
    %c2_226 = arith.constant 2 : index
    %398 = vector.load %arg2[%c0_225, %c2_226] : memref<128x9xf32, #tpu.memory_space<vmem>>, vector<128x1xf32>
    %399 = vector.broadcast %398 : vector<128x1xf32> to vector<128x128xf32>
    %400 = arith.mulf %397, %399 : vector<128x128xf32>
    %401 = arith.addf %394, %400 : vector<128x128xf32>
    %cst_227 = arith.constant 0.000000e+00 : f32
    %402 = vector.broadcast %cst_227 : f32 to vector<1x128xf32>
    %403 = vector.extract_strided_slice %379 {offsets = [0, 0], sizes = [127, 128], strides = [1, 1]} : vector<128x128xf32> to vector<127x128xf32>
    %404 = tpu.concatenate %402, %403 in 0 : vector<1x128xf32>, vector<127x128xf32> -> vector<128x128xf32>
    %c0_228 = arith.constant 0 : index
    %c3_229 = arith.constant 3 : index
    %405 = vector.load %arg2[%c0_228, %c3_229] : memref<128x9xf32, #tpu.memory_space<vmem>>, vector<128x1xf32>
    %406 = vector.broadcast %405 : vector<128x1xf32> to vector<128x128xf32>
    %407 = arith.mulf %404, %406 : vector<128x128xf32>
    %408 = arith.addf %401, %407 : vector<128x128xf32>
    %c0_230 = arith.constant 0 : index
    %c4_231 = arith.constant 4 : index
    %409 = vector.load %arg2[%c0_230, %c4_231] : memref<128x9xf32, #tpu.memory_space<vmem>>, vector<128x1xf32>
    %410 = vector.broadcast %409 : vector<128x1xf32> to vector<128x128xf32>
    %411 = arith.mulf %379, %410 : vector<128x128xf32>
    %412 = arith.addf %408, %411 : vector<128x128xf32>
    %cst_232 = arith.constant 0.000000e+00 : f32
    %413 = vector.broadcast %cst_232 : f32 to vector<1x128xf32>
    %414 = vector.extract_strided_slice %379 {offsets = [1, 0], sizes = [127, 128], strides = [1, 1]} : vector<128x128xf32> to vector<127x128xf32>
    %415 = tpu.concatenate %414, %413 in 0 : vector<127x128xf32>, vector<1x128xf32> -> vector<128x128xf32>
    %c0_233 = arith.constant 0 : index
    %c5_234 = arith.constant 5 : index
    %416 = vector.load %arg2[%c0_233, %c5_234] : memref<128x9xf32, #tpu.memory_space<vmem>>, vector<128x1xf32>
    %417 = vector.broadcast %416 : vector<128x1xf32> to vector<128x128xf32>
    %418 = arith.mulf %415, %417 : vector<128x128xf32>
    %419 = arith.addf %412, %418 : vector<128x128xf32>
    %cst_235 = arith.constant 0.000000e+00 : f32
    %420 = vector.broadcast %cst_235 : f32 to vector<7x128xf32>
    %421 = vector.extract_strided_slice %379 {offsets = [7, 0], sizes = [121, 128], strides = [1, 1]} : vector<128x128xf32> to vector<121x128xf32>
    %422 = tpu.concatenate %421, %420 in 0 : vector<121x128xf32>, vector<7x128xf32> -> vector<128x128xf32>
    %c0_236 = arith.constant 0 : index
    %c6_237 = arith.constant 6 : index
    %423 = vector.load %arg2[%c0_236, %c6_237] : memref<128x9xf32, #tpu.memory_space<vmem>>, vector<128x1xf32>
    %424 = vector.broadcast %423 : vector<128x1xf32> to vector<128x128xf32>
    %425 = arith.mulf %422, %424 : vector<128x128xf32>
    %426 = arith.addf %419, %425 : vector<128x128xf32>
    %cst_238 = arith.constant 0.000000e+00 : f32
    %427 = vector.broadcast %cst_238 : f32 to vector<8x128xf32>
    %428 = vector.extract_strided_slice %379 {offsets = [8, 0], sizes = [120, 128], strides = [1, 1]} : vector<128x128xf32> to vector<120x128xf32>
    %429 = tpu.concatenate %428, %427 in 0 : vector<120x128xf32>, vector<8x128xf32> -> vector<128x128xf32>
    %c0_239 = arith.constant 0 : index
    %c7_240 = arith.constant 7 : index
    %430 = vector.load %arg2[%c0_239, %c7_240] : memref<128x9xf32, #tpu.memory_space<vmem>>, vector<128x1xf32>
    %431 = vector.broadcast %430 : vector<128x1xf32> to vector<128x128xf32>
    %432 = arith.mulf %429, %431 : vector<128x128xf32>
    %433 = arith.addf %426, %432 : vector<128x128xf32>
    %cst_241 = arith.constant 0.000000e+00 : f32
    %434 = vector.broadcast %cst_241 : f32 to vector<9x128xf32>
    %435 = vector.extract_strided_slice %379 {offsets = [9, 0], sizes = [119, 128], strides = [1, 1]} : vector<128x128xf32> to vector<119x128xf32>
    %436 = tpu.concatenate %435, %434 in 0 : vector<119x128xf32>, vector<9x128xf32> -> vector<128x128xf32>
    %c0_242 = arith.constant 0 : index
    %c8_243 = arith.constant 8 : index
    %437 = vector.load %arg2[%c0_242, %c8_243] : memref<128x9xf32, #tpu.memory_space<vmem>>, vector<128x1xf32>
    %438 = vector.broadcast %437 : vector<128x1xf32> to vector<128x128xf32>
    %439 = arith.mulf %436, %438 : vector<128x128xf32>
    %440 = arith.addf %433, %439 : vector<128x128xf32>
    %441 = arith.truncf %440 : vector<128x128xf32> to vector<128x128xbf16>
    %c256_244 = arith.constant 256 : index
    %c0_245 = arith.constant 0 : index
    %442 = vector.load %arg12[%c256_244, %c0_245] : memref<384x96xbf16, #tpu.memory_space<vmem>>, vector<128x96xbf16>
    %cst_246 = arith.constant dense<0.000000e+00> : vector<128x96xf32>
    %443 = tpu.matmul %441, %442, %cst_246 {dimension_numbers = #tpu.dot_dimension_numbers<[1], [0], [0], [1], [0, 0, 1, 1], [], []>} : vector<128x128xbf16>, vector<128x96xbf16>, vector<128x96xf32> -> vector<128x96xf32>
    %444 = arith.addf %378, %443 : vector<128x96xf32>
    %c0_247 = arith.constant 0 : index
    %c0_248 = arith.constant 0 : index
    %445 = vector.load %arg3[%c0_247, %c0_248] : memref<128x1xf32, #tpu.memory_space<vmem>>, vector<128x1xf32>
    %446 = vector.broadcast %445 : vector<128x1xf32> to vector<128x96xf32>
    %447 = arith.mulf %444, %446 : vector<128x96xf32>
    %c0_249 = arith.constant 0 : index
    %c0_250 = arith.constant 0 : index
    %448 = vector.load %arg13[%c0_249, %c0_250] : memref<1x96xf32, #tpu.memory_space<vmem>>, vector<1x96xf32>
    %449 = vector.broadcast %448 : vector<1x96xf32> to vector<128x96xf32>
    %450 = arith.addf %447, %449 : vector<128x96xf32>
    %cst_251 = arith.constant 0.000000e+00 : f32
    %451 = vector.broadcast %cst_251 : f32 to vector<128x96xf32>
    %452 = arith.maximumf %450, %451 : vector<128x96xf32>
    %c0_252 = arith.constant 0 : index
    %c288 = arith.constant 288 : index
    %453 = vector.load %arg14[%c0_252, %c288] : memref<128x384xf32, #tpu.memory_space<vmem>>, vector<128x96xf32>
    tpu.vector_store %arg14[%c0_252, %c288], %452 {strides = array<i32>} : memref<128x384xf32, #tpu.memory_space<vmem>>, vector<128x96xf32>,
    return
  }
  func.func @transform_0(%arg0: i32) -> (i32, i32) {
    %c0_i32 = arith.constant 0 : i32
    %c0_i32_0 = arith.constant 0 : i32
    return %arg0, %c0_i32 : i32, i32
  }
  func.func @transform_1(%arg0: i32) -> (i32, i32) {
    %c0_i32 = arith.constant 0 : i32
    %c0_i32_0 = arith.constant 0 : i32
    %c0_i32_1 = arith.constant 0 : i32
    return %c0_i32, %c0_i32_0 : i32, i32
  }
  func.func @transform_2(%arg0: i32) -> (i32, i32) {
    %c0_i32 = arith.constant 0 : i32
    %c0_i32_0 = arith.constant 0 : i32
    %c0_i32_1 = arith.constant 0 : i32
    return %c0_i32, %c0_i32_0 : i32, i32
  }
  func.func @transform_3(%arg0: i32) -> (i32, i32) {
    %c0_i32 = arith.constant 0 : i32
    %c0_i32_0 = arith.constant 0 : i32
    %c0_i32_1 = arith.constant 0 : i32
    return %c0_i32, %c0_i32_0 : i32, i32
  }
  func.func @transform_4(%arg0: i32) -> (i32, i32) {
    %c0_i32 = arith.constant 0 : i32
    %c0_i32_0 = arith.constant 0 : i32
    %c0_i32_1 = arith.constant 0 : i32
    return %c0_i32, %c0_i32_0 : i32, i32
  }
  func.func @transform_5(%arg0: i32) -> (i32, i32) {
    %c0_i32 = arith.constant 0 : i32
    %c0_i32_0 = arith.constant 0 : i32
    %c0_i32_1 = arith.constant 0 : i32
    return %c0_i32, %c0_i32_0 : i32, i32
  }
  func.func @transform_6(%arg0: i32) -> (i32, i32) {
    %c0_i32 = arith.constant 0 : i32
    %c0_i32_0 = arith.constant 0 : i32
    %c0_i32_1 = arith.constant 0 : i32
    return %c0_i32, %c0_i32_0 : i32, i32
  }
  func.func @transform_7(%arg0: i32) -> (i32, i32) {
    %c0_i32 = arith.constant 0 : i32
    %c0_i32_0 = arith.constant 0 : i32
    %c0_i32_1 = arith.constant 0 : i32
    return %c0_i32, %c0_i32_0 : i32, i32
  }
  func.func @transform_8(%arg0: i32) -> (i32, i32) {
    %c0_i32 = arith.constant 0 : i32
    %c0_i32_0 = arith.constant 0 : i32
    %c0_i32_1 = arith.constant 0 : i32
    return %c0_i32, %c0_i32_0 : i32, i32
  }
  func.func @transform_9(%arg0: i32) -> (i32, i32) {
    %c0_i32 = arith.constant 0 : i32
    %c0_i32_0 = arith.constant 0 : i32
    %c0_i32_1 = arith.constant 0 : i32
    return %c0_i32, %c0_i32_0 : i32, i32
  }
  func.func @transform_10(%arg0: i32) -> (i32, i32) {
    %c0_i32 = arith.constant 0 : i32
    %c0_i32_0 = arith.constant 0 : i32
    %c0_i32_1 = arith.constant 0 : i32
    return %c0_i32, %c0_i32_0 : i32, i32
  }
  func.func @transform_11(%arg0: i32) -> (i32, i32) {
    %c0_i32 = arith.constant 0 : i32
    %c0_i32_0 = arith.constant 0 : i32
    %c0_i32_1 = arith.constant 0 : i32
    return %c0_i32, %c0_i32_0 : i32, i32
  }
  func.func @transform_12(%arg0: i32) -> (i32, i32) {
    %c0_i32 = arith.constant 0 : i32
    %c0_i32_0 = arith.constant 0 : i32
    %c0_i32_1 = arith.constant 0 : i32
    return %c0_i32, %c0_i32_0 : i32, i32
  }
  func.func @transform_13(%arg0: i32) -> (i32, i32) {
    %c0_i32 = arith.constant 0 : i32
    %c0_i32_0 = arith.constant 0 : i32
    return %arg0, %c0_i32 : i32, i32
  }
}

</mosaic_0001>

<llo_original>
// kernel: tpu_custom_call.1
$region0: #{tpu_custom_call.1}
  #allocation0 [shape = 'u32[]', space=smem, size = 0x4, offset = 0x4, fixed_abs, tag = 'smem constant byte address 0x4 - core index']
  #allocation1 [shape = 'u32[144,128]{1,0:T(1,128)}', space=vmem, size = 0x12000, scoped, tag = 'internal scratch']
  #allocation2 [shape = 'bf16[128,1152]{1,0:T(16,128)(2,1)}', space=vmem, size = 0x48000, scoped, tag = 'scratch operand']
  %s0 = inlined_call_operand.vmem [shape: f32[256,384], index: 0, kind: input, shape index: {}]
  %s1 = inlined_call_operand.vmem [shape: f32[128,9], index: 1, kind: input, shape index: {}]
  %s2 = inlined_call_operand.vmem [shape: f32[128,1], index: 2, kind: input, shape index: {}]
  %s3 = inlined_call_operand.vmem [shape: bf16[384,384], index: 3, kind: input, shape index: {}]
  %s4 = inlined_call_operand.vmem [shape: f32[1,384], index: 4, kind: input, shape index: {}]
  %s5 = inlined_call_operand.vmem [shape: bf16[1152,96], index: 5, kind: input, shape index: {}]
  %s6 = inlined_call_operand.vmem [shape: f32[1,96], index: 6, kind: input, shape index: {}]
  %s7 = inlined_call_operand.vmem [shape: bf16[1152,128], index: 7, kind: input, shape index: {}]
  %s8 = inlined_call_operand.vmem [shape: f32[1,128], index: 8, kind: input, shape index: {}]
  %s9 = inlined_call_operand.vmem [shape: bf16[1152,96], index: 9, kind: input, shape index: {}]
  %s10 = inlined_call_operand.vmem [shape: f32[1,96], index: 10, kind: input, shape index: {}]
  %s11 = inlined_call_operand.vmem [shape: bf16[384,96], index: 11, kind: input, shape index: {}]
  %s12 = inlined_call_operand.vmem [shape: f32[1,96], index: 12, kind: input, shape index: {}]
  %s13 = inlined_call_operand.hbm [shape: f32[256,384], index: 13, kind: output, shape index: {}]
  %s14 = sld [smem:[#allocation0]]
  $region85: #{tpu_custom_call.1} parent=0
    _
  %s16 = ssub.s32 1, %s14
  %s17 = scalar_select 0, %s16, %s14
  $region1: #{tpu_custom_call.1} parent=0
    #allocation3 [shape = 'u8[393216]{0}', space=vmem, size = 0x60000, scoped, tag = 'output window, operand 0']
    #allocation4 [shape = 's32[2]{0}', space=sflag, size = 0x8, scoped, tag = 'scoped memory for tpu_custom_call.1']
    %18 = vsyncpa [#allocation4], 0
    %s19 = scalar_lea.sflag [#allocation4], 1
    %20 = vsyncpa %s19, 0
    loop: start=0, step=1, limit=4
    $region2: #{tpu_custom_call.1} parent=1 // loop_pre_header
      _
    $region3: #{tpu_custom_call.1} parent=1 // loop_header
      %s22 = sphi 0, %s26
      %p23 = scmp.ge.s32.totalorder %s22, 4
      %s32 = sphi 0, %s34
      %s35 = sphi 0, %s32
      %s36 = sphi 0, %s35
      %s52 = sphi 0, %s36
      %s56 = sphi 0, %s56
      %s58 = sphi 0, %s56
      %s59 = sphi 0, %s58
      %s73 = sphi 0, %s59
      %s77 = sphi 0, %s77
      %s79 = sphi 0, %s77
      %s80 = sphi 0, %s79
      %s94 = sphi 0, %s80
      %s98 = sphi 0, %s98
      %s100 = sphi 0, %s98
      %s101 = sphi 0, %s100
      %s115 = sphi 0, %s101
      %s119 = sphi 0, %s119
      %s121 = sphi 0, %s119
      %s122 = sphi 0, %s121
      %s136 = sphi 0, %s122
      %s140 = sphi 0, %s140
      %s142 = sphi 0, %s140
      %s143 = sphi 0, %s142
      %s157 = sphi 0, %s143
      %s161 = sphi 0, %s161
      %s163 = sphi 0, %s161
      %s164 = sphi 0, %s163
      %s178 = sphi 0, %s164
      %s182 = sphi 0, %s182
      %s184 = sphi 0, %s182
      %s185 = sphi 0, %s184
      %s199 = sphi 0, %s185
      %s203 = sphi 0, %s203
      %s205 = sphi 0, %s203
      %s206 = sphi 0, %s205
      %s220 = sphi 0, %s206
      %s224 = sphi 0, %s224
      %s226 = sphi 0, %s224
      %s227 = sphi 0, %s226
      %s241 = sphi 0, %s227
      %s245 = sphi 0, %s245
      %s247 = sphi 0, %s245
      %s248 = sphi 0, %s247
      %s262 = sphi 0, %s248
      %s266 = sphi 0, %s266
      %s268 = sphi 0, %s266
      %s269 = sphi 0, %s268
      %s283 = sphi 0, %s269
      %s287 = sphi 0, %s287
      %s289 = sphi 0, %s287
      %s290 = sphi 0, %s289
      %s304 = sphi 0, %s290
      %s310 = sphi 0, %s312
      %s313 = sphi 0, %s310
      %s314 = sphi 0, %s313
      %s330 = sphi 0, %s314
    $region4: #{tpu_custom_call.1} parent=1 // loop_header_branch
      %25 = sbr.rel (%p23) target = $region8
    $region5: #{tpu_custom_call.1} parent=1 // loop_body
      %s27 = ssub.s32 %s22, 1
      %s28 = ssub.s32 %s22, 2
      %s29 = sadd.s32 %s22, 1
      %s30 = ssub.s32 %s22, %s29
      %p31 = scmp.eq.s32.totalorder %s30, 0
      %s33 = sadd.s32 %s32, 1
      %s34 = scalar_select %p31, %s32, %s33
      %p37 = pneg %p31
      %p38 = scmp.eq.s32.totalorder %s22, 1
      %p39 = por %p37, %p38
      %p40 = scmp.ne.s32.totalorder %s32, %s35
      %p41 = scmp.eq.s32.totalorder %s22, 0
      %p42 = por %p40, %p41
      %p43 = scmp.ne.s32.totalorder %s32, %s35
      %p44 = scmp.eq.s32.totalorder %s27, 1
      %p45 = por %p43, %p44
      %p46 = scmp.ne.s32.totalorder %s35, %s36
      %p47 = scmp.eq.s32.totalorder %s27, 0
      %p48 = por %p46, %p47
      %p49 = scmp.ne.s32.totalorder %s35, %s36
      %p50 = scmp.eq.s32.totalorder %s28, 1
      %p51 = por %p49, %p50
      %p53 = scmp.ne.s32.totalorder %s36, %s52
      %p54 = scmp.eq.s32.totalorder %s28, 0
      %p55 = por %p53, %p54
      %s57 = sadd.s32 %s56, 1
      %p60 = scmp.eq.s32.totalorder %s22, 1
      %p61 = scmp.ne.s32.totalorder %s56, %s58
      %p62 = scmp.eq.s32.totalorder %s22, 0
      %p63 = por %p61, %p62
      %p64 = scmp.ne.s32.totalorder %s56, %s58
      %p65 = scmp.eq.s32.totalorder %s27, 1
      %p66 = por %p64, %p65
      %p67 = scmp.ne.s32.totalorder %s58, %s59
      %p68 = scmp.eq.s32.totalorder %s27, 0
      %p69 = por %p67, %p68
      %p70 = scmp.ne.s32.totalorder %s58, %s59
      %p71 = scmp.eq.s32.totalorder %s28, 1
      %p72 = por %p70, %p71
      %p74 = scmp.ne.s32.totalorder %s59, %s73
      %p75 = scmp.eq.s32.totalorder %s28, 0
      %p76 = por %p74, %p75
      %s78 = sadd.s32 %s77, 1
      %p81 = scmp.eq.s32.totalorder %s22, 1
      %p82 = scmp.ne.s32.totalorder %s77, %s79
      %p83 = scmp.eq.s32.totalorder %s22, 0
      %p84 = por %p82, %p83
      %p85 = scmp.ne.s32.totalorder %s77, %s79
      %p86 = scmp.eq.s32.totalorder %s27, 1
      %p87 = por %p85, %p86
      %p88 = scmp.ne.s32.totalorder %s79, %s80
      %p89 = scmp.eq.s32.totalorder %s27, 0
      %p90 = por %p88, %p89
      %p91 = scmp.ne.s32.totalorder %s79, %s80
      %p92 = scmp.eq.s32.totalorder %s28, 1
      %p93 = por %p91, %p92
      %p95 = scmp.ne.s32.totalorder %s80, %s94
      %p96 = scmp.eq.s32.totalorder %s28, 0
      %p97 = por %p95, %p96
      %s99 = sadd.s32 %s98, 1
      %p102 = scmp.eq.s32.totalorder %s22, 1
      %p103 = scmp.ne.s32.totalorder %s98, %s100
      %p104 = scmp.eq.s32.totalorder %s22, 0
      %p105 = por %p103, %p104
      %p106 = scmp.ne.s32.totalorder %s98, %s100
      %p107 = scmp.eq.s32.totalorder %s27, 1
      %p108 = por %p106, %p107
      %p109 = scmp.ne.s32.totalorder %s100, %s101
      %p110 = scmp.eq.s32.totalorder %s27, 0
      %p111 = por %p109, %p110
      %p112 = scmp.ne.s32.totalorder %s100, %s101
      %p113 = scmp.eq.s32.totalorder %s28, 1
      %p114 = por %p112, %p113
      %p116 = scmp.ne.s32.totalorder %s101, %s115
      %p117 = scmp.eq.s32.totalorder %s28, 0
      %p118 = por %p116, %p117
      %s120 = sadd.s32 %s119, 1
      %p123 = scmp.eq.s32.totalorder %s22, 1
      %p124 = scmp.ne.s32.totalorder %s119, %s121
      %p125 = scmp.eq.s32.totalorder %s22, 0
      %p126 = por %p124, %p125
      %p127 = scmp.ne.s32.totalorder %s119, %s121
      %p128 = scmp.eq.s32.totalorder %s27, 1
      %p129 = por %p127, %p128
      %p130 = scmp.ne.s32.totalorder %s121, %s122
      %p131 = scmp.eq.s32.totalorder %s27, 0
      %p132 = por %p130, %p131
      %p133 = scmp.ne.s32.totalorder %s121, %s122
      %p134 = scmp.eq.s32.totalorder %s28, 1
      %p135 = por %p133, %p134
      %p137 = scmp.ne.s32.totalorder %s122, %s136
      %p138 = scmp.eq.s32.totalorder %s28, 0
      %p139 = por %p137, %p138
      %s141 = sadd.s32 %s140, 1
      %p144 = scmp.eq.s32.totalorder %s22, 1
      %p145 = scmp.ne.s32.totalorder %s140, %s142
      %p146 = scmp.eq.s32.totalorder %s22, 0
      %p147 = por %p145, %p146
      %p148 = scmp.ne.s32.totalorder %s140, %s142
      %p149 = scmp.eq.s32.totalorder %s27, 1
      %p150 = por %p148, %p149
      %p151 = scmp.ne.s32.totalorder %s142, %s143
      %p152 = scmp.eq.s32.totalorder %s27, 0
      %p153 = por %p151, %p152
      %p154 = scmp.ne.s32.totalorder %s142, %s143
      %p155 = scmp.eq.s32.totalorder %s28, 1
      %p156 = por %p154, %p155
      %p158 = scmp.ne.s32.totalorder %s143, %s157
      %p159 = scmp.eq.s32.totalorder %s28, 0
      %p160 = por %p158, %p159
      %s162 = sadd.s32 %s161, 1
      %p165 = scmp.eq.s32.totalorder %s22, 1
      %p166 = scmp.ne.s32.totalorder %s161, %s163
      %p167 = scmp.eq.s32.totalorder %s22, 0
      %p168 = por %p166, %p167
      %p169 = scmp.ne.s32.totalorder %s161, %s163
      %p170 = scmp.eq.s32.totalorder %s27, 1
      %p171 = por %p169, %p170
      %p172 = scmp.ne.s32.totalorder %s163, %s164
      %p173 = scmp.eq.s32.totalorder %s27, 0
      %p174 = por %p172, %p173
      %p175 = scmp.ne.s32.totalorder %s163, %s164
      %p176 = scmp.eq.s32.totalorder %s28, 1
      %p177 = por %p175, %p176
      %p179 = scmp.ne.s32.totalorder %s164, %s178
      %p180 = scmp.eq.s32.totalorder %s28, 0
      %p181 = por %p179, %p180
      %s183 = sadd.s32 %s182, 1
      %p186 = scmp.eq.s32.totalorder %s22, 1
      %p187 = scmp.ne.s32.totalorder %s182, %s184
      %p188 = scmp.eq.s32.totalorder %s22, 0
      %p189 = por %p187, %p188
      %p190 = scmp.ne.s32.totalorder %s182, %s184
      %p191 = scmp.eq.s32.totalorder %s27, 1
      %p192 = por %p190, %p191
      %p193 = scmp.ne.s32.totalorder %s184, %s185
      %p194 = scmp.eq.s32.totalorder %s27, 0
      %p195 = por %p193, %p194
      %p196 = scmp.ne.s32.totalorder %s184, %s185
      %p197 = scmp.eq.s32.totalorder %s28, 1
      %p198 = por %p196, %p197
      %p200 = scmp.ne.s32.totalorder %s185, %s199
      %p201 = scmp.eq.s32.totalorder %s28, 0
      %p202 = por %p200, %p201
      %s204 = sadd.s32 %s203, 1
      %p207 = scmp.eq.s32.totalorder %s22, 1
      %p208 = scmp.ne.s32.totalorder %s203, %s205
      %p209 = scmp.eq.s32.totalorder %s22, 0
      %p210 = por %p208, %p209
      %p211 = scmp.ne.s32.totalorder %s203, %s205
      %p212 = scmp.eq.s32.totalorder %s27, 1
      %p213 = por %p211, %p212
      %p214 = scmp.ne.s32.totalorder %s205, %s206
      %p215 = scmp.eq.s32.totalorder %s27, 0
      %p216 = por %p214, %p215
      %p217 = scmp.ne.s32.totalorder %s205, %s206
      %p218 = scmp.eq.s32.totalorder %s28, 1
      %p219 = por %p217, %p218
      %p221 = scmp.ne.s32.totalorder %s206, %s220
      %p222 = scmp.eq.s32.totalorder %s28, 0
      %p223 = por %p221, %p222
      %s225 = sadd.s32 %s224, 1
      %p228 = scmp.eq.s32.totalorder %s22, 1
      %p229 = scmp.ne.s32.totalorder %s224, %s226
      %p230 = scmp.eq.s32.totalorder %s22, 0
      %p231 = por %p229, %p230
      %p232 = scmp.ne.s32.totalorder %s224, %s226
      %p233 = scmp.eq.s32.totalorder %s27, 1
      %p234 = por %p232, %p233
      %p235 = scmp.ne.s32.totalorder %s226, %s227
      %p236 = scmp.eq.s32.totalorder %s27, 0
      %p237 = por %p235, %p236
      %p238 = scmp.ne.s32.totalorder %s226, %s227
      %p239 = scmp.eq.s32.totalorder %s28, 1
      %p240 = por %p238, %p239
      %p242 = scmp.ne.s32.totalorder %s227, %s241
      %p243 = scmp.eq.s32.totalorder %s28, 0
      %p244 = por %p242, %p243
      %s246 = sadd.s32 %s245, 1
      %p249 = scmp.eq.s32.totalorder %s22, 1
      %p250 = scmp.ne.s32.totalorder %s245, %s247
      %p251 = scmp.eq.s32.totalorder %s22, 0
      %p252 = por %p250, %p251
      %p253 = scmp.ne.s32.totalorder %s245, %s247
      %p254 = scmp.eq.s32.totalorder %s27, 1
      %p255 = por %p253, %p254
      %p256 = scmp.ne.s32.totalorder %s247, %s248
      %p257 = scmp.eq.s32.totalorder %s27, 0
      %p258 = por %p256, %p257
      %p259 = scmp.ne.s32.totalorder %s247, %s248
      %p260 = scmp.eq.s32.totalorder %s28, 1
      %p261 = por %p259, %p260
      %p263 = scmp.ne.s32.totalorder %s248, %s262
      %p264 = scmp.eq.s32.totalorder %s28, 0
      %p265 = por %p263, %p264
      %s267 = sadd.s32 %s266, 1
      %p270 = scmp.eq.s32.totalorder %s22, 1
      %p271 = scmp.ne.s32.totalorder %s266, %s268
      %p272 = scmp.eq.s32.totalorder %s22, 0
      %p273 = por %p271, %p272
      %p274 = scmp.ne.s32.totalorder %s266, %s268
      %p275 = scmp.eq.s32.totalorder %s27, 1
      %p276 = por %p274, %p275
      %p277 = scmp.ne.s32.totalorder %s268, %s269
      %p278 = scmp.eq.s32.totalorder %s27, 0
      %p279 = por %p277, %p278
      %p280 = scmp.ne.s32.totalorder %s268, %s269
      %p281 = scmp.eq.s32.totalorder %s28, 1
      %p282 = por %p280, %p281
      %p284 = scmp.ne.s32.totalorder %s269, %s283
      %p285 = scmp.eq.s32.totalorder %s28, 0
      %p286 = por %p284, %p285
      %s288 = sadd.s32 %s287, 1
      %p291 = scmp.eq.s32.totalorder %s22, 1
      %p292 = scmp.ne.s32.totalorder %s287, %s289
      %p293 = scmp.eq.s32.totalorder %s22, 0
      %p294 = por %p292, %p293
      %p295 = scmp.ne.s32.totalorder %s287, %s289
      %p296 = scmp.eq.s32.totalorder %s27, 1
      %p297 = por %p295, %p296
      %p298 = scmp.ne.s32.totalorder %s289, %s290
      %p299 = scmp.eq.s32.totalorder %s27, 0
      %p300 = por %p298, %p299
      %p301 = scmp.ne.s32.totalorder %s289, %s290
      %p302 = scmp.eq.s32.totalorder %s28, 1
      %p303 = por %p301, %p302
      %p305 = scmp.ne.s32.totalorder %s290, %s304
      %p306 = scmp.eq.s32.totalorder %s28, 0
      %p307 = por %p305, %p306
      %s308 = ssub.s32 %s22, %s29
      %p309 = scmp.eq.s32.totalorder %s308, 0
      %s311 = sadd.s32 %s310, 1
      %s312 = scalar_select %p309, %s310, %s311
      %p315 = pneg %p309
      %p316 = scmp.eq.s32.totalorder %s22, 1
      %p317 = por %p315, %p316
      %p318 = scmp.ne.s32.totalorder %s310, %s313
      %p319 = scmp.eq.s32.totalorder %s22, 0
      %p320 = por %p318, %p319
      %p321 = scmp.ne.s32.totalorder %s310, %s313
      %p322 = scmp.eq.s32.totalorder %s27, 1
      %p323 = por %p321, %p322
      %p324 = scmp.ne.s32.totalorder %s313, %s314
      %p325 = scmp.eq.s32.totalorder %s27, 0
      %p326 = por %p324, %p325
      %p327 = scmp.ne.s32.totalorder %s313, %s314
      %p328 = scmp.eq.s32.totalorder %s28, 1
      %p329 = por %p327, %p328
      %p331 = scmp.ne.s32.totalorder %s314, %s330
      %p332 = scmp.eq.s32.totalorder %s28, 0
      %p333 = por %p331, %p332
      %p334 = scmp.le.s32.totalorder 1, %s22
      %p335 = scmp.lt.s32.totalorder %s22, 3
      %p336 = pnand %p334, %p335
      %p337 = pneg %p336
      // Predicated region
      $region9: #{tpu_custom_call.1} parent=5 // pred_check
        _
      $region10: #{tpu_custom_call.1} parent=5 // pred_check_branch
        %339 = sbr.rel (%p336) target = $region12
      $region11: #{tpu_custom_call.1} parent=5 // pred_region
        %s340 = ssub.s32 %s22, 1
        // Predicated region
        $region13: #{tpu_custom_call.1} parent=11 // pred_check
          %p341 = pneg %p69
        $region14: #{tpu_custom_call.1} parent=11 // pred_check_branch
          %343 = sbr.rel (%p341) target = $region16
        $region15: #{tpu_custom_call.1} parent=11 // pred_region
          _
        $region16: #{tpu_custom_call.1} parent=11 // pred_fallthru
          _
        // Predicated region
        $region17: #{tpu_custom_call.1} parent=11 // pred_check
          %p344 = pneg %p90
        $region18: #{tpu_custom_call.1} parent=11 // pred_check_branch
          %346 = sbr.rel (%p344) target = $region20
        $region19: #{tpu_custom_call.1} parent=11 // pred_region
          _
        $region20: #{tpu_custom_call.1} parent=11 // pred_fallthru
          _
        // Predicated region
        $region21: #{tpu_custom_call.1} parent=11 // pred_check
          %p347 = pneg %p111
        $region22: #{tpu_custom_call.1} parent=11 // pred_check_branch
          %349 = sbr.rel (%p347) target = $region24
        $region23: #{tpu_custom_call.1} parent=11 // pred_region
          _
        $region24: #{tpu_custom_call.1} parent=11 // pred_fallthru
          _
        // Predicated region
        $region25: #{tpu_custom_call.1} parent=11 // pred_check
          %p350 = pneg %p132
        $region26: #{tpu_custom_call.1} parent=11 // pred_check_branch
          %352 = sbr.rel (%p350) target = $region28
        $region27: #{tpu_custom_call.1} parent=11 // pred_region
          _
        $region28: #{tpu_custom_call.1} parent=11 // pred_fallthru
          _
        // Predicated region
        $region29: #{tpu_custom_call.1} parent=11 // pred_check
          %p353 = pneg %p153
        $region30: #{tpu_custom_call.1} parent=11 // pred_check_branch
          %355 = sbr.rel (%p353) target = $region32
        $region31: #{tpu_custom_call.1} parent=11 // pred_region
          _
        $region32: #{tpu_custom_call.1} parent=11 // pred_fallthru
          _
        // Predicated region
        $region33: #{tpu_custom_call.1} parent=11 // pred_check
          %p356 = pneg %p174
        $region34: #{tpu_custom_call.1} parent=11 // pred_check_branch
          %358 = sbr.rel (%p356) target = $region36
        $region35: #{tpu_custom_call.1} parent=11 // pred_region
          _
        $region36: #{tpu_custom_call.1} parent=11 // pred_fallthru
          _
        // Predicated region
        $region37: #{tpu_custom_call.1} parent=11 // pred_check
          %p359 = pneg %p195
        $region38: #{tpu_custom_call.1} parent=11 // pred_check_branch
          %361 = sbr.rel (%p359) target = $region40
        $region39: #{tpu_custom_call.1} parent=11 // pred_region
          _
        $region40: #{tpu_custom_call.1} parent=11 // pred_fallthru
          _
        // Predicated region
        $region41: #{tpu_custom_call.1} parent=11 // pred_check
          %p362 = pneg %p216
        $region42: #{tpu_custom_call.1} parent=11 // pred_check_branch
          %364 = sbr.rel (%p362) target = $region44
        $region43: #{tpu_custom_call.1} parent=11 // pred_region
          _
        $region44: #{tpu_custom_call.1} parent=11 // pred_fallthru
          _
        // Predicated region
        $region45: #{tpu_custom_call.1} parent=11 // pred_check
          %p365 = pneg %p237
        $region46: #{tpu_custom_call.1} parent=11 // pred_check_branch
          %367 = sbr.rel (%p365) target = $region48
        $region47: #{tpu_custom_call.1} parent=11 // pred_region
          _
        $region48: #{tpu_custom_call.1} parent=11 // pred_fallthru
          _
        // Predicated region
        $region49: #{tpu_custom_call.1} parent=11 // pred_check
          %p368 = pneg %p258
        $region50: #{tpu_custom_call.1} parent=11 // pred_check_branch
          %370 = sbr.rel (%p368) target = $region52
        $region51: #{tpu_custom_call.1} parent=11 // pred_region
          _
        $region52: #{tpu_custom_call.1} parent=11 // pred_fallthru
          _
        // Predicated region
        $region53: #{tpu_custom_call.1} parent=11 // pred_check
          %p371 = pneg %p279
        $region54: #{tpu_custom_call.1} parent=11 // pred_check_branch
          %373 = sbr.rel (%p371) target = $region56
        $region55: #{tpu_custom_call.1} parent=11 // pred_region
          _
        $region56: #{tpu_custom_call.1} parent=11 // pred_fallthru
          _
        // Predicated region
        $region57: #{tpu_custom_call.1} parent=11 // pred_check
          %p374 = pneg %p300
        $region58: #{tpu_custom_call.1} parent=11 // pred_check_branch
          %376 = sbr.rel (%p374) target = $region60
        $region59: #{tpu_custom_call.1} parent=11 // pred_region
          _
        $region60: #{tpu_custom_call.1} parent=11 // pred_fallthru
          _
      $region12: #{tpu_custom_call.1} parent=5 // pred_fallthru
        _
      %p377 = scmp.lt.s32.totalorder %s22, 2
      // Predicated region
      $region61: #{tpu_custom_call.1} parent=5 // pred_check
        %p378 = pneg %p377
      $region62: #{tpu_custom_call.1} parent=5 // pred_check_branch
        %380 = sbr.rel (%p378) target = $region64
      $region63: #{tpu_custom_call.1} parent=5 // pred_region
        // Predicated region
        $region65: #{tpu_custom_call.1} parent=63 // pred_check
          %p381 = pneg %p42
        $region66: #{tpu_custom_call.1} parent=63 // pred_check_branch
          %383 = sbr.rel (%p381) target = $region68
        $region67: #{tpu_custom_call.1} parent=63 // pred_region
          %s384 = smul.u32 16, %s22
          %p385 = scmp.lt.s32.totalorder %s384, 31
          %s386 = scalar_select %p385, %s384, 31
          %s387 = smul.addr %s386, 3
          %s388 = smul.addr %s387, 8
          %s389 = scalar_lea.vmem %s0, %s388
          %s390 = smul.u32 16, %s22
        $region68: #{tpu_custom_call.1} parent=63 // pred_fallthru
          _
      $region64: #{tpu_custom_call.1} parent=5 // pred_fallthru
        _
      %p391 = scmp.le.s32.totalorder 1, %s22
      %p392 = scmp.lt.s32.totalorder %s22, 3
      %p393 = pnand %p391, %p392
      %p394 = pneg %p393
      // Predicated region
      $region69: #{tpu_custom_call.1} parent=5 // pred_check
        _
      $region70: #{tpu_custom_call.1} parent=5 // pred_check_branch
        %396 = sbr.rel (%p393) target = $region72
      $region71: #{tpu_custom_call.1} parent=5 // pred_region
        %s397 = ssub.s32 %s22, 1
        %s398 = smul.u32 16, %s27
        %p399 = scmp.lt.s32.totalorder %s398, 31
        %s400 = scalar_select %p399, %s398, 31
        %s401 = smul.addr %s400, 3
        %s402 = smul.addr %s401, 8
        %s403 = scalar_lea.vmem %s0, %s402
        %p404 = pneg %p48
        %p405 = pneg %p45
        %p406 = pneg %p69
        %p407 = pneg %p66
        %p408 = pneg %p90
        %p409 = pneg %p87
        %p410 = pneg %p111
        %p411 = pneg %p108
        %p412 = pneg %p132
        %p413 = pneg %p129
        %p414 = pneg %p153
        %p415 = pneg %p150
        %p416 = pneg %p174
        %p417 = pneg %p171
        %p418 = pneg %p195
        %p419 = pneg %p192
        %p420 = pneg %p216
        %p421 = pneg %p213
        %p422 = pneg %p237
        %p423 = pneg %p234
        %p424 = pneg %p258
        %p425 = pneg %p255
        %p426 = pneg %p279
        %p427 = pneg %p276
        %p428 = pneg %p300
        %p429 = pneg %p297
        %p430 = pneg %p326
        %p431 = pneg %p323
        %s432 = sand.u32 %s313, 1
        %s433 = scalar_lea.sflag [#allocation4], %s432
        %s434 = sand.u32 %s313, 1
        %s435 = smul.addr %s434, 384
        %s436 = scalar_lea.vmem [#allocation3], %s435
        %s437 = smul.u32 16, %s27
        %p438 = scmp.lt.s32.totalorder %s437, 31
        %s439 = scalar_select %p438, %s437, 31
        %s440 = smul.addr %s439, 3
        %s441 = smul.addr %s440, 8
        %s442 = scalar_lea.vmem %s0, %s441
        %s443 = smul.u32 16, %s27
        %s444 = smul.u32 16, %s27
        %v446 = vld [vmem:[%s442] sm:$0xff]
        %v447 = vld [vmem:[%s442 + $0x8] sm:$0xff]
        %v448 = vld [vmem:[%s442 + $0x10] sm:$0xff]
        %v449 = vld [vmem:[%s442 + $0x18] sm:$0xff]
        %v450 = vld [vmem:[%s442 + $0x20] sm:$0xff]
        %v451 = vld [vmem:[%s442 + $0x28] sm:$0xff]
        %v452 = vld [vmem:[%s442 + $0x30] sm:$0xff]
        %v453 = vld [vmem:[%s442 + $0x38] sm:$0xff]
        %v454 = vld [vmem:[%s442 + $0x40] sm:$0xff]
        %v455 = vld [vmem:[%s442 + $0x48] sm:$0xff]
        %v456 = vld [vmem:[%s442 + $0x50] sm:$0xff]
        %v457 = vld [vmem:[%s442 + $0x58] sm:$0xff]
        %v458 = vld [vmem:[%s442 + $0x60] sm:$0xff]
        %v459 = vld [vmem:[%s442 + $0x68] sm:$0xff]
        %v460 = vld [vmem:[%s442 + $0x70] sm:$0xff]
        %v461 = vld [vmem:[%s442 + $0x78] sm:$0xff]
        %v462 = vld [vmem:[%s442 + $0x80] sm:$0xff]
        %v463 = vld [vmem:[%s442 + $0x88] sm:$0xff]
        %v464 = vld [vmem:[%s442 + $0x90] sm:$0xff]
        %v465 = vld [vmem:[%s442 + $0x98] sm:$0xff]
        %v466 = vld [vmem:[%s442 + $0xa0] sm:$0xff]
        %v467 = vld [vmem:[%s442 + $0xa8] sm:$0xff]
        %v468 = vld [vmem:[%s442 + $0xb0] sm:$0xff]
        %v469 = vld [vmem:[%s442 + $0xb8] sm:$0xff]
        %v470 = vld [vmem:[%s442 + $0xc0] sm:$0xff]
        %v471 = vld [vmem:[%s442 + $0xc8] sm:$0xff]
        %v472 = vld [vmem:[%s442 + $0xd0] sm:$0xff]
        %v473 = vld [vmem:[%s442 + $0xd8] sm:$0xff]
        %v474 = vld [vmem:[%s442 + $0xe0] sm:$0xff]
        %v475 = vld [vmem:[%s442 + $0xe8] sm:$0xff]
        %v476 = vld [vmem:[%s442 + $0xf0] sm:$0xff]
        %v477 = vld [vmem:[%s442 + $0xf8] sm:$0xff]
        %v478 = vld [vmem:[%s442 + $0x100] sm:$0xff]
        %v479 = vld [vmem:[%s442 + $0x108] sm:$0xff]
        %v480 = vld [vmem:[%s442 + $0x110] sm:$0xff]
        %v481 = vld [vmem:[%s442 + $0x118] sm:$0xff]
        %v482 = vld [vmem:[%s442 + $0x120] sm:$0xff]
        %v483 = vld [vmem:[%s442 + $0x128] sm:$0xff]
        %v484 = vld [vmem:[%s442 + $0x130] sm:$0xff]
        %v485 = vld [vmem:[%s442 + $0x138] sm:$0xff]
        %v486 = vld [vmem:[%s442 + $0x140] sm:$0xff]
        %v487 = vld [vmem:[%s442 + $0x148] sm:$0xff]
        %v488 = vld [vmem:[%s442 + $0x150] sm:$0xff]
        %v489 = vld [vmem:[%s442 + $0x158] sm:$0xff]
        %v490 = vld [vmem:[%s442 + $0x160] sm:$0xff]
        %v491 = vld [vmem:[%s442 + $0x168] sm:$0xff]
        %v492 = vld [vmem:[%s442 + $0x170] sm:$0xff]
        %v493 = vld [vmem:[%s442 + $0x178] sm:$0xff]
        %v494 = vpack.c.bf16 %v449, %v446
        %v495 = vpack.c.bf16 %v450, %v447
        %v496 = vpack.c.bf16 %v451, %v448
        %v497 = vpack.c.bf16 %v455, %v452
        %v498 = vpack.c.bf16 %v456, %v453
        %v499 = vpack.c.bf16 %v457, %v454
        %v500 = vpack.c.bf16 %v461, %v458
        %v501 = vpack.c.bf16 %v462, %v459
        %v502 = vpack.c.bf16 %v463, %v460
        %v503 = vpack.c.bf16 %v467, %v464
        %v504 = vpack.c.bf16 %v468, %v465
        %v505 = vpack.c.bf16 %v469, %v466
        %v506 = vpack.c.bf16 %v473, %v470
        %v507 = vpack.c.bf16 %v474, %v471
        %v508 = vpack.c.bf16 %v475, %v472
        %v509 = vpack.c.bf16 %v479, %v476
        %v510 = vpack.c.bf16 %v480, %v477
        %v511 = vpack.c.bf16 %v481, %v478
        %v512 = vpack.c.bf16 %v485, %v482
        %v513 = vpack.c.bf16 %v486, %v483
        %v514 = vpack.c.bf16 %v487, %v484
        %v515 = vpack.c.bf16 %v491, %v488
        %v516 = vpack.c.bf16 %v492, %v489
        %v517 = vpack.c.bf16 %v493, %v490
        %v518 = vld [vmem:[%s3] sm:$0xff]
        %v519 = vld [vmem:[%s3 + $0x8] sm:$0xf]
        %v520 = vld [vmem:[%s3 + $0xc] sm:$0xff]
        %v521 = vld [vmem:[%s3 + $0x14] sm:$0xf]
        %v522 = vld [vmem:[%s3 + $0x18] sm:$0xff]
        %v523 = vld [vmem:[%s3 + $0x20] sm:$0xf]
        %v524 = vld [vmem:[%s3 + $0x24] sm:$0xff]
        %v525 = vld [vmem:[%s3 + $0x2c] sm:$0xf]
        %v526 = vld [vmem:[%s3 + $0x30] sm:$0xff]
        %v527 = vld [vmem:[%s3 + $0x38] sm:$0xf]
        %v528 = vld [vmem:[%s3 + $0x3c] sm:$0xff]
        %v529 = vld [vmem:[%s3 + $0x44] sm:$0xf]
        %v530 = vld [vmem:[%s3 + $0x48] sm:$0xff]
        %v531 = vld [vmem:[%s3 + $0x50] sm:$0xf]
        %v532 = vld [vmem:[%s3 + $0x54] sm:$0xff]
        %v533 = vld [vmem:[%s3 + $0x5c] sm:$0xf]
        %v534 = vld [vmem:[%s3 + $0x60] sm:$0xff]
        %v535 = vld [vmem:[%s3 + $0x68] sm:$0xf]
        %v536 = vld [vmem:[%s3 + $0x6c] sm:$0xff]
        %v537 = vld [vmem:[%s3 + $0x74] sm:$0xf]
        %v538 = vld [vmem:[%s3 + $0x78] sm:$0xff]
        %v539 = vld [vmem:[%s3 + $0x80] sm:$0xf]
        %v540 = vld [vmem:[%s3 + $0x84] sm:$0xff]
        %v541 = vld [vmem:[%s3 + $0x8c] sm:$0xf]
        %v542 = vld [vmem:[%s3 + $0x90] sm:$0xff]
        %v543 = vld [vmem:[%s3 + $0x98] sm:$0xf]
        %v544 = vld [vmem:[%s3 + $0x9c] sm:$0xff]
        %v545 = vld [vmem:[%s3 + $0xa4] sm:$0xf]
        %v546 = vld [vmem:[%s3 + $0xa8] sm:$0xff]
        %v547 = vld [vmem:[%s3 + $0xb0] sm:$0xf]
        %v548 = vld [vmem:[%s3 + $0xb4] sm:$0xff]
        %v549 = vld [vmem:[%s3 + $0xbc] sm:$0xf]
        %v550 = vld [vmem:[%s3 + $0xc0] sm:$0xff]
        %v551 = vld [vmem:[%s3 + $0xc8] sm:$0xf]
        %v552 = vld [vmem:[%s3 + $0xcc] sm:$0xff]
        %v553 = vld [vmem:[%s3 + $0xd4] sm:$0xf]
        %v554 = vld [vmem:[%s3 + $0xd8] sm:$0xff]
        %v555 = vld [vmem:[%s3 + $0xe0] sm:$0xf]
        %v556 = vld [vmem:[%s3 + $0xe4] sm:$0xff]
        %v557 = vld [vmem:[%s3 + $0xec] sm:$0xf]
        %v558 = vld [vmem:[%s3 + $0xf0] sm:$0xff]
        %v559 = vld [vmem:[%s3 + $0xf8] sm:$0xf]
        %v560 = vld [vmem:[%s3 + $0xfc] sm:$0xff]
        %v561 = vld [vmem:[%s3 + $0x104] sm:$0xf]
        %v562 = vld [vmem:[%s3 + $0x108] sm:$0xff]
        %v563 = vld [vmem:[%s3 + $0x110] sm:$0xf]
        %v564 = vld [vmem:[%s3 + $0x114] sm:$0xff]
        %v565 = vld [vmem:[%s3 + $0x11c] sm:$0xf]
        %v566 = vld [vmem:[%s3 + $0x120] sm:$0xff]
        %v567 = vld [vmem:[%s3 + $0x128] sm:$0xf]
        %v568 = vld [vmem:[%s3 + $0x12c] sm:$0xff]
        %v569 = vld [vmem:[%s3 + $0x134] sm:$0xf]
        %v570 = vld [vmem:[%s3 + $0x138] sm:$0xff]
        %v571 = vld [vmem:[%s3 + $0x140] sm:$0xf]
        %v572 = vld [vmem:[%s3 + $0x144] sm:$0xff]
        %v573 = vld [vmem:[%s3 + $0x14c] sm:$0xf]
        %v574 = vld [vmem:[%s3 + $0x150] sm:$0xff]
        %v575 = vld [vmem:[%s3 + $0x158] sm:$0xf]
        %v576 = vld [vmem:[%s3 + $0x15c] sm:$0xff]
        %v577 = vld [vmem:[%s3 + $0x164] sm:$0xf]
        %v578 = vld [vmem:[%s3 + $0x168] sm:$0xff]
        %v579 = vld [vmem:[%s3 + $0x170] sm:$0xf]
        %v580 = vld [vmem:[%s3 + $0x174] sm:$0xff]
        %v581 = vld [vmem:[%s3 + $0x17c] sm:$0xf]
        %v582 = vld [vmem:[%s3 + $0x180] sm:$0xff]
        %v583 = vld [vmem:[%s3 + $0x188] sm:$0xf]
        %v584 = vld [vmem:[%s3 + $0x18c] sm:$0xff]
        %v585 = vld [vmem:[%s3 + $0x194] sm:$0xf]
        %v586 = vld [vmem:[%s3 + $0x198] sm:$0xff]
        %v587 = vld [vmem:[%s3 + $0x1a0] sm:$0xf]
        %v588 = vld [vmem:[%s3 + $0x1a4] sm:$0xff]
        %v589 = vld [vmem:[%s3 + $0x1ac] sm:$0xf]
        %v590 = vld [vmem:[%s3 + $0x1b0] sm:$0xff]
        %v591 = vld [vmem:[%s3 + $0x1b8] sm:$0xf]
        %v592 = vld [vmem:[%s3 + $0x1bc] sm:$0xff]
        %v593 = vld [vmem:[%s3 + $0x1c4] sm:$0xf]
        %v594 = vld [vmem:[%s3 + $0x1c8] sm:$0xff]
        %v595 = vld [vmem:[%s3 + $0x1d0] sm:$0xf]
        %v596 = vld [vmem:[%s3 + $0x1d4] sm:$0xff]
        %v597 = vld [vmem:[%s3 + $0x1dc] sm:$0xf]
        %v598 = vld [vmem:[%s3 + $0x1e0] sm:$0xff]
        %v599 = vld [vmem:[%s3 + $0x1e8] sm:$0xf]
        %v600 = vld [vmem:[%s3 + $0x1ec] sm:$0xff]
        %v601 = vld [vmem:[%s3 + $0x1f4] sm:$0xf]
        %v602 = vld [vmem:[%s3 + $0x1f8] sm:$0xff]
        %v603 = vld [vmem:[%s3 + $0x200] sm:$0xf]
        %v604 = vld [vmem:[%s3 + $0x204] sm:$0xff]
        %v605 = vld [vmem:[%s3 + $0x20c] sm:$0xf]
        %v606 = vld [vmem:[%s3 + $0x210] sm:$0xff]
        %v607 = vld [vmem:[%s3 + $0x218] sm:$0xf]
        %v608 = vld [vmem:[%s3 + $0x21c] sm:$0xff]
        %v609 = vld [vmem:[%s3 + $0x224] sm:$0xf]
        %v610 = vld [vmem:[%s3 + $0x228] sm:$0xff]
        %v611 = vld [vmem:[%s3 + $0x230] sm:$0xf]
        %v612 = vld [vmem:[%s3 + $0x234] sm:$0xff]
        %v613 = vld [vmem:[%s3 + $0x23c] sm:$0xf]
        %v614 = vld [vmem:[%s4] sm:$0x7]
        %v616 = vlaneseq
        %v617 = vshrl.u32 %v616, 7
        %v618 = vsub.s32 0, %v617
        %v619 = vrot.slane %v614, %v618
        %v620 = vlaneseq
        %v621 = vshrl.u32 %v620, 7
        %v622 = vsub.s32 1, %v621
        %v623 = vrot.slane %v614, %v622
        %v624 = vlaneseq
        %v625 = vshrl.u32 %v624, 7
        %v626 = vsub.s32 2, %v625
        %v627 = vrot.slane %v614, %v626
        %v727 = vunpack.c.l.b16 %v518
        %v728 = vunpack.c.h.b16 %v518
        %v729 = vunpack.c.l.b16 %v519
        %v730 = vunpack.c.l.b16 %v520
        %v731 = vunpack.c.h.b16 %v520
        %v732 = vunpack.c.l.b16 %v521
        %v733 = vunpack.c.l.b16 %v522
        %v734 = vunpack.c.h.b16 %v522
        %v735 = vunpack.c.l.b16 %v523
        %v736 = vunpack.c.l.b16 %v524
        %v737 = vunpack.c.h.b16 %v524
        %v738 = vunpack.c.l.b16 %v525
        %v739 = vunpack.c.l.b16 %v526
        %v740 = vunpack.c.h.b16 %v526
        %v741 = vunpack.c.l.b16 %v527
        %v742 = vunpack.c.l.b16 %v528
        %v743 = vunpack.c.h.b16 %v528
        %v744 = vunpack.c.l.b16 %v529
        %v745 = vunpack.c.l.b16 %v530
        %v746 = vunpack.c.h.b16 %v530
        %v747 = vunpack.c.l.b16 %v531
        %v748 = vunpack.c.l.b16 %v532
        %v749 = vunpack.c.h.b16 %v532
        %v750 = vunpack.c.l.b16 %v533
        %v751 = vunpack.c.l.b16 %v534
        %v752 = vunpack.c.h.b16 %v534
        %v753 = vunpack.c.l.b16 %v535
        %v754 = vunpack.c.l.b16 %v536
        %v755 = vunpack.c.h.b16 %v536
        %v756 = vunpack.c.l.b16 %v537
        %v757 = vunpack.c.l.b16 %v538
        %v758 = vunpack.c.h.b16 %v538
        %v759 = vunpack.c.l.b16 %v539
        %v760 = vunpack.c.l.b16 %v540
        %v761 = vunpack.c.h.b16 %v540
        %v762 = vunpack.c.l.b16 %v541
        %v763 = vunpack.c.l.b16 %v542
        %v764 = vunpack.c.h.b16 %v542
        %v765 = vunpack.c.l.b16 %v543
        %v766 = vunpack.c.l.b16 %v544
        %v767 = vunpack.c.h.b16 %v544
        %v768 = vunpack.c.l.b16 %v545
        %v769 = vunpack.c.l.b16 %v546
        %v770 = vunpack.c.h.b16 %v546
        %v771 = vunpack.c.l.b16 %v547
        %v772 = vunpack.c.l.b16 %v548
        %v773 = vunpack.c.h.b16 %v548
        %v774 = vunpack.c.l.b16 %v549
        %v775 = vunpack.c.l.b16 %v550
        %v776 = vunpack.c.h.b16 %v550
        %v777 = vunpack.c.l.b16 %v551
        %v778 = vunpack.c.l.b16 %v552
        %v779 = vunpack.c.h.b16 %v552
        %v780 = vunpack.c.l.b16 %v553
        %v781 = vunpack.c.l.b16 %v554
        %v782 = vunpack.c.h.b16 %v554
        %v783 = vunpack.c.l.b16 %v555
        %v784 = vunpack.c.l.b16 %v556
        %v785 = vunpack.c.h.b16 %v556
        %v786 = vunpack.c.l.b16 %v557
        %v787 = vunpack.c.l.b16 %v558
        %v788 = vunpack.c.h.b16 %v558
        %v789 = vunpack.c.l.b16 %v559
        %v790 = vunpack.c.l.b16 %v560
        %v791 = vunpack.c.h.b16 %v560
        %v792 = vunpack.c.l.b16 %v561
        %v793 = vunpack.c.l.b16 %v562
        %v794 = vunpack.c.h.b16 %v562
        %v795 = vunpack.c.l.b16 %v563
        %v796 = vunpack.c.l.b16 %v564
        %v797 = vunpack.c.h.b16 %v564
        %v798 = vunpack.c.l.b16 %v565
        %v799 = vunpack.c.l.b16 %v566
        %v800 = vunpack.c.h.b16 %v566
        %v801 = vunpack.c.l.b16 %v567
        %v802 = vunpack.c.l.b16 %v568
        %v803 = vunpack.c.h.b16 %v568
        %v804 = vunpack.c.l.b16 %v569
        %v805 = vunpack.c.l.b16 %v570
        %v806 = vunpack.c.h.b16 %v570
        %v807 = vunpack.c.l.b16 %v571
        %v808 = vunpack.c.l.b16 %v572
        %v809 = vunpack.c.h.b16 %v572
        %v810 = vunpack.c.l.b16 %v573
        %v811 = vunpack.c.l.b16 %v574
        %v812 = vunpack.c.h.b16 %v574
        %v813 = vunpack.c.l.b16 %v575
        %v814 = vunpack.c.l.b16 %v576
        %v815 = vunpack.c.h.b16 %v576
        %v816 = vunpack.c.l.b16 %v577
        %v817 = vunpack.c.l.b16 %v578
        %v818 = vunpack.c.h.b16 %v578
        %v819 = vunpack.c.l.b16 %v579
        %v820 = vunpack.c.l.b16 %v580
        %v821 = vunpack.c.h.b16 %v580
        %v822 = vunpack.c.l.b16 %v581
        %v823 = vunpack.c.l.b16 %v582
        %v824 = vunpack.c.h.b16 %v582
        %v825 = vunpack.c.l.b16 %v583
        %v826 = vunpack.c.l.b16 %v584
        %v827 = vunpack.c.h.b16 %v584
        %v828 = vunpack.c.l.b16 %v585
        %v829 = vunpack.c.l.b16 %v586
        %v830 = vunpack.c.h.b16 %v586
        %v831 = vunpack.c.l.b16 %v587
        %v832 = vunpack.c.l.b16 %v588
        %v833 = vunpack.c.h.b16 %v588
        %v834 = vunpack.c.l.b16 %v589
        %v835 = vunpack.c.l.b16 %v590
        %v836 = vunpack.c.h.b16 %v590
        %v837 = vunpack.c.l.b16 %v591
        %v838 = vunpack.c.l.b16 %v592
        %v839 = vunpack.c.h.b16 %v592
        %v840 = vunpack.c.l.b16 %v593
        %v841 = vunpack.c.l.b16 %v594
        %v842 = vunpack.c.h.b16 %v594
        %v843 = vunpack.c.l.b16 %v595
        %v844 = vunpack.c.l.b16 %v596
        %v845 = vunpack.c.h.b16 %v596
        %v846 = vunpack.c.l.b16 %v597
        %v847 = vunpack.c.l.b16 %v598
        %v848 = vunpack.c.h.b16 %v598
        %v849 = vunpack.c.l.b16 %v599
        %v850 = vunpack.c.l.b16 %v600
        %v851 = vunpack.c.h.b16 %v600
        %v852 = vunpack.c.l.b16 %v601
        %v853 = vunpack.c.l.b16 %v602
        %v854 = vunpack.c.h.b16 %v602
        %v855 = vunpack.c.l.b16 %v603
        %v856 = vunpack.c.l.b16 %v604
        %v857 = vunpack.c.h.b16 %v604
        %v858 = vunpack.c.l.b16 %v605
        %v859 = vunpack.c.l.b16 %v606
        %v860 = vunpack.c.h.b16 %v606
        %v861 = vunpack.c.l.b16 %v607
        %v862 = vunpack.c.l.b16 %v608
        %v863 = vunpack.c.h.b16 %v608
        %v864 = vunpack.c.l.b16 %v609
        %v865 = vunpack.c.l.b16 %v610
        %v866 = vunpack.c.h.b16 %v610
        %v867 = vunpack.c.l.b16 %v611
        %v868 = vunpack.c.l.b16 %v612
        %v869 = vunpack.c.h.b16 %v612
        %v870 = vunpack.c.l.b16 %v613
        %v871 = vpack.c.b16 %v730, %v727
        %v872 = vpack.c.b16 %v731, %v728
        %v873 = vpack.c.b16 %v732, %v729
        %v874 = vpack.c.b16 %v736, %v733
        %v875 = vpack.c.b16 %v737, %v734
        %v876 = vpack.c.b16 %v738, %v735
        %v877 = vpack.c.b16 %v742, %v739
        %v878 = vpack.c.b16 %v743, %v740
        %v879 = vpack.c.b16 %v744, %v741
        %v880 = vpack.c.b16 %v748, %v745
        %v881 = vpack.c.b16 %v749, %v746
        %v882 = vpack.c.b16 %v750, %v747
        %v883 = vpack.c.b16 %v754, %v751
        %v884 = vpack.c.b16 %v755, %v752
        %v885 = vpack.c.b16 %v756, %v753
        %v886 = vpack.c.b16 %v760, %v757
        %v887 = vpack.c.b16 %v761, %v758
        %v888 = vpack.c.b16 %v762, %v759
        %v889 = vpack.c.b16 %v766, %v763
        %v890 = vpack.c.b16 %v767, %v764
        %v891 = vpack.c.b16 %v768, %v765
        %v892 = vpack.c.b16 %v772, %v769
        %v893 = vpack.c.b16 %v773, %v770
        %v894 = vpack.c.b16 %v774, %v771
        %v895 = vpack.c.b16 %v778, %v775
        %v896 = vpack.c.b16 %v779, %v776
        %v897 = vpack.c.b16 %v780, %v777
        %v898 = vpack.c.b16 %v784, %v781
        %v899 = vpack.c.b16 %v785, %v782
        %v900 = vpack.c.b16 %v786, %v783
        %v901 = vpack.c.b16 %v790, %v787
        %v902 = vpack.c.b16 %v791, %v788
        %v903 = vpack.c.b16 %v792, %v789
        %v904 = vpack.c.b16 %v796, %v793
        %v905 = vpack.c.b16 %v797, %v794
        %v906 = vpack.c.b16 %v798, %v795
        %v907 = vpack.c.b16 %v802, %v799
        %v908 = vpack.c.b16 %v803, %v800
        %v909 = vpack.c.b16 %v804, %v801
        %v910 = vpack.c.b16 %v808, %v805
        %v911 = vpack.c.b16 %v809, %v806
        %v912 = vpack.c.b16 %v810, %v807
        %v913 = vpack.c.b16 %v814, %v811
        %v914 = vpack.c.b16 %v815, %v812
        %v915 = vpack.c.b16 %v816, %v813
        %v916 = vpack.c.b16 %v820, %v817
        %v917 = vpack.c.b16 %v821, %v818
        %v918 = vpack.c.b16 %v822, %v819
        %v919 = vpack.c.b16 %v826, %v823
        %v920 = vpack.c.b16 %v827, %v824
        %v921 = vpack.c.b16 %v828, %v825
        %v922 = vpack.c.b16 %v832, %v829
        %v923 = vpack.c.b16 %v833, %v830
        %v924 = vpack.c.b16 %v834, %v831
        %v925 = vpack.c.b16 %v838, %v835
        %v926 = vpack.c.b16 %v839, %v836
        %v927 = vpack.c.b16 %v840, %v837
        %v928 = vpack.c.b16 %v844, %v841
        %v929 = vpack.c.b16 %v845, %v842
        %v930 = vpack.c.b16 %v846, %v843
        %v931 = vpack.c.b16 %v850, %v847
        %v932 = vpack.c.b16 %v851, %v848
        %v933 = vpack.c.b16 %v852, %v849
        %v934 = vpack.c.b16 %v856, %v853
        %v935 = vpack.c.b16 %v857, %v854
        %v936 = vpack.c.b16 %v858, %v855
        %v937 = vpack.c.b16 %v862, %v859
        %v938 = vpack.c.b16 %v863, %v860
        %v939 = vpack.c.b16 %v864, %v861
        %v940 = vpack.c.b16 %v868, %v865
        %v941 = vpack.c.b16 %v869, %v866
        %v942 = vpack.c.b16 %v870, %v867
        %1015 = vmatprep.subr.bf16.mxu0 %v872
        %1016 = vmatpush1.bf16.msra.mxu0 %v871
        %1017 = vmatprep.subr.bf16.mxu0 %v875
        %1018 = vmatpush1.bf16.msra.mxu0 %v874
        %1019 = vmatprep.subr.bf16.mxu0 %v878
        %1020 = vmatpush1.bf16.msra.mxu0 %v877
        %1021 = vmatprep.subr.bf16.mxu0 %v881
        %1022 = vmatpush1.bf16.msra.mxu0 %v880
        %1023 = vmatprep.subr.bf16.mxu0 %v884
        %1024 = vmatpush1.bf16.msra.mxu0 %v883
        %1025 = vmatprep.subr.bf16.mxu0 %v887
        %1026 = vmatpush1.bf16.msra.mxu0 %v886
        %1027 = vmatprep.subr.bf16.mxu0 %v890
        %1028 = vmatpush1.bf16.msra.mxu0 %v889
        %1029 = vmatprep.subr.bf16.mxu0 %v893
        %1030 = vmatpush1.bf16.msra.mxu0 %v892
        %1031 = vmatprep.subr.bf16.mxu0 %v896
        %1032 = vmatpush1.bf16.msra.mxu0 %v895
        %1033 = vmatprep.subr.bf16.mxu0 %v899
        %1034 = vmatpush1.bf16.msra.mxu0 %v898
        %1035 = vmatprep.subr.bf16.mxu0 %v902
        %1036 = vmatpush1.bf16.msra.mxu0 %v901
        %1037 = vmatprep.subr.bf16.mxu0 %v905
        %1038 = vmatpush1.bf16.msra.mxu0 %v904
        %1039 = vmatprep.subr.bf16.mxu0 %v908
        %1040 = vmatpush1.bf16.msra.mxu0 %v907
        %1041 = vmatprep.subr.bf16.mxu0 %v911
        %1042 = vmatpush1.bf16.msra.mxu0 %v910
        %1043 = vmatprep.subr.bf16.mxu0 %v914
        %1044 = vmatpush1.bf16.msra.mxu0 %v913
        %1045 = vmatprep.subr.bf16.mxu0 %v917
        %1046 = vmatpush1.bf16.msra.mxu0 %v916
        %1047 = vmatprep.mubr.bf16.mxu0 %v495
        %1048 = vmatmul.mubr.bf16.gmra.mrb[0].mxu0 %v494
        %v1049 = vpop.f32.mrb[0].mxu0
        %v1050 = vadd.f32 %v619, %v1049
        %v1051 = vpop.f32.mrb[0].mxu0
        %v1052 = vadd.f32 %v623, %v1051
        %v1053 = vpop.f32.mrb[0].mxu0
        %v1054 = vadd.f32 %v619, %v1053
        %v1055 = vpop.f32.mrb[0].mxu0
        %v1056 = vadd.f32 %v623, %v1055
        %1057 = vmatprep.mubr.bf16.mxu0 %v498
        %1058 = vmatmul.mubr.bf16.gmra.mrb[0].mxu0 %v497
        %v1059 = vpop.f32.mrb[0].mxu0
        %v1060 = vadd.f32 %v619, %v1059
        %v1061 = vpop.f32.mrb[0].mxu0
        %v1062 = vadd.f32 %v623, %v1061
        %v1063 = vpop.f32.mrb[0].mxu0
        %v1064 = vadd.f32 %v619, %v1063
        %v1065 = vpop.f32.mrb[0].mxu0
        %v1066 = vadd.f32 %v623, %v1065
        %1067 = vmatprep.mubr.bf16.mxu0 %v501
        %1068 = vmatmul.mubr.bf16.gmra.mrb[0].mxu0 %v500
        %v1069 = vpop.f32.mrb[0].mxu0
        %v1070 = vadd.f32 %v619, %v1069
        %v1071 = vpop.f32.mrb[0].mxu0
        %v1072 = vadd.f32 %v623, %v1071
        %v1073 = vpop.f32.mrb[0].mxu0
        %v1074 = vadd.f32 %v619, %v1073
        %v1075 = vpop.f32.mrb[0].mxu0
        %v1076 = vadd.f32 %v623, %v1075
        %1077 = vmatprep.mubr.bf16.mxu0 %v504
        %1078 = vmatmul.mubr.bf16.gmra.mrb[0].mxu0 %v503
        %v1079 = vpop.f32.mrb[0].mxu0
        %v1080 = vadd.f32 %v619, %v1079
        %v1081 = vpop.f32.mrb[0].mxu0
        %v1082 = vadd.f32 %v623, %v1081
        %v1083 = vpop.f32.mrb[0].mxu0
        %v1084 = vadd.f32 %v619, %v1083
        %v1085 = vpop.f32.mrb[0].mxu0
        %v1086 = vadd.f32 %v623, %v1085
        %1087 = vmatprep.mubr.bf16.mxu0 %v507
        %1088 = vmatmul.mubr.bf16.gmra.mrb[0].mxu0 %v506
        %v1089 = vpop.f32.mrb[0].mxu0
        %v1090 = vadd.f32 %v619, %v1089
        %v1091 = vpop.f32.mrb[0].mxu0
        %v1092 = vadd.f32 %v623, %v1091
        %v1093 = vpop.f32.mrb[0].mxu0
        %v1094 = vadd.f32 %v619, %v1093
        %v1095 = vpop.f32.mrb[0].mxu0
        %v1096 = vadd.f32 %v623, %v1095
        %1097 = vmatprep.mubr.bf16.mxu0 %v510
        %1098 = vmatmul.mubr.bf16.gmra.mrb[0].mxu0 %v509
        %v1099 = vpop.f32.mrb[0].mxu0
        %v1100 = vadd.f32 %v619, %v1099
        %v1101 = vpop.f32.mrb[0].mxu0
        %v1102 = vadd.f32 %v623, %v1101
        %v1103 = vpop.f32.mrb[0].mxu0
        %v1104 = vadd.f32 %v619, %v1103
        %v1105 = vpop.f32.mrb[0].mxu0
        %v1106 = vadd.f32 %v623, %v1105
        %1107 = vmatprep.mubr.bf16.mxu0 %v513
        %1108 = vmatmul.mubr.bf16.gmra.mrb[0].mxu0 %v512
        %v1109 = vpop.f32.mrb[0].mxu0
        %v1110 = vadd.f32 %v619, %v1109
        %v1111 = vpop.f32.mrb[0].mxu0
        %v1112 = vadd.f32 %v623, %v1111
        %v1113 = vpop.f32.mrb[0].mxu0
        %v1114 = vadd.f32 %v619, %v1113
        %v1115 = vpop.f32.mrb[0].mxu0
        %v1116 = vadd.f32 %v623, %v1115
        %1117 = vmatprep.mubr.bf16.mxu0 %v516
        %1118 = vmatmul.mubr.bf16.gmra.mrb[0].mxu0 %v515
        %v1119 = vpop.f32.mrb[0].mxu0
        %v1120 = vadd.f32 %v619, %v1119
        %v1121 = vpop.f32.mrb[0].mxu0
        %v1122 = vadd.f32 %v623, %v1121
        %v1123 = vpop.f32.mrb[0].mxu0
        %v1124 = vadd.f32 %v619, %v1123
        %v1125 = vpop.f32.mrb[0].mxu0
        %v1126 = vadd.f32 %v623, %v1125
        %1127 = vdwg.mxu0
        %1128 = vmatprep.subr.bf16.mxu0 %v920
        %1129 = vmatpush1.bf16.msra.mxu0 %v919
        %1130 = vmatprep.subr.bf16.mxu0 %v923
        %1131 = vmatpush1.bf16.msra.mxu0 %v922
        %1132 = vmatprep.subr.bf16.mxu0 %v926
        %1133 = vmatpush1.bf16.msra.mxu0 %v925
        %1134 = vmatprep.subr.bf16.mxu0 %v929
        %1135 = vmatpush1.bf16.msra.mxu0 %v928
        %1136 = vmatprep.subr.bf16.mxu0 %v932
        %1137 = vmatpush1.bf16.msra.mxu0 %v931
        %1138 = vmatprep.subr.bf16.mxu0 %v935
        %1139 = vmatpush1.bf16.msra.mxu0 %v934
        %1140 = vmatprep.subr.bf16.mxu0 %v938
        %1141 = vmatpush1.bf16.msra.mxu0 %v937
        %1142 = vmatprep.subr.bf16.mxu0 %v941
        %1143 = vmatpush1.bf16.msra.mxu0 %v940
        %1144 = vmatprep.subr.bf16.mxu0 0
        %1145 = vmatpush1.bf16.msra.mxu0 0
        %1146 = vmatprep.subr.bf16.mxu0 0
        %1147 = vmatpush1.bf16.msra.mxu0 0
        %1148 = vmatprep.subr.bf16.mxu0 0
        %1149 = vmatpush1.bf16.msra.mxu0 0
        %1150 = vmatprep.subr.bf16.mxu0 0
        %1151 = vmatpush1.bf16.msra.mxu0 0
        %1152 = vmatprep.subr.bf16.mxu0 0
        %1153 = vmatpush1.bf16.msra.mxu0 0
        %1154 = vmatprep.subr.bf16.mxu0 0
        %1155 = vmatpush1.bf16.msra.mxu0 0
        %1156 = vmatprep.subr.bf16.mxu0 0
        %1157 = vmatpush1.bf16.msra.mxu0 0
        %1158 = vmatprep.subr.bf16.mxu0 0
        %1159 = vmatpush1.bf16.msra.mxu0 0
        %1160 = vmatprep.mubr.bf16.mxu0 0
        %1161 = vmatmul.mubr.bf16.gmra.mrb[0].mxu0 %v496
        %v1162 = vpop.f32.mrb[0].mxu0
        %v1163 = vadd.f32 %v1050, %v1162
        %v1164 = vpop.f32.mrb[0].mxu0
        %v1165 = vadd.f32 %v1052, %v1164
        %v1166 = vpop.f32.mrb[0].mxu0
        %v1167 = vadd.f32 %v1054, %v1166
        %v1168 = vpop.f32.mrb[0].mxu0
        %v1169 = vadd.f32 %v1056, %v1168
        %1170 = vmatprep.mubr.bf16.mxu0 0
        %1171 = vmatmul.mubr.bf16.gmra.mrb[0].mxu0 %v499
        %v1172 = vpop.f32.mrb[0].mxu0
        %v1173 = vadd.f32 %v1060, %v1172
        %v1174 = vpop.f32.mrb[0].mxu0
        %v1175 = vadd.f32 %v1062, %v1174
        %v1176 = vpop.f32.mrb[0].mxu0
        %v1177 = vadd.f32 %v1064, %v1176
        %v1178 = vpop.f32.mrb[0].mxu0
        %v1179 = vadd.f32 %v1066, %v1178
        %1180 = vmatprep.mubr.bf16.mxu0 0
        %1181 = vmatmul.mubr.bf16.gmra.mrb[0].mxu0 %v502
        %v1182 = vpop.f32.mrb[0].mxu0
        %v1183 = vadd.f32 %v1070, %v1182
        %v1184 = vpop.f32.mrb[0].mxu0
        %v1185 = vadd.f32 %v1072, %v1184
        %v1186 = vpop.f32.mrb[0].mxu0
        %v1187 = vadd.f32 %v1074, %v1186
        %v1188 = vpop.f32.mrb[0].mxu0
        %v1189 = vadd.f32 %v1076, %v1188
        %1190 = vmatprep.mubr.bf16.mxu0 0
        %1191 = vmatmul.mubr.bf16.gmra.mrb[0].mxu0 %v505
        %v1192 = vpop.f32.mrb[0].mxu0
        %v1193 = vadd.f32 %v1080, %v1192
        %v1194 = vpop.f32.mrb[0].mxu0
        %v1195 = vadd.f32 %v1082, %v1194
        %v1196 = vpop.f32.mrb[0].mxu0
        %v1197 = vadd.f32 %v1084, %v1196
        %v1198 = vpop.f32.mrb[0].mxu0
        %v1199 = vadd.f32 %v1086, %v1198
        %1200 = vmatprep.mubr.bf16.mxu0 0
        %1201 = vmatmul.mubr.bf16.gmra.mrb[0].mxu0 %v508
        %v1202 = vpop.f32.mrb[0].mxu0
        %v1203 = vadd.f32 %v1090, %v1202
        %v1204 = vpop.f32.mrb[0].mxu0
        %v1205 = vadd.f32 %v1092, %v1204
        %v1206 = vpop.f32.mrb[0].mxu0
        %v1207 = vadd.f32 %v1094, %v1206
        %v1208 = vpop.f32.mrb[0].mxu0
        %v1209 = vadd.f32 %v1096, %v1208
        %1210 = vmatprep.mubr.bf16.mxu0 0
        %1211 = vmatmul.mubr.bf16.gmra.mrb[0].mxu0 %v511
        %v1212 = vpop.f32.mrb[0].mxu0
        %v1213 = vadd.f32 %v1100, %v1212
        %v1214 = vpop.f32.mrb[0].mxu0
        %v1215 = vadd.f32 %v1102, %v1214
        %v1216 = vpop.f32.mrb[0].mxu0
        %v1217 = vadd.f32 %v1104, %v1216
        %v1218 = vpop.f32.mrb[0].mxu0
        %v1219 = vadd.f32 %v1106, %v1218
        %1220 = vmatprep.mubr.bf16.mxu0 0
        %1221 = vmatmul.mubr.bf16.gmra.mrb[0].mxu0 %v514
        %v1222 = vpop.f32.mrb[0].mxu0
        %v1223 = vadd.f32 %v1110, %v1222
        %v1224 = vpop.f32.mrb[0].mxu0
        %v1225 = vadd.f32 %v1112, %v1224
        %v1226 = vpop.f32.mrb[0].mxu0
        %v1227 = vadd.f32 %v1114, %v1226
        %v1228 = vpop.f32.mrb[0].mxu0
        %v1229 = vadd.f32 %v1116, %v1228
        %1230 = vmatprep.mubr.bf16.mxu0 0
        %1231 = vmatmul.mubr.bf16.gmra.mrb[0].mxu0 %v517
        %v1232 = vpop.f32.mrb[0].mxu0
        %v1233 = vadd.f32 %v1120, %v1232
        %v1234 = vpop.f32.mrb[0].mxu0
        %v1235 = vadd.f32 %v1122, %v1234
        %v1236 = vpop.f32.mrb[0].mxu0
        %v1237 = vadd.f32 %v1124, %v1236
        %v1238 = vpop.f32.mrb[0].mxu0
        %v1239 = vadd.f32 %v1126, %v1238
        %1240 = vdwg.mxu0
        %1241 = vmatprep.subr.bf16.mxu0 0
        %1242 = vmatpush1.bf16.msra.mxu0 %v873
        %1243 = vmatprep.subr.bf16.mxu0 0
        %1244 = vmatpush1.bf16.msra.mxu0 %v876
        %1245 = vmatprep.subr.bf16.mxu0 0
        %1246 = vmatpush1.bf16.msra.mxu0 %v879
        %1247 = vmatprep.subr.bf16.mxu0 0
        %1248 = vmatpush1.bf16.msra.mxu0 %v882
        %1249 = vmatprep.subr.bf16.mxu0 0
        %1250 = vmatpush1.bf16.msra.mxu0 %v885
        %1251 = vmatprep.subr.bf16.mxu0 0
        %1252 = vmatpush1.bf16.msra.mxu0 %v888
        %1253 = vmatprep.subr.bf16.mxu0 0
        %1254 = vmatpush1.bf16.msra.mxu0 %v891
        %1255 = vmatprep.subr.bf16.mxu0 0
        %1256 = vmatpush1.bf16.msra.mxu0 %v894
        %1257 = vmatprep.subr.bf16.mxu0 0
        %1258 = vmatpush1.bf16.msra.mxu0 %v897
        %1259 = vmatprep.subr.bf16.mxu0 0
        %1260 = vmatpush1.bf16.msra.mxu0 %v900
        %1261 = vmatprep.subr.bf16.mxu0 0
        %1262 = vmatpush1.bf16.msra.mxu0 %v903
        %1263 = vmatprep.subr.bf16.mxu0 0
        %1264 = vmatpush1.bf16.msra.mxu0 %v906
        %1265 = vmatprep.subr.bf16.mxu0 0
        %1266 = vmatpush1.bf16.msra.mxu0 %v909
        %1267 = vmatprep.subr.bf16.mxu0 0
        %1268 = vmatpush1.bf16.msra.mxu0 %v912
        %1269 = vmatprep.subr.bf16.mxu0 0
        %1270 = vmatpush1.bf16.msra.mxu0 %v915
        %1271 = vmatprep.subr.bf16.mxu0 0
        %1272 = vmatpush1.bf16.msra.mxu0 %v918
        %1273 = vmatprep.mubr.bf16.mxu0 %v495
        %1274 = vmatmul.mubr.bf16.gmra.mrb[0].mxu0 %v494
        %v1275 = vpop.f32.mrb[0].mxu0
        %v1276 = vadd.f32 %v627, %v1275
        %v1277 = vpop.f32.mrb[0].mxu0
        %v1278 = vpop.f32.mrb[0].mxu0
        %v1279 = vadd.f32 %v627, %v1278
        %v1280 = vpop.f32.mrb[0].mxu0
        %1281 = vmatprep.mubr.bf16.mxu0 %v498
        %1282 = vmatmul.mubr.bf16.gmra.mrb[0].mxu0 %v497
        %v1283 = vpop.f32.mrb[0].mxu0
        %v1284 = vadd.f32 %v627, %v1283
        %v1285 = vpop.f32.mrb[0].mxu0
        %v1286 = vpop.f32.mrb[0].mxu0
        %v1287 = vadd.f32 %v627, %v1286
        %v1288 = vpop.f32.mrb[0].mxu0
        %1289 = vmatprep.mubr.bf16.mxu0 %v501
        %1290 = vmatmul.mubr.bf16.gmra.mrb[0].mxu0 %v500
        %v1291 = vpop.f32.mrb[0].mxu0
        %v1292 = vadd.f32 %v627, %v1291
        %v1293 = vpop.f32.mrb[0].mxu0
        %v1294 = vpop.f32.mrb[0].mxu0
        %v1295 = vadd.f32 %v627, %v1294
        %v1296 = vpop.f32.mrb[0].mxu0
        %1297 = vmatprep.mubr.bf16.mxu0 %v504
        %1298 = vmatmul.mubr.bf16.gmra.mrb[0].mxu0 %v503
        %v1299 = vpop.f32.mrb[0].mxu0
        %v1300 = vadd.f32 %v627, %v1299
        %v1301 = vpop.f32.mrb[0].mxu0
        %v1302 = vpop.f32.mrb[0].mxu0
        %v1303 = vadd.f32 %v627, %v1302
        %v1304 = vpop.f32.mrb[0].mxu0
        %1305 = vmatprep.mubr.bf16.mxu0 %v507
        %1306 = vmatmul.mubr.bf16.gmra.mrb[0].mxu0 %v506
        %v1307 = vpop.f32.mrb[0].mxu0
        %v1308 = vadd.f32 %v627, %v1307
        %v1309 = vpop.f32.mrb[0].mxu0
        %v1310 = vpop.f32.mrb[0].mxu0
        %v1311 = vadd.f32 %v627, %v1310
        %v1312 = vpop.f32.mrb[0].mxu0
        %1313 = vmatprep.mubr.bf16.mxu0 %v510
        %1314 = vmatmul.mubr.bf16.gmra.mrb[0].mxu0 %v509
        %v1315 = vpop.f32.mrb[0].mxu0
        %v1316 = vadd.f32 %v627, %v1315
        %v1317 = vpop.f32.mrb[0].mxu0
        %v1318 = vpop.f32.mrb[0].mxu0
        %v1319 = vadd.f32 %v627, %v1318
        %v1320 = vpop.f32.mrb[0].mxu0
        %1321 = vmatprep.mubr.bf16.mxu0 %v513
        %1322 = vmatmul.mubr.bf16.gmra.mrb[0].mxu0 %v512
        %v1323 = vpop.f32.mrb[0].mxu0
        %v1324 = vadd.f32 %v627, %v1323
        %v1325 = vpop.f32.mrb[0].mxu0
        %v1326 = vpop.f32.mrb[0].mxu0
        %v1327 = vadd.f32 %v627, %v1326
        %v1328 = vpop.f32.mrb[0].mxu0
        %1329 = vmatprep.mubr.bf16.mxu0 %v516
        %1330 = vmatmul.mubr.bf16.gmra.mrb[0].mxu0 %v515
        %v1331 = vpop.f32.mrb[0].mxu0
        %v1332 = vadd.f32 %v627, %v1331
        %v1333 = vpop.f32.mrb[0].mxu0
        %v1334 = vpop.f32.mrb[0].mxu0
        %v1335 = vadd.f32 %v627, %v1334
        %v1336 = vpop.f32.mrb[0].mxu0
        %1337 = vdwg.mxu0
        %1338 = vmatprep.subr.bf16.mxu0 0
        %1339 = vmatpush1.bf16.msra.mxu0 %v921
        %1340 = vmatprep.subr.bf16.mxu0 0
        %1341 = vmatpush1.bf16.msra.mxu0 %v924
        %1342 = vmatprep.subr.bf16.mxu0 0
        %1343 = vmatpush1.bf16.msra.mxu0 %v927
        %1344 = vmatprep.subr.bf16.mxu0 0
        %1345 = vmatpush1.bf16.msra.mxu0 %v930
        %1346 = vmatprep.subr.bf16.mxu0 0
        %1347 = vmatpush1.bf16.msra.mxu0 %v933
        %1348 = vmatprep.subr.bf16.mxu0 0
        %1349 = vmatpush1.bf16.msra.mxu0 %v936
        %1350 = vmatprep.subr.bf16.mxu0 0
        %1351 = vmatpush1.bf16.msra.mxu0 %v939
        %1352 = vmatprep.subr.bf16.mxu0 0
        %1353 = vmatpush1.bf16.msra.mxu0 %v942
        %1354 = vmatprep.subr.bf16.mxu0 0
        %1355 = vmatpush1.bf16.msra.mxu0 0
        %1356 = vmatprep.subr.bf16.mxu0 0
        %1357 = vmatpush1.bf16.msra.mxu0 0
        %1358 = vmatprep.subr.bf16.mxu0 0
        %1359 = vmatpush1.bf16.msra.mxu0 0
        %1360 = vmatprep.subr.bf16.mxu0 0
        %1361 = vmatpush1.bf16.msra.mxu0 0
        %1362 = vmatprep.subr.bf16.mxu0 0
        %1363 = vmatpush1.bf16.msra.mxu0 0
        %1364 = vmatprep.subr.bf16.mxu0 0
        %1365 = vmatpush1.bf16.msra.mxu0 0
        %1366 = vmatprep.subr.bf16.mxu0 0
        %1367 = vmatpush1.bf16.msra.mxu0 0
        %1368 = vmatprep.subr.bf16.mxu0 0
        %1369 = vmatpush1.bf16.msra.mxu0 0
        %1370 = vmatprep.mubr.bf16.mxu0 0
        %1371 = vmatmul.mubr.bf16.gmra.mrb[0].mxu0 %v496
        %v1372 = vpop.f32.mrb[0].mxu0
        %v1373 = vadd.f32 %v1276, %v1372
        %v1374 = vpop.f32.mrb[0].mxu0
        %v1375 = vpop.f32.mrb[0].mxu0
        %v1376 = vadd.f32 %v1279, %v1375
        %v1377 = vpop.f32.mrb[0].mxu0
        %1378 = vmatprep.mubr.bf16.mxu0 0
        %1379 = vmatmul.mubr.bf16.gmra.mrb[0].mxu0 %v499
        %v1380 = vpop.f32.mrb[0].mxu0
        %v1381 = vadd.f32 %v1284, %v1380
        %v1382 = vpop.f32.mrb[0].mxu0
        %v1383 = vpop.f32.mrb[0].mxu0
        %v1384 = vadd.f32 %v1287, %v1383
        %v1385 = vpop.f32.mrb[0].mxu0
        %1386 = vmatprep.mubr.bf16.mxu0 0
        %1387 = vmatmul.mubr.bf16.gmra.mrb[0].mxu0 %v502
        %v1388 = vpop.f32.mrb[0].mxu0
        %v1389 = vadd.f32 %v1292, %v1388
        %v1390 = vpop.f32.mrb[0].mxu0
        %v1391 = vpop.f32.mrb[0].mxu0
        %v1392 = vadd.f32 %v1295, %v1391
        %v1393 = vpop.f32.mrb[0].mxu0
        %1394 = vmatprep.mubr.bf16.mxu0 0
        %1395 = vmatmul.mubr.bf16.gmra.mrb[0].mxu0 %v505
        %v1396 = vpop.f32.mrb[0].mxu0
        %v1397 = vadd.f32 %v1300, %v1396
        %v1398 = vpop.f32.mrb[0].mxu0
        %v1399 = vpop.f32.mrb[0].mxu0
        %v1400 = vadd.f32 %v1303, %v1399
        %v1401 = vpop.f32.mrb[0].mxu0
        %1402 = vmatprep.mubr.bf16.mxu0 0
        %1403 = vmatmul.mubr.bf16.gmra.mrb[0].mxu0 %v508
        %v1404 = vpop.f32.mrb[0].mxu0
        %v1405 = vadd.f32 %v1308, %v1404
        %v1406 = vpop.f32.mrb[0].mxu0
        %v1407 = vpop.f32.mrb[0].mxu0
        %v1408 = vadd.f32 %v1311, %v1407
        %v1409 = vpop.f32.mrb[0].mxu0
        %1410 = vmatprep.mubr.bf16.mxu0 0
        %1411 = vmatmul.mubr.bf16.gmra.mrb[0].mxu0 %v511
        %v1412 = vpop.f32.mrb[0].mxu0
        %v1413 = vadd.f32 %v1316, %v1412
        %v1414 = vpop.f32.mrb[0].mxu0
        %v1415 = vpop.f32.mrb[0].mxu0
        %v1416 = vadd.f32 %v1319, %v1415
        %v1417 = vpop.f32.mrb[0].mxu0
        %1418 = vmatprep.mubr.bf16.mxu0 0
        %1419 = vmatmul.mubr.bf16.gmra.mrb[0].mxu0 %v514
        %v1420 = vpop.f32.mrb[0].mxu0
        %v1421 = vadd.f32 %v1324, %v1420
        %v1422 = vpop.f32.mrb[0].mxu0
        %v1423 = vpop.f32.mrb[0].mxu0
        %v1424 = vadd.f32 %v1327, %v1423
        %v1425 = vpop.f32.mrb[0].mxu0
        %1426 = vmatprep.mubr.bf16.mxu0 0
        %1427 = vmatmul.mubr.bf16.gmra.mrb[0].mxu0 %v517
        %v1428 = vpop.f32.mrb[0].mxu0
        %v1429 = vadd.f32 %v1332, %v1428
        %v1430 = vpop.f32.mrb[0].mxu0
        %v1431 = vpop.f32.mrb[0].mxu0
        %v1432 = vadd.f32 %v1335, %v1431
        %v1433 = vpop.f32.mrb[0].mxu0
        %1434 = vdwg.mxu0
        %v1435 = vmax.f32 %v1163, 0.0
        %v1436 = vmax.f32 %v1165, 0.0
        %v1437 = vmax.f32 %v1373, 0.0
        %v1438 = vmax.f32 %v1167, 0.0
        %v1439 = vmax.f32 %v1169, 0.0
        %v1440 = vmax.f32 %v1376, 0.0
        %v1441 = vmax.f32 %v1173, 0.0
        %v1442 = vmax.f32 %v1175, 0.0
        %v1443 = vmax.f32 %v1381, 0.0
        %v1444 = vmax.f32 %v1177, 0.0
        %v1445 = vmax.f32 %v1179, 0.0
        %v1446 = vmax.f32 %v1384, 0.0
        %v1447 = vmax.f32 %v1183, 0.0
        %v1448 = vmax.f32 %v1185, 0.0
        %v1449 = vmax.f32 %v1389, 0.0
        %v1450 = vmax.f32 %v1187, 0.0
        %v1451 = vmax.f32 %v1189, 0.0
        %v1452 = vmax.f32 %v1392, 0.0
        %v1453 = vmax.f32 %v1193, 0.0
        %v1454 = vmax.f32 %v1195, 0.0
        %v1455 = vmax.f32 %v1397, 0.0
        %v1456 = vmax.f32 %v1197, 0.0
        %v1457 = vmax.f32 %v1199, 0.0
        %v1458 = vmax.f32 %v1400, 0.0
        %v1459 = vmax.f32 %v1203, 0.0
        %v1460 = vmax.f32 %v1205, 0.0
        %v1461 = vmax.f32 %v1405, 0.0
        %v1462 = vmax.f32 %v1207, 0.0
        %v1463 = vmax.f32 %v1209, 0.0
        %v1464 = vmax.f32 %v1408, 0.0
        %v1465 = vmax.f32 %v1213, 0.0
        %v1466 = vmax.f32 %v1215, 0.0
        %v1467 = vmax.f32 %v1413, 0.0
        %v1468 = vmax.f32 %v1217, 0.0
        %v1469 = vmax.f32 %v1219, 0.0
        %v1470 = vmax.f32 %v1416, 0.0
        %v1471 = vmax.f32 %v1223, 0.0
        %v1472 = vmax.f32 %v1225, 0.0
        %v1473 = vmax.f32 %v1421, 0.0
        %v1474 = vmax.f32 %v1227, 0.0
        %v1475 = vmax.f32 %v1229, 0.0
        %v1476 = vmax.f32 %v1424, 0.0
        %v1477 = vmax.f32 %v1233, 0.0
        %v1478 = vmax.f32 %v1235, 0.0
        %v1479 = vmax.f32 %v1429, 0.0
        %v1480 = vmax.f32 %v1237, 0.0
        %v1481 = vmax.f32 %v1239, 0.0
        %v1482 = vmax.f32 %v1432, 0.0
        %vm1483 = vcmask 785408
        %1484 = vst.msk [vmem:[%s436] sm:$0xff] %vm1483, %v1437
        %1485 = vst.msk [vmem:[%s436 + $0x18] sm:$0xff] %vm1483, %v1440
        %1486 = vst.msk [vmem:[%s436 + $0x30] sm:$0xff] %vm1483, %v1443
        %1487 = vst.msk [vmem:[%s436 + $0x48] sm:$0xff] %vm1483, %v1446
        %1488 = vst.msk [vmem:[%s436 + $0x60] sm:$0xff] %vm1483, %v1449
        %1489 = vst.msk [vmem:[%s436 + $0x78] sm:$0xff] %vm1483, %v1452
        %1490 = vst.msk [vmem:[%s436 + $0x90] sm:$0xff] %vm1483, %v1455
        %1491 = vst.msk [vmem:[%s436 + $0xa8] sm:$0xff] %vm1483, %v1458
        %1492 = vst.msk [vmem:[%s436 + $0xc0] sm:$0xff] %vm1483, %v1461
        %1493 = vst.msk [vmem:[%s436 + $0xd8] sm:$0xff] %vm1483, %v1464
        %1494 = vst.msk [vmem:[%s436 + $0xf0] sm:$0xff] %vm1483, %v1467
        %1495 = vst.msk [vmem:[%s436 + $0x108] sm:$0xff] %vm1483, %v1470
        %1496 = vst.msk [vmem:[%s436 + $0x120] sm:$0xff] %vm1483, %v1473
        %1497 = vst.msk [vmem:[%s436 + $0x138] sm:$0xff] %vm1483, %v1476
        %1498 = vst.msk [vmem:[%s436 + $0x150] sm:$0xff] %vm1483, %v1479
        %1499 = vst.msk [vmem:[%s436 + $0x168] sm:$0xff] %vm1483, %v1482
        %v1500 = vld [vmem:[%s1] sm:$0xff]
        %v1501 = vld [vmem:[%s1 + $0x8] sm:$0xff]
        %v1502 = vld [vmem:[%s1 + $0x10] sm:$0xff]
        %v1503 = vld [vmem:[%s1 + $0x18] sm:$0xff]
        %v1504 = vld [vmem:[%s1 + $0x20] sm:$0xff]
        %v1505 = vld [vmem:[%s1 + $0x28] sm:$0xff]
        %v1506 = vld [vmem:[%s1 + $0x30] sm:$0xff]
        %v1507 = vld [vmem:[%s1 + $0x38] sm:$0xff]
        %v1508 = vld [vmem:[%s1 + $0x40] sm:$0xff]
        %v1509 = vld [vmem:[%s1 + $0x48] sm:$0xff]
        %v1510 = vld [vmem:[%s1 + $0x50] sm:$0xff]
        %v1511 = vld [vmem:[%s1 + $0x58] sm:$0xff]
        %v1512 = vld [vmem:[%s1 + $0x60] sm:$0xff]
        %v1513 = vld [vmem:[%s1 + $0x68] sm:$0xff]
        %v1514 = vld [vmem:[%s1 + $0x70] sm:$0xff]
        %v1515 = vld [vmem:[%s1 + $0x78] sm:$0xff]
        %vm1531 = vcmask 1040384
        %v1532 = vrot.slane %v1435, 7
        %v1533 = vrot.slane %v1438, 7
        %v1534 = vsel %vm1531, %v1532, %v1533
        %v1535 = vrot.slane %v1441, 7
        %v1536 = vsel %vm1531, %v1533, %v1535
        %v1537 = vrot.slane %v1444, 7
        %v1538 = vsel %vm1531, %v1535, %v1537
        %v1539 = vrot.slane %v1447, 7
        %v1540 = vsel %vm1531, %v1537, %v1539
        %v1541 = vrot.slane %v1450, 7
        %v1542 = vsel %vm1531, %v1539, %v1541
        %v1543 = vrot.slane %v1453, 7
        %v1544 = vsel %vm1531, %v1541, %v1543
        %v1545 = vrot.slane %v1456, 7
        %v1546 = vsel %vm1531, %v1543, %v1545
        %v1547 = vrot.slane %v1459, 7
        %v1548 = vsel %vm1531, %v1545, %v1547
        %v1549 = vrot.slane %v1462, 7
        %v1550 = vsel %vm1531, %v1547, %v1549
        %v1551 = vrot.slane %v1465, 7
        %v1552 = vsel %vm1531, %v1549, %v1551
        %v1553 = vrot.slane %v1468, 7
        %v1554 = vsel %vm1531, %v1551, %v1553
        %v1555 = vrot.slane %v1471, 7
        %v1556 = vsel %vm1531, %v1553, %v1555
        %v1557 = vrot.slane %v1474, 7
        %v1558 = vsel %vm1531, %v1555, %v1557
        %v1559 = vrot.slane %v1477, 7
        %v1560 = vsel %vm1531, %v1557, %v1559
        %v1576 = vsel %vm1531, 0.0, %v1532
        %1578 = vset.pattern.permute.xlu0 0
        %1579 = vperm.xlu0 %1578, %v1500
        %v1580 = vpop.permute.xlu0 %1579
        %1583 = vset.pattern.permute.xlu0 0
        %1584 = vperm.xlu0 %1583, %v1501
        %v1585 = vpop.permute.xlu0 %1584
        %1588 = vset.pattern.permute.xlu0 0
        %1589 = vperm.xlu0 %1588, %v1502
        %v1590 = vpop.permute.xlu0 %1589
        %1593 = vset.pattern.permute.xlu0 0
        %1594 = vperm.xlu0 %1593, %v1503
        %v1595 = vpop.permute.xlu0 %1594
        %1598 = vset.pattern.permute.xlu0 0
        %1599 = vperm.xlu0 %1598, %v1504
        %v1600 = vpop.permute.xlu0 %1599
        %1603 = vset.pattern.permute.xlu0 0
        %1604 = vperm.xlu0 %1603, %v1505
        %v1605 = vpop.permute.xlu0 %1604
        %1608 = vset.pattern.permute.xlu0 0
        %1609 = vperm.xlu0 %1608, %v1506
        %v1610 = vpop.permute.xlu0 %1609
        %1613 = vset.pattern.permute.xlu0 0
        %1614 = vperm.xlu0 %1613, %v1507
        %v1615 = vpop.permute.xlu0 %1614
        %1618 = vset.pattern.permute.xlu0 0
        %1619 = vperm.xlu0 %1618, %v1508
        %v1620 = vpop.permute.xlu0 %1619
        %1623 = vset.pattern.permute.xlu0 0
        %1624 = vperm.xlu0 %1623, %v1509
        %v1625 = vpop.permute.xlu0 %1624
        %1628 = vset.pattern.permute.xlu0 0
        %1629 = vperm.xlu0 %1628, %v1510
        %v1630 = vpop.permute.xlu0 %1629
        %1633 = vset.pattern.permute.xlu0 0
        %1634 = vperm.xlu0 %1633, %v1511
        %v1635 = vpop.permute.xlu0 %1634
        %1638 = vset.pattern.permute.xlu0 0
        %1639 = vperm.xlu0 %1638, %v1512
        %v1640 = vpop.permute.xlu0 %1639
        %1643 = vset.pattern.permute.xlu0 0
        %1644 = vperm.xlu0 %1643, %v1513
        %v1645 = vpop.permute.xlu0 %1644
        %1648 = vset.pattern.permute.xlu0 0
        %1649 = vperm.xlu0 %1648, %v1514
        %v1650 = vpop.permute.xlu0 %1649
        %1653 = vset.pattern.permute.xlu0 0
        %1654 = vperm.xlu0 %1653, %v1515
        %v1655 = vpop.permute.xlu0 %1654
        %v1657 = vmul.f32 %v1580, 0.0
        %v1658 = vmul.f32 %v1576, %v1585
        %v1659 = vmul.f32 %v1534, %v1590
        %v1660 = vmul.f32 %v1536, %v1595
        %v1661 = vmul.f32 %v1538, %v1600
        %v1662 = vmul.f32 %v1540, %v1605
        %v1663 = vmul.f32 %v1542, %v1610
        %v1664 = vmul.f32 %v1544, %v1615
        %v1665 = vmul.f32 %v1546, %v1620
        %v1666 = vmul.f32 %v1548, %v1625
        %v1667 = vmul.f32 %v1550, %v1630
        %v1668 = vmul.f32 %v1552, %v1635
        %v1669 = vmul.f32 %v1554, %v1640
        %v1670 = vmul.f32 %v1556, %v1645
        %v1671 = vmul.f32 %v1558, %v1650
        %v1672 = vmul.f32 %v1560, %v1655
        %v1673 = vpack.c.bf16 %v1658, %v1657
        %v1674 = vpack.c.bf16 %v1660, %v1659
        %v1675 = vpack.c.bf16 %v1662, %v1661
        %v1676 = vpack.c.bf16 %v1664, %v1663
        %v1677 = vpack.c.bf16 %v1666, %v1665
        %v1678 = vpack.c.bf16 %v1668, %v1667
        %v1679 = vpack.c.bf16 %v1670, %v1669
        %v1680 = vpack.c.bf16 %v1672, %v1671
        %1681 = vst [vmem:[#allocation2] sm:$0xff] %v1673
        %1682 = vst [vmem:[#allocation2 + $0x48] sm:$0xff] %v1674
        %1683 = vst [vmem:[#allocation2 + $0x90] sm:$0xff] %v1675
        %1684 = vst [vmem:[#allocation2 + $0xd8] sm:$0xff] %v1676
        %1685 = vst [vmem:[#allocation2 + $0x120] sm:$0xff] %v1677
        %1686 = vst [vmem:[#allocation2 + $0x168] sm:$0xff] %v1678
        %1687 = vst [vmem:[#allocation2 + $0x1b0] sm:$0xff] %v1679
        %1688 = vst [vmem:[#allocation2 + $0x1f8] sm:$0xff] %v1680
        %v1689 = vld [vmem:[%s1] sm:$0xff]
        %v1690 = vld [vmem:[%s1 + $0x8] sm:$0xff]
        %v1691 = vld [vmem:[%s1 + $0x10] sm:$0xff]
        %v1692 = vld [vmem:[%s1 + $0x18] sm:$0xff]
        %v1693 = vld [vmem:[%s1 + $0x20] sm:$0xff]
        %v1694 = vld [vmem:[%s1 + $0x28] sm:$0xff]
        %v1695 = vld [vmem:[%s1 + $0x30] sm:$0xff]
        %v1696 = vld [vmem:[%s1 + $0x38] sm:$0xff]
        %v1697 = vld [vmem:[%s1 + $0x40] sm:$0xff]
        %v1698 = vld [vmem:[%s1 + $0x48] sm:$0xff]
        %v1699 = vld [vmem:[%s1 + $0x50] sm:$0xff]
        %v1700 = vld [vmem:[%s1 + $0x58] sm:$0xff]
        %v1701 = vld [vmem:[%s1 + $0x60] sm:$0xff]
        %v1702 = vld [vmem:[%s1 + $0x68] sm:$0xff]
        %v1703 = vld [vmem:[%s1 + $0x70] sm:$0xff]
        %v1704 = vld [vmem:[%s1 + $0x78] sm:$0xff]
        %1706 = vset.pattern.permute.xlu0 1
        %1707 = vperm.xlu0 %1706, %v1689
        %v1708 = vpop.permute.xlu0 %1707
        %1711 = vset.pattern.permute.xlu0 1
        %1712 = vperm.xlu0 %1711, %v1690
        %v1713 = vpop.permute.xlu0 %1712
        %1716 = vset.pattern.permute.xlu0 1
        %1717 = vperm.xlu0 %1716, %v1691
        %v1718 = vpop.permute.xlu0 %1717
        %1721 = vset.pattern.permute.xlu0 1
        %1722 = vperm.xlu0 %1721, %v1692
        %v1723 = vpop.permute.xlu0 %1722
        %1726 = vset.pattern.permute.xlu0 1
        %1727 = vperm.xlu0 %1726, %v1693
        %v1728 = vpop.permute.xlu0 %1727
        %1731 = vset.pattern.permute.xlu0 1
        %1732 = vperm.xlu0 %1731, %v1694
        %v1733 = vpop.permute.xlu0 %1732
        %1736 = vset.pattern.permute.xlu0 1
        %1737 = vperm.xlu0 %1736, %v1695
        %v1738 = vpop.permute.xlu0 %1737
        %1741 = vset.pattern.permute.xlu0 1
        %1742 = vperm.xlu0 %1741, %v1696
        %v1743 = vpop.permute.xlu0 %1742
        %1746 = vset.pattern.permute.xlu0 1
        %1747 = vperm.xlu0 %1746, %v1697
        %v1748 = vpop.permute.xlu0 %1747
        %1751 = vset.pattern.permute.xlu0 1
        %1752 = vperm.xlu0 %1751, %v1698
        %v1753 = vpop.permute.xlu0 %1752
        %1756 = vset.pattern.permute.xlu0 1
        %1757 = vperm.xlu0 %1756, %v1699
        %v1758 = vpop.permute.xlu0 %1757
        %1761 = vset.pattern.permute.xlu0 1
        %1762 = vperm.xlu0 %1761, %v1700
        %v1763 = vpop.permute.xlu0 %1762
        %1766 = vset.pattern.permute.xlu0 1
        %1767 = vperm.xlu0 %1766, %v1701
        %v1768 = vpop.permute.xlu0 %1767
        %1771 = vset.pattern.permute.xlu0 1
        %1772 = vperm.xlu0 %1771, %v1702
        %v1773 = vpop.permute.xlu0 %1772
        %1776 = vset.pattern.permute.xlu0 1
        %1777 = vperm.xlu0 %1776, %v1703
        %v1778 = vpop.permute.xlu0 %1777
        %1781 = vset.pattern.permute.xlu0 1
        %1782 = vperm.xlu0 %1781, %v1704
        %v1783 = vpop.permute.xlu0 %1782
        %v1785 = vmul.f32 %v1708, 0.0
        %v1786 = vmul.f32 %v1435, %v1713
        %v1787 = vmul.f32 %v1438, %v1718
        %v1788 = vmul.f32 %v1441, %v1723
        %v1789 = vmul.f32 %v1444, %v1728
        %v1790 = vmul.f32 %v1447, %v1733
        %v1791 = vmul.f32 %v1450, %v1738
        %v1792 = vmul.f32 %v1453, %v1743
        %v1793 = vmul.f32 %v1456, %v1748
        %v1794 = vmul.f32 %v1459, %v1753
        %v1795 = vmul.f32 %v1462, %v1758
        %v1796 = vmul.f32 %v1465, %v1763
        %v1797 = vmul.f32 %v1468, %v1768
        %v1798 = vmul.f32 %v1471, %v1773
        %v1799 = vmul.f32 %v1474, %v1778
        %v1800 = vmul.f32 %v1477, %v1783
        %v1801 = vpack.c.bf16 %v1786, %v1785
        %v1802 = vpack.c.bf16 %v1788, %v1787
        %v1803 = vpack.c.bf16 %v1790, %v1789
        %v1804 = vpack.c.bf16 %v1792, %v1791
        %v1805 = vpack.c.bf16 %v1794, %v1793
        %v1806 = vpack.c.bf16 %v1796, %v1795
        %v1807 = vpack.c.bf16 %v1798, %v1797
        %v1808 = vpack.c.bf16 %v1800, %v1799
        %1809 = vst [vmem:[#allocation2 + $0x8] sm:$0xff] %v1801
        %1810 = vst [vmem:[#allocation2 + $0x50] sm:$0xff] %v1802
        %1811 = vst [vmem:[#allocation2 + $0x98] sm:$0xff] %v1803
        %1812 = vst [vmem:[#allocation2 + $0xe0] sm:$0xff] %v1804
        %1813 = vst [vmem:[#allocation2 + $0x128] sm:$0xff] %v1805
        %1814 = vst [vmem:[#allocation2 + $0x170] sm:$0xff] %v1806
        %1815 = vst [vmem:[#allocation2 + $0x1b8] sm:$0xff] %v1807
        %1816 = vst [vmem:[#allocation2 + $0x200] sm:$0xff] %v1808
        %v1817 = vld [vmem:[%s1] sm:$0xff]
        %v1818 = vld [vmem:[%s1 + $0x8] sm:$0xff]
        %v1819 = vld [vmem:[%s1 + $0x10] sm:$0xff]
        %v1820 = vld [vmem:[%s1 + $0x18] sm:$0xff]
        %v1821 = vld [vmem:[%s1 + $0x20] sm:$0xff]
        %v1822 = vld [vmem:[%s1 + $0x28] sm:$0xff]
        %v1823 = vld [vmem:[%s1 + $0x30] sm:$0xff]
        %v1824 = vld [vmem:[%s1 + $0x38] sm:$0xff]
        %v1825 = vld [vmem:[%s1 + $0x40] sm:$0xff]
        %v1826 = vld [vmem:[%s1 + $0x48] sm:$0xff]
        %v1827 = vld [vmem:[%s1 + $0x50] sm:$0xff]
        %v1828 = vld [vmem:[%s1 + $0x58] sm:$0xff]
        %v1829 = vld [vmem:[%s1 + $0x60] sm:$0xff]
        %v1830 = vld [vmem:[%s1 + $0x68] sm:$0xff]
        %v1831 = vld [vmem:[%s1 + $0x70] sm:$0xff]
        %v1832 = vld [vmem:[%s1 + $0x78] sm:$0xff]
        %vm1834 = vcmask 1046528
        %v1835 = vrot.slane %v1435, 1
        %v1836 = vrot.slane %v1438, 1
        %v1837 = vsel %vm1834, %v1835, %v1836
        %v1838 = vrot.slane %v1441, 1
        %v1839 = vsel %vm1834, %v1836, %v1838
        %v1840 = vrot.slane %v1444, 1
        %v1841 = vsel %vm1834, %v1838, %v1840
        %v1842 = vrot.slane %v1447, 1
        %v1843 = vsel %vm1834, %v1840, %v1842
        %v1844 = vrot.slane %v1450, 1
        %v1845 = vsel %vm1834, %v1842, %v1844
        %v1846 = vrot.slane %v1453, 1
        %v1847 = vsel %vm1834, %v1844, %v1846
        %v1848 = vrot.slane %v1456, 1
        %v1849 = vsel %vm1834, %v1846, %v1848
        %v1850 = vrot.slane %v1459, 1
        %v1851 = vsel %vm1834, %v1848, %v1850
        %v1852 = vrot.slane %v1462, 1
        %v1853 = vsel %vm1834, %v1850, %v1852
        %v1854 = vrot.slane %v1465, 1
        %v1855 = vsel %vm1834, %v1852, %v1854
        %v1856 = vrot.slane %v1468, 1
        %v1857 = vsel %vm1834, %v1854, %v1856
        %v1858 = vrot.slane %v1471, 1
        %v1859 = vsel %vm1834, %v1856, %v1858
        %v1860 = vrot.slane %v1474, 1
        %v1861 = vsel %vm1834, %v1858, %v1860
        %v1862 = vrot.slane %v1477, 1
        %v1863 = vsel %vm1834, %v1860, %v1862
        %v1864 = vrot.slane %v1480, 1
        %v1865 = vsel %vm1834, %v1862, %v1864
        %v1882 = vsel %vm1834, 0.0, %v1835
        %1884 = vset.pattern.permute.xlu0 2
        %1885 = vperm.xlu0 %1884, %v1817
        %v1886 = vpop.permute.xlu0 %1885
        %1889 = vset.pattern.permute.xlu0 2
        %1890 = vperm.xlu0 %1889, %v1818
        %v1891 = vpop.permute.xlu0 %1890
        %1894 = vset.pattern.permute.xlu0 2
        %1895 = vperm.xlu0 %1894, %v1819
        %v1896 = vpop.permute.xlu0 %1895
        %1899 = vset.pattern.permute.xlu0 2
        %1900 = vperm.xlu0 %1899, %v1820
        %v1901 = vpop.permute.xlu0 %1900
        %1904 = vset.pattern.permute.xlu0 2
        %1905 = vperm.xlu0 %1904, %v1821
        %v1906 = vpop.permute.xlu0 %1905
        %1909 = vset.pattern.permute.xlu0 2
        %1910 = vperm.xlu0 %1909, %v1822
        %v1911 = vpop.permute.xlu0 %1910
        %1914 = vset.pattern.permute.xlu0 2
        %1915 = vperm.xlu0 %1914, %v1823
        %v1916 = vpop.permute.xlu0 %1915
        %1919 = vset.pattern.permute.xlu0 2
        %1920 = vperm.xlu0 %1919, %v1824
        %v1921 = vpop.permute.xlu0 %1920
        %1924 = vset.pattern.permute.xlu0 2
        %1925 = vperm.xlu0 %1924, %v1825
        %v1926 = vpop.permute.xlu0 %1925
        %1929 = vset.pattern.permute.xlu0 2
        %1930 = vperm.xlu0 %1929, %v1826
        %v1931 = vpop.permute.xlu0 %1930
        %1934 = vset.pattern.permute.xlu0 2
        %1935 = vperm.xlu0 %1934, %v1827
        %v1936 = vpop.permute.xlu0 %1935
        %1939 = vset.pattern.permute.xlu0 2
        %1940 = vperm.xlu0 %1939, %v1828
        %v1941 = vpop.permute.xlu0 %1940
        %1944 = vset.pattern.permute.xlu0 2
        %1945 = vperm.xlu0 %1944, %v1829
        %v1946 = vpop.permute.xlu0 %1945
        %1949 = vset.pattern.permute.xlu0 2
        %1950 = vperm.xlu0 %1949, %v1830
        %v1951 = vpop.permute.xlu0 %1950
        %1954 = vset.pattern.permute.xlu0 2
        %1955 = vperm.xlu0 %1954, %v1831
        %v1956 = vpop.permute.xlu0 %1955
        %1959 = vset.pattern.permute.xlu0 2
        %1960 = vperm.xlu0 %1959, %v1832
        %v1961 = vpop.permute.xlu0 %1960
        %v1963 = vmul.f32 %v1882, %v1886
        %v1964 = vmul.f32 %v1837, %v1891
        %v1965 = vmul.f32 %v1839, %v1896
        %v1966 = vmul.f32 %v1841, %v1901
        %v1967 = vmul.f32 %v1843, %v1906
        %v1968 = vmul.f32 %v1845, %v1911
        %v1969 = vmul.f32 %v1847, %v1916
        %v1970 = vmul.f32 %v1849, %v1921
        %v1971 = vmul.f32 %v1851, %v1926
        %v1972 = vmul.f32 %v1853, %v1931
        %v1973 = vmul.f32 %v1855, %v1936
        %v1974 = vmul.f32 %v1857, %v1941
        %v1975 = vmul.f32 %v1859, %v1946
        %v1976 = vmul.f32 %v1861, %v1951
        %v1977 = vmul.f32 %v1863, %v1956
        %v1978 = vmul.f32 %v1865, %v1961
        %v1979 = vpack.c.bf16 %v1964, %v1963
        %v1980 = vpack.c.bf16 %v1966, %v1965
        %v1981 = vpack.c.bf16 %v1968, %v1967
        %v1982 = vpack.c.bf16 %v1970, %v1969
        %v1983 = vpack.c.bf16 %v1972, %v1971
        %v1984 = vpack.c.bf16 %v1974, %v1973
        %v1985 = vpack.c.bf16 %v1976, %v1975
        %v1986 = vpack.c.bf16 %v1978, %v1977
        %1987 = vst [vmem:[#allocation2 + $0x10] sm:$0xff] %v1979
        %1988 = vst [vmem:[#allocation2 + $0x58] sm:$0xff] %v1980
        %1989 = vst [vmem:[#allocation2 + $0xa0] sm:$0xff] %v1981
        %1990 = vst [vmem:[#allocation2 + $0xe8] sm:$0xff] %v1982
        %1991 = vst [vmem:[#allocation2 + $0x130] sm:$0xff] %v1983
        %1992 = vst [vmem:[#allocation2 + $0x178] sm:$0xff] %v1984
        %1993 = vst [vmem:[#allocation2 + $0x1c0] sm:$0xff] %v1985
        %1994 = vst [vmem:[#allocation2 + $0x208] sm:$0xff] %v1986
        %v1995 = vld [vmem:[%s1] sm:$0xff]
        %v1996 = vld [vmem:[%s1 + $0x8] sm:$0xff]
        %v1997 = vld [vmem:[%s1 + $0x10] sm:$0xff]
        %v1998 = vld [vmem:[%s1 + $0x18] sm:$0xff]
        %v1999 = vld [vmem:[%s1 + $0x20] sm:$0xff]
        %v2000 = vld [vmem:[%s1 + $0x28] sm:$0xff]
        %v2001 = vld [vmem:[%s1 + $0x30] sm:$0xff]
        %v2002 = vld [vmem:[%s1 + $0x38] sm:$0xff]
        %v2003 = vld [vmem:[%s1 + $0x40] sm:$0xff]
        %v2004 = vld [vmem:[%s1 + $0x48] sm:$0xff]
        %v2005 = vld [vmem:[%s1 + $0x50] sm:$0xff]
        %v2006 = vld [vmem:[%s1 + $0x58] sm:$0xff]
        %v2007 = vld [vmem:[%s1 + $0x60] sm:$0xff]
        %v2008 = vld [vmem:[%s1 + $0x68] sm:$0xff]
        %v2009 = vld [vmem:[%s1 + $0x70] sm:$0xff]
        %v2010 = vld [vmem:[%s1 + $0x78] sm:$0xff]
        %v2011 = vrot.slane %v1480, 7
        %v2012 = vsel %vm1531, %v1559, %v2011
        %2015 = vset.pattern.permute.xlu0 3
        %2016 = vperm.xlu0 %2015, %v1995
        %v2017 = vpop.permute.xlu0 %2016
        %2020 = vset.pattern.permute.xlu0 3
        %2021 = vperm.xlu0 %2020, %v1996
        %v2022 = vpop.permute.xlu0 %2021
        %2025 = vset.pattern.permute.xlu0 3
        %2026 = vperm.xlu0 %2025, %v1997
        %v2027 = vpop.permute.xlu0 %2026
        %2030 = vset.pattern.permute.xlu0 3
        %2031 = vperm.xlu0 %2030, %v1998
        %v2032 = vpop.permute.xlu0 %2031
        %2035 = vset.pattern.permute.xlu0 3
        %2036 = vperm.xlu0 %2035, %v1999
        %v2037 = vpop.permute.xlu0 %2036
        %2040 = vset.pattern.permute.xlu0 3
        %2041 = vperm.xlu0 %2040, %v2000
        %v2042 = vpop.permute.xlu0 %2041
        %2045 = vset.pattern.permute.xlu0 3
        %2046 = vperm.xlu0 %2045, %v2001
        %v2047 = vpop.permute.xlu0 %2046
        %2050 = vset.pattern.permute.xlu0 3
        %2051 = vperm.xlu0 %2050, %v2002
        %v2052 = vpop.permute.xlu0 %2051
        %2055 = vset.pattern.permute.xlu0 3
        %2056 = vperm.xlu0 %2055, %v2003
        %v2057 = vpop.permute.xlu0 %2056
        %2060 = vset.pattern.permute.xlu0 3
        %2061 = vperm.xlu0 %2060, %v2004
        %v2062 = vpop.permute.xlu0 %2061
        %2065 = vset.pattern.permute.xlu0 3
        %2066 = vperm.xlu0 %2065, %v2005
        %v2067 = vpop.permute.xlu0 %2066
        %2070 = vset.pattern.permute.xlu0 3
        %2071 = vperm.xlu0 %2070, %v2006
        %v2072 = vpop.permute.xlu0 %2071
        %2075 = vset.pattern.permute.xlu0 3
        %2076 = vperm.xlu0 %2075, %v2007
        %v2077 = vpop.permute.xlu0 %2076
        %2080 = vset.pattern.permute.xlu0 3
        %2081 = vperm.xlu0 %2080, %v2008
        %v2082 = vpop.permute.xlu0 %2081
        %2085 = vset.pattern.permute.xlu0 3
        %2086 = vperm.xlu0 %2085, %v2009
        %v2087 = vpop.permute.xlu0 %2086
        %2090 = vset.pattern.permute.xlu0 3
        %2091 = vperm.xlu0 %2090, %v2010
        %v2092 = vpop.permute.xlu0 %2091
        %v2094 = vmul.f32 %v1576, %v2017
        %v2095 = vmul.f32 %v1534, %v2022
        %v2096 = vmul.f32 %v1536, %v2027
        %v2097 = vmul.f32 %v1538, %v2032
        %v2098 = vmul.f32 %v1540, %v2037
        %v2099 = vmul.f32 %v1542, %v2042
        %v2100 = vmul.f32 %v1544, %v2047
        %v2101 = vmul.f32 %v1546, %v2052
        %v2102 = vmul.f32 %v1548, %v2057
        %v2103 = vmul.f32 %v1550, %v2062
        %v2104 = vmul.f32 %v1552, %v2067
        %v2105 = vmul.f32 %v1554, %v2072
        %v2106 = vmul.f32 %v1556, %v2077
        %v2107 = vmul.f32 %v1558, %v2082
        %v2108 = vmul.f32 %v1560, %v2087
        %v2109 = vmul.f32 %v2012, %v2092
        %v2110 = vpack.c.bf16 %v2095, %v2094
        %v2111 = vpack.c.bf16 %v2097, %v2096
        %v2112 = vpack.c.bf16 %v2099, %v2098
        %v2113 = vpack.c.bf16 %v2101, %v2100
        %v2114 = vpack.c.bf16 %v2103, %v2102
        %v2115 = vpack.c.bf16 %v2105, %v2104
        %v2116 = vpack.c.bf16 %v2107, %v2106
        %v2117 = vpack.c.bf16 %v2109, %v2108
        %2118 = vst [vmem:[#allocation2 + $0x18] sm:$0xff] %v2110
        %2119 = vst [vmem:[#allocation2 + $0x60] sm:$0xff] %v2111
        %2120 = vst [vmem:[#allocation2 + $0xa8] sm:$0xff] %v2112
        %2121 = vst [vmem:[#allocation2 + $0xf0] sm:$0xff] %v2113
        %2122 = vst [vmem:[#allocation2 + $0x138] sm:$0xff] %v2114
        %2123 = vst [vmem:[#allocation2 + $0x180] sm:$0xff] %v2115
        %2124 = vst [vmem:[#allocation2 + $0x1c8] sm:$0xff] %v2116
        %2125 = vst [vmem:[#allocation2 + $0x210] sm:$0xff] %v2117
        %v2126 = vld [vmem:[%s1] sm:$0xff]
        %v2127 = vld [vmem:[%s1 + $0x8] sm:$0xff]
        %v2128 = vld [vmem:[%s1 + $0x10] sm:$0xff]
        %v2129 = vld [vmem:[%s1 + $0x18] sm:$0xff]
        %v2130 = vld [vmem:[%s1 + $0x20] sm:$0xff]
        %v2131 = vld [vmem:[%s1 + $0x28] sm:$0xff]
        %v2132 = vld [vmem:[%s1 + $0x30] sm:$0xff]
        %v2133 = vld [vmem:[%s1 + $0x38] sm:$0xff]
        %v2134 = vld [vmem:[%s1 + $0x40] sm:$0xff]
        %v2135 = vld [vmem:[%s1 + $0x48] sm:$0xff]
        %v2136 = vld [vmem:[%s1 + $0x50] sm:$0xff]
        %v2137 = vld [vmem:[%s1 + $0x58] sm:$0xff]
        %v2138 = vld [vmem:[%s1 + $0x60] sm:$0xff]
        %v2139 = vld [vmem:[%s1 + $0x68] sm:$0xff]
        %v2140 = vld [vmem:[%s1 + $0x70] sm:$0xff]
        %v2141 = vld [vmem:[%s1 + $0x78] sm:$0xff]
        %2143 = vset.pattern.permute.xlu0 4
        %2144 = vperm.xlu0 %2143, %v2126
        %v2145 = vpop.permute.xlu0 %2144
        %2148 = vset.pattern.permute.xlu0 4
        %2149 = vperm.xlu0 %2148, %v2127
        %v2150 = vpop.permute.xlu0 %2149
        %2153 = vset.pattern.permute.xlu0 4
        %2154 = vperm.xlu0 %2153, %v2128
        %v2155 = vpop.permute.xlu0 %2154
        %2158 = vset.pattern.permute.xlu0 4
        %2159 = vperm.xlu0 %2158, %v2129
        %v2160 = vpop.permute.xlu0 %2159
        %2163 = vset.pattern.permute.xlu0 4
        %2164 = vperm.xlu0 %2163, %v2130
        %v2165 = vpop.permute.xlu0 %2164
        %2168 = vset.pattern.permute.xlu0 4
        %2169 = vperm.xlu0 %2168, %v2131
        %v2170 = vpop.permute.xlu0 %2169
        %2173 = vset.pattern.permute.xlu0 4
        %2174 = vperm.xlu0 %2173, %v2132
        %v2175 = vpop.permute.xlu0 %2174
        %2178 = vset.pattern.permute.xlu0 4
        %2179 = vperm.xlu0 %2178, %v2133
        %v2180 = vpop.permute.xlu0 %2179
        %2183 = vset.pattern.permute.xlu0 4
        %2184 = vperm.xlu0 %2183, %v2134
        %v2185 = vpop.permute.xlu0 %2184
        %2188 = vset.pattern.permute.xlu0 4
        %2189 = vperm.xlu0 %2188, %v2135
        %v2190 = vpop.permute.xlu0 %2189
        %2193 = vset.pattern.permute.xlu0 4
        %2194 = vperm.xlu0 %2193, %v2136
        %v2195 = vpop.permute.xlu0 %2194
        %2198 = vset.pattern.permute.xlu0 4
        %2199 = vperm.xlu0 %2198, %v2137
        %v2200 = vpop.permute.xlu0 %2199
        %2203 = vset.pattern.permute.xlu0 4
        %2204 = vperm.xlu0 %2203, %v2138
        %v2205 = vpop.permute.xlu0 %2204
        %2208 = vset.pattern.permute.xlu0 4
        %2209 = vperm.xlu0 %2208, %v2139
        %v2210 = vpop.permute.xlu0 %2209
        %2213 = vset.pattern.permute.xlu0 4
        %2214 = vperm.xlu0 %2213, %v2140
        %v2215 = vpop.permute.xlu0 %2214
        %2218 = vset.pattern.permute.xlu0 4
        %2219 = vperm.xlu0 %2218, %v2141
        %v2220 = vpop.permute.xlu0 %2219
        %v2222 = vmul.f32 %v1435, %v2145
        %v2223 = vmul.f32 %v1438, %v2150
        %v2224 = vmul.f32 %v1441, %v2155
        %v2225 = vmul.f32 %v1444, %v2160
        %v2226 = vmul.f32 %v1447, %v2165
        %v2227 = vmul.f32 %v1450, %v2170
        %v2228 = vmul.f32 %v1453, %v2175
        %v2229 = vmul.f32 %v1456, %v2180
        %v2230 = vmul.f32 %v1459, %v2185
        %v2231 = vmul.f32 %v1462, %v2190
        %v2232 = vmul.f32 %v1465, %v2195
        %v2233 = vmul.f32 %v1468, %v2200
        %v2234 = vmul.f32 %v1471, %v2205
        %v2235 = vmul.f32 %v1474, %v2210
        %v2236 = vmul.f32 %v1477, %v2215
        %v2237 = vmul.f32 %v1480, %v2220
        %v2238 = vpack.c.bf16 %v2223, %v2222
        %v2239 = vpack.c.bf16 %v2225, %v2224
        %v2240 = vpack.c.bf16 %v2227, %v2226
        %v2241 = vpack.c.bf16 %v2229, %v2228
        %v2242 = vpack.c.bf16 %v2231, %v2230
        %v2243 = vpack.c.bf16 %v2233, %v2232
        %v2244 = vpack.c.bf16 %v2235, %v2234
        %v2245 = vpack.c.bf16 %v2237, %v2236
        %2246 = vst [vmem:[#allocation2 + $0x20] sm:$0xff] %v2238
        %2247 = vst [vmem:[#allocation2 + $0x68] sm:$0xff] %v2239
        %2248 = vst [vmem:[#allocation2 + $0xb0] sm:$0xff] %v2240
        %2249 = vst [vmem:[#allocation2 + $0xf8] sm:$0xff] %v2241
        %2250 = vst [vmem:[#allocation2 + $0x140] sm:$0xff] %v2242
        %2251 = vst [vmem:[#allocation2 + $0x188] sm:$0xff] %v2243
        %2252 = vst [vmem:[#allocation2 + $0x1d0] sm:$0xff] %v2244
        %2253 = vst [vmem:[#allocation2 + $0x218] sm:$0xff] %v2245
        %v2254 = vld [vmem:[%s1] sm:$0xff]
        %v2255 = vld [vmem:[%s1 + $0x8] sm:$0xff]
        %v2256 = vld [vmem:[%s1 + $0x10] sm:$0xff]
        %v2257 = vld [vmem:[%s1 + $0x18] sm:$0xff]
        %v2258 = vld [vmem:[%s1 + $0x20] sm:$0xff]
        %v2259 = vld [vmem:[%s1 + $0x28] sm:$0xff]
        %v2260 = vld [vmem:[%s1 + $0x30] sm:$0xff]
        %v2261 = vld [vmem:[%s1 + $0x38] sm:$0xff]
        %v2262 = vld [vmem:[%s1 + $0x40] sm:$0xff]
        %v2263 = vld [vmem:[%s1 + $0x48] sm:$0xff]
        %v2264 = vld [vmem:[%s1 + $0x50] sm:$0xff]
        %v2265 = vld [vmem:[%s1 + $0x58] sm:$0xff]
        %v2266 = vld [vmem:[%s1 + $0x60] sm:$0xff]
        %v2267 = vld [vmem:[%s1 + $0x68] sm:$0xff]
        %v2268 = vld [vmem:[%s1 + $0x70] sm:$0xff]
        %v2269 = vld [vmem:[%s1 + $0x78] sm:$0xff]
        %v2271 = vsel %vm1834, %v1864, 0.0
        %2273 = vset.pattern.permute.xlu0 5
        %2274 = vperm.xlu0 %2273, %v2254
        %v2275 = vpop.permute.xlu0 %2274
        %2278 = vset.pattern.permute.xlu0 5
        %2279 = vperm.xlu0 %2278, %v2255
        %v2280 = vpop.permute.xlu0 %2279
        %2283 = vset.pattern.permute.xlu0 5
        %2284 = vperm.xlu0 %2283, %v2256
        %v2285 = vpop.permute.xlu0 %2284
        %2288 = vset.pattern.permute.xlu0 5
        %2289 = vperm.xlu0 %2288, %v2257
        %v2290 = vpop.permute.xlu0 %2289
        %2293 = vset.pattern.permute.xlu0 5
        %2294 = vperm.xlu0 %2293, %v2258
        %v2295 = vpop.permute.xlu0 %2294
        %2298 = vset.pattern.permute.xlu0 5
        %2299 = vperm.xlu0 %2298, %v2259
        %v2300 = vpop.permute.xlu0 %2299
        %2303 = vset.pattern.permute.xlu0 5
        %2304 = vperm.xlu0 %2303, %v2260
        %v2305 = vpop.permute.xlu0 %2304
        %2308 = vset.pattern.permute.xlu0 5
        %2309 = vperm.xlu0 %2308, %v2261
        %v2310 = vpop.permute.xlu0 %2309
        %2313 = vset.pattern.permute.xlu0 5
        %2314 = vperm.xlu0 %2313, %v2262
        %v2315 = vpop.permute.xlu0 %2314
        %2318 = vset.pattern.permute.xlu0 5
        %2319 = vperm.xlu0 %2318, %v2263
        %v2320 = vpop.permute.xlu0 %2319
        %2323 = vset.pattern.permute.xlu0 5
        %2324 = vperm.xlu0 %2323, %v2264
        %v2325 = vpop.permute.xlu0 %2324
        %2328 = vset.pattern.permute.xlu0 5
        %2329 = vperm.xlu0 %2328, %v2265
        %v2330 = vpop.permute.xlu0 %2329
        %2333 = vset.pattern.permute.xlu0 5
        %2334 = vperm.xlu0 %2333, %v2266
        %v2335 = vpop.permute.xlu0 %2334
        %2338 = vset.pattern.permute.xlu0 5
        %2339 = vperm.xlu0 %2338, %v2267
        %v2340 = vpop.permute.xlu0 %2339
        %2343 = vset.pattern.permute.xlu0 5
        %2344 = vperm.xlu0 %2343, %v2268
        %v2345 = vpop.permute.xlu0 %2344
        %2348 = vset.pattern.permute.xlu0 5
        %2349 = vperm.xlu0 %2348, %v2269
        %v2350 = vpop.permute.xlu0 %2349
        %v2352 = vmul.f32 %v1837, %v2275
        %v2353 = vmul.f32 %v1839, %v2280
        %v2354 = vmul.f32 %v1841, %v2285
        %v2355 = vmul.f32 %v1843, %v2290
        %v2356 = vmul.f32 %v1845, %v2295
        %v2357 = vmul.f32 %v1847, %v2300
        %v2358 = vmul.f32 %v1849, %v2305
        %v2359 = vmul.f32 %v1851, %v2310
        %v2360 = vmul.f32 %v1853, %v2315
        %v2361 = vmul.f32 %v1855, %v2320
        %v2362 = vmul.f32 %v1857, %v2325
        %v2363 = vmul.f32 %v1859, %v2330
        %v2364 = vmul.f32 %v1861, %v2335
        %v2365 = vmul.f32 %v1863, %v2340
        %v2366 = vmul.f32 %v1865, %v2345
        %v2367 = vmul.f32 %v2271, %v2350
        %v2368 = vpack.c.bf16 %v2353, %v2352
        %v2369 = vpack.c.bf16 %v2355, %v2354
        %v2370 = vpack.c.bf16 %v2357, %v2356
        %v2371 = vpack.c.bf16 %v2359, %v2358
        %v2372 = vpack.c.bf16 %v2361, %v2360
        %v2373 = vpack.c.bf16 %v2363, %v2362
        %v2374 = vpack.c.bf16 %v2365, %v2364
        %v2375 = vpack.c.bf16 %v2367, %v2366
        %2376 = vst [vmem:[#allocation2 + $0x28] sm:$0xff] %v2368
        %2377 = vst [vmem:[#allocation2 + $0x70] sm:$0xff] %v2369
        %2378 = vst [vmem:[#allocation2 + $0xb8] sm:$0xff] %v2370
        %2379 = vst [vmem:[#allocation2 + $0x100] sm:$0xff] %v2371
        %2380 = vst [vmem:[#allocation2 + $0x148] sm:$0xff] %v2372
        %2381 = vst [vmem:[#allocation2 + $0x190] sm:$0xff] %v2373
        %2382 = vst [vmem:[#allocation2 + $0x1d8] sm:$0xff] %v2374
        %2383 = vst [vmem:[#allocation2 + $0x220] sm:$0xff] %v2375
        %v2384 = vld [vmem:[%s1] sm:$0xff]
        %v2385 = vld [vmem:[%s1 + $0x8] sm:$0xff]
        %v2386 = vld [vmem:[%s1 + $0x10] sm:$0xff]
        %v2387 = vld [vmem:[%s1 + $0x18] sm:$0xff]
        %v2388 = vld [vmem:[%s1 + $0x20] sm:$0xff]
        %v2389 = vld [vmem:[%s1 + $0x28] sm:$0xff]
        %v2390 = vld [vmem:[%s1 + $0x30] sm:$0xff]
        %v2391 = vld [vmem:[%s1 + $0x38] sm:$0xff]
        %v2392 = vld [vmem:[%s1 + $0x40] sm:$0xff]
        %v2393 = vld [vmem:[%s1 + $0x48] sm:$0xff]
        %v2394 = vld [vmem:[%s1 + $0x50] sm:$0xff]
        %v2395 = vld [vmem:[%s1 + $0x58] sm:$0xff]
        %v2396 = vld [vmem:[%s1 + $0x60] sm:$0xff]
        %v2397 = vld [vmem:[%s1 + $0x68] sm:$0xff]
        %v2398 = vld [vmem:[%s1 + $0x70] sm:$0xff]
        %v2399 = vld [vmem:[%s1 + $0x78] sm:$0xff]
        %v2401 = vsel %vm1531, %v2011, 0.0
        %2403 = vset.pattern.permute.xlu0 6
        %2404 = vperm.xlu0 %2403, %v2384
        %v2405 = vpop.permute.xlu0 %2404
        %2408 = vset.pattern.permute.xlu0 6
        %2409 = vperm.xlu0 %2408, %v2385
        %v2410 = vpop.permute.xlu0 %2409
        %2413 = vset.pattern.permute.xlu0 6
        %2414 = vperm.xlu0 %2413, %v2386
        %v2415 = vpop.permute.xlu0 %2414
        %2418 = vset.pattern.permute.xlu0 6
        %2419 = vperm.xlu0 %2418, %v2387
        %v2420 = vpop.permute.xlu0 %2419
        %2423 = vset.pattern.permute.xlu0 6
        %2424 = vperm.xlu0 %2423, %v2388
        %v2425 = vpop.permute.xlu0 %2424
        %2428 = vset.pattern.permute.xlu0 6
        %2429 = vperm.xlu0 %2428, %v2389
        %v2430 = vpop.permute.xlu0 %2429
        %2433 = vset.pattern.permute.xlu0 6
        %2434 = vperm.xlu0 %2433, %v2390
        %v2435 = vpop.permute.xlu0 %2434
        %2438 = vset.pattern.permute.xlu0 6
        %2439 = vperm.xlu0 %2438, %v2391
        %v2440 = vpop.permute.xlu0 %2439
        %2443 = vset.pattern.permute.xlu0 6
        %2444 = vperm.xlu0 %2443, %v2392
        %v2445 = vpop.permute.xlu0 %2444
        %2448 = vset.pattern.permute.xlu0 6
        %2449 = vperm.xlu0 %2448, %v2393
        %v2450 = vpop.permute.xlu0 %2449
        %2453 = vset.pattern.permute.xlu0 6
        %2454 = vperm.xlu0 %2453, %v2394
        %v2455 = vpop.permute.xlu0 %2454
        %2458 = vset.pattern.permute.xlu0 6
        %2459 = vperm.xlu0 %2458, %v2395
        %v2460 = vpop.permute.xlu0 %2459
        %2463 = vset.pattern.permute.xlu0 6
        %2464 = vperm.xlu0 %2463, %v2396
        %v2465 = vpop.permute.xlu0 %2464
        %2468 = vset.pattern.permute.xlu0 6
        %2469 = vperm.xlu0 %2468, %v2397
        %v2470 = vpop.permute.xlu0 %2469
        %2473 = vset.pattern.permute.xlu0 6
        %2474 = vperm.xlu0 %2473, %v2398
        %v2475 = vpop.permute.xlu0 %2474
        %2478 = vset.pattern.permute.xlu0 6
        %2479 = vperm.xlu0 %2478, %v2399
        %v2480 = vpop.permute.xlu0 %2479
        %v2482 = vmul.f32 %v1534, %v2405
        %v2483 = vmul.f32 %v1536, %v2410
        %v2484 = vmul.f32 %v1538, %v2415
        %v2485 = vmul.f32 %v1540, %v2420
        %v2486 = vmul.f32 %v1542, %v2425
        %v2487 = vmul.f32 %v1544, %v2430
        %v2488 = vmul.f32 %v1546, %v2435
        %v2489 = vmul.f32 %v1548, %v2440
        %v2490 = vmul.f32 %v1550, %v2445
        %v2491 = vmul.f32 %v1552, %v2450
        %v2492 = vmul.f32 %v1554, %v2455
        %v2493 = vmul.f32 %v1556, %v2460
        %v2494 = vmul.f32 %v1558, %v2465
        %v2495 = vmul.f32 %v1560, %v2470
        %v2496 = vmul.f32 %v2012, %v2475
        %v2497 = vmul.f32 %v2401, %v2480
        %v2498 = vpack.c.bf16 %v2483, %v2482
        %v2499 = vpack.c.bf16 %v2485, %v2484
        %v2500 = vpack.c.bf16 %v2487, %v2486
        %v2501 = vpack.c.bf16 %v2489, %v2488
        %v2502 = vpack.c.bf16 %v2491, %v2490
        %v2503 = vpack.c.bf16 %v2493, %v2492
        %v2504 = vpack.c.bf16 %v2495, %v2494
        %v2505 = vpack.c.bf16 %v2497, %v2496
        %2506 = vst [vmem:[#allocation2 + $0x30] sm:$0xff] %v2498
        %2507 = vst [vmem:[#allocation2 + $0x78] sm:$0xff] %v2499
        %2508 = vst [vmem:[#allocation2 + $0xc0] sm:$0xff] %v2500
        %2509 = vst [vmem:[#allocation2 + $0x108] sm:$0xff] %v2501
        %2510 = vst [vmem:[#allocation2 + $0x150] sm:$0xff] %v2502
        %2511 = vst [vmem:[#allocation2 + $0x198] sm:$0xff] %v2503
        %2512 = vst [vmem:[#allocation2 + $0x1e0] sm:$0xff] %v2504
        %2513 = vst [vmem:[#allocation2 + $0x228] sm:$0xff] %v2505
        %v2514 = vld [vmem:[%s1] sm:$0xff]
        %v2515 = vld [vmem:[%s1 + $0x8] sm:$0xff]
        %v2516 = vld [vmem:[%s1 + $0x10] sm:$0xff]
        %v2517 = vld [vmem:[%s1 + $0x18] sm:$0xff]
        %v2518 = vld [vmem:[%s1 + $0x20] sm:$0xff]
        %v2519 = vld [vmem:[%s1 + $0x28] sm:$0xff]
        %v2520 = vld [vmem:[%s1 + $0x30] sm:$0xff]
        %v2521 = vld [vmem:[%s1 + $0x38] sm:$0xff]
        %v2522 = vld [vmem:[%s1 + $0x40] sm:$0xff]
        %v2523 = vld [vmem:[%s1 + $0x48] sm:$0xff]
        %v2524 = vld [vmem:[%s1 + $0x50] sm:$0xff]
        %v2525 = vld [vmem:[%s1 + $0x58] sm:$0xff]
        %v2526 = vld [vmem:[%s1 + $0x60] sm:$0xff]
        %v2527 = vld [vmem:[%s1 + $0x68] sm:$0xff]
        %v2528 = vld [vmem:[%s1 + $0x70] sm:$0xff]
        %v2529 = vld [vmem:[%s1 + $0x78] sm:$0xff]
        %2531 = vset.pattern.permute.xlu0 7
        %2532 = vperm.xlu0 %2531, %v2514
        %v2533 = vpop.permute.xlu0 %2532
        %2536 = vset.pattern.permute.xlu0 7
        %2537 = vperm.xlu0 %2536, %v2515
        %v2538 = vpop.permute.xlu0 %2537
        %2541 = vset.pattern.permute.xlu0 7
        %2542 = vperm.xlu0 %2541, %v2516
        %v2543 = vpop.permute.xlu0 %2542
        %2546 = vset.pattern.permute.xlu0 7
        %2547 = vperm.xlu0 %2546, %v2517
        %v2548 = vpop.permute.xlu0 %2547
        %2551 = vset.pattern.permute.xlu0 7
        %2552 = vperm.xlu0 %2551, %v2518
        %v2553 = vpop.permute.xlu0 %2552
        %2556 = vset.pattern.permute.xlu0 7
        %2557 = vperm.xlu0 %2556, %v2519
        %v2558 = vpop.permute.xlu0 %2557
        %2561 = vset.pattern.permute.xlu0 7
        %2562 = vperm.xlu0 %2561, %v2520
        %v2563 = vpop.permute.xlu0 %2562
        %2566 = vset.pattern.permute.xlu0 7
        %2567 = vperm.xlu0 %2566, %v2521
        %v2568 = vpop.permute.xlu0 %2567
        %2571 = vset.pattern.permute.xlu0 7
        %2572 = vperm.xlu0 %2571, %v2522
        %v2573 = vpop.permute.xlu0 %2572
        %2576 = vset.pattern.permute.xlu0 7
        %2577 = vperm.xlu0 %2576, %v2523
        %v2578 = vpop.permute.xlu0 %2577
        %2581 = vset.pattern.permute.xlu0 7
        %2582 = vperm.xlu0 %2581, %v2524
        %v2583 = vpop.permute.xlu0 %2582
        %2586 = vset.pattern.permute.xlu0 7
        %2587 = vperm.xlu0 %2586, %v2525
        %v2588 = vpop.permute.xlu0 %2587
        %2591 = vset.pattern.permute.xlu0 7
        %2592 = vperm.xlu0 %2591, %v2526
        %v2593 = vpop.permute.xlu0 %2592
        %2596 = vset.pattern.permute.xlu0 7
        %2597 = vperm.xlu0 %2596, %v2527
        %v2598 = vpop.permute.xlu0 %2597
        %2601 = vset.pattern.permute.xlu0 7
        %2602 = vperm.xlu0 %2601, %v2528
        %v2603 = vpop.permute.xlu0 %2602
        %2606 = vset.pattern.permute.xlu0 7
        %2607 = vperm.xlu0 %2606, %v2529
        %v2608 = vpop.permute.xlu0 %2607
        %v2610 = vmul.f32 %v1438, %v2533
        %v2611 = vmul.f32 %v1441, %v2538
        %v2612 = vmul.f32 %v1444, %v2543
        %v2613 = vmul.f32 %v1447, %v2548
        %v2614 = vmul.f32 %v1450, %v2553
        %v2615 = vmul.f32 %v1453, %v2558
        %v2616 = vmul.f32 %v1456, %v2563
        %v2617 = vmul.f32 %v1459, %v2568
        %v2618 = vmul.f32 %v1462, %v2573
        %v2619 = vmul.f32 %v1465, %v2578
        %v2620 = vmul.f32 %v1468, %v2583
        %v2621 = vmul.f32 %v1471, %v2588
        %v2622 = vmul.f32 %v1474, %v2593
        %v2623 = vmul.f32 %v1477, %v2598
        %v2624 = vmul.f32 %v1480, %v2603
        %v2625 = vmul.f32 %v2608, 0.0
        %v2626 = vpack.c.bf16 %v2611, %v2610
        %v2627 = vpack.c.bf16 %v2613, %v2612
        %v2628 = vpack.c.bf16 %v2615, %v2614
        %v2629 = vpack.c.bf16 %v2617, %v2616
        %v2630 = vpack.c.bf16 %v2619, %v2618
        %v2631 = vpack.c.bf16 %v2621, %v2620
        %v2632 = vpack.c.bf16 %v2623, %v2622
        %v2633 = vpack.c.bf16 %v2625, %v2624
        %2634 = vst [vmem:[#allocation2 + $0x38] sm:$0xff] %v2626
        %2635 = vst [vmem:[#allocation2 + $0x80] sm:$0xff] %v2627
        %2636 = vst [vmem:[#allocation2 + $0xc8] sm:$0xff] %v2628
        %2637 = vst [vmem:[#allocation2 + $0x110] sm:$0xff] %v2629
        %2638 = vst [vmem:[#allocation2 + $0x158] sm:$0xff] %v2630
        %2639 = vst [vmem:[#allocation2 + $0x1a0] sm:$0xff] %v2631
        %2640 = vst [vmem:[#allocation2 + $0x1e8] sm:$0xff] %v2632
        %2641 = vst [vmem:[#allocation2 + $0x230] sm:$0xff] %v2633
        %v2642 = vld [vmem:[%s1] sm:$0xff]
        %v2643 = vld [vmem:[%s1 + $0x8] sm:$0xff]
        %v2644 = vld [vmem:[%s1 + $0x10] sm:$0xff]
        %v2645 = vld [vmem:[%s1 + $0x18] sm:$0xff]
        %v2646 = vld [vmem:[%s1 + $0x20] sm:$0xff]
        %v2647 = vld [vmem:[%s1 + $0x28] sm:$0xff]
        %v2648 = vld [vmem:[%s1 + $0x30] sm:$0xff]
        %v2649 = vld [vmem:[%s1 + $0x38] sm:$0xff]
        %v2650 = vld [vmem:[%s1 + $0x40] sm:$0xff]
        %v2651 = vld [vmem:[%s1 + $0x48] sm:$0xff]
        %v2652 = vld [vmem:[%s1 + $0x50] sm:$0xff]
        %v2653 = vld [vmem:[%s1 + $0x58] sm:$0xff]
        %v2654 = vld [vmem:[%s1 + $0x60] sm:$0xff]
        %v2655 = vld [vmem:[%s1 + $0x68] sm:$0xff]
        %v2656 = vld [vmem:[%s1 + $0x70] sm:$0xff]
        %v2657 = vld [vmem:[%s1 + $0x78] sm:$0xff]
        %2659 = vset.pattern.permute.xlu0 8
        %2660 = vperm.xlu0 %2659, %v2642
        %v2661 = vpop.permute.xlu0 %2660
        %2664 = vset.pattern.permute.xlu0 8
        %2665 = vperm.xlu0 %2664, %v2643
        %v2666 = vpop.permute.xlu0 %2665
        %2669 = vset.pattern.permute.xlu0 8
        %2670 = vperm.xlu0 %2669, %v2644
        %v2671 = vpop.permute.xlu0 %2670
        %2674 = vset.pattern.permute.xlu0 8
        %2675 = vperm.xlu0 %2674, %v2645
        %v2676 = vpop.permute.xlu0 %2675
        %2679 = vset.pattern.permute.xlu0 8
        %2680 = vperm.xlu0 %2679, %v2646
        %v2681 = vpop.permute.xlu0 %2680
        %2684 = vset.pattern.permute.xlu0 8
        %2685 = vperm.xlu0 %2684, %v2647
        %v2686 = vpop.permute.xlu0 %2685
        %2689 = vset.pattern.permute.xlu0 8
        %2690 = vperm.xlu0 %2689, %v2648
        %v2691 = vpop.permute.xlu0 %2690
        %2694 = vset.pattern.permute.xlu0 8
        %2695 = vperm.xlu0 %2694, %v2649
        %v2696 = vpop.permute.xlu0 %2695
        %2699 = vset.pattern.permute.xlu0 8
        %2700 = vperm.xlu0 %2699, %v2650
        %v2701 = vpop.permute.xlu0 %2700
        %2704 = vset.pattern.permute.xlu0 8
        %2705 = vperm.xlu0 %2704, %v2651
        %v2706 = vpop.permute.xlu0 %2705
        %2709 = vset.pattern.permute.xlu0 8
        %2710 = vperm.xlu0 %2709, %v2652
        %v2711 = vpop.permute.xlu0 %2710
        %2714 = vset.pattern.permute.xlu0 8
        %2715 = vperm.xlu0 %2714, %v2653
        %v2716 = vpop.permute.xlu0 %2715
        %2719 = vset.pattern.permute.xlu0 8
        %2720 = vperm.xlu0 %2719, %v2654
        %v2721 = vpop.permute.xlu0 %2720
        %2724 = vset.pattern.permute.xlu0 8
        %2725 = vperm.xlu0 %2724, %v2655
        %v2726 = vpop.permute.xlu0 %2725
        %2729 = vset.pattern.permute.xlu0 8
        %2730 = vperm.xlu0 %2729, %v2656
        %v2731 = vpop.permute.xlu0 %2730
        %2734 = vset.pattern.permute.xlu0 8
        %2735 = vperm.xlu0 %2734, %v2657
        %v2736 = vpop.permute.xlu0 %2735
        %v2738 = vmul.f32 %v1839, %v2661
        %v2739 = vmul.f32 %v1841, %v2666
        %v2740 = vmul.f32 %v1843, %v2671
        %v2741 = vmul.f32 %v1845, %v2676
        %v2742 = vmul.f32 %v1847, %v2681
        %v2743 = vmul.f32 %v1849, %v2686
        %v2744 = vmul.f32 %v1851, %v2691
        %v2745 = vmul.f32 %v1853, %v2696
        %v2746 = vmul.f32 %v1855, %v2701
        %v2747 = vmul.f32 %v1857, %v2706
        %v2748 = vmul.f32 %v1859, %v2711
        %v2749 = vmul.f32 %v1861, %v2716
        %v2750 = vmul.f32 %v1863, %v2721
        %v2751 = vmul.f32 %v1865, %v2726
        %v2752 = vmul.f32 %v2271, %v2731
        %v2753 = vmul.f32 %v2736, 0.0
        %v2754 = vpack.c.bf16 %v2739, %v2738
        %v2755 = vpack.c.bf16 %v2741, %v2740
        %v2756 = vpack.c.bf16 %v2743, %v2742
        %v2757 = vpack.c.bf16 %v2745, %v2744
        %v2758 = vpack.c.bf16 %v2747, %v2746
        %v2759 = vpack.c.bf16 %v2749, %v2748
        %v2760 = vpack.c.bf16 %v2751, %v2750
        %v2761 = vpack.c.bf16 %v2753, %v2752
        %2762 = vst [vmem:[#allocation2 + $0x40] sm:$0xff] %v2754
        %2763 = vst [vmem:[#allocation2 + $0x88] sm:$0xff] %v2755
        %2764 = vst [vmem:[#allocation2 + $0xd0] sm:$0xff] %v2756
        %2765 = vst [vmem:[#allocation2 + $0x118] sm:$0xff] %v2757
        %2766 = vst [vmem:[#allocation2 + $0x160] sm:$0xff] %v2758
        %2767 = vst [vmem:[#allocation2 + $0x1a8] sm:$0xff] %v2759
        %2768 = vst [vmem:[#allocation2 + $0x1f0] sm:$0xff] %v2760
        %2769 = vst [vmem:[#allocation2 + $0x238] sm:$0xff] %v2761
        %v2770 = vld [vmem:[#allocation2] sm:$0xff]
        %v2771 = vld [vmem:[#allocation2 + $0x8] sm:$0xff]
        %v2772 = vld [vmem:[#allocation2 + $0x10] sm:$0xff]
        %v2773 = vld [vmem:[#allocation2 + $0x18] sm:$0xff]
        %v2774 = vld [vmem:[#allocation2 + $0x20] sm:$0xff]
        %v2775 = vld [vmem:[#allocation2 + $0x28] sm:$0xff]
        %v2776 = vld [vmem:[#allocation2 + $0x30] sm:$0xff]
        %v2777 = vld [vmem:[#allocation2 + $0x38] sm:$0xff]
        %v2778 = vld [vmem:[#allocation2 + $0x40] sm:$0xff]
        %v2779 = vld [vmem:[#allocation2 + $0x48] sm:$0xff]
        %v2780 = vld [vmem:[#allocation2 + $0x50] sm:$0xff]
        %v2781 = vld [vmem:[#allocation2 + $0x58] sm:$0xff]
        %v2782 = vld [vmem:[#allocation2 + $0x60] sm:$0xff]
        %v2783 = vld [vmem:[#allocation2 + $0x68] sm:$0xff]
        %v2784 = vld [vmem:[#allocation2 + $0x70] sm:$0xff]
        %v2785 = vld [vmem:[#allocation2 + $0x78] sm:$0xff]
        %v2786 = vld [vmem:[#allocation2 + $0x80] sm:$0xff]
        %v2787 = vld [vmem:[#allocation2 + $0x88] sm:$0xff]
        %v2788 = vld [vmem:[#allocation2 + $0x90] sm:$0xff]
        %v2789 = vld [vmem:[#allocation2 + $0x98] sm:$0xff]
        %v2790 = vld [vmem:[#allocation2 + $0xa0] sm:$0xff]
        %v2791 = vld [vmem:[#allocation2 + $0xa8] sm:$0xff]
        %v2792 = vld [vmem:[#allocation2 + $0xb0] sm:$0xff]
        %v2793 = vld [vmem:[#allocation2 + $0xb8] sm:$0xff]
        %v2794 = vld [vmem:[#allocation2 + $0xc0] sm:$0xff]
        %v2795 = vld [vmem:[#allocation2 + $0xc8] sm:$0xff]
        %v2796 = vld [vmem:[#allocation2 + $0xd0] sm:$0xff]
        %v2797 = vld [vmem:[#allocation2 + $0xd8] sm:$0xff]
        %v2798 = vld [vmem:[#allocation2 + $0xe0] sm:$0xff]
        %v2799 = vld [vmem:[#allocation2 + $0xe8] sm:$0xff]
        %v2800 = vld [vmem:[#allocation2 + $0xf0] sm:$0xff]
        %v2801 = vld [vmem:[#allocation2 + $0xf8] sm:$0xff]
        %v2802 = vld [vmem:[#allocation2 + $0x100] sm:$0xff]
        %v2803 = vld [vmem:[#allocation2 + $0x108] sm:$0xff]
        %v2804 = vld [vmem:[#allocation2 + $0x110] sm:$0xff]
        %v2805 = vld [vmem:[#allocation2 + $0x118] sm:$0xff]
        %v2806 = vld [vmem:[#allocation2 + $0x120] sm:$0xff]
        %v2807 = vld [vmem:[#allocation2 + $0x128] sm:$0xff]
        %v2808 = vld [vmem:[#allocation2 + $0x130] sm:$0xff]
        %v2809 = vld [vmem:[#allocation2 + $0x138] sm:$0xff]
        %v2810 = vld [vmem:[#allocation2 + $0x140] sm:$0xff]
        %v2811 = vld [vmem:[#allocation2 + $0x148] sm:$0xff]
        %v2812 = vld [vmem:[#allocation2 + $0x150] sm:$0xff]
        %v2813 = vld [vmem:[#allocation2 + $0x158] sm:$0xff]
        %v2814 = vld [vmem:[#allocation2 + $0x160] sm:$0xff]
        %v2815 = vld [vmem:[#allocation2 + $0x168] sm:$0xff]
        %v2816 = vld [vmem:[#allocation2 + $0x170] sm:$0xff]
        %v2817 = vld [vmem:[#allocation2 + $0x178] sm:$0xff]
        %v2818 = vld [vmem:[#allocation2 + $0x180] sm:$0xff]
        %v2819 = vld [vmem:[#allocation2 + $0x188] sm:$0xff]
        %v2820 = vld [vmem:[#allocation2 + $0x190] sm:$0xff]
        %v2821 = vld [vmem:[#allocation2 + $0x198] sm:$0xff]
        %v2822 = vld [vmem:[#allocation2 + $0x1a0] sm:$0xff]
        %v2823 = vld [vmem:[#allocation2 + $0x1a8] sm:$0xff]
        %v2824 = vld [vmem:[#allocation2 + $0x1b0] sm:$0xff]
        %v2825 = vld [vmem:[#allocation2 + $0x1b8] sm:$0xff]
        %v2826 = vld [vmem:[#allocation2 + $0x1c0] sm:$0xff]
        %v2827 = vld [vmem:[#allocation2 + $0x1c8] sm:$0xff]
        %v2828 = vld [vmem:[#allocation2 + $0x1d0] sm:$0xff]
        %v2829 = vld [vmem:[#allocation2 + $0x1d8] sm:$0xff]
        %v2830 = vld [vmem:[#allocation2 + $0x1e0] sm:$0xff]
        %v2831 = vld [vmem:[#allocation2 + $0x1e8] sm:$0xff]
        %v2832 = vld [vmem:[#allocation2 + $0x1f0] sm:$0xff]
        %v2833 = vld [vmem:[#allocation2 + $0x1f8] sm:$0xff]
        %v2834 = vld [vmem:[#allocation2 + $0x200] sm:$0xff]
        %v2835 = vld [vmem:[#allocation2 + $0x208] sm:$0xff]
        %v2836 = vld [vmem:[#allocation2 + $0x210] sm:$0xff]
        %v2837 = vld [vmem:[#allocation2 + $0x218] sm:$0xff]
        %v2838 = vld [vmem:[#allocation2 + $0x220] sm:$0xff]
        %v2839 = vld [vmem:[#allocation2 + $0x228] sm:$0xff]
        %v2840 = vld [vmem:[#allocation2 + $0x230] sm:$0xff]
        %v2841 = vld [vmem:[#allocation2 + $0x238] sm:$0xff]
        %v2842 = vld [vmem:[%s5] sm:$0xf]
        %v2843 = vld [vmem:[%s5 + $0x4] sm:$0xf]
        %v2844 = vld [vmem:[%s5 + $0x8] sm:$0xf]
        %v2845 = vld [vmem:[%s5 + $0xc] sm:$0xf]
        %v2846 = vld [vmem:[%s5 + $0x10] sm:$0xf]
        %v2847 = vld [vmem:[%s5 + $0x14] sm:$0xf]
        %v2848 = vld [vmem:[%s5 + $0x18] sm:$0xf]
        %v2849 = vld [vmem:[%s5 + $0x1c] sm:$0xf]
        %v2850 = vld [vmem:[%s5 + $0x20] sm:$0xf]
        %v2851 = vld [vmem:[%s5 + $0x24] sm:$0xf]
        %v2852 = vld [vmem:[%s5 + $0x28] sm:$0xf]
        %v2853 = vld [vmem:[%s5 + $0x2c] sm:$0xf]
        %v2854 = vld [vmem:[%s5 + $0x30] sm:$0xf]
        %v2855 = vld [vmem:[%s5 + $0x34] sm:$0xf]
        %v2856 = vld [vmem:[%s5 + $0x38] sm:$0xf]
        %v2857 = vld [vmem:[%s5 + $0x3c] sm:$0xf]
        %v2858 = vld [vmem:[%s5 + $0x40] sm:$0xf]
        %v2859 = vld [vmem:[%s5 + $0x44] sm:$0xf]
        %v2860 = vld [vmem:[%s5 + $0x48] sm:$0xf]
        %v2861 = vld [vmem:[%s5 + $0x4c] sm:$0xf]
        %v2862 = vld [vmem:[%s5 + $0x50] sm:$0xf]
        %v2863 = vld [vmem:[%s5 + $0x54] sm:$0xf]
        %v2864 = vld [vmem:[%s5 + $0x58] sm:$0xf]
        %v2865 = vld [vmem:[%s5 + $0x5c] sm:$0xf]
        %v2866 = vld [vmem:[%s5 + $0x60] sm:$0xf]
        %v2867 = vld [vmem:[%s5 + $0x64] sm:$0xf]
        %v2868 = vld [vmem:[%s5 + $0x68] sm:$0xf]
        %v2869 = vld [vmem:[%s5 + $0x6c] sm:$0xf]
        %v2870 = vld [vmem:[%s5 + $0x70] sm:$0xf]
        %v2871 = vld [vmem:[%s5 + $0x74] sm:$0xf]
        %v2872 = vld [vmem:[%s5 + $0x78] sm:$0xf]
        %v2873 = vld [vmem:[%s5 + $0x7c] sm:$0xf]
        %v2874 = vld [vmem:[%s5 + $0x80] sm:$0xf]
        %v2875 = vld [vmem:[%s5 + $0x84] sm:$0xf]
        %v2876 = vld [vmem:[%s5 + $0x88] sm:$0xf]
        %v2877 = vld [vmem:[%s5 + $0x8c] sm:$0xf]
        %v2878 = vld [vmem:[%s5 + $0x90] sm:$0xf]
        %v2879 = vld [vmem:[%s5 + $0x94] sm:$0xf]
        %v2880 = vld [vmem:[%s5 + $0x98] sm:$0xf]
        %v2881 = vld [vmem:[%s5 + $0x9c] sm:$0xf]
        %v2882 = vld [vmem:[%s5 + $0xa0] sm:$0xf]
        %v2883 = vld [vmem:[%s5 + $0xa4] sm:$0xf]
        %v2884 = vld [vmem:[%s5 + $0xa8] sm:$0xf]
        %v2885 = vld [vmem:[%s5 + $0xac] sm:$0xf]
        %v2886 = vld [vmem:[%s5 + $0xb0] sm:$0xf]
        %v2887 = vld [vmem:[%s5 + $0xb4] sm:$0xf]
        %v2888 = vld [vmem:[%s5 + $0xb8] sm:$0xf]
        %v2889 = vld [vmem:[%s5 + $0xbc] sm:$0xf]
        %v2890 = vld [vmem:[%s5 + $0xc0] sm:$0xf]
        %v2891 = vld [vmem:[%s5 + $0xc4] sm:$0xf]
        %v2892 = vld [vmem:[%s5 + $0xc8] sm:$0xf]
        %v2893 = vld [vmem:[%s5 + $0xcc] sm:$0xf]
        %v2894 = vld [vmem:[%s5 + $0xd0] sm:$0xf]
        %v2895 = vld [vmem:[%s5 + $0xd4] sm:$0xf]
        %v2896 = vld [vmem:[%s5 + $0xd8] sm:$0xf]
        %v2897 = vld [vmem:[%s5 + $0xdc] sm:$0xf]
        %v2898 = vld [vmem:[%s5 + $0xe0] sm:$0xf]
        %v2899 = vld [vmem:[%s5 + $0xe4] sm:$0xf]
        %v2900 = vld [vmem:[%s5 + $0xe8] sm:$0xf]
        %v2901 = vld [vmem:[%s5 + $0xec] sm:$0xf]
        %v2902 = vld [vmem:[%s5 + $0xf0] sm:$0xf]
        %v2903 = vld [vmem:[%s5 + $0xf4] sm:$0xf]
        %v2904 = vld [vmem:[%s5 + $0xf8] sm:$0xf]
        %v2905 = vld [vmem:[%s5 + $0xfc] sm:$0xf]
        %v2906 = vld [vmem:[%s5 + $0x100] sm:$0xf]
        %v2907 = vld [vmem:[%s5 + $0x104] sm:$0xf]
        %v2908 = vld [vmem:[%s5 + $0x108] sm:$0xf]
        %v2909 = vld [vmem:[%s5 + $0x10c] sm:$0xf]
        %v2910 = vld [vmem:[%s5 + $0x110] sm:$0xf]
        %v2911 = vld [vmem:[%s5 + $0x114] sm:$0xf]
        %v2912 = vld [vmem:[%s5 + $0x118] sm:$0xf]
        %v2913 = vld [vmem:[%s5 + $0x11c] sm:$0xf]
        %v2914 = vld [vmem:[%s5 + $0x120] sm:$0xf]
        %v2915 = vld [vmem:[%s5 + $0x124] sm:$0xf]
        %v2916 = vld [vmem:[%s5 + $0x128] sm:$0xf]
        %v2917 = vld [vmem:[%s5 + $0x12c] sm:$0xf]
        %v2918 = vld [vmem:[%s5 + $0x130] sm:$0xf]
        %v2919 = vld [vmem:[%s5 + $0x134] sm:$0xf]
        %v2920 = vld [vmem:[%s5 + $0x138] sm:$0xf]
        %v2921 = vld [vmem:[%s5 + $0x13c] sm:$0xf]
        %v2922 = vld [vmem:[%s5 + $0x140] sm:$0xf]
        %v2923 = vld [vmem:[%s5 + $0x144] sm:$0xf]
        %v2924 = vld [vmem:[%s5 + $0x148] sm:$0xf]
        %v2925 = vld [vmem:[%s5 + $0x14c] sm:$0xf]
        %v2926 = vld [vmem:[%s5 + $0x150] sm:$0xf]
        %v2927 = vld [vmem:[%s5 + $0x154] sm:$0xf]
        %v2928 = vld [vmem:[%s5 + $0x158] sm:$0xf]
        %v2929 = vld [vmem:[%s5 + $0x15c] sm:$0xf]
        %v2930 = vld [vmem:[%s5 + $0x160] sm:$0xf]
        %v2931 = vld [vmem:[%s5 + $0x164] sm:$0xf]
        %v2932 = vld [vmem:[%s5 + $0x168] sm:$0xf]
        %v2933 = vld [vmem:[%s5 + $0x16c] sm:$0xf]
        %v2934 = vld [vmem:[%s5 + $0x170] sm:$0xf]
        %v2935 = vld [vmem:[%s5 + $0x174] sm:$0xf]
        %v2936 = vld [vmem:[%s5 + $0x178] sm:$0xf]
        %v2937 = vld [vmem:[%s5 + $0x17c] sm:$0xf]
        %v2938 = vld [vmem:[%s5 + $0x180] sm:$0xf]
        %v2939 = vld [vmem:[%s5 + $0x184] sm:$0xf]
        %v2940 = vld [vmem:[%s5 + $0x188] sm:$0xf]
        %v2941 = vld [vmem:[%s5 + $0x18c] sm:$0xf]
        %v2942 = vld [vmem:[%s5 + $0x190] sm:$0xf]
        %v2943 = vld [vmem:[%s5 + $0x194] sm:$0xf]
        %v2944 = vld [vmem:[%s5 + $0x198] sm:$0xf]
        %v2945 = vld [vmem:[%s5 + $0x19c] sm:$0xf]
        %v2946 = vld [vmem:[%s5 + $0x1a0] sm:$0xf]
        %v2947 = vld [vmem:[%s5 + $0x1a4] sm:$0xf]
        %v2948 = vld [vmem:[%s5 + $0x1a8] sm:$0xf]
        %v2949 = vld [vmem:[%s5 + $0x1ac] sm:$0xf]
        %v2950 = vld [vmem:[%s5 + $0x1b0] sm:$0xf]
        %v2951 = vld [vmem:[%s5 + $0x1b4] sm:$0xf]
        %v2952 = vld [vmem:[%s5 + $0x1b8] sm:$0xf]
        %v2953 = vld [vmem:[%s5 + $0x1bc] sm:$0xf]
        %v2954 = vld [vmem:[%s5 + $0x1c0] sm:$0xf]
        %v2955 = vld [vmem:[%s5 + $0x1c4] sm:$0xf]
        %v2956 = vld [vmem:[%s5 + $0x1c8] sm:$0xf]
        %v2957 = vld [vmem:[%s5 + $0x1cc] sm:$0xf]
        %v2958 = vld [vmem:[%s5 + $0x1d0] sm:$0xf]
        %v2959 = vld [vmem:[%s5 + $0x1d4] sm:$0xf]
        %v2960 = vld [vmem:[%s5 + $0x1d8] sm:$0xf]
        %v2961 = vld [vmem:[%s5 + $0x1dc] sm:$0xf]
        %v2962 = vld [vmem:[%s5 + $0x1e0] sm:$0xf]
        %v2963 = vld [vmem:[%s5 + $0x1e4] sm:$0xf]
        %v2964 = vld [vmem:[%s5 + $0x1e8] sm:$0xf]
        %v2965 = vld [vmem:[%s5 + $0x1ec] sm:$0xf]
        %v2966 = vld [vmem:[%s5 + $0x1f0] sm:$0xf]
        %v2967 = vld [vmem:[%s5 + $0x1f4] sm:$0xf]
        %v2968 = vld [vmem:[%s5 + $0x1f8] sm:$0xf]
        %v2969 = vld [vmem:[%s5 + $0x1fc] sm:$0xf]
        %v2970 = vld [vmem:[%s5 + $0x200] sm:$0xf]
        %v2971 = vld [vmem:[%s5 + $0x204] sm:$0xf]
        %v2972 = vld [vmem:[%s5 + $0x208] sm:$0xf]
        %v2973 = vld [vmem:[%s5 + $0x20c] sm:$0xf]
        %v2974 = vld [vmem:[%s5 + $0x210] sm:$0xf]
        %v2975 = vld [vmem:[%s5 + $0x214] sm:$0xf]
        %v2976 = vld [vmem:[%s5 + $0x218] sm:$0xf]
        %v2977 = vld [vmem:[%s5 + $0x21c] sm:$0xf]
        %v2978 = vld [vmem:[%s5 + $0x220] sm:$0xf]
        %v2979 = vld [vmem:[%s5 + $0x224] sm:$0xf]
        %v2980 = vld [vmem:[%s5 + $0x228] sm:$0xf]
        %v2981 = vld [vmem:[%s5 + $0x22c] sm:$0xf]
        %v2982 = vld [vmem:[%s5 + $0x230] sm:$0xf]
        %v2983 = vld [vmem:[%s5 + $0x234] sm:$0xf]
        %v2984 = vld [vmem:[%s5 + $0x238] sm:$0xf]
        %v2985 = vld [vmem:[%s5 + $0x23c] sm:$0xf]
        %v2986 = vld [vmem:[%s6] sm:$0x1]
        %v2988 = vlaneseq
        %v2989 = vshrl.u32 %v2988, 7
        %v2990 = vsub.s32 0, %v2989
        %v2991 = vrot.slane %v2986, %v2990
        %v3137 = vunpack.c.l.b16 %v2842
        %v3138 = vunpack.c.l.b16 %v2843
        %v3139 = vunpack.c.l.b16 %v2844
        %v3140 = vunpack.c.l.b16 %v2845
        %v3141 = vunpack.c.l.b16 %v2846
        %v3142 = vunpack.c.l.b16 %v2847
        %v3143 = vunpack.c.l.b16 %v2848
        %v3144 = vunpack.c.l.b16 %v2849
        %v3145 = vunpack.c.l.b16 %v2850
        %v3146 = vunpack.c.l.b16 %v2851
        %v3147 = vunpack.c.l.b16 %v2852
        %v3148 = vunpack.c.l.b16 %v2853
        %v3149 = vunpack.c.l.b16 %v2854
        %v3150 = vunpack.c.l.b16 %v2855
        %v3151 = vunpack.c.l.b16 %v2856
        %v3152 = vunpack.c.l.b16 %v2857
        %v3153 = vunpack.c.l.b16 %v2858
        %v3154 = vunpack.c.l.b16 %v2859
        %v3155 = vunpack.c.l.b16 %v2860
        %v3156 = vunpack.c.l.b16 %v2861
        %v3157 = vunpack.c.l.b16 %v2862
        %v3158 = vunpack.c.l.b16 %v2863
        %v3159 = vunpack.c.l.b16 %v2864
        %v3160 = vunpack.c.l.b16 %v2865
        %v3161 = vunpack.c.l.b16 %v2866
        %v3162 = vunpack.c.l.b16 %v2867
        %v3163 = vunpack.c.l.b16 %v2868
        %v3164 = vunpack.c.l.b16 %v2869
        %v3165 = vunpack.c.l.b16 %v2870
        %v3166 = vunpack.c.l.b16 %v2871
        %v3167 = vunpack.c.l.b16 %v2872
        %v3168 = vunpack.c.l.b16 %v2873
        %v3169 = vunpack.c.l.b16 %v2874
        %v3170 = vunpack.c.l.b16 %v2875
        %v3171 = vunpack.c.l.b16 %v2876
        %v3172 = vunpack.c.l.b16 %v2877
        %v3173 = vunpack.c.l.b16 %v2878
        %v3174 = vunpack.c.l.b16 %v2879
        %v3175 = vunpack.c.l.b16 %v2880
        %v3176 = vunpack.c.l.b16 %v2881
        %v3177 = vunpack.c.l.b16 %v2882
        %v3178 = vunpack.c.l.b16 %v2883
        %v3179 = vunpack.c.l.b16 %v2884
        %v3180 = vunpack.c.l.b16 %v2885
        %v3181 = vunpack.c.l.b16 %v2886
        %v3182 = vunpack.c.l.b16 %v2887
        %v3183 = vunpack.c.l.b16 %v2888
        %v3184 = vunpack.c.l.b16 %v2889
        %v3185 = vunpack.c.l.b16 %v2890
        %v3186 = vunpack.c.l.b16 %v2891
        %v3187 = vunpack.c.l.b16 %v2892
        %v3188 = vunpack.c.l.b16 %v2893
        %v3189 = vunpack.c.l.b16 %v2894
        %v3190 = vunpack.c.l.b16 %v2895
        %v3191 = vunpack.c.l.b16 %v2896
        %v3192 = vunpack.c.l.b16 %v2897
        %v3193 = vunpack.c.l.b16 %v2898
        %v3194 = vunpack.c.l.b16 %v2899
        %v3195 = vunpack.c.l.b16 %v2900
        %v3196 = vunpack.c.l.b16 %v2901
        %v3197 = vunpack.c.l.b16 %v2902
        %v3198 = vunpack.c.l.b16 %v2903
        %v3199 = vunpack.c.l.b16 %v2904
        %v3200 = vunpack.c.l.b16 %v2905
        %v3201 = vunpack.c.l.b16 %v2906
        %v3202 = vunpack.c.l.b16 %v2907
        %v3203 = vunpack.c.l.b16 %v2908
        %v3204 = vunpack.c.l.b16 %v2909
        %v3205 = vunpack.c.l.b16 %v2910
        %v3206 = vunpack.c.l.b16 %v2911
        %v3207 = vunpack.c.l.b16 %v2912
        %v3208 = vunpack.c.l.b16 %v2913
        %v3209 = vunpack.c.l.b16 %v2914
        %v3210 = vunpack.c.l.b16 %v2915
        %v3211 = vunpack.c.l.b16 %v2916
        %v3212 = vunpack.c.l.b16 %v2917
        %v3213 = vunpack.c.l.b16 %v2918
        %v3214 = vunpack.c.l.b16 %v2919
        %v3215 = vunpack.c.l.b16 %v2920
        %v3216 = vunpack.c.l.b16 %v2921
        %v3217 = vunpack.c.l.b16 %v2922
        %v3218 = vunpack.c.l.b16 %v2923
        %v3219 = vunpack.c.l.b16 %v2924
        %v3220 = vunpack.c.l.b16 %v2925
        %v3221 = vunpack.c.l.b16 %v2926
        %v3222 = vunpack.c.l.b16 %v2927
        %v3223 = vunpack.c.l.b16 %v2928
        %v3224 = vunpack.c.l.b16 %v2929
        %v3225 = vunpack.c.l.b16 %v2930
        %v3226 = vunpack.c.l.b16 %v2931
        %v3227 = vunpack.c.l.b16 %v2932
        %v3228 = vunpack.c.l.b16 %v2933
        %v3229 = vunpack.c.l.b16 %v2934
        %v3230 = vunpack.c.l.b16 %v2935
        %v3231 = vunpack.c.l.b16 %v2936
        %v3232 = vunpack.c.l.b16 %v2937
        %v3233 = vunpack.c.l.b16 %v2938
        %v3234 = vunpack.c.l.b16 %v2939
        %v3235 = vunpack.c.l.b16 %v2940
        %v3236 = vunpack.c.l.b16 %v2941
        %v3237 = vunpack.c.l.b16 %v2942
        %v3238 = vunpack.c.l.b16 %v2943
        %v3239 = vunpack.c.l.b16 %v2944
        %v3240 = vunpack.c.l.b16 %v2945
        %v3241 = vunpack.c.l.b16 %v2946
        %v3242 = vunpack.c.l.b16 %v2947
        %v3243 = vunpack.c.l.b16 %v2948
        %v3244 = vunpack.c.l.b16 %v2949
        %v3245 = vunpack.c.l.b16 %v2950
        %v3246 = vunpack.c.l.b16 %v2951
        %v3247 = vunpack.c.l.b16 %v2952
        %v3248 = vunpack.c.l.b16 %v2953
        %v3249 = vunpack.c.l.b16 %v2954
        %v3250 = vunpack.c.l.b16 %v2955
        %v3251 = vunpack.c.l.b16 %v2956
        %v3252 = vunpack.c.l.b16 %v2957
        %v3253 = vunpack.c.l.b16 %v2958
        %v3254 = vunpack.c.l.b16 %v2959
        %v3255 = vunpack.c.l.b16 %v2960
        %v3256 = vunpack.c.l.b16 %v2961
        %v3257 = vunpack.c.l.b16 %v2962
        %v3258 = vunpack.c.l.b16 %v2963
        %v3259 = vunpack.c.l.b16 %v2964
        %v3260 = vunpack.c.l.b16 %v2965
        %v3261 = vunpack.c.l.b16 %v2966
        %v3262 = vunpack.c.l.b16 %v2967
        %v3263 = vunpack.c.l.b16 %v2968
        %v3264 = vunpack.c.l.b16 %v2969
        %v3265 = vunpack.c.l.b16 %v2970
        %v3266 = vunpack.c.l.b16 %v2971
        %v3267 = vunpack.c.l.b16 %v2972
        %v3268 = vunpack.c.l.b16 %v2973
        %v3269 = vunpack.c.l.b16 %v2974
        %v3270 = vunpack.c.l.b16 %v2975
        %v3271 = vunpack.c.l.b16 %v2976
        %v3272 = vunpack.c.l.b16 %v2977
        %v3273 = vunpack.c.l.b16 %v2978
        %v3274 = vunpack.c.l.b16 %v2979
        %v3275 = vunpack.c.l.b16 %v2980
        %v3276 = vunpack.c.l.b16 %v2981
        %v3277 = vunpack.c.l.b16 %v2982
        %v3278 = vunpack.c.l.b16 %v2983
        %v3279 = vunpack.c.l.b16 %v2984
        %v3280 = vunpack.c.l.b16 %v2985
        %v3281 = vpack.c.b16 %v3138, %v3137
        %v3282 = vpack.c.b16 %v3140, %v3139
        %v3283 = vpack.c.b16 %v3142, %v3141
        %v3284 = vpack.c.b16 %v3144, %v3143
        %v3285 = vpack.c.b16 %v3146, %v3145
        %v3286 = vpack.c.b16 %v3148, %v3147
        %v3287 = vpack.c.b16 %v3150, %v3149
        %v3288 = vpack.c.b16 %v3152, %v3151
        %v3289 = vpack.c.b16 %v3154, %v3153
        %v3290 = vpack.c.b16 %v3156, %v3155
        %v3291 = vpack.c.b16 %v3158, %v3157
        %v3292 = vpack.c.b16 %v3160, %v3159
        %v3293 = vpack.c.b16 %v3162, %v3161
        %v3294 = vpack.c.b16 %v3164, %v3163
        %v3295 = vpack.c.b16 %v3166, %v3165
        %v3296 = vpack.c.b16 %v3168, %v3167
        %v3297 = vpack.c.b16 %v3170, %v3169
        %v3298 = vpack.c.b16 %v3172, %v3171
        %v3299 = vpack.c.b16 %v3174, %v3173
        %v3300 = vpack.c.b16 %v3176, %v3175
        %v3301 = vpack.c.b16 %v3178, %v3177
        %v3302 = vpack.c.b16 %v3180, %v3179
        %v3303 = vpack.c.b16 %v3182, %v3181
        %v3304 = vpack.c.b16 %v3184, %v3183
        %v3305 = vpack.c.b16 %v3186, %v3185
        %v3306 = vpack.c.b16 %v3188, %v3187
        %v3307 = vpack.c.b16 %v3190, %v3189
        %v3308 = vpack.c.b16 %v3192, %v3191
        %v3309 = vpack.c.b16 %v3194, %v3193
        %v3310 = vpack.c.b16 %v3196, %v3195
        %v3311 = vpack.c.b16 %v3198, %v3197
        %v3312 = vpack.c.b16 %v3200, %v3199
        %v3313 = vpack.c.b16 %v3202, %v3201
        %v3314 = vpack.c.b16 %v3204, %v3203
        %v3315 = vpack.c.b16 %v3206, %v3205
        %v3316 = vpack.c.b16 %v3208, %v3207
        %v3317 = vpack.c.b16 %v3210, %v3209
        %v3318 = vpack.c.b16 %v3212, %v3211
        %v3319 = vpack.c.b16 %v3214, %v3213
        %v3320 = vpack.c.b16 %v3216, %v3215
        %v3321 = vpack.c.b16 %v3218, %v3217
        %v3322 = vpack.c.b16 %v3220, %v3219
        %v3323 = vpack.c.b16 %v3222, %v3221
        %v3324 = vpack.c.b16 %v3224, %v3223
        %v3325 = vpack.c.b16 %v3226, %v3225
        %v3326 = vpack.c.b16 %v3228, %v3227
        %v3327 = vpack.c.b16 %v3230, %v3229
        %v3328 = vpack.c.b16 %v3232, %v3231
        %v3329 = vpack.c.b16 %v3234, %v3233
        %v3330 = vpack.c.b16 %v3236, %v3235
        %v3331 = vpack.c.b16 %v3238, %v3237
        %v3332 = vpack.c.b16 %v3240, %v3239
        %v3333 = vpack.c.b16 %v3242, %v3241
        %v3334 = vpack.c.b16 %v3244, %v3243
        %v3335 = vpack.c.b16 %v3246, %v3245
        %v3336 = vpack.c.b16 %v3248, %v3247
        %v3337 = vpack.c.b16 %v3250, %v3249
        %v3338 = vpack.c.b16 %v3252, %v3251
        %v3339 = vpack.c.b16 %v3254, %v3253
        %v3340 = vpack.c.b16 %v3256, %v3255
        %v3341 = vpack.c.b16 %v3258, %v3257
        %v3342 = vpack.c.b16 %v3260, %v3259
        %v3343 = vpack.c.b16 %v3262, %v3261
        %v3344 = vpack.c.b16 %v3264, %v3263
        %v3345 = vpack.c.b16 %v3266, %v3265
        %v3346 = vpack.c.b16 %v3268, %v3267
        %v3347 = vpack.c.b16 %v3270, %v3269
        %v3348 = vpack.c.b16 %v3272, %v3271
        %v3349 = vpack.c.b16 %v3274, %v3273
        %v3350 = vpack.c.b16 %v3276, %v3275
        %v3351 = vpack.c.b16 %v3278, %v3277
        %v3352 = vpack.c.b16 %v3280, %v3279
        %3425 = vmatprep.subr.bf16.mxu0 0
        %3426 = vmatpush1.bf16.msra.mxu0 %v3281
        %3427 = vmatprep.subr.bf16.mxu0 0
        %3428 = vmatpush1.bf16.msra.mxu0 %v3282
        %3429 = vmatprep.subr.bf16.mxu0 0
        %3430 = vmatpush1.bf16.msra.mxu0 %v3283
        %3431 = vmatprep.subr.bf16.mxu0 0
        %3432 = vmatpush1.bf16.msra.mxu0 %v3284
        %3433 = vmatprep.subr.bf16.mxu0 0
        %3434 = vmatpush1.bf16.msra.mxu0 %v3285
        %3435 = vmatprep.subr.bf16.mxu0 0
        %3436 = vmatpush1.bf16.msra.mxu0 %v3286
        %3437 = vmatprep.subr.bf16.mxu0 0
        %3438 = vmatpush1.bf16.msra.mxu0 %v3287
        %3439 = vmatprep.subr.bf16.mxu0 0
        %3440 = vmatpush1.bf16.msra.mxu0 %v3288
        %3441 = vmatprep.subr.bf16.mxu0 0
        %3442 = vmatpush1.bf16.msra.mxu0 %v3289
        %3443 = vmatprep.subr.bf16.mxu0 0
        %3444 = vmatpush1.bf16.msra.mxu0 %v3290
        %3445 = vmatprep.subr.bf16.mxu0 0
        %3446 = vmatpush1.bf16.msra.mxu0 %v3291
        %3447 = vmatprep.subr.bf16.mxu0 0
        %3448 = vmatpush1.bf16.msra.mxu0 %v3292
        %3449 = vmatprep.subr.bf16.mxu0 0
        %3450 = vmatpush1.bf16.msra.mxu0 %v3293
        %3451 = vmatprep.subr.bf16.mxu0 0
        %3452 = vmatpush1.bf16.msra.mxu0 %v3294
        %3453 = vmatprep.subr.bf16.mxu0 0
        %3454 = vmatpush1.bf16.msra.mxu0 %v3295
        %3455 = vmatprep.subr.bf16.mxu0 0
        %3456 = vmatpush1.bf16.msra.mxu0 %v3296
        %3457 = vmatprep.mubr.bf16.mxu0 %v2771
        %3458 = vmatmul.mubr.bf16.gmra.mrb[0].mxu0 %v2770
        %v3459 = vpop.f32.mrb[0].mxu0
        %v3460 = vadd.f32 %v2991, %v3459
        %v3461 = vpop.f32.mrb[0].mxu0
        %v3462 = vpop.f32.mrb[0].mxu0
        %v3463 = vadd.f32 %v2991, %v3462
        %v3464 = vpop.f32.mrb[0].mxu0
        %3465 = vmatprep.mubr.bf16.mxu0 %v2780
        %3466 = vmatmul.mubr.bf16.gmra.mrb[0].mxu0 %v2779
        %v3467 = vpop.f32.mrb[0].mxu0
        %v3468 = vadd.f32 %v2991, %v3467
        %v3469 = vpop.f32.mrb[0].mxu0
        %v3470 = vpop.f32.mrb[0].mxu0
        %v3471 = vadd.f32 %v2991, %v3470
        %v3472 = vpop.f32.mrb[0].mxu0
        %3473 = vmatprep.mubr.bf16.mxu0 %v2789
        %3474 = vmatmul.mubr.bf16.gmra.mrb[0].mxu0 %v2788
        %v3475 = vpop.f32.mrb[0].mxu0
        %v3476 = vadd.f32 %v2991, %v3475
        %v3477 = vpop.f32.mrb[0].mxu0
        %v3478 = vpop.f32.mrb[0].mxu0
        %v3479 = vadd.f32 %v2991, %v3478
        %v3480 = vpop.f32.mrb[0].mxu0
        %3481 = vmatprep.mubr.bf16.mxu0 %v2798
        %3482 = vmatmul.mubr.bf16.gmra.mrb[0].mxu0 %v2797
        %v3483 = vpop.f32.mrb[0].mxu0
        %v3484 = vadd.f32 %v2991, %v3483
        %v3485 = vpop.f32.mrb[0].mxu0
        %v3486 = vpop.f32.mrb[0].mxu0
        %v3487 = vadd.f32 %v2991, %v3486
        %v3488 = vpop.f32.mrb[0].mxu0
        %3489 = vmatprep.mubr.bf16.mxu0 %v2807
        %3490 = vmatmul.mubr.bf16.gmra.mrb[0].mxu0 %v2806
        %v3491 = vpop.f32.mrb[0].mxu0
        %v3492 = vadd.f32 %v2991, %v3491
        %v3493 = vpop.f32.mrb[0].mxu0
        %v3494 = vpop.f32.mrb[0].mxu0
        %v3495 = vadd.f32 %v2991, %v3494
        %v3496 = vpop.f32.mrb[0].mxu0
        %3497 = vmatprep.mubr.bf16.mxu0 %v2816
        %3498 = vmatmul.mubr.bf16.gmra.mrb[0].mxu0 %v2815
        %v3499 = vpop.f32.mrb[0].mxu0
        %v3500 = vadd.f32 %v2991, %v3499
        %v3501 = vpop.f32.mrb[0].mxu0
        %v3502 = vpop.f32.mrb[0].mxu0
        %v3503 = vadd.f32 %v2991, %v3502
        %v3504 = vpop.f32.mrb[0].mxu0
        %3505 = vmatprep.mubr.bf16.mxu0 %v2825
        %3506 = vmatmul.mubr.bf16.gmra.mrb[0].mxu0 %v2824
        %v3507 = vpop.f32.mrb[0].mxu0
        %v3508 = vadd.f32 %v2991, %v3507
        %v3509 = vpop.f32.mrb[0].mxu0
        %v3510 = vpop.f32.mrb[0].mxu0
        %v3511 = vadd.f32 %v2991, %v3510
        %v3512 = vpop.f32.mrb[0].mxu0
        %3513 = vmatprep.mubr.bf16.mxu0 %v2834
        %3514 = vmatmul.mubr.bf16.gmra.mrb[0].mxu0 %v2833
        %v3515 = vpop.f32.mrb[0].mxu0
        %v3516 = vadd.f32 %v2991, %v3515
        %v3517 = vpop.f32.mrb[0].mxu0
        %v3518 = vpop.f32.mrb[0].mxu0
        %v3519 = vadd.f32 %v2991, %v3518
        %v3520 = vpop.f32.mrb[0].mxu0
        %3521 = vdwg.mxu0
        %3522 = vmatprep.subr.bf16.mxu0 0
        %3523 = vmatpush1.bf16.msra.mxu0 %v3297
        %3524 = vmatprep.subr.bf16.mxu0 0
        %3525 = vmatpush1.bf16.msra.mxu0 %v3298
        %3526 = vmatprep.subr.bf16.mxu0 0
        %3527 = vmatpush1.bf16.msra.mxu0 %v3299
        %3528 = vmatprep.subr.bf16.mxu0 0
        %3529 = vmatpush1.bf16.msra.mxu0 %v3300
        %3530 = vmatprep.subr.bf16.mxu0 0
        %3531 = vmatpush1.bf16.msra.mxu0 %v3301
        %3532 = vmatprep.subr.bf16.mxu0 0
        %3533 = vmatpush1.bf16.msra.mxu0 %v3302
        %3534 = vmatprep.subr.bf16.mxu0 0
        %3535 = vmatpush1.bf16.msra.mxu0 %v3303
        %3536 = vmatprep.subr.bf16.mxu0 0
        %3537 = vmatpush1.bf16.msra.mxu0 %v3304
        %3538 = vmatprep.subr.bf16.mxu0 0
        %3539 = vmatpush1.bf16.msra.mxu0 %v3305
        %3540 = vmatprep.subr.bf16.mxu0 0
        %3541 = vmatpush1.bf16.msra.mxu0 %v3306
        %3542 = vmatprep.subr.bf16.mxu0 0
        %3543 = vmatpush1.bf16.msra.mxu0 %v3307
        %3544 = vmatprep.subr.bf16.mxu0 0
        %3545 = vmatpush1.bf16.msra.mxu0 %v3308
        %3546 = vmatprep.subr.bf16.mxu0 0
        %3547 = vmatpush1.bf16.msra.mxu0 %v3309
        %3548 = vmatprep.subr.bf16.mxu0 0
        %3549 = vmatpush1.bf16.msra.mxu0 %v3310
        %3550 = vmatprep.subr.bf16.mxu0 0
        %3551 = vmatpush1.bf16.msra.mxu0 %v3311
        %3552 = vmatprep.subr.bf16.mxu0 0
        %3553 = vmatpush1.bf16.msra.mxu0 %v3312
        %3554 = vmatprep.mubr.bf16.mxu0 %v2773
        %3555 = vmatmul.mubr.bf16.gmra.mrb[0].mxu0 %v2772
        %v3556 = vpop.f32.mrb[0].mxu0
        %v3557 = vadd.f32 %v3460, %v3556
        %v3558 = vpop.f32.mrb[0].mxu0
        %v3559 = vpop.f32.mrb[0].mxu0
        %v3560 = vadd.f32 %v3463, %v3559
        %v3561 = vpop.f32.mrb[0].mxu0
        %3562 = vmatprep.mubr.bf16.mxu0 %v2782
        %3563 = vmatmul.mubr.bf16.gmra.mrb[0].mxu0 %v2781
        %v3564 = vpop.f32.mrb[0].mxu0
        %v3565 = vadd.f32 %v3468, %v3564
        %v3566 = vpop.f32.mrb[0].mxu0
        %v3567 = vpop.f32.mrb[0].mxu0
        %v3568 = vadd.f32 %v3471, %v3567
        %v3569 = vpop.f32.mrb[0].mxu0
        %3570 = vmatprep.mubr.bf16.mxu0 %v2791
        %3571 = vmatmul.mubr.bf16.gmra.mrb[0].mxu0 %v2790
        %v3572 = vpop.f32.mrb[0].mxu0
        %v3573 = vadd.f32 %v3476, %v3572
        %v3574 = vpop.f32.mrb[0].mxu0
        %v3575 = vpop.f32.mrb[0].mxu0
        %v3576 = vadd.f32 %v3479, %v3575
        %v3577 = vpop.f32.mrb[0].mxu0
        %3578 = vmatprep.mubr.bf16.mxu0 %v2800
        %3579 = vmatmul.mubr.bf16.gmra.mrb[0].mxu0 %v2799
        %v3580 = vpop.f32.mrb[0].mxu0
        %v3581 = vadd.f32 %v3484, %v3580
        %v3582 = vpop.f32.mrb[0].mxu0
        %v3583 = vpop.f32.mrb[0].mxu0
        %v3584 = vadd.f32 %v3487, %v3583
        %v3585 = vpop.f32.mrb[0].mxu0
        %3586 = vmatprep.mubr.bf16.mxu0 %v2809
        %3587 = vmatmul.mubr.bf16.gmra.mrb[0].mxu0 %v2808
        %v3588 = vpop.f32.mrb[0].mxu0
        %v3589 = vadd.f32 %v3492, %v3588
        %v3590 = vpop.f32.mrb[0].mxu0
        %v3591 = vpop.f32.mrb[0].mxu0
        %v3592 = vadd.f32 %v3495, %v3591
        %v3593 = vpop.f32.mrb[0].mxu0
        %3594 = vmatprep.mubr.bf16.mxu0 %v2818
        %3595 = vmatmul.mubr.bf16.gmra.mrb[0].mxu0 %v2817
        %v3596 = vpop.f32.mrb[0].mxu0
        %v3597 = vadd.f32 %v3500, %v3596
        %v3598 = vpop.f32.mrb[0].mxu0
        %v3599 = vpop.f32.mrb[0].mxu0
        %v3600 = vadd.f32 %v3503, %v3599
        %v3601 = vpop.f32.mrb[0].mxu0
        %3602 = vmatprep.mubr.bf16.mxu0 %v2827
        %3603 = vmatmul.mubr.bf16.gmra.mrb[0].mxu0 %v2826
        %v3604 = vpop.f32.mrb[0].mxu0
        %v3605 = vadd.f32 %v3508, %v3604
        %v3606 = vpop.f32.mrb[0].mxu0
        %v3607 = vpop.f32.mrb[0].mxu0
        %v3608 = vadd.f32 %v3511, %v3607
        %v3609 = vpop.f32.mrb[0].mxu0
        %3610 = vmatprep.mubr.bf16.mxu0 %v2836
        %3611 = vmatmul.mubr.bf16.gmra.mrb[0].mxu0 %v2835
        %v3612 = vpop.f32.mrb[0].mxu0
        %v3613 = vadd.f32 %v3516, %v3612
        %v3614 = vpop.f32.mrb[0].mxu0
        %v3615 = vpop.f32.mrb[0].mxu0
        %v3616 = vadd.f32 %v3519, %v3615
        %v3617 = vpop.f32.mrb[0].mxu0
        %3618 = vdwg.mxu0
        %3619 = vmatprep.subr.bf16.mxu0 0
        %3620 = vmatpush1.bf16.msra.mxu0 %v3313
        %3621 = vmatprep.subr.bf16.mxu0 0
        %3622 = vmatpush1.bf16.msra.mxu0 %v3314
        %3623 = vmatprep.subr.bf16.mxu0 0
        %3624 = vmatpush1.bf16.msra.mxu0 %v3315
        %3625 = vmatprep.subr.bf16.mxu0 0
        %3626 = vmatpush1.bf16.msra.mxu0 %v3316
        %3627 = vmatprep.subr.bf16.mxu0 0
        %3628 = vmatpush1.bf16.msra.mxu0 %v3317
        %3629 = vmatprep.subr.bf16.mxu0 0
        %3630 = vmatpush1.bf16.msra.mxu0 %v3318
        %3631 = vmatprep.subr.bf16.mxu0 0
        %3632 = vmatpush1.bf16.msra.mxu0 %v3319
        %3633 = vmatprep.subr.bf16.mxu0 0
        %3634 = vmatpush1.bf16.msra.mxu0 %v3320
        %3635 = vmatprep.subr.bf16.mxu0 0
        %3636 = vmatpush1.bf16.msra.mxu0 %v3321
        %3637 = vmatprep.subr.bf16.mxu0 0
        %3638 = vmatpush1.bf16.msra.mxu0 %v3322
        %3639 = vmatprep.subr.bf16.mxu0 0
        %3640 = vmatpush1.bf16.msra.mxu0 %v3323
        %3641 = vmatprep.subr.bf16.mxu0 0
        %3642 = vmatpush1.bf16.msra.mxu0 %v3324
        %3643 = vmatprep.subr.bf16.mxu0 0
        %3644 = vmatpush1.bf16.msra.mxu0 %v3325
        %3645 = vmatprep.subr.bf16.mxu0 0
        %3646 = vmatpush1.bf16.msra.mxu0 %v3326
        %3647 = vmatprep.subr.bf16.mxu0 0
        %3648 = vmatpush1.bf16.msra.mxu0 %v3327
        %3649 = vmatprep.subr.bf16.mxu0 0
        %3650 = vmatpush1.bf16.msra.mxu0 %v3328
        %3651 = vmatprep.mubr.bf16.mxu0 %v2775
        %3652 = vmatmul.mubr.bf16.gmra.mrb[0].mxu0 %v2774
        %v3653 = vpop.f32.mrb[0].mxu0
        %v3654 = vadd.f32 %v3557, %v3653
        %v3655 = vpop.f32.mrb[0].mxu0
        %v3656 = vpop.f32.mrb[0].mxu0
        %v3657 = vadd.f32 %v3560, %v3656
        %v3658 = vpop.f32.mrb[0].mxu0
        %3659 = vmatprep.mubr.bf16.mxu0 %v2784
        %3660 = vmatmul.mubr.bf16.gmra.mrb[0].mxu0 %v2783
        %v3661 = vpop.f32.mrb[0].mxu0
        %v3662 = vadd.f32 %v3565, %v3661
        %v3663 = vpop.f32.mrb[0].mxu0
        %v3664 = vpop.f32.mrb[0].mxu0
        %v3665 = vadd.f32 %v3568, %v3664
        %v3666 = vpop.f32.mrb[0].mxu0
        %3667 = vmatprep.mubr.bf16.mxu0 %v2793
        %3668 = vmatmul.mubr.bf16.gmra.mrb[0].mxu0 %v2792
        %v3669 = vpop.f32.mrb[0].mxu0
        %v3670 = vadd.f32 %v3573, %v3669
        %v3671 = vpop.f32.mrb[0].mxu0
        %v3672 = vpop.f32.mrb[0].mxu0
        %v3673 = vadd.f32 %v3576, %v3672
        %v3674 = vpop.f32.mrb[0].mxu0
        %3675 = vmatprep.mubr.bf16.mxu0 %v2802
        %3676 = vmatmul.mubr.bf16.gmra.mrb[0].mxu0 %v2801
        %v3677 = vpop.f32.mrb[0].mxu0
        %v3678 = vadd.f32 %v3581, %v3677
        %v3679 = vpop.f32.mrb[0].mxu0
        %v3680 = vpop.f32.mrb[0].mxu0
        %v3681 = vadd.f32 %v3584, %v3680
        %v3682 = vpop.f32.mrb[0].mxu0
        %3683 = vmatprep.mubr.bf16.mxu0 %v2811
        %3684 = vmatmul.mubr.bf16.gmra.mrb[0].mxu0 %v2810
        %v3685 = vpop.f32.mrb[0].mxu0
        %v3686 = vadd.f32 %v3589, %v3685
        %v3687 = vpop.f32.mrb[0].mxu0
        %v3688 = vpop.f32.mrb[0].mxu0
        %v3689 = vadd.f32 %v3592, %v3688
        %v3690 = vpop.f32.mrb[0].mxu0
        %3691 = vmatprep.mubr.bf16.mxu0 %v2820
        %3692 = vmatmul.mubr.bf16.gmra.mrb[0].mxu0 %v2819
        %v3693 = vpop.f32.mrb[0].mxu0
        %v3694 = vadd.f32 %v3597, %v3693
        %v3695 = vpop.f32.mrb[0].mxu0
        %v3696 = vpop.f32.mrb[0].mxu0
        %v3697 = vadd.f32 %v3600, %v3696
        %v3698 = vpop.f32.mrb[0].mxu0
        %3699 = vmatprep.mubr.bf16.mxu0 %v2829
        %3700 = vmatmul.mubr.bf16.gmra.mrb[0].mxu0 %v2828
        %v3701 = vpop.f32.mrb[0].mxu0
        %v3702 = vadd.f32 %v3605, %v3701
        %v3703 = vpop.f32.mrb[0].mxu0
        %v3704 = vpop.f32.mrb[0].mxu0
        %v3705 = vadd.f32 %v3608, %v3704
        %v3706 = vpop.f32.mrb[0].mxu0
        %3707 = vmatprep.mubr.bf16.mxu0 %v2838
        %3708 = vmatmul.mubr.bf16.gmra.mrb[0].mxu0 %v2837
        %v3709 = vpop.f32.mrb[0].mxu0
        %v3710 = vadd.f32 %v3613, %v3709
        %v3711 = vpop.f32.mrb[0].mxu0
        %v3712 = vpop.f32.mrb[0].mxu0
        %v3713 = vadd.f32 %v3616, %v3712
        %v3714 = vpop.f32.mrb[0].mxu0
        %3715 = vdwg.mxu0
        %3716 = vmatprep.subr.bf16.mxu0 0
        %3717 = vmatpush1.bf16.msra.mxu0 %v3329
        %3718 = vmatprep.subr.bf16.mxu0 0
        %3719 = vmatpush1.bf16.msra.mxu0 %v3330
        %3720 = vmatprep.subr.bf16.mxu0 0
        %3721 = vmatpush1.bf16.msra.mxu0 %v3331
        %3722 = vmatprep.subr.bf16.mxu0 0
        %3723 = vmatpush1.bf16.msra.mxu0 %v3332
        %3724 = vmatprep.subr.bf16.mxu0 0
        %3725 = vmatpush1.bf16.msra.mxu0 %v3333
        %3726 = vmatprep.subr.bf16.mxu0 0
        %3727 = vmatpush1.bf16.msra.mxu0 %v3334
        %3728 = vmatprep.subr.bf16.mxu0 0
        %3729 = vmatpush1.bf16.msra.mxu0 %v3335
        %3730 = vmatprep.subr.bf16.mxu0 0
        %3731 = vmatpush1.bf16.msra.mxu0 %v3336
        %3732 = vmatprep.subr.bf16.mxu0 0
        %3733 = vmatpush1.bf16.msra.mxu0 %v3337
        %3734 = vmatprep.subr.bf16.mxu0 0
        %3735 = vmatpush1.bf16.msra.mxu0 %v3338
        %3736 = vmatprep.subr.bf16.mxu0 0
        %3737 = vmatpush1.bf16.msra.mxu0 %v3339
        %3738 = vmatprep.subr.bf16.mxu0 0
        %3739 = vmatpush1.bf16.msra.mxu0 %v3340
        %3740 = vmatprep.subr.bf16.mxu0 0
        %3741 = vmatpush1.bf16.msra.mxu0 %v3341
        %3742 = vmatprep.subr.bf16.mxu0 0
        %3743 = vmatpush1.bf16.msra.mxu0 %v3342
        %3744 = vmatprep.subr.bf16.mxu0 0
        %3745 = vmatpush1.bf16.msra.mxu0 %v3343
        %3746 = vmatprep.subr.bf16.mxu0 0
        %3747 = vmatpush1.bf16.msra.mxu0 %v3344
        %3748 = vmatprep.mubr.bf16.mxu0 %v2777
        %3749 = vmatmul.mubr.bf16.gmra.mrb[0].mxu0 %v2776
        %v3750 = vpop.f32.mrb[0].mxu0
        %v3751 = vadd.f32 %v3654, %v3750
        %v3752 = vpop.f32.mrb[0].mxu0
        %v3753 = vpop.f32.mrb[0].mxu0
        %v3754 = vadd.f32 %v3657, %v3753
        %v3755 = vpop.f32.mrb[0].mxu0
        %3756 = vmatprep.mubr.bf16.mxu0 %v2786
        %3757 = vmatmul.mubr.bf16.gmra.mrb[0].mxu0 %v2785
        %v3758 = vpop.f32.mrb[0].mxu0
        %v3759 = vadd.f32 %v3662, %v3758
        %v3760 = vpop.f32.mrb[0].mxu0
        %v3761 = vpop.f32.mrb[0].mxu0
        %v3762 = vadd.f32 %v3665, %v3761
        %v3763 = vpop.f32.mrb[0].mxu0
        %3764 = vmatprep.mubr.bf16.mxu0 %v2795
        %3765 = vmatmul.mubr.bf16.gmra.mrb[0].mxu0 %v2794
        %v3766 = vpop.f32.mrb[0].mxu0
        %v3767 = vadd.f32 %v3670, %v3766
        %v3768 = vpop.f32.mrb[0].mxu0
        %v3769 = vpop.f32.mrb[0].mxu0
        %v3770 = vadd.f32 %v3673, %v3769
        %v3771 = vpop.f32.mrb[0].mxu0
        %3772 = vmatprep.mubr.bf16.mxu0 %v2804
        %3773 = vmatmul.mubr.bf16.gmra.mrb[0].mxu0 %v2803
        %v3774 = vpop.f32.mrb[0].mxu0
        %v3775 = vadd.f32 %v3678, %v3774
        %v3776 = vpop.f32.mrb[0].mxu0
        %v3777 = vpop.f32.mrb[0].mxu0
        %v3778 = vadd.f32 %v3681, %v3777
        %v3779 = vpop.f32.mrb[0].mxu0
        %3780 = vmatprep.mubr.bf16.mxu0 %v2813
        %3781 = vmatmul.mubr.bf16.gmra.mrb[0].mxu0 %v2812
        %v3782 = vpop.f32.mrb[0].mxu0
        %v3783 = vadd.f32 %v3686, %v3782
        %v3784 = vpop.f32.mrb[0].mxu0
        %v3785 = vpop.f32.mrb[0].mxu0
        %v3786 = vadd.f32 %v3689, %v3785
        %v3787 = vpop.f32.mrb[0].mxu0
        %3788 = vmatprep.mubr.bf16.mxu0 %v2822
        %3789 = vmatmul.mubr.bf16.gmra.mrb[0].mxu0 %v2821
        %v3790 = vpop.f32.mrb[0].mxu0
        %v3791 = vadd.f32 %v3694, %v3790
        %v3792 = vpop.f32.mrb[0].mxu0
        %v3793 = vpop.f32.mrb[0].mxu0
        %v3794 = vadd.f32 %v3697, %v3793
        %v3795 = vpop.f32.mrb[0].mxu0
        %3796 = vmatprep.mubr.bf16.mxu0 %v2831
        %3797 = vmatmul.mubr.bf16.gmra.mrb[0].mxu0 %v2830
        %v3798 = vpop.f32.mrb[0].mxu0
        %v3799 = vadd.f32 %v3702, %v3798
        %v3800 = vpop.f32.mrb[0].mxu0
        %v3801 = vpop.f32.mrb[0].mxu0
        %v3802 = vadd.f32 %v3705, %v3801
        %v3803 = vpop.f32.mrb[0].mxu0
        %3804 = vmatprep.mubr.bf16.mxu0 %v2840
        %3805 = vmatmul.mubr.bf16.gmra.mrb[0].mxu0 %v2839
        %v3806 = vpop.f32.mrb[0].mxu0
        %v3807 = vadd.f32 %v3710, %v3806
        %v3808 = vpop.f32.mrb[0].mxu0
        %v3809 = vpop.f32.mrb[0].mxu0
        %v3810 = vadd.f32 %v3713, %v3809
        %v3811 = vpop.f32.mrb[0].mxu0
        %3812 = vdwg.mxu0
        %3813 = vmatprep.subr.bf16.mxu0 0
        %3814 = vmatpush1.bf16.msra.mxu0 %v3345
        %3815 = vmatprep.subr.bf16.mxu0 0
        %3816 = vmatpush1.bf16.msra.mxu0 %v3346
        %3817 = vmatprep.subr.bf16.mxu0 0
        %3818 = vmatpush1.bf16.msra.mxu0 %v3347
        %3819 = vmatprep.subr.bf16.mxu0 0
        %3820 = vmatpush1.bf16.msra.mxu0 %v3348
        %3821 = vmatprep.subr.bf16.mxu0 0
        %3822 = vmatpush1.bf16.msra.mxu0 %v3349
        %3823 = vmatprep.subr.bf16.mxu0 0
        %3824 = vmatpush1.bf16.msra.mxu0 %v3350
        %3825 = vmatprep.subr.bf16.mxu0 0
        %3826 = vmatpush1.bf16.msra.mxu0 %v3351
        %3827 = vmatprep.subr.bf16.mxu0 0
        %3828 = vmatpush1.bf16.msra.mxu0 %v3352
        %3829 = vmatprep.subr.bf16.mxu0 0
        %3830 = vmatpush1.bf16.msra.mxu0 0
        %3831 = vmatprep.subr.bf16.mxu0 0
        %3832 = vmatpush1.bf16.msra.mxu0 0
        %3833 = vmatprep.subr.bf16.mxu0 0
        %3834 = vmatpush1.bf16.msra.mxu0 0
        %3835 = vmatprep.subr.bf16.mxu0 0
        %3836 = vmatpush1.bf16.msra.mxu0 0
        %3837 = vmatprep.subr.bf16.mxu0 0
        %3838 = vmatpush1.bf16.msra.mxu0 0
        %3839 = vmatprep.subr.bf16.mxu0 0
        %3840 = vmatpush1.bf16.msra.mxu0 0
        %3841 = vmatprep.subr.bf16.mxu0 0
        %3842 = vmatpush1.bf16.msra.mxu0 0
        %3843 = vmatprep.subr.bf16.mxu0 0
        %3844 = vmatpush1.bf16.msra.mxu0 0
        %3845 = vmatprep.mubr.bf16.mxu0 0
        %3846 = vmatmul.mubr.bf16.gmra.mrb[0].mxu0 %v2778
        %v3847 = vpop.f32.mrb[0].mxu0
        %v3848 = vadd.f32 %v3751, %v3847
        %v3849 = vpop.f32.mrb[0].mxu0
        %v3850 = vpop.f32.mrb[0].mxu0
        %v3851 = vadd.f32 %v3754, %v3850
        %v3852 = vpop.f32.mrb[0].mxu0
        %3853 = vmatprep.mubr.bf16.mxu0 0
        %3854 = vmatmul.mubr.bf16.gmra.mrb[0].mxu0 %v2787
        %v3855 = vpop.f32.mrb[0].mxu0
        %v3856 = vadd.f32 %v3759, %v3855
        %v3857 = vpop.f32.mrb[0].mxu0
        %v3858 = vpop.f32.mrb[0].mxu0
        %v3859 = vadd.f32 %v3762, %v3858
        %v3860 = vpop.f32.mrb[0].mxu0
        %3861 = vmatprep.mubr.bf16.mxu0 0
        %3862 = vmatmul.mubr.bf16.gmra.mrb[0].mxu0 %v2796
        %v3863 = vpop.f32.mrb[0].mxu0
        %v3864 = vadd.f32 %v3767, %v3863
        %v3865 = vpop.f32.mrb[0].mxu0
        %v3866 = vpop.f32.mrb[0].mxu0
        %v3867 = vadd.f32 %v3770, %v3866
        %v3868 = vpop.f32.mrb[0].mxu0
        %3869 = vmatprep.mubr.bf16.mxu0 0
        %3870 = vmatmul.mubr.bf16.gmra.mrb[0].mxu0 %v2805
        %v3871 = vpop.f32.mrb[0].mxu0
        %v3872 = vadd.f32 %v3775, %v3871
        %v3873 = vpop.f32.mrb[0].mxu0
        %v3874 = vpop.f32.mrb[0].mxu0
        %v3875 = vadd.f32 %v3778, %v3874
        %v3876 = vpop.f32.mrb[0].mxu0
        %3877 = vmatprep.mubr.bf16.mxu0 0
        %3878 = vmatmul.mubr.bf16.gmra.mrb[0].mxu0 %v2814
        %v3879 = vpop.f32.mrb[0].mxu0
        %v3880 = vadd.f32 %v3783, %v3879
        %v3881 = vpop.f32.mrb[0].mxu0
        %v3882 = vpop.f32.mrb[0].mxu0
        %v3883 = vadd.f32 %v3786, %v3882
        %v3884 = vpop.f32.mrb[0].mxu0
        %3885 = vmatprep.mubr.bf16.mxu0 0
        %3886 = vmatmul.mubr.bf16.gmra.mrb[0].mxu0 %v2823
        %v3887 = vpop.f32.mrb[0].mxu0
        %v3888 = vadd.f32 %v3791, %v3887
        %v3889 = vpop.f32.mrb[0].mxu0
        %v3890 = vpop.f32.mrb[0].mxu0
        %v3891 = vadd.f32 %v3794, %v3890
        %v3892 = vpop.f32.mrb[0].mxu0
        %3893 = vmatprep.mubr.bf16.mxu0 0
        %3894 = vmatmul.mubr.bf16.gmra.mrb[0].mxu0 %v2832
        %v3895 = vpop.f32.mrb[0].mxu0
        %v3896 = vadd.f32 %v3799, %v3895
        %v3897 = vpop.f32.mrb[0].mxu0
        %v3898 = vpop.f32.mrb[0].mxu0
        %v3899 = vadd.f32 %v3802, %v3898
        %v3900 = vpop.f32.mrb[0].mxu0
        %3901 = vmatprep.mubr.bf16.mxu0 0
        %3902 = vmatmul.mubr.bf16.gmra.mrb[0].mxu0 %v2841
        %v3903 = vpop.f32.mrb[0].mxu0
        %v3904 = vadd.f32 %v3807, %v3903
        %v3905 = vpop.f32.mrb[0].mxu0
        %v3906 = vpop.f32.mrb[0].mxu0
        %v3907 = vadd.f32 %v3810, %v3906
        %v3908 = vpop.f32.mrb[0].mxu0
        %3909 = vdwg.mxu0
        %v3910 = vmax.f32 %v3848, 0.0
        %v3911 = vmax.f32 %v3851, 0.0
        %v3912 = vmax.f32 %v3856, 0.0
        %v3913 = vmax.f32 %v3859, 0.0
        %v3914 = vmax.f32 %v3864, 0.0
        %v3915 = vmax.f32 %v3867, 0.0
        %v3916 = vmax.f32 %v3872, 0.0
        %v3917 = vmax.f32 %v3875, 0.0
        %v3918 = vmax.f32 %v3880, 0.0
        %v3919 = vmax.f32 %v3883, 0.0
        %v3920 = vmax.f32 %v3888, 0.0
        %v3921 = vmax.f32 %v3891, 0.0
        %v3922 = vmax.f32 %v3896, 0.0
        %v3923 = vmax.f32 %v3899, 0.0
        %v3924 = vmax.f32 %v3904, 0.0
        %v3925 = vmax.f32 %v3907, 0.0
        %3942 = vrot.lane.b32.xlu0 %v3910, 96
        %v3943 = vpop.permute.xlu0 %3942
        %3944 = vrot.lane.b32.xlu0 %v3911, 96
        %v3945 = vpop.permute.xlu0 %3944
        %3946 = vrot.lane.b32.xlu0 %v3912, 96
        %v3947 = vpop.permute.xlu0 %3946
        %3948 = vrot.lane.b32.xlu0 %v3913, 96
        %v3949 = vpop.permute.xlu0 %3948
        %3950 = vrot.lane.b32.xlu0 %v3914, 96
        %v3951 = vpop.permute.xlu0 %3950
        %3952 = vrot.lane.b32.xlu0 %v3915, 96
        %v3953 = vpop.permute.xlu0 %3952
        %3954 = vrot.lane.b32.xlu0 %v3916, 96
        %v3955 = vpop.permute.xlu0 %3954
        %3956 = vrot.lane.b32.xlu0 %v3917, 96
        %v3957 = vpop.permute.xlu0 %3956
        %3958 = vrot.lane.b32.xlu0 %v3918, 96
        %v3959 = vpop.permute.xlu0 %3958
        %3960 = vrot.lane.b32.xlu0 %v3919, 96
        %v3961 = vpop.permute.xlu0 %3960
        %3962 = vrot.lane.b32.xlu0 %v3920, 96
        %v3963 = vpop.permute.xlu0 %3962
        %3964 = vrot.lane.b32.xlu0 %v3921, 96
        %v3965 = vpop.permute.xlu0 %3964
        %3966 = vrot.lane.b32.xlu0 %v3922, 96
        %v3967 = vpop.permute.xlu0 %3966
        %3968 = vrot.lane.b32.xlu0 %v3923, 96
        %v3969 = vpop.permute.xlu0 %3968
        %3970 = vrot.lane.b32.xlu0 %v3924, 96
        %v3971 = vpop.permute.xlu0 %3970
        %3972 = vrot.lane.b32.xlu0 %v3925, 96
        %v3973 = vpop.permute.xlu0 %3972
        %vm3990 = vcmask 1048320
        %3991 = vst.msk [vmem:[%s436] sm:$0xff] %vm3990, %v3943
        %vm3992 = vcmask 523264
        %3993 = vst.msk [vmem:[%s436 + $0x8] sm:$0xff] %vm3992, %v3943
        %3994 = vst.msk [vmem:[%s436 + $0x18] sm:$0xff] %vm3990, %v3945
        %3995 = vst.msk [vmem:[%s436 + $0x20] sm:$0xff] %vm3992, %v3945
        %3996 = vst.msk [vmem:[%s436 + $0x30] sm:$0xff] %vm3990, %v3947
        %3997 = vst.msk [vmem:[%s436 + $0x38] sm:$0xff] %vm3992, %v3947
        %3998 = vst.msk [vmem:[%s436 + $0x48] sm:$0xff] %vm3990, %v3949
        %3999 = vst.msk [vmem:[%s436 + $0x50] sm:$0xff] %vm3992, %v3949
        %4000 = vst.msk [vmem:[%s436 + $0x60] sm:$0xff] %vm3990, %v3951
        %4001 = vst.msk [vmem:[%s436 + $0x68] sm:$0xff] %vm3992, %v3951
        %4002 = vst.msk [vmem:[%s436 + $0x78] sm:$0xff] %vm3990, %v3953
        %4003 = vst.msk [vmem:[%s436 + $0x80] sm:$0xff] %vm3992, %v3953
        %4004 = vst.msk [vmem:[%s436 + $0x90] sm:$0xff] %vm3990, %v3955
        %4005 = vst.msk [vmem:[%s436 + $0x98] sm:$0xff] %vm3992, %v3955
        %4006 = vst.msk [vmem:[%s436 + $0xa8] sm:$0xff] %vm3990, %v3957
        %4007 = vst.msk [vmem:[%s436 + $0xb0] sm:$0xff] %vm3992, %v3957
        %4008 = vst.msk [vmem:[%s436 + $0xc0] sm:$0xff] %vm3990, %v3959
        %4009 = vst.msk [vmem:[%s436 + $0xc8] sm:$0xff] %vm3992, %v3959
        %4010 = vst.msk [vmem:[%s436 + $0xd8] sm:$0xff] %vm3990, %v3961
        %4011 = vst.msk [vmem:[%s436 + $0xe0] sm:$0xff] %vm3992, %v3961
        %4012 = vst.msk [vmem:[%s436 + $0xf0] sm:$0xff] %vm3990, %v3963
        %4013 = vst.msk [vmem:[%s436 + $0xf8] sm:$0xff] %vm3992, %v3963
        %4014 = vst.msk [vmem:[%s436 + $0x108] sm:$0xff] %vm3990, %v3965
        %4015 = vst.msk [vmem:[%s436 + $0x110] sm:$0xff] %vm3992, %v3965
        %4016 = vst.msk [vmem:[%s436 + $0x120] sm:$0xff] %vm3990, %v3967
        %4017 = vst.msk [vmem:[%s436 + $0x128] sm:$0xff] %vm3992, %v3967
        %4018 = vst.msk [vmem:[%s436 + $0x138] sm:$0xff] %vm3990, %v3969
        %4019 = vst.msk [vmem:[%s436 + $0x140] sm:$0xff] %vm3992, %v3969
        %4020 = vst.msk [vmem:[%s436 + $0x150] sm:$0xff] %vm3990, %v3971
        %4021 = vst.msk [vmem:[%s436 + $0x158] sm:$0xff] %vm3992, %v3971
        %4022 = vst.msk [vmem:[%s436 + $0x168] sm:$0xff] %vm3990, %v3973
        %4023 = vst.msk [vmem:[%s436 + $0x170] sm:$0xff] %vm3992, %v3973
        %v4024 = vld [vmem:[%s1] sm:$0xff]
        %v4025 = vld [vmem:[%s1 + $0x8] sm:$0xff]
        %v4026 = vld [vmem:[%s1 + $0x10] sm:$0xff]
        %v4027 = vld [vmem:[%s1 + $0x18] sm:$0xff]
        %v4028 = vld [vmem:[%s1 + $0x20] sm:$0xff]
        %v4029 = vld [vmem:[%s1 + $0x28] sm:$0xff]
        %v4030 = vld [vmem:[%s1 + $0x30] sm:$0xff]
        %v4031 = vld [vmem:[%s1 + $0x38] sm:$0xff]
        %v4032 = vld [vmem:[%s1 + $0x40] sm:$0xff]
        %v4033 = vld [vmem:[%s1 + $0x48] sm:$0xff]
        %v4034 = vld [vmem:[%s1 + $0x50] sm:$0xff]
        %v4035 = vld [vmem:[%s1 + $0x58] sm:$0xff]
        %v4036 = vld [vmem:[%s1 + $0x60] sm:$0xff]
        %v4037 = vld [vmem:[%s1 + $0x68] sm:$0xff]
        %v4038 = vld [vmem:[%s1 + $0x70] sm:$0xff]
        %v4039 = vld [vmem:[%s1 + $0x78] sm:$0xff]
        %v4055 = vrot.slane %v1436, 7
        %v4056 = vrot.slane %v1439, 7
        %v4057 = vsel %vm1531, %v4055, %v4056
        %v4058 = vrot.slane %v1442, 7
        %v4059 = vsel %vm1531, %v4056, %v4058
        %v4060 = vrot.slane %v1445, 7
        %v4061 = vsel %vm1531, %v4058, %v4060
        %v4062 = vrot.slane %v1448, 7
        %v4063 = vsel %vm1531, %v4060, %v4062
        %v4064 = vrot.slane %v1451, 7
        %v4065 = vsel %vm1531, %v4062, %v4064
        %v4066 = vrot.slane %v1454, 7
        %v4067 = vsel %vm1531, %v4064, %v4066
        %v4068 = vrot.slane %v1457, 7
        %v4069 = vsel %vm1531, %v4066, %v4068
        %v4070 = vrot.slane %v1460, 7
        %v4071 = vsel %vm1531, %v4068, %v4070
        %v4072 = vrot.slane %v1463, 7
        %v4073 = vsel %vm1531, %v4070, %v4072
        %v4074 = vrot.slane %v1466, 7
        %v4075 = vsel %vm1531, %v4072, %v4074
        %v4076 = vrot.slane %v1469, 7
        %v4077 = vsel %vm1531, %v4074, %v4076
        %v4078 = vrot.slane %v1472, 7
        %v4079 = vsel %vm1531, %v4076, %v4078
        %v4080 = vrot.slane %v1475, 7
        %v4081 = vsel %vm1531, %v4078, %v4080
        %v4082 = vrot.slane %v1478, 7
        %v4083 = vsel %vm1531, %v4080, %v4082
        %v4099 = vsel %vm1531, 0.0, %v4055
        %4101 = vset.pattern.permute.xlu0 0
        %4102 = vperm.xlu0 %4101, %v4024
        %v4103 = vpop.permute.xlu0 %4102
        %4106 = vset.pattern.permute.xlu0 0
        %4107 = vperm.xlu0 %4106, %v4025
        %v4108 = vpop.permute.xlu0 %4107
        %4111 = vset.pattern.permute.xlu0 0
        %4112 = vperm.xlu0 %4111, %v4026
        %v4113 = vpop.permute.xlu0 %4112
        %4116 = vset.pattern.permute.xlu0 0
        %4117 = vperm.xlu0 %4116, %v4027
        %v4118 = vpop.permute.xlu0 %4117
        %4121 = vset.pattern.permute.xlu0 0
        %4122 = vperm.xlu0 %4121, %v4028
        %v4123 = vpop.permute.xlu0 %4122
        %4126 = vset.pattern.permute.xlu0 0
        %4127 = vperm.xlu0 %4126, %v4029
        %v4128 = vpop.permute.xlu0 %4127
        %4131 = vset.pattern.permute.xlu0 0
        %4132 = vperm.xlu0 %4131, %v4030
        %v4133 = vpop.permute.xlu0 %4132
        %4136 = vset.pattern.permute.xlu0 0
        %4137 = vperm.xlu0 %4136, %v4031
        %v4138 = vpop.permute.xlu0 %4137
        %4141 = vset.pattern.permute.xlu0 0
        %4142 = vperm.xlu0 %4141, %v4032
        %v4143 = vpop.permute.xlu0 %4142
        %4146 = vset.pattern.permute.xlu0 0
        %4147 = vperm.xlu0 %4146, %v4033
        %v4148 = vpop.permute.xlu0 %4147
        %4151 = vset.pattern.permute.xlu0 0
        %4152 = vperm.xlu0 %4151, %v4034
        %v4153 = vpop.permute.xlu0 %4152
        %4156 = vset.pattern.permute.xlu0 0
        %4157 = vperm.xlu0 %4156, %v4035
        %v4158 = vpop.permute.xlu0 %4157
        %4161 = vset.pattern.permute.xlu0 0
        %4162 = vperm.xlu0 %4161, %v4036
        %v4163 = vpop.permute.xlu0 %4162
        %4166 = vset.pattern.permute.xlu0 0
        %4167 = vperm.xlu0 %4166, %v4037
        %v4168 = vpop.permute.xlu0 %4167
        %4171 = vset.pattern.permute.xlu0 0
        %4172 = vperm.xlu0 %4171, %v4038
        %v4173 = vpop.permute.xlu0 %4172
        %4176 = vset.pattern.permute.xlu0 0
        %4177 = vperm.xlu0 %4176, %v4039
        %v4178 = vpop.permute.xlu0 %4177
        %v4180 = vmul.f32 %v4103, 0.0
        %v4181 = vmul.f32 %v4099, %v4108
        %v4182 = vmul.f32 %v4057, %v4113
        %v4183 = vmul.f32 %v4059, %v4118
        %v4184 = vmul.f32 %v4061, %v4123
        %v4185 = vmul.f32 %v4063, %v4128
        %v4186 = vmul.f32 %v4065, %v4133
        %v4187 = vmul.f32 %v4067, %v4138
        %v4188 = vmul.f32 %v4069, %v4143
        %v4189 = vmul.f32 %v4071, %v4148
        %v4190 = vmul.f32 %v4073, %v4153
        %v4191 = vmul.f32 %v4075, %v4158
        %v4192 = vmul.f32 %v4077, %v4163
        %v4193 = vmul.f32 %v4079, %v4168
        %v4194 = vmul.f32 %v4081, %v4173
        %v4195 = vmul.f32 %v4083, %v4178
        %v4196 = vpack.c.bf16 %v4181, %v4180
        %v4197 = vpack.c.bf16 %v4183, %v4182
        %v4198 = vpack.c.bf16 %v4185, %v4184
        %v4199 = vpack.c.bf16 %v4187, %v4186
        %v4200 = vpack.c.bf16 %v4189, %v4188
        %v4201 = vpack.c.bf16 %v4191, %v4190
        %v4202 = vpack.c.bf16 %v4193, %v4192
        %v4203 = vpack.c.bf16 %v4195, %v4194
        %4204 = vst [vmem:[#allocation2] sm:$0xff] %v4196
        %4205 = vst [vmem:[#allocation2 + $0x48] sm:$0xff] %v4197
        %4206 = vst [vmem:[#allocation2 + $0x90] sm:$0xff] %v4198
        %4207 = vst [vmem:[#allocation2 + $0xd8] sm:$0xff] %v4199
        %4208 = vst [vmem:[#allocation2 + $0x120] sm:$0xff] %v4200
        %4209 = vst [vmem:[#allocation2 + $0x168] sm:$0xff] %v4201
        %4210 = vst [vmem:[#allocation2 + $0x1b0] sm:$0xff] %v4202
        %4211 = vst [vmem:[#allocation2 + $0x1f8] sm:$0xff] %v4203
        %v4212 = vld [vmem:[%s1] sm:$0xff]
        %v4213 = vld [vmem:[%s1 + $0x8] sm:$0xff]
        %v4214 = vld [vmem:[%s1 + $0x10] sm:$0xff]
        %v4215 = vld [vmem:[%s1 + $0x18] sm:$0xff]
        %v4216 = vld [vmem:[%s1 + $0x20] sm:$0xff]
        %v4217 = vld [vmem:[%s1 + $0x28] sm:$0xff]
        %v4218 = vld [vmem:[%s1 + $0x30] sm:$0xff]
        %v4219 = vld [vmem:[%s1 + $0x38] sm:$0xff]
        %v4220 = vld [vmem:[%s1 + $0x40] sm:$0xff]
        %v4221 = vld [vmem:[%s1 + $0x48] sm:$0xff]
        %v4222 = vld [vmem:[%s1 + $0x50] sm:$0xff]
        %v4223 = vld [vmem:[%s1 + $0x58] sm:$0xff]
        %v4224 = vld [vmem:[%s1 + $0x60] sm:$0xff]
        %v4225 = vld [vmem:[%s1 + $0x68] sm:$0xff]
        %v4226 = vld [vmem:[%s1 + $0x70] sm:$0xff]
        %v4227 = vld [vmem:[%s1 + $0x78] sm:$0xff]
        %4229 = vset.pattern.permute.xlu0 1
        %4230 = vperm.xlu0 %4229, %v4212
        %v4231 = vpop.permute.xlu0 %4230
        %4234 = vset.pattern.permute.xlu0 1
        %4235 = vperm.xlu0 %4234, %v4213
        %v4236 = vpop.permute.xlu0 %4235
        %4239 = vset.pattern.permute.xlu0 1
        %4240 = vperm.xlu0 %4239, %v4214
        %v4241 = vpop.permute.xlu0 %4240
        %4244 = vset.pattern.permute.xlu0 1
        %4245 = vperm.xlu0 %4244, %v4215
        %v4246 = vpop.permute.xlu0 %4245
        %4249 = vset.pattern.permute.xlu0 1
        %4250 = vperm.xlu0 %4249, %v4216
        %v4251 = vpop.permute.xlu0 %4250
        %4254 = vset.pattern.permute.xlu0 1
        %4255 = vperm.xlu0 %4254, %v4217
        %v4256 = vpop.permute.xlu0 %4255
        %4259 = vset.pattern.permute.xlu0 1
        %4260 = vperm.xlu0 %4259, %v4218
        %v4261 = vpop.permute.xlu0 %4260
        %4264 = vset.pattern.permute.xlu0 1
        %4265 = vperm.xlu0 %4264, %v4219
        %v4266 = vpop.permute.xlu0 %4265
        %4269 = vset.pattern.permute.xlu0 1
        %4270 = vperm.xlu0 %4269, %v4220
        %v4271 = vpop.permute.xlu0 %4270
        %4274 = vset.pattern.permute.xlu0 1
        %4275 = vperm.xlu0 %4274, %v4221
        %v4276 = vpop.permute.xlu0 %4275
        %4279 = vset.pattern.permute.xlu0 1
        %4280 = vperm.xlu0 %4279, %v4222
        %v4281 = vpop.permute.xlu0 %4280
        %4284 = vset.pattern.permute.xlu0 1
        %4285 = vperm.xlu0 %4284, %v4223
        %v4286 = vpop.permute.xlu0 %4285
        %4289 = vset.pattern.permute.xlu0 1
        %4290 = vperm.xlu0 %4289, %v4224
        %v4291 = vpop.permute.xlu0 %4290
        %4294 = vset.pattern.permute.xlu0 1
        %4295 = vperm.xlu0 %4294, %v4225
        %v4296 = vpop.permute.xlu0 %4295
        %4299 = vset.pattern.permute.xlu0 1
        %4300 = vperm.xlu0 %4299, %v4226
        %v4301 = vpop.permute.xlu0 %4300
        %4304 = vset.pattern.permute.xlu0 1
        %4305 = vperm.xlu0 %4304, %v4227
        %v4306 = vpop.permute.xlu0 %4305
        %v4308 = vmul.f32 %v4231, 0.0
        %v4309 = vmul.f32 %v1436, %v4236
        %v4310 = vmul.f32 %v1439, %v4241
        %v4311 = vmul.f32 %v1442, %v4246
        %v4312 = vmul.f32 %v1445, %v4251
        %v4313 = vmul.f32 %v1448, %v4256
        %v4314 = vmul.f32 %v1451, %v4261
        %v4315 = vmul.f32 %v1454, %v4266
        %v4316 = vmul.f32 %v1457, %v4271
        %v4317 = vmul.f32 %v1460, %v4276
        %v4318 = vmul.f32 %v1463, %v4281
        %v4319 = vmul.f32 %v1466, %v4286
        %v4320 = vmul.f32 %v1469, %v4291
        %v4321 = vmul.f32 %v1472, %v4296
        %v4322 = vmul.f32 %v1475, %v4301
        %v4323 = vmul.f32 %v1478, %v4306
        %v4324 = vpack.c.bf16 %v4309, %v4308
        %v4325 = vpack.c.bf16 %v4311, %v4310
        %v4326 = vpack.c.bf16 %v4313, %v4312
        %v4327 = vpack.c.bf16 %v4315, %v4314
        %v4328 = vpack.c.bf16 %v4317, %v4316
        %v4329 = vpack.c.bf16 %v4319, %v4318
        %v4330 = vpack.c.bf16 %v4321, %v4320
        %v4331 = vpack.c.bf16 %v4323, %v4322
        %4332 = vst [vmem:[#allocation2 + $0x8] sm:$0xff] %v4324
        %4333 = vst [vmem:[#allocation2 + $0x50] sm:$0xff] %v4325
        %4334 = vst [vmem:[#allocation2 + $0x98] sm:$0xff] %v4326
        %4335 = vst [vmem:[#allocation2 + $0xe0] sm:$0xff] %v4327
        %4336 = vst [vmem:[#allocation2 + $0x128] sm:$0xff] %v4328
        %4337 = vst [vmem:[#allocation2 + $0x170] sm:$0xff] %v4329
        %4338 = vst [vmem:[#allocation2 + $0x1b8] sm:$0xff] %v4330
        %4339 = vst [vmem:[#allocation2 + $0x200] sm:$0xff] %v4331
        %v4340 = vld [vmem:[%s1] sm:$0xff]
        %v4341 = vld [vmem:[%s1 + $0x8] sm:$0xff]
        %v4342 = vld [vmem:[%s1 + $0x10] sm:$0xff]
        %v4343 = vld [vmem:[%s1 + $0x18] sm:$0xff]
        %v4344 = vld [vmem:[%s1 + $0x20] sm:$0xff]
        %v4345 = vld [vmem:[%s1 + $0x28] sm:$0xff]
        %v4346 = vld [vmem:[%s1 + $0x30] sm:$0xff]
        %v4347 = vld [vmem:[%s1 + $0x38] sm:$0xff]
        %v4348 = vld [vmem:[%s1 + $0x40] sm:$0xff]
        %v4349 = vld [vmem:[%s1 + $0x48] sm:$0xff]
        %v4350 = vld [vmem:[%s1 + $0x50] sm:$0xff]
        %v4351 = vld [vmem:[%s1 + $0x58] sm:$0xff]
        %v4352 = vld [vmem:[%s1 + $0x60] sm:$0xff]
        %v4353 = vld [vmem:[%s1 + $0x68] sm:$0xff]
        %v4354 = vld [vmem:[%s1 + $0x70] sm:$0xff]
        %v4355 = vld [vmem:[%s1 + $0x78] sm:$0xff]
        %v4357 = vrot.slane %v1436, 1
        %v4358 = vrot.slane %v1439, 1
        %v4359 = vsel %vm1834, %v4357, %v4358
        %v4360 = vrot.slane %v1442, 1
        %v4361 = vsel %vm1834, %v4358, %v4360
        %v4362 = vrot.slane %v1445, 1
        %v4363 = vsel %vm1834, %v4360, %v4362
        %v4364 = vrot.slane %v1448, 1
        %v4365 = vsel %vm1834, %v4362, %v4364
        %v4366 = vrot.slane %v1451, 1
        %v4367 = vsel %vm1834, %v4364, %v4366
        %v4368 = vrot.slane %v1454, 1
        %v4369 = vsel %vm1834, %v4366, %v4368
        %v4370 = vrot.slane %v1457, 1
        %v4371 = vsel %vm1834, %v4368, %v4370
        %v4372 = vrot.slane %v1460, 1
        %v4373 = vsel %vm1834, %v4370, %v4372
        %v4374 = vrot.slane %v1463, 1
        %v4375 = vsel %vm1834, %v4372, %v4374
        %v4376 = vrot.slane %v1466, 1
        %v4377 = vsel %vm1834, %v4374, %v4376
        %v4378 = vrot.slane %v1469, 1
        %v4379 = vsel %vm1834, %v4376, %v4378
        %v4380 = vrot.slane %v1472, 1
        %v4381 = vsel %vm1834, %v4378, %v4380
        %v4382 = vrot.slane %v1475, 1
        %v4383 = vsel %vm1834, %v4380, %v4382
        %v4384 = vrot.slane %v1478, 1
        %v4385 = vsel %vm1834, %v4382, %v4384
        %v4386 = vrot.slane %v1481, 1
        %v4387 = vsel %vm1834, %v4384, %v4386
        %v4404 = vsel %vm1834, 0.0, %v4357
        %4406 = vset.pattern.permute.xlu0 2
        %4407 = vperm.xlu0 %4406, %v4340
        %v4408 = vpop.permute.xlu0 %4407
        %4411 = vset.pattern.permute.xlu0 2
        %4412 = vperm.xlu0 %4411, %v4341
        %v4413 = vpop.permute.xlu0 %4412
        %4416 = vset.pattern.permute.xlu0 2
        %4417 = vperm.xlu0 %4416, %v4342
        %v4418 = vpop.permute.xlu0 %4417
        %4421 = vset.pattern.permute.xlu0 2
        %4422 = vperm.xlu0 %4421, %v4343
        %v4423 = vpop.permute.xlu0 %4422
        %4426 = vset.pattern.permute.xlu0 2
        %4427 = vperm.xlu0 %4426, %v4344
        %v4428 = vpop.permute.xlu0 %4427
        %4431 = vset.pattern.permute.xlu0 2
        %4432 = vperm.xlu0 %4431, %v4345
        %v4433 = vpop.permute.xlu0 %4432
        %4436 = vset.pattern.permute.xlu0 2
        %4437 = vperm.xlu0 %4436, %v4346
        %v4438 = vpop.permute.xlu0 %4437
        %4441 = vset.pattern.permute.xlu0 2
        %4442 = vperm.xlu0 %4441, %v4347
        %v4443 = vpop.permute.xlu0 %4442
        %4446 = vset.pattern.permute.xlu0 2
        %4447 = vperm.xlu0 %4446, %v4348
        %v4448 = vpop.permute.xlu0 %4447
        %4451 = vset.pattern.permute.xlu0 2
        %4452 = vperm.xlu0 %4451, %v4349
        %v4453 = vpop.permute.xlu0 %4452
        %4456 = vset.pattern.permute.xlu0 2
        %4457 = vperm.xlu0 %4456, %v4350
        %v4458 = vpop.permute.xlu0 %4457
        %4461 = vset.pattern.permute.xlu0 2
        %4462 = vperm.xlu0 %4461, %v4351
        %v4463 = vpop.permute.xlu0 %4462
        %4466 = vset.pattern.permute.xlu0 2
        %4467 = vperm.xlu0 %4466, %v4352
        %v4468 = vpop.permute.xlu0 %4467
        %4471 = vset.pattern.permute.xlu0 2
        %4472 = vperm.xlu0 %4471, %v4353
        %v4473 = vpop.permute.xlu0 %4472
        %4476 = vset.pattern.permute.xlu0 2
        %4477 = vperm.xlu0 %4476, %v4354
        %v4478 = vpop.permute.xlu0 %4477
        %4481 = vset.pattern.permute.xlu0 2
        %4482 = vperm.xlu0 %4481, %v4355
        %v4483 = vpop.permute.xlu0 %4482
        %v4485 = vmul.f32 %v4404, %v4408
        %v4486 = vmul.f32 %v4359, %v4413
        %v4487 = vmul.f32 %v4361, %v4418
        %v4488 = vmul.f32 %v4363, %v4423
        %v4489 = vmul.f32 %v4365, %v4428
        %v4490 = vmul.f32 %v4367, %v4433
        %v4491 = vmul.f32 %v4369, %v4438
        %v4492 = vmul.f32 %v4371, %v4443
        %v4493 = vmul.f32 %v4373, %v4448
        %v4494 = vmul.f32 %v4375, %v4453
        %v4495 = vmul.f32 %v4377, %v4458
        %v4496 = vmul.f32 %v4379, %v4463
        %v4497 = vmul.f32 %v4381, %v4468
        %v4498 = vmul.f32 %v4383, %v4473
        %v4499 = vmul.f32 %v4385, %v4478
        %v4500 = vmul.f32 %v4387, %v4483
        %v4501 = vpack.c.bf16 %v4486, %v4485
        %v4502 = vpack.c.bf16 %v4488, %v4487
        %v4503 = vpack.c.bf16 %v4490, %v4489
        %v4504 = vpack.c.bf16 %v4492, %v4491
        %v4505 = vpack.c.bf16 %v4494, %v4493
        %v4506 = vpack.c.bf16 %v4496, %v4495
        %v4507 = vpack.c.bf16 %v4498, %v4497
        %v4508 = vpack.c.bf16 %v4500, %v4499
        %4509 = vst [vmem:[#allocation2 + $0x10] sm:$0xff] %v4501
        %4510 = vst [vmem:[#allocation2 + $0x58] sm:$0xff] %v4502
        %4511 = vst [vmem:[#allocation2 + $0xa0] sm:$0xff] %v4503
        %4512 = vst [vmem:[#allocation2 + $0xe8] sm:$0xff] %v4504
        %4513 = vst [vmem:[#allocation2 + $0x130] sm:$0xff] %v4505
        %4514 = vst [vmem:[#allocation2 + $0x178] sm:$0xff] %v4506
        %4515 = vst [vmem:[#allocation2 + $0x1c0] sm:$0xff] %v4507
        %4516 = vst [vmem:[#allocation2 + $0x208] sm:$0xff] %v4508
        %v4517 = vld [vmem:[%s1] sm:$0xff]
        %v4518 = vld [vmem:[%s1 + $0x8] sm:$0xff]
        %v4519 = vld [vmem:[%s1 + $0x10] sm:$0xff]
        %v4520 = vld [vmem:[%s1 + $0x18] sm:$0xff]
        %v4521 = vld [vmem:[%s1 + $0x20] sm:$0xff]
        %v4522 = vld [vmem:[%s1 + $0x28] sm:$0xff]
        %v4523 = vld [vmem:[%s1 + $0x30] sm:$0xff]
        %v4524 = vld [vmem:[%s1 + $0x38] sm:$0xff]
        %v4525 = vld [vmem:[%s1 + $0x40] sm:$0xff]
        %v4526 = vld [vmem:[%s1 + $0x48] sm:$0xff]
        %v4527 = vld [vmem:[%s1 + $0x50] sm:$0xff]
        %v4528 = vld [vmem:[%s1 + $0x58] sm:$0xff]
        %v4529 = vld [vmem:[%s1 + $0x60] sm:$0xff]
        %v4530 = vld [vmem:[%s1 + $0x68] sm:$0xff]
        %v4531 = vld [vmem:[%s1 + $0x70] sm:$0xff]
        %v4532 = vld [vmem:[%s1 + $0x78] sm:$0xff]
        %v4533 = vrot.slane %v1481, 7
        %v4534 = vsel %vm1531, %v4082, %v4533
        %4537 = vset.pattern.permute.xlu0 3
        %4538 = vperm.xlu0 %4537, %v4517
        %v4539 = vpop.permute.xlu0 %4538
        %4542 = vset.pattern.permute.xlu0 3
        %4543 = vperm.xlu0 %4542, %v4518
        %v4544 = vpop.permute.xlu0 %4543
        %4547 = vset.pattern.permute.xlu0 3
        %4548 = vperm.xlu0 %4547, %v4519
        %v4549 = vpop.permute.xlu0 %4548
        %4552 = vset.pattern.permute.xlu0 3
        %4553 = vperm.xlu0 %4552, %v4520
        %v4554 = vpop.permute.xlu0 %4553
        %4557 = vset.pattern.permute.xlu0 3
        %4558 = vperm.xlu0 %4557, %v4521
        %v4559 = vpop.permute.xlu0 %4558
        %4562 = vset.pattern.permute.xlu0 3
        %4563 = vperm.xlu0 %4562, %v4522
        %v4564 = vpop.permute.xlu0 %4563
        %4567 = vset.pattern.permute.xlu0 3
        %4568 = vperm.xlu0 %4567, %v4523
        %v4569 = vpop.permute.xlu0 %4568
        %4572 = vset.pattern.permute.xlu0 3
        %4573 = vperm.xlu0 %4572, %v4524
        %v4574 = vpop.permute.xlu0 %4573
        %4577 = vset.pattern.permute.xlu0 3
        %4578 = vperm.xlu0 %4577, %v4525
        %v4579 = vpop.permute.xlu0 %4578
        %4582 = vset.pattern.permute.xlu0 3
        %4583 = vperm.xlu0 %4582, %v4526
        %v4584 = vpop.permute.xlu0 %4583
        %4587 = vset.pattern.permute.xlu0 3
        %4588 = vperm.xlu0 %4587, %v4527
        %v4589 = vpop.permute.xlu0 %4588
        %4592 = vset.pattern.permute.xlu0 3
        %4593 = vperm.xlu0 %4592, %v4528
        %v4594 = vpop.permute.xlu0 %4593
        %4597 = vset.pattern.permute.xlu0 3
        %4598 = vperm.xlu0 %4597, %v4529
        %v4599 = vpop.permute.xlu0 %4598
        %4602 = vset.pattern.permute.xlu0 3
        %4603 = vperm.xlu0 %4602, %v4530
        %v4604 = vpop.permute.xlu0 %4603
        %4607 = vset.pattern.permute.xlu0 3
        %4608 = vperm.xlu0 %4607, %v4531
        %v4609 = vpop.permute.xlu0 %4608
        %4612 = vset.pattern.permute.xlu0 3
        %4613 = vperm.xlu0 %4612, %v4532
        %v4614 = vpop.permute.xlu0 %4613
        %v4616 = vmul.f32 %v4099, %v4539
        %v4617 = vmul.f32 %v4057, %v4544
        %v4618 = vmul.f32 %v4059, %v4549
        %v4619 = vmul.f32 %v4061, %v4554
        %v4620 = vmul.f32 %v4063, %v4559
        %v4621 = vmul.f32 %v4065, %v4564
        %v4622 = vmul.f32 %v4067, %v4569
        %v4623 = vmul.f32 %v4069, %v4574
        %v4624 = vmul.f32 %v4071, %v4579
        %v4625 = vmul.f32 %v4073, %v4584
        %v4626 = vmul.f32 %v4075, %v4589
        %v4627 = vmul.f32 %v4077, %v4594
        %v4628 = vmul.f32 %v4079, %v4599
        %v4629 = vmul.f32 %v4081, %v4604
        %v4630 = vmul.f32 %v4083, %v4609
        %v4631 = vmul.f32 %v4534, %v4614
        %v4632 = vpack.c.bf16 %v4617, %v4616
        %v4633 = vpack.c.bf16 %v4619, %v4618
        %v4634 = vpack.c.bf16 %v4621, %v4620
        %v4635 = vpack.c.bf16 %v4623, %v4622
        %v4636 = vpack.c.bf16 %v4625, %v4624
        %v4637 = vpack.c.bf16 %v4627, %v4626
        %v4638 = vpack.c.bf16 %v4629, %v4628
        %v4639 = vpack.c.bf16 %v4631, %v4630
        %4640 = vst [vmem:[#allocation2 + $0x18] sm:$0xff] %v4632
        %4641 = vst [vmem:[#allocation2 + $0x60] sm:$0xff] %v4633
        %4642 = vst [vmem:[#allocation2 + $0xa8] sm:$0xff] %v4634
        %4643 = vst [vmem:[#allocation2 + $0xf0] sm:$0xff] %v4635
        %4644 = vst [vmem:[#allocation2 + $0x138] sm:$0xff] %v4636
        %4645 = vst [vmem:[#allocation2 + $0x180] sm:$0xff] %v4637
        %4646 = vst [vmem:[#allocation2 + $0x1c8] sm:$0xff] %v4638
        %4647 = vst [vmem:[#allocation2 + $0x210] sm:$0xff] %v4639
        %v4648 = vld [vmem:[%s1] sm:$0xff]
        %v4649 = vld [vmem:[%s1 + $0x8] sm:$0xff]
        %v4650 = vld [vmem:[%s1 + $0x10] sm:$0xff]
        %v4651 = vld [vmem:[%s1 + $0x18] sm:$0xff]
        %v4652 = vld [vmem:[%s1 + $0x20] sm:$0xff]
        %v4653 = vld [vmem:[%s1 + $0x28] sm:$0xff]
        %v4654 = vld [vmem:[%s1 + $0x30] sm:$0xff]
        %v4655 = vld [vmem:[%s1 + $0x38] sm:$0xff]
        %v4656 = vld [vmem:[%s1 + $0x40] sm:$0xff]
        %v4657 = vld [vmem:[%s1 + $0x48] sm:$0xff]
        %v4658 = vld [vmem:[%s1 + $0x50] sm:$0xff]
        %v4659 = vld [vmem:[%s1 + $0x58] sm:$0xff]
        %v4660 = vld [vmem:[%s1 + $0x60] sm:$0xff]
        %v4661 = vld [vmem:[%s1 + $0x68] sm:$0xff]
        %v4662 = vld [vmem:[%s1 + $0x70] sm:$0xff]
        %v4663 = vld [vmem:[%s1 + $0x78] sm:$0xff]
        %4665 = vset.pattern.permute.xlu0 4
        %4666 = vperm.xlu0 %4665, %v4648
        %v4667 = vpop.permute.xlu0 %4666
        %4670 = vset.pattern.permute.xlu0 4
        %4671 = vperm.xlu0 %4670, %v4649
        %v4672 = vpop.permute.xlu0 %4671
        %4675 = vset.pattern.permute.xlu0 4
        %4676 = vperm.xlu0 %4675, %v4650
        %v4677 = vpop.permute.xlu0 %4676
        %4680 = vset.pattern.permute.xlu0 4
        %4681 = vperm.xlu0 %4680, %v4651
        %v4682 = vpop.permute.xlu0 %4681
        %4685 = vset.pattern.permute.xlu0 4
        %4686 = vperm.xlu0 %4685, %v4652
        %v4687 = vpop.permute.xlu0 %4686
        %4690 = vset.pattern.permute.xlu0 4
        %4691 = vperm.xlu0 %4690, %v4653
        %v4692 = vpop.permute.xlu0 %4691
        %4695 = vset.pattern.permute.xlu0 4
        %4696 = vperm.xlu0 %4695, %v4654
        %v4697 = vpop.permute.xlu0 %4696
        %4700 = vset.pattern.permute.xlu0 4
        %4701 = vperm.xlu0 %4700, %v4655
        %v4702 = vpop.permute.xlu0 %4701
        %4705 = vset.pattern.permute.xlu0 4
        %4706 = vperm.xlu0 %4705, %v4656
        %v4707 = vpop.permute.xlu0 %4706
        %4710 = vset.pattern.permute.xlu0 4
        %4711 = vperm.xlu0 %4710, %v4657
        %v4712 = vpop.permute.xlu0 %4711
        %4715 = vset.pattern.permute.xlu0 4
        %4716 = vperm.xlu0 %4715, %v4658
        %v4717 = vpop.permute.xlu0 %4716
        %4720 = vset.pattern.permute.xlu0 4
        %4721 = vperm.xlu0 %4720, %v4659
        %v4722 = vpop.permute.xlu0 %4721
        %4725 = vset.pattern.permute.xlu0 4
        %4726 = vperm.xlu0 %4725, %v4660
        %v4727 = vpop.permute.xlu0 %4726
        %4730 = vset.pattern.permute.xlu0 4
        %4731 = vperm.xlu0 %4730, %v4661
        %v4732 = vpop.permute.xlu0 %4731
        %4735 = vset.pattern.permute.xlu0 4
        %4736 = vperm.xlu0 %4735, %v4662
        %v4737 = vpop.permute.xlu0 %4736
        %4740 = vset.pattern.permute.xlu0 4
        %4741 = vperm.xlu0 %4740, %v4663
        %v4742 = vpop.permute.xlu0 %4741
        %v4744 = vmul.f32 %v1436, %v4667
        %v4745 = vmul.f32 %v1439, %v4672
        %v4746 = vmul.f32 %v1442, %v4677
        %v4747 = vmul.f32 %v1445, %v4682
        %v4748 = vmul.f32 %v1448, %v4687
        %v4749 = vmul.f32 %v1451, %v4692
        %v4750 = vmul.f32 %v1454, %v4697
        %v4751 = vmul.f32 %v1457, %v4702
        %v4752 = vmul.f32 %v1460, %v4707
        %v4753 = vmul.f32 %v1463, %v4712
        %v4754 = vmul.f32 %v1466, %v4717
        %v4755 = vmul.f32 %v1469, %v4722
        %v4756 = vmul.f32 %v1472, %v4727
        %v4757 = vmul.f32 %v1475, %v4732
        %v4758 = vmul.f32 %v1478, %v4737
        %v4759 = vmul.f32 %v1481, %v4742
        %v4760 = vpack.c.bf16 %v4745, %v4744
        %v4761 = vpack.c.bf16 %v4747, %v4746
        %v4762 = vpack.c.bf16 %v4749, %v4748
        %v4763 = vpack.c.bf16 %v4751, %v4750
        %v4764 = vpack.c.bf16 %v4753, %v4752
        %v4765 = vpack.c.bf16 %v4755, %v4754
        %v4766 = vpack.c.bf16 %v4757, %v4756
        %v4767 = vpack.c.bf16 %v4759, %v4758
        %4768 = vst [vmem:[#allocation2 + $0x20] sm:$0xff] %v4760
        %4769 = vst [vmem:[#allocation2 + $0x68] sm:$0xff] %v4761
        %4770 = vst [vmem:[#allocation2 + $0xb0] sm:$0xff] %v4762
        %4771 = vst [vmem:[#allocation2 + $0xf8] sm:$0xff] %v4763
        %4772 = vst [vmem:[#allocation2 + $0x140] sm:$0xff] %v4764
        %4773 = vst [vmem:[#allocation2 + $0x188] sm:$0xff] %v4765
        %4774 = vst [vmem:[#allocation2 + $0x1d0] sm:$0xff] %v4766
        %4775 = vst [vmem:[#allocation2 + $0x218] sm:$0xff] %v4767
        %v4776 = vld [vmem:[%s1] sm:$0xff]
        %v4777 = vld [vmem:[%s1 + $0x8] sm:$0xff]
        %v4778 = vld [vmem:[%s1 + $0x10] sm:$0xff]
        %v4779 = vld [vmem:[%s1 + $0x18] sm:$0xff]
        %v4780 = vld [vmem:[%s1 + $0x20] sm:$0xff]
        %v4781 = vld [vmem:[%s1 + $0x28] sm:$0xff]
        %v4782 = vld [vmem:[%s1 + $0x30] sm:$0xff]
        %v4783 = vld [vmem:[%s1 + $0x38] sm:$0xff]
        %v4784 = vld [vmem:[%s1 + $0x40] sm:$0xff]
        %v4785 = vld [vmem:[%s1 + $0x48] sm:$0xff]
        %v4786 = vld [vmem:[%s1 + $0x50] sm:$0xff]
        %v4787 = vld [vmem:[%s1 + $0x58] sm:$0xff]
        %v4788 = vld [vmem:[%s1 + $0x60] sm:$0xff]
        %v4789 = vld [vmem:[%s1 + $0x68] sm:$0xff]
        %v4790 = vld [vmem:[%s1 + $0x70] sm:$0xff]
        %v4791 = vld [vmem:[%s1 + $0x78] sm:$0xff]
        %v4793 = vsel %vm1834, %v4386, 0.0
        %4795 = vset.pattern.permute.xlu0 5
        %4796 = vperm.xlu0 %4795, %v4776
        %v4797 = vpop.permute.xlu0 %4796
        %4800 = vset.pattern.permute.xlu0 5
        %4801 = vperm.xlu0 %4800, %v4777
        %v4802 = vpop.permute.xlu0 %4801
        %4805 = vset.pattern.permute.xlu0 5
        %4806 = vperm.xlu0 %4805, %v4778
        %v4807 = vpop.permute.xlu0 %4806
        %4810 = vset.pattern.permute.xlu0 5
        %4811 = vperm.xlu0 %4810, %v4779
        %v4812 = vpop.permute.xlu0 %4811
        %4815 = vset.pattern.permute.xlu0 5
        %4816 = vperm.xlu0 %4815, %v4780
        %v4817 = vpop.permute.xlu0 %4816
        %4820 = vset.pattern.permute.xlu0 5
        %4821 = vperm.xlu0 %4820, %v4781
        %v4822 = vpop.permute.xlu0 %4821
        %4825 = vset.pattern.permute.xlu0 5
        %4826 = vperm.xlu0 %4825, %v4782
        %v4827 = vpop.permute.xlu0 %4826
        %4830 = vset.pattern.permute.xlu0 5
        %4831 = vperm.xlu0 %4830, %v4783
        %v4832 = vpop.permute.xlu0 %4831
        %4835 = vset.pattern.permute.xlu0 5
        %4836 = vperm.xlu0 %4835, %v4784
        %v4837 = vpop.permute.xlu0 %4836
        %4840 = vset.pattern.permute.xlu0 5
        %4841 = vperm.xlu0 %4840, %v4785
        %v4842 = vpop.permute.xlu0 %4841
        %4845 = vset.pattern.permute.xlu0 5
        %4846 = vperm.xlu0 %4845, %v4786
        %v4847 = vpop.permute.xlu0 %4846
        %4850 = vset.pattern.permute.xlu0 5
        %4851 = vperm.xlu0 %4850, %v4787
        %v4852 = vpop.permute.xlu0 %4851
        %4855 = vset.pattern.permute.xlu0 5
        %4856 = vperm.xlu0 %4855, %v4788
        %v4857 = vpop.permute.xlu0 %4856
        %4860 = vset.pattern.permute.xlu0 5
        %4861 = vperm.xlu0 %4860, %v4789
        %v4862 = vpop.permute.xlu0 %4861
        %4865 = vset.pattern.permute.xlu0 5
        %4866 = vperm.xlu0 %4865, %v4790
        %v4867 = vpop.permute.xlu0 %4866
        %4870 = vset.pattern.permute.xlu0 5
        %4871 = vperm.xlu0 %4870, %v4791
        %v4872 = vpop.permute.xlu0 %4871
        %v4874 = vmul.f32 %v4359, %v4797
        %v4875 = vmul.f32 %v4361, %v4802
        %v4876 = vmul.f32 %v4363, %v4807
        %v4877 = vmul.f32 %v4365, %v4812
        %v4878 = vmul.f32 %v4367, %v4817
        %v4879 = vmul.f32 %v4369, %v4822
        %v4880 = vmul.f32 %v4371, %v4827
        %v4881 = vmul.f32 %v4373, %v4832
        %v4882 = vmul.f32 %v4375, %v4837
        %v4883 = vmul.f32 %v4377, %v4842
        %v4884 = vmul.f32 %v4379, %v4847
        %v4885 = vmul.f32 %v4381, %v4852
        %v4886 = vmul.f32 %v4383, %v4857
        %v4887 = vmul.f32 %v4385, %v4862
        %v4888 = vmul.f32 %v4387, %v4867
        %v4889 = vmul.f32 %v4793, %v4872
        %v4890 = vpack.c.bf16 %v4875, %v4874
        %v4891 = vpack.c.bf16 %v4877, %v4876
        %v4892 = vpack.c.bf16 %v4879, %v4878
        %v4893 = vpack.c.bf16 %v4881, %v4880
        %v4894 = vpack.c.bf16 %v4883, %v4882
        %v4895 = vpack.c.bf16 %v4885, %v4884
        %v4896 = vpack.c.bf16 %v4887, %v4886
        %v4897 = vpack.c.bf16 %v4889, %v4888
        %4898 = vst [vmem:[#allocation2 + $0x28] sm:$0xff] %v4890
        %4899 = vst [vmem:[#allocation2 + $0x70] sm:$0xff] %v4891
        %4900 = vst [vmem:[#allocation2 + $0xb8] sm:$0xff] %v4892
        %4901 = vst [vmem:[#allocation2 + $0x100] sm:$0xff] %v4893
        %4902 = vst [vmem:[#allocation2 + $0x148] sm:$0xff] %v4894
        %4903 = vst [vmem:[#allocation2 + $0x190] sm:$0xff] %v4895
        %4904 = vst [vmem:[#allocation2 + $0x1d8] sm:$0xff] %v4896
        %4905 = vst [vmem:[#allocation2 + $0x220] sm:$0xff] %v4897
        %v4906 = vld [vmem:[%s1] sm:$0xff]
        %v4907 = vld [vmem:[%s1 + $0x8] sm:$0xff]
        %v4908 = vld [vmem:[%s1 + $0x10] sm:$0xff]
        %v4909 = vld [vmem:[%s1 + $0x18] sm:$0xff]
        %v4910 = vld [vmem:[%s1 + $0x20] sm:$0xff]
        %v4911 = vld [vmem:[%s1 + $0x28] sm:$0xff]
        %v4912 = vld [vmem:[%s1 + $0x30] sm:$0xff]
        %v4913 = vld [vmem:[%s1 + $0x38] sm:$0xff]
        %v4914 = vld [vmem:[%s1 + $0x40] sm:$0xff]
        %v4915 = vld [vmem:[%s1 + $0x48] sm:$0xff]
        %v4916 = vld [vmem:[%s1 + $0x50] sm:$0xff]
        %v4917 = vld [vmem:[%s1 + $0x58] sm:$0xff]
        %v4918 = vld [vmem:[%s1 + $0x60] sm:$0xff]
        %v4919 = vld [vmem:[%s1 + $0x68] sm:$0xff]
        %v4920 = vld [vmem:[%s1 + $0x70] sm:$0xff]
        %v4921 = vld [vmem:[%s1 + $0x78] sm:$0xff]
        %v4923 = vsel %vm1531, %v4533, 0.0
        %4925 = vset.pattern.permute.xlu0 6
        %4926 = vperm.xlu0 %4925, %v4906
        %v4927 = vpop.permute.xlu0 %4926
        %4930 = vset.pattern.permute.xlu0 6
        %4931 = vperm.xlu0 %4930, %v4907
        %v4932 = vpop.permute.xlu0 %4931
        %4935 = vset.pattern.permute.xlu0 6
        %4936 = vperm.xlu0 %4935, %v4908
        %v4937 = vpop.permute.xlu0 %4936
        %4940 = vset.pattern.permute.xlu0 6
        %4941 = vperm.xlu0 %4940, %v4909
        %v4942 = vpop.permute.xlu0 %4941
        %4945 = vset.pattern.permute.xlu0 6
        %4946 = vperm.xlu0 %4945, %v4910
        %v4947 = vpop.permute.xlu0 %4946
        %4950 = vset.pattern.permute.xlu0 6
        %4951 = vperm.xlu0 %4950, %v4911
        %v4952 = vpop.permute.xlu0 %4951
        %4955 = vset.pattern.permute.xlu0 6
        %4956 = vperm.xlu0 %4955, %v4912
        %v4957 = vpop.permute.xlu0 %4956
        %4960 = vset.pattern.permute.xlu0 6
        %4961 = vperm.xlu0 %4960, %v4913
        %v4962 = vpop.permute.xlu0 %4961
        %4965 = vset.pattern.permute.xlu0 6
        %4966 = vperm.xlu0 %4965, %v4914
        %v4967 = vpop.permute.xlu0 %4966
        %4970 = vset.pattern.permute.xlu0 6
        %4971 = vperm.xlu0 %4970, %v4915
        %v4972 = vpop.permute.xlu0 %4971
        %4975 = vset.pattern.permute.xlu0 6
        %4976 = vperm.xlu0 %4975, %v4916
        %v4977 = vpop.permute.xlu0 %4976
        %4980 = vset.pattern.permute.xlu0 6
        %4981 = vperm.xlu0 %4980, %v4917
        %v4982 = vpop.permute.xlu0 %4981
        %4985 = vset.pattern.permute.xlu0 6
        %4986 = vperm.xlu0 %4985, %v4918
        %v4987 = vpop.permute.xlu0 %4986
        %4990 = vset.pattern.permute.xlu0 6
        %4991 = vperm.xlu0 %4990, %v4919
        %v4992 = vpop.permute.xlu0 %4991
        %4995 = vset.pattern.permute.xlu0 6
        %4996 = vperm.xlu0 %4995, %v4920
        %v4997 = vpop.permute.xlu0 %4996
        %5000 = vset.pattern.permute.xlu0 6
        %5001 = vperm.xlu0 %5000, %v4921
        %v5002 = vpop.permute.xlu0 %5001
        %v5004 = vmul.f32 %v4057, %v4927
        %v5005 = vmul.f32 %v4059, %v4932
        %v5006 = vmul.f32 %v4061, %v4937
        %v5007 = vmul.f32 %v4063, %v4942
        %v5008 = vmul.f32 %v4065, %v4947
        %v5009 = vmul.f32 %v4067, %v4952
        %v5010 = vmul.f32 %v4069, %v4957
        %v5011 = vmul.f32 %v4071, %v4962
        %v5012 = vmul.f32 %v4073, %v4967
        %v5013 = vmul.f32 %v4075, %v4972
        %v5014 = vmul.f32 %v4077, %v4977
        %v5015 = vmul.f32 %v4079, %v4982
        %v5016 = vmul.f32 %v4081, %v4987
        %v5017 = vmul.f32 %v4083, %v4992
        %v5018 = vmul.f32 %v4534, %v4997
        %v5019 = vmul.f32 %v4923, %v5002
        %v5020 = vpack.c.bf16 %v5005, %v5004
        %v5021 = vpack.c.bf16 %v5007, %v5006
        %v5022 = vpack.c.bf16 %v5009, %v5008
        %v5023 = vpack.c.bf16 %v5011, %v5010
        %v5024 = vpack.c.bf16 %v5013, %v5012
        %v5025 = vpack.c.bf16 %v5015, %v5014
        %v5026 = vpack.c.bf16 %v5017, %v5016
        %v5027 = vpack.c.bf16 %v5019, %v5018
        %5028 = vst [vmem:[#allocation2 + $0x30] sm:$0xff] %v5020
        %5029 = vst [vmem:[#allocation2 + $0x78] sm:$0xff] %v5021
        %5030 = vst [vmem:[#allocation2 + $0xc0] sm:$0xff] %v5022
        %5031 = vst [vmem:[#allocation2 + $0x108] sm:$0xff] %v5023
        %5032 = vst [vmem:[#allocation2 + $0x150] sm:$0xff] %v5024
        %5033 = vst [vmem:[#allocation2 + $0x198] sm:$0xff] %v5025
        %5034 = vst [vmem:[#allocation2 + $0x1e0] sm:$0xff] %v5026
        %5035 = vst [vmem:[#allocation2 + $0x228] sm:$0xff] %v5027
        %v5036 = vld [vmem:[%s1] sm:$0xff]
        %v5037 = vld [vmem:[%s1 + $0x8] sm:$0xff]
        %v5038 = vld [vmem:[%s1 + $0x10] sm:$0xff]
        %v5039 = vld [vmem:[%s1 + $0x18] sm:$0xff]
        %v5040 = vld [vmem:[%s1 + $0x20] sm:$0xff]
        %v5041 = vld [vmem:[%s1 + $0x28] sm:$0xff]
        %v5042 = vld [vmem:[%s1 + $0x30] sm:$0xff]
        %v5043 = vld [vmem:[%s1 + $0x38] sm:$0xff]
        %v5044 = vld [vmem:[%s1 + $0x40] sm:$0xff]
        %v5045 = vld [vmem:[%s1 + $0x48] sm:$0xff]
        %v5046 = vld [vmem:[%s1 + $0x50] sm:$0xff]
        %v5047 = vld [vmem:[%s1 + $0x58] sm:$0xff]
        %v5048 = vld [vmem:[%s1 + $0x60] sm:$0xff]
        %v5049 = vld [vmem:[%s1 + $0x68] sm:$0xff]
        %v5050 = vld [vmem:[%s1 + $0x70] sm:$0xff]
        %v5051 = vld [vmem:[%s1 + $0x78] sm:$0xff]
        %5053 = vset.pattern.permute.xlu0 7
        %5054 = vperm.xlu0 %5053, %v5036
        %v5055 = vpop.permute.xlu0 %5054
        %5058 = vset.pattern.permute.xlu0 7
        %5059 = vperm.xlu0 %5058, %v5037
        %v5060 = vpop.permute.xlu0 %5059
        %5063 = vset.pattern.permute.xlu0 7
        %5064 = vperm.xlu0 %5063, %v5038
        %v5065 = vpop.permute.xlu0 %5064
        %5068 = vset.pattern.permute.xlu0 7
        %5069 = vperm.xlu0 %5068, %v5039
        %v5070 = vpop.permute.xlu0 %5069
        %5073 = vset.pattern.permute.xlu0 7
        %5074 = vperm.xlu0 %5073, %v5040
        %v5075 = vpop.permute.xlu0 %5074
        %5078 = vset.pattern.permute.xlu0 7
        %5079 = vperm.xlu0 %5078, %v5041
        %v5080 = vpop.permute.xlu0 %5079
        %5083 = vset.pattern.permute.xlu0 7
        %5084 = vperm.xlu0 %5083, %v5042
        %v5085 = vpop.permute.xlu0 %5084
        %5088 = vset.pattern.permute.xlu0 7
        %5089 = vperm.xlu0 %5088, %v5043
        %v5090 = vpop.permute.xlu0 %5089
        %5093 = vset.pattern.permute.xlu0 7
        %5094 = vperm.xlu0 %5093, %v5044
        %v5095 = vpop.permute.xlu0 %5094
        %5098 = vset.pattern.permute.xlu0 7
        %5099 = vperm.xlu0 %5098, %v5045
        %v5100 = vpop.permute.xlu0 %5099
        %5103 = vset.pattern.permute.xlu0 7
        %5104 = vperm.xlu0 %5103, %v5046
        %v5105 = vpop.permute.xlu0 %5104
        %5108 = vset.pattern.permute.xlu0 7
        %5109 = vperm.xlu0 %5108, %v5047
        %v5110 = vpop.permute.xlu0 %5109
        %5113 = vset.pattern.permute.xlu0 7
        %5114 = vperm.xlu0 %5113, %v5048
        %v5115 = vpop.permute.xlu0 %5114
        %5118 = vset.pattern.permute.xlu0 7
        %5119 = vperm.xlu0 %5118, %v5049
        %v5120 = vpop.permute.xlu0 %5119
        %5123 = vset.pattern.permute.xlu0 7
        %5124 = vperm.xlu0 %5123, %v5050
        %v5125 = vpop.permute.xlu0 %5124
        %5128 = vset.pattern.permute.xlu0 7
        %5129 = vperm.xlu0 %5128, %v5051
        %v5130 = vpop.permute.xlu0 %5129
        %v5132 = vmul.f32 %v1439, %v5055
        %v5133 = vmul.f32 %v1442, %v5060
        %v5134 = vmul.f32 %v1445, %v5065
        %v5135 = vmul.f32 %v1448, %v5070
        %v5136 = vmul.f32 %v1451, %v5075
        %v5137 = vmul.f32 %v1454, %v5080
        %v5138 = vmul.f32 %v1457, %v5085
        %v5139 = vmul.f32 %v1460, %v5090
        %v5140 = vmul.f32 %v1463, %v5095
        %v5141 = vmul.f32 %v1466, %v5100
        %v5142 = vmul.f32 %v1469, %v5105
        %v5143 = vmul.f32 %v1472, %v5110
        %v5144 = vmul.f32 %v1475, %v5115
        %v5145 = vmul.f32 %v1478, %v5120
        %v5146 = vmul.f32 %v1481, %v5125
        %v5147 = vmul.f32 %v5130, 0.0
        %v5148 = vpack.c.bf16 %v5133, %v5132
        %v5149 = vpack.c.bf16 %v5135, %v5134
        %v5150 = vpack.c.bf16 %v5137, %v5136
        %v5151 = vpack.c.bf16 %v5139, %v5138
        %v5152 = vpack.c.bf16 %v5141, %v5140
        %v5153 = vpack.c.bf16 %v5143, %v5142
        %v5154 = vpack.c.bf16 %v5145, %v5144
        %v5155 = vpack.c.bf16 %v5147, %v5146
        %5156 = vst [vmem:[#allocation2 + $0x38] sm:$0xff] %v5148
        %5157 = vst [vmem:[#allocation2 + $0x80] sm:$0xff] %v5149
        %5158 = vst [vmem:[#allocation2 + $0xc8] sm:$0xff] %v5150
        %5159 = vst [vmem:[#allocation2 + $0x110] sm:$0xff] %v5151
        %5160 = vst [vmem:[#allocation2 + $0x158] sm:$0xff] %v5152
        %5161 = vst [vmem:[#allocation2 + $0x1a0] sm:$0xff] %v5153
        %5162 = vst [vmem:[#allocation2 + $0x1e8] sm:$0xff] %v5154
        %5163 = vst [vmem:[#allocation2 + $0x230] sm:$0xff] %v5155
        %v5164 = vld [vmem:[%s1] sm:$0xff]
        %v5165 = vld [vmem:[%s1 + $0x8] sm:$0xff]
        %v5166 = vld [vmem:[%s1 + $0x10] sm:$0xff]
        %v5167 = vld [vmem:[%s1 + $0x18] sm:$0xff]
        %v5168 = vld [vmem:[%s1 + $0x20] sm:$0xff]
        %v5169 = vld [vmem:[%s1 + $0x28] sm:$0xff]
        %v5170 = vld [vmem:[%s1 + $0x30] sm:$0xff]
        %v5171 = vld [vmem:[%s1 + $0x38] sm:$0xff]
        %v5172 = vld [vmem:[%s1 + $0x40] sm:$0xff]
        %v5173 = vld [vmem:[%s1 + $0x48] sm:$0xff]
        %v5174 = vld [vmem:[%s1 + $0x50] sm:$0xff]
        %v5175 = vld [vmem:[%s1 + $0x58] sm:$0xff]
        %v5176 = vld [vmem:[%s1 + $0x60] sm:$0xff]
        %v5177 = vld [vmem:[%s1 + $0x68] sm:$0xff]
        %v5178 = vld [vmem:[%s1 + $0x70] sm:$0xff]
        %v5179 = vld [vmem:[%s1 + $0x78] sm:$0xff]
        %5181 = vset.pattern.permute.xlu0 8
        %5182 = vperm.xlu0 %5181, %v5164
        %v5183 = vpop.permute.xlu0 %5182
        %5186 = vset.pattern.permute.xlu0 8
        %5187 = vperm.xlu0 %5186, %v5165
        %v5188 = vpop.permute.xlu0 %5187
        %5191 = vset.pattern.permute.xlu0 8
        %5192 = vperm.xlu0 %5191, %v5166
        %v5193 = vpop.permute.xlu0 %5192
        %5196 = vset.pattern.permute.xlu0 8
        %5197 = vperm.xlu0 %5196, %v5167
        %v5198 = vpop.permute.xlu0 %5197
        %5201 = vset.pattern.permute.xlu0 8
        %5202 = vperm.xlu0 %5201, %v5168
        %v5203 = vpop.permute.xlu0 %5202
        %5206 = vset.pattern.permute.xlu0 8
        %5207 = vperm.xlu0 %5206, %v5169
        %v5208 = vpop.permute.xlu0 %5207
        %5211 = vset.pattern.permute.xlu0 8
        %5212 = vperm.xlu0 %5211, %v5170
        %v5213 = vpop.permute.xlu0 %5212
        %5216 = vset.pattern.permute.xlu0 8
        %5217 = vperm.xlu0 %5216, %v5171
        %v5218 = vpop.permute.xlu0 %5217
        %5221 = vset.pattern.permute.xlu0 8
        %5222 = vperm.xlu0 %5221, %v5172
        %v5223 = vpop.permute.xlu0 %5222
        %5226 = vset.pattern.permute.xlu0 8
        %5227 = vperm.xlu0 %5226, %v5173
        %v5228 = vpop.permute.xlu0 %5227
        %5231 = vset.pattern.permute.xlu0 8
        %5232 = vperm.xlu0 %5231, %v5174
        %v5233 = vpop.permute.xlu0 %5232
        %5236 = vset.pattern.permute.xlu0 8
        %5237 = vperm.xlu0 %5236, %v5175
        %v5238 = vpop.permute.xlu0 %5237
        %5241 = vset.pattern.permute.xlu0 8
        %5242 = vperm.xlu0 %5241, %v5176
        %v5243 = vpop.permute.xlu0 %5242
        %5246 = vset.pattern.permute.xlu0 8
        %5247 = vperm.xlu0 %5246, %v5177
        %v5248 = vpop.permute.xlu0 %5247
        %5251 = vset.pattern.permute.xlu0 8
        %5252 = vperm.xlu0 %5251, %v5178
        %v5253 = vpop.permute.xlu0 %5252
        %5256 = vset.pattern.permute.xlu0 8
        %5257 = vperm.xlu0 %5256, %v5179
        %v5258 = vpop.permute.xlu0 %5257
        %v5260 = vmul.f32 %v4361, %v5183
        %v5261 = vmul.f32 %v4363, %v5188
        %v5262 = vmul.f32 %v4365, %v5193
        %v5263 = vmul.f32 %v4367, %v5198
        %v5264 = vmul.f32 %v4369, %v5203
        %v5265 = vmul.f32 %v4371, %v5208
        %v5266 = vmul.f32 %v4373, %v5213
        %v5267 = vmul.f32 %v4375, %v5218
        %v5268 = vmul.f32 %v4377, %v5223
        %v5269 = vmul.f32 %v4379, %v5228
        %v5270 = vmul.f32 %v4381, %v5233
        %v5271 = vmul.f32 %v4383, %v5238
        %v5272 = vmul.f32 %v4385, %v5243
        %v5273 = vmul.f32 %v4387, %v5248
        %v5274 = vmul.f32 %v4793, %v5253
        %v5275 = vmul.f32 %v5258, 0.0
        %v5276 = vpack.c.bf16 %v5261, %v5260
        %v5277 = vpack.c.bf16 %v5263, %v5262
        %v5278 = vpack.c.bf16 %v5265, %v5264
        %v5279 = vpack.c.bf16 %v5267, %v5266
        %v5280 = vpack.c.bf16 %v5269, %v5268
        %v5281 = vpack.c.bf16 %v5271, %v5270
        %v5282 = vpack.c.bf16 %v5273, %v5272
        %v5283 = vpack.c.bf16 %v5275, %v5274
        %5284 = vst [vmem:[#allocation2 + $0x40] sm:$0xff] %v5276
        %5285 = vst [vmem:[#allocation2 + $0x88] sm:$0xff] %v5277
        %5286 = vst [vmem:[#allocation2 + $0xd0] sm:$0xff] %v5278
        %5287 = vst [vmem:[#allocation2 + $0x118] sm:$0xff] %v5279
        %5288 = vst [vmem:[#allocation2 + $0x160] sm:$0xff] %v5280
        %5289 = vst [vmem:[#allocation2 + $0x1a8] sm:$0xff] %v5281
        %5290 = vst [vmem:[#allocation2 + $0x1f0] sm:$0xff] %v5282
        %5291 = vst [vmem:[#allocation2 + $0x238] sm:$0xff] %v5283
        %v5292 = vld [vmem:[#allocation2] sm:$0xff]
        %v5293 = vld [vmem:[#allocation2 + $0x8] sm:$0xff]
        %v5294 = vld [vmem:[#allocation2 + $0x10] sm:$0xff]
        %v5295 = vld [vmem:[#allocation2 + $0x18] sm:$0xff]
        %v5296 = vld [vmem:[#allocation2 + $0x20] sm:$0xff]
        %v5297 = vld [vmem:[#allocation2 + $0x28] sm:$0xff]
        %v5298 = vld [vmem:[#allocation2 + $0x30] sm:$0xff]
        %v5299 = vld [vmem:[#allocation2 + $0x38] sm:$0xff]
        %v5300 = vld [vmem:[#allocation2 + $0x40] sm:$0xff]
        %v5301 = vld [vmem:[#allocation2 + $0x48] sm:$0xff]
        %v5302 = vld [vmem:[#allocation2 + $0x50] sm:$0xff]
        %v5303 = vld [vmem:[#allocation2 + $0x58] sm:$0xff]
        %v5304 = vld [vmem:[#allocation2 + $0x60] sm:$0xff]
        %v5305 = vld [vmem:[#allocation2 + $0x68] sm:$0xff]
        %v5306 = vld [vmem:[#allocation2 + $0x70] sm:$0xff]
        %v5307 = vld [vmem:[#allocation2 + $0x78] sm:$0xff]
        %v5308 = vld [vmem:[#allocation2 + $0x80] sm:$0xff]
        %v5309 = vld [vmem:[#allocation2 + $0x88] sm:$0xff]
        %v5310 = vld [vmem:[#allocation2 + $0x90] sm:$0xff]
        %v5311 = vld [vmem:[#allocation2 + $0x98] sm:$0xff]
        %v5312 = vld [vmem:[#allocation2 + $0xa0] sm:$0xff]
        %v5313 = vld [vmem:[#allocation2 + $0xa8] sm:$0xff]
        %v5314 = vld [vmem:[#allocation2 + $0xb0] sm:$0xff]
        %v5315 = vld [vmem:[#allocation2 + $0xb8] sm:$0xff]
        %v5316 = vld [vmem:[#allocation2 + $0xc0] sm:$0xff]
        %v5317 = vld [vmem:[#allocation2 + $0xc8] sm:$0xff]
        %v5318 = vld [vmem:[#allocation2 + $0xd0] sm:$0xff]
        %v5319 = vld [vmem:[#allocation2 + $0xd8] sm:$0xff]
        %v5320 = vld [vmem:[#allocation2 + $0xe0] sm:$0xff]
        %v5321 = vld [vmem:[#allocation2 + $0xe8] sm:$0xff]
        %v5322 = vld [vmem:[#allocation2 + $0xf0] sm:$0xff]
        %v5323 = vld [vmem:[#allocation2 + $0xf8] sm:$0xff]
        %v5324 = vld [vmem:[#allocation2 + $0x100] sm:$0xff]
        %v5325 = vld [vmem:[#allocation2 + $0x108] sm:$0xff]
        %v5326 = vld [vmem:[#allocation2 + $0x110] sm:$0xff]
        %v5327 = vld [vmem:[#allocation2 + $0x118] sm:$0xff]
        %v5328 = vld [vmem:[#allocation2 + $0x120] sm:$0xff]
        %v5329 = vld [vmem:[#allocation2 + $0x128] sm:$0xff]
        %v5330 = vld [vmem:[#allocation2 + $0x130] sm:$0xff]
        %v5331 = vld [vmem:[#allocation2 + $0x138] sm:$0xff]
        %v5332 = vld [vmem:[#allocation2 + $0x140] sm:$0xff]
        %v5333 = vld [vmem:[#allocation2 + $0x148] sm:$0xff]
        %v5334 = vld [vmem:[#allocation2 + $0x150] sm:$0xff]
        %v5335 = vld [vmem:[#allocation2 + $0x158] sm:$0xff]
        %v5336 = vld [vmem:[#allocation2 + $0x160] sm:$0xff]
        %v5337 = vld [vmem:[#allocation2 + $0x168] sm:$0xff]
        %v5338 = vld [vmem:[#allocation2 + $0x170] sm:$0xff]
        %v5339 = vld [vmem:[#allocation2 + $0x178] sm:$0xff]
        %v5340 = vld [vmem:[#allocation2 + $0x180] sm:$0xff]
        %v5341 = vld [vmem:[#allocation2 + $0x188] sm:$0xff]
        %v5342 = vld [vmem:[#allocation2 + $0x190] sm:$0xff]
        %v5343 = vld [vmem:[#allocation2 + $0x198] sm:$0xff]
        %v5344 = vld [vmem:[#allocation2 + $0x1a0] sm:$0xff]
        %v5345 = vld [vmem:[#allocation2 + $0x1a8] sm:$0xff]
        %v5346 = vld [vmem:[#allocation2 + $0x1b0] sm:$0xff]
        %v5347 = vld [vmem:[#allocation2 + $0x1b8] sm:$0xff]
        %v5348 = vld [vmem:[#allocation2 + $0x1c0] sm:$0xff]
        %v5349 = vld [vmem:[#allocation2 + $0x1c8] sm:$0xff]
        %v5350 = vld [vmem:[#allocation2 + $0x1d0] sm:$0xff]
        %v5351 = vld [vmem:[#allocation2 + $0x1d8] sm:$0xff]
        %v5352 = vld [vmem:[#allocation2 + $0x1e0] sm:$0xff]
        %v5353 = vld [vmem:[#allocation2 + $0x1e8] sm:$0xff]
        %v5354 = vld [vmem:[#allocation2 + $0x1f0] sm:$0xff]
        %v5355 = vld [vmem:[#allocation2 + $0x1f8] sm:$0xff]
        %v5356 = vld [vmem:[#allocation2 + $0x200] sm:$0xff]
        %v5357 = vld [vmem:[#allocation2 + $0x208] sm:$0xff]
        %v5358 = vld [vmem:[#allocation2 + $0x210] sm:$0xff]
        %v5359 = vld [vmem:[#allocation2 + $0x218] sm:$0xff]
        %v5360 = vld [vmem:[#allocation2 + $0x220] sm:$0xff]
        %v5361 = vld [vmem:[#allocation2 + $0x228] sm:$0xff]
        %v5362 = vld [vmem:[#allocation2 + $0x230] sm:$0xff]
        %v5363 = vld [vmem:[#allocation2 + $0x238] sm:$0xff]
        %v5364 = vld [vmem:[%s7] sm:$0xf]
        %v5365 = vld [vmem:[%s7 + $0x4] sm:$0xf]
        %v5366 = vld [vmem:[%s7 + $0x8] sm:$0xf]
        %v5367 = vld [vmem:[%s7 + $0xc] sm:$0xf]
        %v5368 = vld [vmem:[%s7 + $0x10] sm:$0xf]
        %v5369 = vld [vmem:[%s7 + $0x14] sm:$0xf]
        %v5370 = vld [vmem:[%s7 + $0x18] sm:$0xf]
        %v5371 = vld [vmem:[%s7 + $0x1c] sm:$0xf]
        %v5372 = vld [vmem:[%s7 + $0x20] sm:$0xf]
        %v5373 = vld [vmem:[%s7 + $0x24] sm:$0xf]
        %v5374 = vld [vmem:[%s7 + $0x28] sm:$0xf]
        %v5375 = vld [vmem:[%s7 + $0x2c] sm:$0xf]
        %v5376 = vld [vmem:[%s7 + $0x30] sm:$0xf]
        %v5377 = vld [vmem:[%s7 + $0x34] sm:$0xf]
        %v5378 = vld [vmem:[%s7 + $0x38] sm:$0xf]
        %v5379 = vld [vmem:[%s7 + $0x3c] sm:$0xf]
        %v5380 = vld [vmem:[%s7 + $0x40] sm:$0xf]
        %v5381 = vld [vmem:[%s7 + $0x44] sm:$0xf]
        %v5382 = vld [vmem:[%s7 + $0x48] sm:$0xf]
        %v5383 = vld [vmem:[%s7 + $0x4c] sm:$0xf]
        %v5384 = vld [vmem:[%s7 + $0x50] sm:$0xf]
        %v5385 = vld [vmem:[%s7 + $0x54] sm:$0xf]
        %v5386 = vld [vmem:[%s7 + $0x58] sm:$0xf]
        %v5387 = vld [vmem:[%s7 + $0x5c] sm:$0xf]
        %v5388 = vld [vmem:[%s7 + $0x60] sm:$0xf]
        %v5389 = vld [vmem:[%s7 + $0x64] sm:$0xf]
        %v5390 = vld [vmem:[%s7 + $0x68] sm:$0xf]
        %v5391 = vld [vmem:[%s7 + $0x6c] sm:$0xf]
        %v5392 = vld [vmem:[%s7 + $0x70] sm:$0xf]
        %v5393 = vld [vmem:[%s7 + $0x74] sm:$0xf]
        %v5394 = vld [vmem:[%s7 + $0x78] sm:$0xf]
        %v5395 = vld [vmem:[%s7 + $0x7c] sm:$0xf]
        %v5396 = vld [vmem:[%s7 + $0x80] sm:$0xf]
        %v5397 = vld [vmem:[%s7 + $0x84] sm:$0xf]
        %v5398 = vld [vmem:[%s7 + $0x88] sm:$0xf]
        %v5399 = vld [vmem:[%s7 + $0x8c] sm:$0xf]
        %v5400 = vld [vmem:[%s7 + $0x90] sm:$0xf]
        %v5401 = vld [vmem:[%s7 + $0x94] sm:$0xf]
        %v5402 = vld [vmem:[%s7 + $0x98] sm:$0xf]
        %v5403 = vld [vmem:[%s7 + $0x9c] sm:$0xf]
        %v5404 = vld [vmem:[%s7 + $0xa0] sm:$0xf]
        %v5405 = vld [vmem:[%s7 + $0xa4] sm:$0xf]
        %v5406 = vld [vmem:[%s7 + $0xa8] sm:$0xf]
        %v5407 = vld [vmem:[%s7 + $0xac] sm:$0xf]
        %v5408 = vld [vmem:[%s7 + $0xb0] sm:$0xf]
        %v5409 = vld [vmem:[%s7 + $0xb4] sm:$0xf]
        %v5410 = vld [vmem:[%s7 + $0xb8] sm:$0xf]
        %v5411 = vld [vmem:[%s7 + $0xbc] sm:$0xf]
        %v5412 = vld [vmem:[%s7 + $0xc0] sm:$0xf]
        %v5413 = vld [vmem:[%s7 + $0xc4] sm:$0xf]
        %v5414 = vld [vmem:[%s7 + $0xc8] sm:$0xf]
        %v5415 = vld [vmem:[%s7 + $0xcc] sm:$0xf]
        %v5416 = vld [vmem:[%s7 + $0xd0] sm:$0xf]
        %v5417 = vld [vmem:[%s7 + $0xd4] sm:$0xf]
        %v5418 = vld [vmem:[%s7 + $0xd8] sm:$0xf]
        %v5419 = vld [vmem:[%s7 + $0xdc] sm:$0xf]
        %v5420 = vld [vmem:[%s7 + $0xe0] sm:$0xf]
        %v5421 = vld [vmem:[%s7 + $0xe4] sm:$0xf]
        %v5422 = vld [vmem:[%s7 + $0xe8] sm:$0xf]
        %v5423 = vld [vmem:[%s7 + $0xec] sm:$0xf]
        %v5424 = vld [vmem:[%s7 + $0xf0] sm:$0xf]
        %v5425 = vld [vmem:[%s7 + $0xf4] sm:$0xf]
        %v5426 = vld [vmem:[%s7 + $0xf8] sm:$0xf]
        %v5427 = vld [vmem:[%s7 + $0xfc] sm:$0xf]
        %v5428 = vld [vmem:[%s7 + $0x100] sm:$0xf]
        %v5429 = vld [vmem:[%s7 + $0x104] sm:$0xf]
        %v5430 = vld [vmem:[%s7 + $0x108] sm:$0xf]
        %v5431 = vld [vmem:[%s7 + $0x10c] sm:$0xf]
        %v5432 = vld [vmem:[%s7 + $0x110] sm:$0xf]
        %v5433 = vld [vmem:[%s7 + $0x114] sm:$0xf]
        %v5434 = vld [vmem:[%s7 + $0x118] sm:$0xf]
        %v5435 = vld [vmem:[%s7 + $0x11c] sm:$0xf]
        %v5436 = vld [vmem:[%s7 + $0x120] sm:$0xf]
        %v5437 = vld [vmem:[%s7 + $0x124] sm:$0xf]
        %v5438 = vld [vmem:[%s7 + $0x128] sm:$0xf]
        %v5439 = vld [vmem:[%s7 + $0x12c] sm:$0xf]
        %v5440 = vld [vmem:[%s7 + $0x130] sm:$0xf]
        %v5441 = vld [vmem:[%s7 + $0x134] sm:$0xf]
        %v5442 = vld [vmem:[%s7 + $0x138] sm:$0xf]
        %v5443 = vld [vmem:[%s7 + $0x13c] sm:$0xf]
        %v5444 = vld [vmem:[%s7 + $0x140] sm:$0xf]
        %v5445 = vld [vmem:[%s7 + $0x144] sm:$0xf]
        %v5446 = vld [vmem:[%s7 + $0x148] sm:$0xf]
        %v5447 = vld [vmem:[%s7 + $0x14c] sm:$0xf]
        %v5448 = vld [vmem:[%s7 + $0x150] sm:$0xf]
        %v5449 = vld [vmem:[%s7 + $0x154] sm:$0xf]
        %v5450 = vld [vmem:[%s7 + $0x158] sm:$0xf]
        %v5451 = vld [vmem:[%s7 + $0x15c] sm:$0xf]
        %v5452 = vld [vmem:[%s7 + $0x160] sm:$0xf]
        %v5453 = vld [vmem:[%s7 + $0x164] sm:$0xf]
        %v5454 = vld [vmem:[%s7 + $0x168] sm:$0xf]
        %v5455 = vld [vmem:[%s7 + $0x16c] sm:$0xf]
        %v5456 = vld [vmem:[%s7 + $0x170] sm:$0xf]
        %v5457 = vld [vmem:[%s7 + $0x174] sm:$0xf]
        %v5458 = vld [vmem:[%s7 + $0x178] sm:$0xf]
        %v5459 = vld [vmem:[%s7 + $0x17c] sm:$0xf]
        %v5460 = vld [vmem:[%s7 + $0x180] sm:$0xf]
        %v5461 = vld [vmem:[%s7 + $0x184] sm:$0xf]
        %v5462 = vld [vmem:[%s7 + $0x188] sm:$0xf]
        %v5463 = vld [vmem:[%s7 + $0x18c] sm:$0xf]
        %v5464 = vld [vmem:[%s7 + $0x190] sm:$0xf]
        %v5465 = vld [vmem:[%s7 + $0x194] sm:$0xf]
        %v5466 = vld [vmem:[%s7 + $0x198] sm:$0xf]
        %v5467 = vld [vmem:[%s7 + $0x19c] sm:$0xf]
        %v5468 = vld [vmem:[%s7 + $0x1a0] sm:$0xf]
        %v5469 = vld [vmem:[%s7 + $0x1a4] sm:$0xf]
        %v5470 = vld [vmem:[%s7 + $0x1a8] sm:$0xf]
        %v5471 = vld [vmem:[%s7 + $0x1ac] sm:$0xf]
        %v5472 = vld [vmem:[%s7 + $0x1b0] sm:$0xf]
        %v5473 = vld [vmem:[%s7 + $0x1b4] sm:$0xf]
        %v5474 = vld [vmem:[%s7 + $0x1b8] sm:$0xf]
        %v5475 = vld [vmem:[%s7 + $0x1bc] sm:$0xf]
        %v5476 = vld [vmem:[%s7 + $0x1c0] sm:$0xf]
        %v5477 = vld [vmem:[%s7 + $0x1c4] sm:$0xf]
        %v5478 = vld [vmem:[%s7 + $0x1c8] sm:$0xf]
        %v5479 = vld [vmem:[%s7 + $0x1cc] sm:$0xf]
        %v5480 = vld [vmem:[%s7 + $0x1d0] sm:$0xf]
        %v5481 = vld [vmem:[%s7 + $0x1d4] sm:$0xf]
        %v5482 = vld [vmem:[%s7 + $0x1d8] sm:$0xf]
        %v5483 = vld [vmem:[%s7 + $0x1dc] sm:$0xf]
        %v5484 = vld [vmem:[%s7 + $0x1e0] sm:$0xf]
        %v5485 = vld [vmem:[%s7 + $0x1e4] sm:$0xf]
        %v5486 = vld [vmem:[%s7 + $0x1e8] sm:$0xf]
        %v5487 = vld [vmem:[%s7 + $0x1ec] sm:$0xf]
        %v5488 = vld [vmem:[%s7 + $0x1f0] sm:$0xf]
        %v5489 = vld [vmem:[%s7 + $0x1f4] sm:$0xf]
        %v5490 = vld [vmem:[%s7 + $0x1f8] sm:$0xf]
        %v5491 = vld [vmem:[%s7 + $0x1fc] sm:$0xf]
        %v5492 = vld [vmem:[%s7 + $0x200] sm:$0xf]
        %v5493 = vld [vmem:[%s7 + $0x204] sm:$0xf]
        %v5494 = vld [vmem:[%s7 + $0x208] sm:$0xf]
        %v5495 = vld [vmem:[%s7 + $0x20c] sm:$0xf]
        %v5496 = vld [vmem:[%s7 + $0x210] sm:$0xf]
        %v5497 = vld [vmem:[%s7 + $0x214] sm:$0xf]
        %v5498 = vld [vmem:[%s7 + $0x218] sm:$0xf]
        %v5499 = vld [vmem:[%s7 + $0x21c] sm:$0xf]
        %v5500 = vld [vmem:[%s7 + $0x220] sm:$0xf]
        %v5501 = vld [vmem:[%s7 + $0x224] sm:$0xf]
        %v5502 = vld [vmem:[%s7 + $0x228] sm:$0xf]
        %v5503 = vld [vmem:[%s7 + $0x22c] sm:$0xf]
        %v5504 = vld [vmem:[%s7 + $0x230] sm:$0xf]
        %v5505 = vld [vmem:[%s7 + $0x234] sm:$0xf]
        %v5506 = vld [vmem:[%s7 + $0x238] sm:$0xf]
        %v5507 = vld [vmem:[%s7 + $0x23c] sm:$0xf]
        %v5508 = vld [vmem:[%s8] sm:$0x1]
        %v5510 = vlaneseq
        %v5511 = vshrl.u32 %v5510, 7
        %v5512 = vsub.s32 0, %v5511
        %v5513 = vrot.slane %v5508, %v5512
        %v5659 = vunpack.c.l.b16 %v5364
        %v5660 = vunpack.c.l.b16 %v5365
        %v5661 = vunpack.c.l.b16 %v5366
        %v5662 = vunpack.c.l.b16 %v5367
        %v5663 = vunpack.c.l.b16 %v5368
        %v5664 = vunpack.c.l.b16 %v5369
        %v5665 = vunpack.c.l.b16 %v5370
        %v5666 = vunpack.c.l.b16 %v5371
        %v5667 = vunpack.c.l.b16 %v5372
        %v5668 = vunpack.c.l.b16 %v5373
        %v5669 = vunpack.c.l.b16 %v5374
        %v5670 = vunpack.c.l.b16 %v5375
        %v5671 = vunpack.c.l.b16 %v5376
        %v5672 = vunpack.c.l.b16 %v5377
        %v5673 = vunpack.c.l.b16 %v5378
        %v5674 = vunpack.c.l.b16 %v5379
        %v5675 = vunpack.c.l.b16 %v5380
        %v5676 = vunpack.c.l.b16 %v5381
        %v5677 = vunpack.c.l.b16 %v5382
        %v5678 = vunpack.c.l.b16 %v5383
        %v5679 = vunpack.c.l.b16 %v5384
        %v5680 = vunpack.c.l.b16 %v5385
        %v5681 = vunpack.c.l.b16 %v5386
        %v5682 = vunpack.c.l.b16 %v5387
        %v5683 = vunpack.c.l.b16 %v5388
        %v5684 = vunpack.c.l.b16 %v5389
        %v5685 = vunpack.c.l.b16 %v5390
        %v5686 = vunpack.c.l.b16 %v5391
        %v5687 = vunpack.c.l.b16 %v5392
        %v5688 = vunpack.c.l.b16 %v5393
        %v5689 = vunpack.c.l.b16 %v5394
        %v5690 = vunpack.c.l.b16 %v5395
        %v5691 = vunpack.c.l.b16 %v5396
        %v5692 = vunpack.c.l.b16 %v5397
        %v5693 = vunpack.c.l.b16 %v5398
        %v5694 = vunpack.c.l.b16 %v5399
        %v5695 = vunpack.c.l.b16 %v5400
        %v5696 = vunpack.c.l.b16 %v5401
        %v5697 = vunpack.c.l.b16 %v5402
        %v5698 = vunpack.c.l.b16 %v5403
        %v5699 = vunpack.c.l.b16 %v5404
        %v5700 = vunpack.c.l.b16 %v5405
        %v5701 = vunpack.c.l.b16 %v5406
        %v5702 = vunpack.c.l.b16 %v5407
        %v5703 = vunpack.c.l.b16 %v5408
        %v5704 = vunpack.c.l.b16 %v5409
        %v5705 = vunpack.c.l.b16 %v5410
        %v5706 = vunpack.c.l.b16 %v5411
        %v5707 = vunpack.c.l.b16 %v5412
        %v5708 = vunpack.c.l.b16 %v5413
        %v5709 = vunpack.c.l.b16 %v5414
        %v5710 = vunpack.c.l.b16 %v5415
        %v5711 = vunpack.c.l.b16 %v5416
        %v5712 = vunpack.c.l.b16 %v5417
        %v5713 = vunpack.c.l.b16 %v5418
        %v5714 = vunpack.c.l.b16 %v5419
        %v5715 = vunpack.c.l.b16 %v5420
        %v5716 = vunpack.c.l.b16 %v5421
        %v5717 = vunpack.c.l.b16 %v5422
        %v5718 = vunpack.c.l.b16 %v5423
        %v5719 = vunpack.c.l.b16 %v5424
        %v5720 = vunpack.c.l.b16 %v5425
        %v5721 = vunpack.c.l.b16 %v5426
        %v5722 = vunpack.c.l.b16 %v5427
        %v5723 = vunpack.c.l.b16 %v5428
        %v5724 = vunpack.c.l.b16 %v5429
        %v5725 = vunpack.c.l.b16 %v5430
        %v5726 = vunpack.c.l.b16 %v5431
        %v5727 = vunpack.c.l.b16 %v5432
        %v5728 = vunpack.c.l.b16 %v5433
        %v5729 = vunpack.c.l.b16 %v5434
        %v5730 = vunpack.c.l.b16 %v5435
        %v5731 = vunpack.c.l.b16 %v5436
        %v5732 = vunpack.c.l.b16 %v5437
        %v5733 = vunpack.c.l.b16 %v5438
        %v5734 = vunpack.c.l.b16 %v5439
        %v5735 = vunpack.c.l.b16 %v5440
        %v5736 = vunpack.c.l.b16 %v5441
        %v5737 = vunpack.c.l.b16 %v5442
        %v5738 = vunpack.c.l.b16 %v5443
        %v5739 = vunpack.c.l.b16 %v5444
        %v5740 = vunpack.c.l.b16 %v5445
        %v5741 = vunpack.c.l.b16 %v5446
        %v5742 = vunpack.c.l.b16 %v5447
        %v5743 = vunpack.c.l.b16 %v5448
        %v5744 = vunpack.c.l.b16 %v5449
        %v5745 = vunpack.c.l.b16 %v5450
        %v5746 = vunpack.c.l.b16 %v5451
        %v5747 = vunpack.c.l.b16 %v5452
        %v5748 = vunpack.c.l.b16 %v5453
        %v5749 = vunpack.c.l.b16 %v5454
        %v5750 = vunpack.c.l.b16 %v5455
        %v5751 = vunpack.c.l.b16 %v5456
        %v5752 = vunpack.c.l.b16 %v5457
        %v5753 = vunpack.c.l.b16 %v5458
        %v5754 = vunpack.c.l.b16 %v5459
        %v5755 = vunpack.c.l.b16 %v5460
        %v5756 = vunpack.c.l.b16 %v5461
        %v5757 = vunpack.c.l.b16 %v5462
        %v5758 = vunpack.c.l.b16 %v5463
        %v5759 = vunpack.c.l.b16 %v5464
        %v5760 = vunpack.c.l.b16 %v5465
        %v5761 = vunpack.c.l.b16 %v5466
        %v5762 = vunpack.c.l.b16 %v5467
        %v5763 = vunpack.c.l.b16 %v5468
        %v5764 = vunpack.c.l.b16 %v5469
        %v5765 = vunpack.c.l.b16 %v5470
        %v5766 = vunpack.c.l.b16 %v5471
        %v5767 = vunpack.c.l.b16 %v5472
        %v5768 = vunpack.c.l.b16 %v5473
        %v5769 = vunpack.c.l.b16 %v5474
        %v5770 = vunpack.c.l.b16 %v5475
        %v5771 = vunpack.c.l.b16 %v5476
        %v5772 = vunpack.c.l.b16 %v5477
        %v5773 = vunpack.c.l.b16 %v5478
        %v5774 = vunpack.c.l.b16 %v5479
        %v5775 = vunpack.c.l.b16 %v5480
        %v5776 = vunpack.c.l.b16 %v5481
        %v5777 = vunpack.c.l.b16 %v5482
        %v5778 = vunpack.c.l.b16 %v5483
        %v5779 = vunpack.c.l.b16 %v5484
        %v5780 = vunpack.c.l.b16 %v5485
        %v5781 = vunpack.c.l.b16 %v5486
        %v5782 = vunpack.c.l.b16 %v5487
        %v5783 = vunpack.c.l.b16 %v5488
        %v5784 = vunpack.c.l.b16 %v5489
        %v5785 = vunpack.c.l.b16 %v5490
        %v5786 = vunpack.c.l.b16 %v5491
        %v5787 = vunpack.c.l.b16 %v5492
        %v5788 = vunpack.c.l.b16 %v5493
        %v5789 = vunpack.c.l.b16 %v5494
        %v5790 = vunpack.c.l.b16 %v5495
        %v5791 = vunpack.c.l.b16 %v5496
        %v5792 = vunpack.c.l.b16 %v5497
        %v5793 = vunpack.c.l.b16 %v5498
        %v5794 = vunpack.c.l.b16 %v5499
        %v5795 = vunpack.c.l.b16 %v5500
        %v5796 = vunpack.c.l.b16 %v5501
        %v5797 = vunpack.c.l.b16 %v5502
        %v5798 = vunpack.c.l.b16 %v5503
        %v5799 = vunpack.c.l.b16 %v5504
        %v5800 = vunpack.c.l.b16 %v5505
        %v5801 = vunpack.c.l.b16 %v5506
        %v5802 = vunpack.c.l.b16 %v5507
        %v5803 = vpack.c.b16 %v5660, %v5659
        %v5804 = vpack.c.b16 %v5662, %v5661
        %v5805 = vpack.c.b16 %v5664, %v5663
        %v5806 = vpack.c.b16 %v5666, %v5665
        %v5807 = vpack.c.b16 %v5668, %v5667
        %v5808 = vpack.c.b16 %v5670, %v5669
        %v5809 = vpack.c.b16 %v5672, %v5671
        %v5810 = vpack.c.b16 %v5674, %v5673
        %v5811 = vpack.c.b16 %v5676, %v5675
        %v5812 = vpack.c.b16 %v5678, %v5677
        %v5813 = vpack.c.b16 %v5680, %v5679
        %v5814 = vpack.c.b16 %v5682, %v5681
        %v5815 = vpack.c.b16 %v5684, %v5683
        %v5816 = vpack.c.b16 %v5686, %v5685
        %v5817 = vpack.c.b16 %v5688, %v5687
        %v5818 = vpack.c.b16 %v5690, %v5689
        %v5819 = vpack.c.b16 %v5692, %v5691
        %v5820 = vpack.c.b16 %v5694, %v5693
        %v5821 = vpack.c.b16 %v5696, %v5695
        %v5822 = vpack.c.b16 %v5698, %v5697
        %v5823 = vpack.c.b16 %v5700, %v5699
        %v5824 = vpack.c.b16 %v5702, %v5701
        %v5825 = vpack.c.b16 %v5704, %v5703
        %v5826 = vpack.c.b16 %v5706, %v5705
        %v5827 = vpack.c.b16 %v5708, %v5707
        %v5828 = vpack.c.b16 %v5710, %v5709
        %v5829 = vpack.c.b16 %v5712, %v5711
        %v5830 = vpack.c.b16 %v5714, %v5713
        %v5831 = vpack.c.b16 %v5716, %v5715
        %v5832 = vpack.c.b16 %v5718, %v5717
        %v5833 = vpack.c.b16 %v5720, %v5719
        %v5834 = vpack.c.b16 %v5722, %v5721
        %v5835 = vpack.c.b16 %v5724, %v5723
        %v5836 = vpack.c.b16 %v5726, %v5725
        %v5837 = vpack.c.b16 %v5728, %v5727
        %v5838 = vpack.c.b16 %v5730, %v5729
        %v5839 = vpack.c.b16 %v5732, %v5731
        %v5840 = vpack.c.b16 %v5734, %v5733
        %v5841 = vpack.c.b16 %v5736, %v5735
        %v5842 = vpack.c.b16 %v5738, %v5737
        %v5843 = vpack.c.b16 %v5740, %v5739
        %v5844 = vpack.c.b16 %v5742, %v5741
        %v5845 = vpack.c.b16 %v5744, %v5743
        %v5846 = vpack.c.b16 %v5746, %v5745
        %v5847 = vpack.c.b16 %v5748, %v5747
        %v5848 = vpack.c.b16 %v5750, %v5749
        %v5849 = vpack.c.b16 %v5752, %v5751
        %v5850 = vpack.c.b16 %v5754, %v5753
        %v5851 = vpack.c.b16 %v5756, %v5755
        %v5852 = vpack.c.b16 %v5758, %v5757
        %v5853 = vpack.c.b16 %v5760, %v5759
        %v5854 = vpack.c.b16 %v5762, %v5761
        %v5855 = vpack.c.b16 %v5764, %v5763
        %v5856 = vpack.c.b16 %v5766, %v5765
        %v5857 = vpack.c.b16 %v5768, %v5767
        %v5858 = vpack.c.b16 %v5770, %v5769
        %v5859 = vpack.c.b16 %v5772, %v5771
        %v5860 = vpack.c.b16 %v5774, %v5773
        %v5861 = vpack.c.b16 %v5776, %v5775
        %v5862 = vpack.c.b16 %v5778, %v5777
        %v5863 = vpack.c.b16 %v5780, %v5779
        %v5864 = vpack.c.b16 %v5782, %v5781
        %v5865 = vpack.c.b16 %v5784, %v5783
        %v5866 = vpack.c.b16 %v5786, %v5785
        %v5867 = vpack.c.b16 %v5788, %v5787
        %v5868 = vpack.c.b16 %v5790, %v5789
        %v5869 = vpack.c.b16 %v5792, %v5791
        %v5870 = vpack.c.b16 %v5794, %v5793
        %v5871 = vpack.c.b16 %v5796, %v5795
        %v5872 = vpack.c.b16 %v5798, %v5797
        %v5873 = vpack.c.b16 %v5800, %v5799
        %v5874 = vpack.c.b16 %v5802, %v5801
        %5947 = vmatprep.subr.bf16.mxu0 0
        %5948 = vmatpush1.bf16.msra.mxu0 %v5803
        %5949 = vmatprep.subr.bf16.mxu0 0
        %5950 = vmatpush1.bf16.msra.mxu0 %v5804
        %5951 = vmatprep.subr.bf16.mxu0 0
        %5952 = vmatpush1.bf16.msra.mxu0 %v5805
        %5953 = vmatprep.subr.bf16.mxu0 0
        %5954 = vmatpush1.bf16.msra.mxu0 %v5806
        %5955 = vmatprep.subr.bf16.mxu0 0
        %5956 = vmatpush1.bf16.msra.mxu0 %v5807
        %5957 = vmatprep.subr.bf16.mxu0 0
        %5958 = vmatpush1.bf16.msra.mxu0 %v5808
        %5959 = vmatprep.subr.bf16.mxu0 0
        %5960 = vmatpush1.bf16.msra.mxu0 %v5809
        %5961 = vmatprep.subr.bf16.mxu0 0
        %5962 = vmatpush1.bf16.msra.mxu0 %v5810
        %5963 = vmatprep.subr.bf16.mxu0 0
        %5964 = vmatpush1.bf16.msra.mxu0 %v5811
        %5965 = vmatprep.subr.bf16.mxu0 0
        %5966 = vmatpush1.bf16.msra.mxu0 %v5812
        %5967 = vmatprep.subr.bf16.mxu0 0
        %5968 = vmatpush1.bf16.msra.mxu0 %v5813
        %5969 = vmatprep.subr.bf16.mxu0 0
        %5970 = vmatpush1.bf16.msra.mxu0 %v5814
        %5971 = vmatprep.subr.bf16.mxu0 0
        %5972 = vmatpush1.bf16.msra.mxu0 %v5815
        %5973 = vmatprep.subr.bf16.mxu0 0
        %5974 = vmatpush1.bf16.msra.mxu0 %v5816
        %5975 = vmatprep.subr.bf16.mxu0 0
        %5976 = vmatpush1.bf16.msra.mxu0 %v5817
        %5977 = vmatprep.subr.bf16.mxu0 0
        %5978 = vmatpush1.bf16.msra.mxu0 %v5818
        %5979 = vmatprep.mubr.bf16.mxu0 %v5293
        %5980 = vmatmul.mubr.bf16.gmra.mrb[0].mxu0 %v5292
        %v5981 = vpop.f32.mrb[0].mxu0
        %v5982 = vadd.f32 %v5513, %v5981
        %v5983 = vpop.f32.mrb[0].mxu0
        %v5984 = vpop.f32.mrb[0].mxu0
        %v5985 = vadd.f32 %v5513, %v5984
        %v5986 = vpop.f32.mrb[0].mxu0
        %5987 = vmatprep.mubr.bf16.mxu0 %v5302
        %5988 = vmatmul.mubr.bf16.gmra.mrb[0].mxu0 %v5301
        %v5989 = vpop.f32.mrb[0].mxu0
        %v5990 = vadd.f32 %v5513, %v5989
        %v5991 = vpop.f32.mrb[0].mxu0
        %v5992 = vpop.f32.mrb[0].mxu0
        %v5993 = vadd.f32 %v5513, %v5992
        %v5994 = vpop.f32.mrb[0].mxu0
        %5995 = vmatprep.mubr.bf16.mxu0 %v5311
        %5996 = vmatmul.mubr.bf16.gmra.mrb[0].mxu0 %v5310
        %v5997 = vpop.f32.mrb[0].mxu0
        %v5998 = vadd.f32 %v5513, %v5997
        %v5999 = vpop.f32.mrb[0].mxu0
        %v6000 = vpop.f32.mrb[0].mxu0
        %v6001 = vadd.f32 %v5513, %v6000
        %v6002 = vpop.f32.mrb[0].mxu0
        %6003 = vmatprep.mubr.bf16.mxu0 %v5320
        %6004 = vmatmul.mubr.bf16.gmra.mrb[0].mxu0 %v5319
        %v6005 = vpop.f32.mrb[0].mxu0
        %v6006 = vadd.f32 %v5513, %v6005
        %v6007 = vpop.f32.mrb[0].mxu0
        %v6008 = vpop.f32.mrb[0].mxu0
        %v6009 = vadd.f32 %v5513, %v6008
        %v6010 = vpop.f32.mrb[0].mxu0
        %6011 = vmatprep.mubr.bf16.mxu0 %v5329
        %6012 = vmatmul.mubr.bf16.gmra.mrb[0].mxu0 %v5328
        %v6013 = vpop.f32.mrb[0].mxu0
        %v6014 = vadd.f32 %v5513, %v6013
        %v6015 = vpop.f32.mrb[0].mxu0
        %v6016 = vpop.f32.mrb[0].mxu0
        %v6017 = vadd.f32 %v5513, %v6016
        %v6018 = vpop.f32.mrb[0].mxu0
        %6019 = vmatprep.mubr.bf16.mxu0 %v5338
        %6020 = vmatmul.mubr.bf16.gmra.mrb[0].mxu0 %v5337
        %v6021 = vpop.f32.mrb[0].mxu0
        %v6022 = vadd.f32 %v5513, %v6021
        %v6023 = vpop.f32.mrb[0].mxu0
        %v6024 = vpop.f32.mrb[0].mxu0
        %v6025 = vadd.f32 %v5513, %v6024
        %v6026 = vpop.f32.mrb[0].mxu0
        %6027 = vmatprep.mubr.bf16.mxu0 %v5347
        %6028 = vmatmul.mubr.bf16.gmra.mrb[0].mxu0 %v5346
        %v6029 = vpop.f32.mrb[0].mxu0
        %v6030 = vadd.f32 %v5513, %v6029
        %v6031 = vpop.f32.mrb[0].mxu0
        %v6032 = vpop.f32.mrb[0].mxu0
        %v6033 = vadd.f32 %v5513, %v6032
        %v6034 = vpop.f32.mrb[0].mxu0
        %6035 = vmatprep.mubr.bf16.mxu0 %v5356
        %6036 = vmatmul.mubr.bf16.gmra.mrb[0].mxu0 %v5355
        %v6037 = vpop.f32.mrb[0].mxu0
        %v6038 = vadd.f32 %v5513, %v6037
        %v6039 = vpop.f32.mrb[0].mxu0
        %v6040 = vpop.f32.mrb[0].mxu0
        %v6041 = vadd.f32 %v5513, %v6040
        %v6042 = vpop.f32.mrb[0].mxu0
        %6043 = vdwg.mxu0
        %6044 = vmatprep.subr.bf16.mxu0 0
        %6045 = vmatpush1.bf16.msra.mxu0 %v5819
        %6046 = vmatprep.subr.bf16.mxu0 0
        %6047 = vmatpush1.bf16.msra.mxu0 %v5820
        %6048 = vmatprep.subr.bf16.mxu0 0
        %6049 = vmatpush1.bf16.msra.mxu0 %v5821
        %6050 = vmatprep.subr.bf16.mxu0 0
        %6051 = vmatpush1.bf16.msra.mxu0 %v5822
        %6052 = vmatprep.subr.bf16.mxu0 0
        %6053 = vmatpush1.bf16.msra.mxu0 %v5823
        %6054 = vmatprep.subr.bf16.mxu0 0
        %6055 = vmatpush1.bf16.msra.mxu0 %v5824
        %6056 = vmatprep.subr.bf16.mxu0 0
        %6057 = vmatpush1.bf16.msra.mxu0 %v5825
        %6058 = vmatprep.subr.bf16.mxu0 0
        %6059 = vmatpush1.bf16.msra.mxu0 %v5826
        %6060 = vmatprep.subr.bf16.mxu0 0
        %6061 = vmatpush1.bf16.msra.mxu0 %v5827
        %6062 = vmatprep.subr.bf16.mxu0 0
        %6063 = vmatpush1.bf16.msra.mxu0 %v5828
        %6064 = vmatprep.subr.bf16.mxu0 0
        %6065 = vmatpush1.bf16.msra.mxu0 %v5829
        %6066 = vmatprep.subr.bf16.mxu0 0
        %6067 = vmatpush1.bf16.msra.mxu0 %v5830
        %6068 = vmatprep.subr.bf16.mxu0 0
        %6069 = vmatpush1.bf16.msra.mxu0 %v5831
        %6070 = vmatprep.subr.bf16.mxu0 0
        %6071 = vmatpush1.bf16.msra.mxu0 %v5832
        %6072 = vmatprep.subr.bf16.mxu0 0
        %6073 = vmatpush1.bf16.msra.mxu0 %v5833
        %6074 = vmatprep.subr.bf16.mxu0 0
        %6075 = vmatpush1.bf16.msra.mxu0 %v5834
        %6076 = vmatprep.mubr.bf16.mxu0 %v5295
        %6077 = vmatmul.mubr.bf16.gmra.mrb[0].mxu0 %v5294
        %v6078 = vpop.f32.mrb[0].mxu0
        %v6079 = vadd.f32 %v5982, %v6078
        %v6080 = vpop.f32.mrb[0].mxu0
        %v6081 = vpop.f32.mrb[0].mxu0
        %v6082 = vadd.f32 %v5985, %v6081
        %v6083 = vpop.f32.mrb[0].mxu0
        %6084 = vmatprep.mubr.bf16.mxu0 %v5304
        %6085 = vmatmul.mubr.bf16.gmra.mrb[0].mxu0 %v5303
        %v6086 = vpop.f32.mrb[0].mxu0
        %v6087 = vadd.f32 %v5990, %v6086
        %v6088 = vpop.f32.mrb[0].mxu0
        %v6089 = vpop.f32.mrb[0].mxu0
        %v6090 = vadd.f32 %v5993, %v6089
        %v6091 = vpop.f32.mrb[0].mxu0
        %6092 = vmatprep.mubr.bf16.mxu0 %v5313
        %6093 = vmatmul.mubr.bf16.gmra.mrb[0].mxu0 %v5312
        %v6094 = vpop.f32.mrb[0].mxu0
        %v6095 = vadd.f32 %v5998, %v6094
        %v6096 = vpop.f32.mrb[0].mxu0
        %v6097 = vpop.f32.mrb[0].mxu0
        %v6098 = vadd.f32 %v6001, %v6097
        %v6099 = vpop.f32.mrb[0].mxu0
        %6100 = vmatprep.mubr.bf16.mxu0 %v5322
        %6101 = vmatmul.mubr.bf16.gmra.mrb[0].mxu0 %v5321
        %v6102 = vpop.f32.mrb[0].mxu0
        %v6103 = vadd.f32 %v6006, %v6102
        %v6104 = vpop.f32.mrb[0].mxu0
        %v6105 = vpop.f32.mrb[0].mxu0
        %v6106 = vadd.f32 %v6009, %v6105
        %v6107 = vpop.f32.mrb[0].mxu0
        %6108 = vmatprep.mubr.bf16.mxu0 %v5331
        %6109 = vmatmul.mubr.bf16.gmra.mrb[0].mxu0 %v5330
        %v6110 = vpop.f32.mrb[0].mxu0
        %v6111 = vadd.f32 %v6014, %v6110
        %v6112 = vpop.f32.mrb[0].mxu0
        %v6113 = vpop.f32.mrb[0].mxu0
        %v6114 = vadd.f32 %v6017, %v6113
        %v6115 = vpop.f32.mrb[0].mxu0
        %6116 = vmatprep.mubr.bf16.mxu0 %v5340
        %6117 = vmatmul.mubr.bf16.gmra.mrb[0].mxu0 %v5339
        %v6118 = vpop.f32.mrb[0].mxu0
        %v6119 = vadd.f32 %v6022, %v6118
        %v6120 = vpop.f32.mrb[0].mxu0
        %v6121 = vpop.f32.mrb[0].mxu0
        %v6122 = vadd.f32 %v6025, %v6121
        %v6123 = vpop.f32.mrb[0].mxu0
        %6124 = vmatprep.mubr.bf16.mxu0 %v5349
        %6125 = vmatmul.mubr.bf16.gmra.mrb[0].mxu0 %v5348
        %v6126 = vpop.f32.mrb[0].mxu0
        %v6127 = vadd.f32 %v6030, %v6126
        %v6128 = vpop.f32.mrb[0].mxu0
        %v6129 = vpop.f32.mrb[0].mxu0
        %v6130 = vadd.f32 %v6033, %v6129
        %v6131 = vpop.f32.mrb[0].mxu0
        %6132 = vmatprep.mubr.bf16.mxu0 %v5358
        %6133 = vmatmul.mubr.bf16.gmra.mrb[0].mxu0 %v5357
        %v6134 = vpop.f32.mrb[0].mxu0
        %v6135 = vadd.f32 %v6038, %v6134
        %v6136 = vpop.f32.mrb[0].mxu0
        %v6137 = vpop.f32.mrb[0].mxu0
        %v6138 = vadd.f32 %v6041, %v6137
        %v6139 = vpop.f32.mrb[0].mxu0
        %6140 = vdwg.mxu0
        %6141 = vmatprep.subr.bf16.mxu0 0
        %6142 = vmatpush1.bf16.msra.mxu0 %v5835
        %6143 = vmatprep.subr.bf16.mxu0 0
        %6144 = vmatpush1.bf16.msra.mxu0 %v5836
        %6145 = vmatprep.subr.bf16.mxu0 0
        %6146 = vmatpush1.bf16.msra.mxu0 %v5837
        %6147 = vmatprep.subr.bf16.mxu0 0
        %6148 = vmatpush1.bf16.msra.mxu0 %v5838
        %6149 = vmatprep.subr.bf16.mxu0 0
        %6150 = vmatpush1.bf16.msra.mxu0 %v5839
        %6151 = vmatprep.subr.bf16.mxu0 0
        %6152 = vmatpush1.bf16.msra.mxu0 %v5840
        %6153 = vmatprep.subr.bf16.mxu0 0
        %6154 = vmatpush1.bf16.msra.mxu0 %v5841
        %6155 = vmatprep.subr.bf16.mxu0 0
        %6156 = vmatpush1.bf16.msra.mxu0 %v5842
        %6157 = vmatprep.subr.bf16.mxu0 0
        %6158 = vmatpush1.bf16.msra.mxu0 %v5843
        %6159 = vmatprep.subr.bf16.mxu0 0
        %6160 = vmatpush1.bf16.msra.mxu0 %v5844
        %6161 = vmatprep.subr.bf16.mxu0 0
        %6162 = vmatpush1.bf16.msra.mxu0 %v5845
        %6163 = vmatprep.subr.bf16.mxu0 0
        %6164 = vmatpush1.bf16.msra.mxu0 %v5846
        %6165 = vmatprep.subr.bf16.mxu0 0
        %6166 = vmatpush1.bf16.msra.mxu0 %v5847
        %6167 = vmatprep.subr.bf16.mxu0 0
        %6168 = vmatpush1.bf16.msra.mxu0 %v5848
        %6169 = vmatprep.subr.bf16.mxu0 0
        %6170 = vmatpush1.bf16.msra.mxu0 %v5849
        %6171 = vmatprep.subr.bf16.mxu0 0
        %6172 = vmatpush1.bf16.msra.mxu0 %v5850
        %6173 = vmatprep.mubr.bf16.mxu0 %v5297
        %6174 = vmatmul.mubr.bf16.gmra.mrb[0].mxu0 %v5296
        %v6175 = vpop.f32.mrb[0].mxu0
        %v6176 = vadd.f32 %v6079, %v6175
        %v6177 = vpop.f32.mrb[0].mxu0
        %v6178 = vpop.f32.mrb[0].mxu0
        %v6179 = vadd.f32 %v6082, %v6178
        %v6180 = vpop.f32.mrb[0].mxu0
        %6181 = vmatprep.mubr.bf16.mxu0 %v5306
        %6182 = vmatmul.mubr.bf16.gmra.mrb[0].mxu0 %v5305
        %v6183 = vpop.f32.mrb[0].mxu0
        %v6184 = vadd.f32 %v6087, %v6183
        %v6185 = vpop.f32.mrb[0].mxu0
        %v6186 = vpop.f32.mrb[0].mxu0
        %v6187 = vadd.f32 %v6090, %v6186
        %v6188 = vpop.f32.mrb[0].mxu0
        %6189 = vmatprep.mubr.bf16.mxu0 %v5315
        %6190 = vmatmul.mubr.bf16.gmra.mrb[0].mxu0 %v5314
        %v6191 = vpop.f32.mrb[0].mxu0
        %v6192 = vadd.f32 %v6095, %v6191
        %v6193 = vpop.f32.mrb[0].mxu0
        %v6194 = vpop.f32.mrb[0].mxu0
        %v6195 = vadd.f32 %v6098, %v6194
        %v6196 = vpop.f32.mrb[0].mxu0
        %6197 = vmatprep.mubr.bf16.mxu0 %v5324
        %6198 = vmatmul.mubr.bf16.gmra.mrb[0].mxu0 %v5323
        %v6199 = vpop.f32.mrb[0].mxu0
        %v6200 = vadd.f32 %v6103, %v6199
        %v6201 = vpop.f32.mrb[0].mxu0
        %v6202 = vpop.f32.mrb[0].mxu0
        %v6203 = vadd.f32 %v6106, %v6202
        %v6204 = vpop.f32.mrb[0].mxu0
        %6205 = vmatprep.mubr.bf16.mxu0 %v5333
        %6206 = vmatmul.mubr.bf16.gmra.mrb[0].mxu0 %v5332
        %v6207 = vpop.f32.mrb[0].mxu0
        %v6208 = vadd.f32 %v6111, %v6207
        %v6209 = vpop.f32.mrb[0].mxu0
        %v6210 = vpop.f32.mrb[0].mxu0
        %v6211 = vadd.f32 %v6114, %v6210
        %v6212 = vpop.f32.mrb[0].mxu0
        %6213 = vmatprep.mubr.bf16.mxu0 %v5342
        %6214 = vmatmul.mubr.bf16.gmra.mrb[0].mxu0 %v5341
        %v6215 = vpop.f32.mrb[0].mxu0
        %v6216 = vadd.f32 %v6119, %v6215
        %v6217 = vpop.f32.mrb[0].mxu0
        %v6218 = vpop.f32.mrb[0].mxu0
        %v6219 = vadd.f32 %v6122, %v6218
        %v6220 = vpop.f32.mrb[0].mxu0
        %6221 = vmatprep.mubr.bf16.mxu0 %v5351
        %6222 = vmatmul.mubr.bf16.gmra.mrb[0].mxu0 %v5350
        %v6223 = vpop.f32.mrb[0].mxu0
        %v6224 = vadd.f32 %v6127, %v6223
        %v6225 = vpop.f32.mrb[0].mxu0
        %v6226 = vpop.f32.mrb[0].mxu0
        %v6227 = vadd.f32 %v6130, %v6226
        %v6228 = vpop.f32.mrb[0].mxu0
        %6229 = vmatprep.mubr.bf16.mxu0 %v5360
        %6230 = vmatmul.mubr.bf16.gmra.mrb[0].mxu0 %v5359
        %v6231 = vpop.f32.mrb[0].mxu0
        %v6232 = vadd.f32 %v6135, %v6231
        %v6233 = vpop.f32.mrb[0].mxu0
        %v6234 = vpop.f32.mrb[0].mxu0
        %v6235 = vadd.f32 %v6138, %v6234
        %v6236 = vpop.f32.mrb[0].mxu0
        %6237 = vdwg.mxu0
        %6238 = vmatprep.subr.bf16.mxu0 0
        %6239 = vmatpush1.bf16.msra.mxu0 %v5851
        %6240 = vmatprep.subr.bf16.mxu0 0
        %6241 = vmatpush1.bf16.msra.mxu0 %v5852
        %6242 = vmatprep.subr.bf16.mxu0 0
        %6243 = vmatpush1.bf16.msra.mxu0 %v5853
        %6244 = vmatprep.subr.bf16.mxu0 0
        %6245 = vmatpush1.bf16.msra.mxu0 %v5854
        %6246 = vmatprep.subr.bf16.mxu0 0
        %6247 = vmatpush1.bf16.msra.mxu0 %v5855
        %6248 = vmatprep.subr.bf16.mxu0 0
        %6249 = vmatpush1.bf16.msra.mxu0 %v5856
        %6250 = vmatprep.subr.bf16.mxu0 0
        %6251 = vmatpush1.bf16.msra.mxu0 %v5857
        %6252 = vmatprep.subr.bf16.mxu0 0
        %6253 = vmatpush1.bf16.msra.mxu0 %v5858
        %6254 = vmatprep.subr.bf16.mxu0 0
        %6255 = vmatpush1.bf16.msra.mxu0 %v5859
        %6256 = vmatprep.subr.bf16.mxu0 0
        %6257 = vmatpush1.bf16.msra.mxu0 %v5860
        %6258 = vmatprep.subr.bf16.mxu0 0
        %6259 = vmatpush1.bf16.msra.mxu0 %v5861
        %6260 = vmatprep.subr.bf16.mxu0 0
        %6261 = vmatpush1.bf16.msra.mxu0 %v5862
        %6262 = vmatprep.subr.bf16.mxu0 0
        %6263 = vmatpush1.bf16.msra.mxu0 %v5863
        %6264 = vmatprep.subr.bf16.mxu0 0
        %6265 = vmatpush1.bf16.msra.mxu0 %v5864
        %6266 = vmatprep.subr.bf16.mxu0 0
        %6267 = vmatpush1.bf16.msra.mxu0 %v5865
        %6268 = vmatprep.subr.bf16.mxu0 0
        %6269 = vmatpush1.bf16.msra.mxu0 %v5866
        %6270 = vmatprep.mubr.bf16.mxu0 %v5299
        %6271 = vmatmul.mubr.bf16.gmra.mrb[0].mxu0 %v5298
        %v6272 = vpop.f32.mrb[0].mxu0
        %v6273 = vadd.f32 %v6176, %v6272
        %v6274 = vpop.f32.mrb[0].mxu0
        %v6275 = vpop.f32.mrb[0].mxu0
        %v6276 = vadd.f32 %v6179, %v6275
        %v6277 = vpop.f32.mrb[0].mxu0
        %6278 = vmatprep.mubr.bf16.mxu0 %v5308
        %6279 = vmatmul.mubr.bf16.gmra.mrb[0].mxu0 %v5307
        %v6280 = vpop.f32.mrb[0].mxu0
        %v6281 = vadd.f32 %v6184, %v6280
        %v6282 = vpop.f32.mrb[0].mxu0
        %v6283 = vpop.f32.mrb[0].mxu0
        %v6284 = vadd.f32 %v6187, %v6283
        %v6285 = vpop.f32.mrb[0].mxu0
        %6286 = vmatprep.mubr.bf16.mxu0 %v5317
        %6287 = vmatmul.mubr.bf16.gmra.mrb[0].mxu0 %v5316
        %v6288 = vpop.f32.mrb[0].mxu0
        %v6289 = vadd.f32 %v6192, %v6288
        %v6290 = vpop.f32.mrb[0].mxu0
        %v6291 = vpop.f32.mrb[0].mxu0
        %v6292 = vadd.f32 %v6195, %v6291
        %v6293 = vpop.f32.mrb[0].mxu0
        %6294 = vmatprep.mubr.bf16.mxu0 %v5326
        %6295 = vmatmul.mubr.bf16.gmra.mrb[0].mxu0 %v5325
        %v6296 = vpop.f32.mrb[0].mxu0
        %v6297 = vadd.f32 %v6200, %v6296
        %v6298 = vpop.f32.mrb[0].mxu0
        %v6299 = vpop.f32.mrb[0].mxu0
        %v6300 = vadd.f32 %v6203, %v6299
        %v6301 = vpop.f32.mrb[0].mxu0
        %6302 = vmatprep.mubr.bf16.mxu0 %v5335
        %6303 = vmatmul.mubr.bf16.gmra.mrb[0].mxu0 %v5334
        %v6304 = vpop.f32.mrb[0].mxu0
        %v6305 = vadd.f32 %v6208, %v6304
        %v6306 = vpop.f32.mrb[0].mxu0
        %v6307 = vpop.f32.mrb[0].mxu0
        %v6308 = vadd.f32 %v6211, %v6307
        %v6309 = vpop.f32.mrb[0].mxu0
        %6310 = vmatprep.mubr.bf16.mxu0 %v5344
        %6311 = vmatmul.mubr.bf16.gmra.mrb[0].mxu0 %v5343
        %v6312 = vpop.f32.mrb[0].mxu0
        %v6313 = vadd.f32 %v6216, %v6312
        %v6314 = vpop.f32.mrb[0].mxu0
        %v6315 = vpop.f32.mrb[0].mxu0
        %v6316 = vadd.f32 %v6219, %v6315
        %v6317 = vpop.f32.mrb[0].mxu0
        %6318 = vmatprep.mubr.bf16.mxu0 %v5353
        %6319 = vmatmul.mubr.bf16.gmra.mrb[0].mxu0 %v5352
        %v6320 = vpop.f32.mrb[0].mxu0
        %v6321 = vadd.f32 %v6224, %v6320
        %v6322 = vpop.f32.mrb[0].mxu0
        %v6323 = vpop.f32.mrb[0].mxu0
        %v6324 = vadd.f32 %v6227, %v6323
        %v6325 = vpop.f32.mrb[0].mxu0
        %6326 = vmatprep.mubr.bf16.mxu0 %v5362
        %6327 = vmatmul.mubr.bf16.gmra.mrb[0].mxu0 %v5361
        %v6328 = vpop.f32.mrb[0].mxu0
        %v6329 = vadd.f32 %v6232, %v6328
        %v6330 = vpop.f32.mrb[0].mxu0
        %v6331 = vpop.f32.mrb[0].mxu0
        %v6332 = vadd.f32 %v6235, %v6331
        %v6333 = vpop.f32.mrb[0].mxu0
        %6334 = vdwg.mxu0
        %6335 = vmatprep.subr.bf16.mxu0 0
        %6336 = vmatpush1.bf16.msra.mxu0 %v5867
        %6337 = vmatprep.subr.bf16.mxu0 0
        %6338 = vmatpush1.bf16.msra.mxu0 %v5868
        %6339 = vmatprep.subr.bf16.mxu0 0
        %6340 = vmatpush1.bf16.msra.mxu0 %v5869
        %6341 = vmatprep.subr.bf16.mxu0 0
        %6342 = vmatpush1.bf16.msra.mxu0 %v5870
        %6343 = vmatprep.subr.bf16.mxu0 0
        %6344 = vmatpush1.bf16.msra.mxu0 %v5871
        %6345 = vmatprep.subr.bf16.mxu0 0
        %6346 = vmatpush1.bf16.msra.mxu0 %v5872
        %6347 = vmatprep.subr.bf16.mxu0 0
        %6348 = vmatpush1.bf16.msra.mxu0 %v5873
        %6349 = vmatprep.subr.bf16.mxu0 0
        %6350 = vmatpush1.bf16.msra.mxu0 %v5874
        %6351 = vmatprep.subr.bf16.mxu0 0
        %6352 = vmatpush1.bf16.msra.mxu0 0
        %6353 = vmatprep.subr.bf16.mxu0 0
        %6354 = vmatpush1.bf16.msra.mxu0 0
        %6355 = vmatprep.subr.bf16.mxu0 0
        %6356 = vmatpush1.bf16.msra.mxu0 0
        %6357 = vmatprep.subr.bf16.mxu0 0
        %6358 = vmatpush1.bf16.msra.mxu0 0
        %6359 = vmatprep.subr.bf16.mxu0 0
        %6360 = vmatpush1.bf16.msra.mxu0 0
        %6361 = vmatprep.subr.bf16.mxu0 0
        %6362 = vmatpush1.bf16.msra.mxu0 0
        %6363 = vmatprep.subr.bf16.mxu0 0
        %6364 = vmatpush1.bf16.msra.mxu0 0
        %6365 = vmatprep.subr.bf16.mxu0 0
        %6366 = vmatpush1.bf16.msra.mxu0 0
        %6367 = vmatprep.mubr.bf16.mxu0 0
        %6368 = vmatmul.mubr.bf16.gmra.mrb[0].mxu0 %v5300
        %v6369 = vpop.f32.mrb[0].mxu0
        %v6370 = vadd.f32 %v6273, %v6369
        %v6371 = vpop.f32.mrb[0].mxu0
        %v6372 = vpop.f32.mrb[0].mxu0
        %v6373 = vadd.f32 %v6276, %v6372
        %v6374 = vpop.f32.mrb[0].mxu0
        %6375 = vmatprep.mubr.bf16.mxu0 0
        %6376 = vmatmul.mubr.bf16.gmra.mrb[0].mxu0 %v5309
        %v6377 = vpop.f32.mrb[0].mxu0
        %v6378 = vadd.f32 %v6281, %v6377
        %v6379 = vpop.f32.mrb[0].mxu0
        %v6380 = vpop.f32.mrb[0].mxu0
        %v6381 = vadd.f32 %v6284, %v6380
        %v6382 = vpop.f32.mrb[0].mxu0
        %6383 = vmatprep.mubr.bf16.mxu0 0
        %6384 = vmatmul.mubr.bf16.gmra.mrb[0].mxu0 %v5318
        %v6385 = vpop.f32.mrb[0].mxu0
        %v6386 = vadd.f32 %v6289, %v6385
        %v6387 = vpop.f32.mrb[0].mxu0
        %v6388 = vpop.f32.mrb[0].mxu0
        %v6389 = vadd.f32 %v6292, %v6388
        %v6390 = vpop.f32.mrb[0].mxu0
        %6391 = vmatprep.mubr.bf16.mxu0 0
        %6392 = vmatmul.mubr.bf16.gmra.mrb[0].mxu0 %v5327
        %v6393 = vpop.f32.mrb[0].mxu0
        %v6394 = vadd.f32 %v6297, %v6393
        %v6395 = vpop.f32.mrb[0].mxu0
        %v6396 = vpop.f32.mrb[0].mxu0
        %v6397 = vadd.f32 %v6300, %v6396
        %v6398 = vpop.f32.mrb[0].mxu0
        %6399 = vmatprep.mubr.bf16.mxu0 0
        %6400 = vmatmul.mubr.bf16.gmra.mrb[0].mxu0 %v5336
        %v6401 = vpop.f32.mrb[0].mxu0
        %v6402 = vadd.f32 %v6305, %v6401
        %v6403 = vpop.f32.mrb[0].mxu0
        %v6404 = vpop.f32.mrb[0].mxu0
        %v6405 = vadd.f32 %v6308, %v6404
        %v6406 = vpop.f32.mrb[0].mxu0
        %6407 = vmatprep.mubr.bf16.mxu0 0
        %6408 = vmatmul.mubr.bf16.gmra.mrb[0].mxu0 %v5345
        %v6409 = vpop.f32.mrb[0].mxu0
        %v6410 = vadd.f32 %v6313, %v6409
        %v6411 = vpop.f32.mrb[0].mxu0
        %v6412 = vpop.f32.mrb[0].mxu0
        %v6413 = vadd.f32 %v6316, %v6412
        %v6414 = vpop.f32.mrb[0].mxu0
        %6415 = vmatprep.mubr.bf16.mxu0 0
        %6416 = vmatmul.mubr.bf16.gmra.mrb[0].mxu0 %v5354
        %v6417 = vpop.f32.mrb[0].mxu0
        %v6418 = vadd.f32 %v6321, %v6417
        %v6419 = vpop.f32.mrb[0].mxu0
        %v6420 = vpop.f32.mrb[0].mxu0
        %v6421 = vadd.f32 %v6324, %v6420
        %v6422 = vpop.f32.mrb[0].mxu0
        %6423 = vmatprep.mubr.bf16.mxu0 0
        %6424 = vmatmul.mubr.bf16.gmra.mrb[0].mxu0 %v5363
        %v6425 = vpop.f32.mrb[0].mxu0
        %v6426 = vadd.f32 %v6329, %v6425
        %v6427 = vpop.f32.mrb[0].mxu0
        %v6428 = vpop.f32.mrb[0].mxu0
        %v6429 = vadd.f32 %v6332, %v6428
        %v6430 = vpop.f32.mrb[0].mxu0
        %6431 = vdwg.mxu0
        %v6432 = vmax.f32 %v6370, 0.0
        %v6433 = vmax.f32 %v6373, 0.0
        %v6434 = vmax.f32 %v6378, 0.0
        %v6435 = vmax.f32 %v6381, 0.0
        %v6436 = vmax.f32 %v6386, 0.0
        %v6437 = vmax.f32 %v6389, 0.0
        %v6438 = vmax.f32 %v6394, 0.0
        %v6439 = vmax.f32 %v6397, 0.0
        %v6440 = vmax.f32 %v6402, 0.0
        %v6441 = vmax.f32 %v6405, 0.0
        %v6442 = vmax.f32 %v6410, 0.0
        %v6443 = vmax.f32 %v6413, 0.0
        %v6444 = vmax.f32 %v6418, 0.0
        %v6445 = vmax.f32 %v6421, 0.0
        %v6446 = vmax.f32 %v6426, 0.0
        %v6447 = vmax.f32 %v6429, 0.0
        %v6448 = vld [vmem:[%s1] sm:$0xff]
        %v6449 = vld [vmem:[%s1 + $0x8] sm:$0xff]
        %v6450 = vld [vmem:[%s1 + $0x10] sm:$0xff]
        %v6451 = vld [vmem:[%s1 + $0x18] sm:$0xff]
        %v6452 = vld [vmem:[%s1 + $0x20] sm:$0xff]
        %v6453 = vld [vmem:[%s1 + $0x28] sm:$0xff]
        %v6454 = vld [vmem:[%s1 + $0x30] sm:$0xff]
        %v6455 = vld [vmem:[%s1 + $0x38] sm:$0xff]
        %v6456 = vld [vmem:[%s1 + $0x40] sm:$0xff]
        %v6457 = vld [vmem:[%s1 + $0x48] sm:$0xff]
        %v6458 = vld [vmem:[%s1 + $0x50] sm:$0xff]
        %v6459 = vld [vmem:[%s1 + $0x58] sm:$0xff]
        %v6460 = vld [vmem:[%s1 + $0x60] sm:$0xff]
        %v6461 = vld [vmem:[%s1 + $0x68] sm:$0xff]
        %v6462 = vld [vmem:[%s1 + $0x70] sm:$0xff]
        %v6463 = vld [vmem:[%s1 + $0x78] sm:$0xff]
        %v6479 = vrot.slane %v6432, 7
        %v6480 = vrot.slane %v6433, 7
        %v6481 = vsel %vm1531, %v6479, %v6480
        %v6482 = vrot.slane %v6434, 7
        %v6483 = vsel %vm1531, %v6480, %v6482
        %v6484 = vrot.slane %v6435, 7
        %v6485 = vsel %vm1531, %v6482, %v6484
        %v6486 = vrot.slane %v6436, 7
        %v6487 = vsel %vm1531, %v6484, %v6486
        %v6488 = vrot.slane %v6437, 7
        %v6489 = vsel %vm1531, %v6486, %v6488
        %v6490 = vrot.slane %v6438, 7
        %v6491 = vsel %vm1531, %v6488, %v6490
        %v6492 = vrot.slane %v6439, 7
        %v6493 = vsel %vm1531, %v6490, %v6492
        %v6494 = vrot.slane %v6440, 7
        %v6495 = vsel %vm1531, %v6492, %v6494
        %v6496 = vrot.slane %v6441, 7
        %v6497 = vsel %vm1531, %v6494, %v6496
        %v6498 = vrot.slane %v6442, 7
        %v6499 = vsel %vm1531, %v6496, %v6498
        %v6500 = vrot.slane %v6443, 7
        %v6501 = vsel %vm1531, %v6498, %v6500
        %v6502 = vrot.slane %v6444, 7
        %v6503 = vsel %vm1531, %v6500, %v6502
        %v6504 = vrot.slane %v6445, 7
        %v6505 = vsel %vm1531, %v6502, %v6504
        %v6506 = vrot.slane %v6446, 7
        %v6507 = vsel %vm1531, %v6504, %v6506
        %v6523 = vsel %vm1531, 0.0, %v6479
        %6525 = vset.pattern.permute.xlu0 0
        %6526 = vperm.xlu0 %6525, %v6448
        %v6527 = vpop.permute.xlu0 %6526
        %6530 = vset.pattern.permute.xlu0 0
        %6531 = vperm.xlu0 %6530, %v6449
        %v6532 = vpop.permute.xlu0 %6531
        %6535 = vset.pattern.permute.xlu0 0
        %6536 = vperm.xlu0 %6535, %v6450
        %v6537 = vpop.permute.xlu0 %6536
        %6540 = vset.pattern.permute.xlu0 0
        %6541 = vperm.xlu0 %6540, %v6451
        %v6542 = vpop.permute.xlu0 %6541
        %6545 = vset.pattern.permute.xlu0 0
        %6546 = vperm.xlu0 %6545, %v6452
        %v6547 = vpop.permute.xlu0 %6546
        %6550 = vset.pattern.permute.xlu0 0
        %6551 = vperm.xlu0 %6550, %v6453
        %v6552 = vpop.permute.xlu0 %6551
        %6555 = vset.pattern.permute.xlu0 0
        %6556 = vperm.xlu0 %6555, %v6454
        %v6557 = vpop.permute.xlu0 %6556
        %6560 = vset.pattern.permute.xlu0 0
        %6561 = vperm.xlu0 %6560, %v6455
        %v6562 = vpop.permute.xlu0 %6561
        %6565 = vset.pattern.permute.xlu0 0
        %6566 = vperm.xlu0 %6565, %v6456
        %v6567 = vpop.permute.xlu0 %6566
        %6570 = vset.pattern.permute.xlu0 0
        %6571 = vperm.xlu0 %6570, %v6457
        %v6572 = vpop.permute.xlu0 %6571
        %6575 = vset.pattern.permute.xlu0 0
        %6576 = vperm.xlu0 %6575, %v6458
        %v6577 = vpop.permute.xlu0 %6576
        %6580 = vset.pattern.permute.xlu0 0
        %6581 = vperm.xlu0 %6580, %v6459
        %v6582 = vpop.permute.xlu0 %6581
        %6585 = vset.pattern.permute.xlu0 0
        %6586 = vperm.xlu0 %6585, %v6460
        %v6587 = vpop.permute.xlu0 %6586
        %6590 = vset.pattern.permute.xlu0 0
        %6591 = vperm.xlu0 %6590, %v6461
        %v6592 = vpop.permute.xlu0 %6591
        %6595 = vset.pattern.permute.xlu0 0
        %6596 = vperm.xlu0 %6595, %v6462
        %v6597 = vpop.permute.xlu0 %6596
        %6600 = vset.pattern.permute.xlu0 0
        %6601 = vperm.xlu0 %6600, %v6463
        %v6602 = vpop.permute.xlu0 %6601
        %v6604 = vmul.f32 %v6527, 0.0
        %v6605 = vmul.f32 %v6523, %v6532
        %v6606 = vmul.f32 %v6481, %v6537
        %v6607 = vmul.f32 %v6483, %v6542
        %v6608 = vmul.f32 %v6485, %v6547
        %v6609 = vmul.f32 %v6487, %v6552
        %v6610 = vmul.f32 %v6489, %v6557
        %v6611 = vmul.f32 %v6491, %v6562
        %v6612 = vmul.f32 %v6493, %v6567
        %v6613 = vmul.f32 %v6495, %v6572
        %v6614 = vmul.f32 %v6497, %v6577
        %v6615 = vmul.f32 %v6499, %v6582
        %v6616 = vmul.f32 %v6501, %v6587
        %v6617 = vmul.f32 %v6503, %v6592
        %v6618 = vmul.f32 %v6505, %v6597
        %v6619 = vmul.f32 %v6507, %v6602
        %v6620 = vpack.c.bf16 %v6605, %v6604
        %v6621 = vpack.c.bf16 %v6607, %v6606
        %v6622 = vpack.c.bf16 %v6609, %v6608
        %v6623 = vpack.c.bf16 %v6611, %v6610
        %v6624 = vpack.c.bf16 %v6613, %v6612
        %v6625 = vpack.c.bf16 %v6615, %v6614
        %v6626 = vpack.c.bf16 %v6617, %v6616
        %v6627 = vpack.c.bf16 %v6619, %v6618
        %6628 = vst [vmem:[#allocation2] sm:$0xff] %v6620
        %6629 = vst [vmem:[#allocation2 + $0x48] sm:$0xff] %v6621
        %6630 = vst [vmem:[#allocation2 + $0x90] sm:$0xff] %v6622
        %6631 = vst [vmem:[#allocation2 + $0xd8] sm:$0xff] %v6623
        %6632 = vst [vmem:[#allocation2 + $0x120] sm:$0xff] %v6624
        %6633 = vst [vmem:[#allocation2 + $0x168] sm:$0xff] %v6625
        %6634 = vst [vmem:[#allocation2 + $0x1b0] sm:$0xff] %v6626
        %6635 = vst [vmem:[#allocation2 + $0x1f8] sm:$0xff] %v6627
        %v6636 = vld [vmem:[%s1] sm:$0xff]
        %v6637 = vld [vmem:[%s1 + $0x8] sm:$0xff]
        %v6638 = vld [vmem:[%s1 + $0x10] sm:$0xff]
        %v6639 = vld [vmem:[%s1 + $0x18] sm:$0xff]
        %v6640 = vld [vmem:[%s1 + $0x20] sm:$0xff]
        %v6641 = vld [vmem:[%s1 + $0x28] sm:$0xff]
        %v6642 = vld [vmem:[%s1 + $0x30] sm:$0xff]
        %v6643 = vld [vmem:[%s1 + $0x38] sm:$0xff]
        %v6644 = vld [vmem:[%s1 + $0x40] sm:$0xff]
        %v6645 = vld [vmem:[%s1 + $0x48] sm:$0xff]
        %v6646 = vld [vmem:[%s1 + $0x50] sm:$0xff]
        %v6647 = vld [vmem:[%s1 + $0x58] sm:$0xff]
        %v6648 = vld [vmem:[%s1 + $0x60] sm:$0xff]
        %v6649 = vld [vmem:[%s1 + $0x68] sm:$0xff]
        %v6650 = vld [vmem:[%s1 + $0x70] sm:$0xff]
        %v6651 = vld [vmem:[%s1 + $0x78] sm:$0xff]
        %6653 = vset.pattern.permute.xlu0 1
        %6654 = vperm.xlu0 %6653, %v6636
        %v6655 = vpop.permute.xlu0 %6654
        %6658 = vset.pattern.permute.xlu0 1
        %6659 = vperm.xlu0 %6658, %v6637
        %v6660 = vpop.permute.xlu0 %6659
        %6663 = vset.pattern.permute.xlu0 1
        %6664 = vperm.xlu0 %6663, %v6638
        %v6665 = vpop.permute.xlu0 %6664
        %6668 = vset.pattern.permute.xlu0 1
        %6669 = vperm.xlu0 %6668, %v6639
        %v6670 = vpop.permute.xlu0 %6669
        %6673 = vset.pattern.permute.xlu0 1
        %6674 = vperm.xlu0 %6673, %v6640
        %v6675 = vpop.permute.xlu0 %6674
        %6678 = vset.pattern.permute.xlu0 1
        %6679 = vperm.xlu0 %6678, %v6641
        %v6680 = vpop.permute.xlu0 %6679
        %6683 = vset.pattern.permute.xlu0 1
        %6684 = vperm.xlu0 %6683, %v6642
        %v6685 = vpop.permute.xlu0 %6684
        %6688 = vset.pattern.permute.xlu0 1
        %6689 = vperm.xlu0 %6688, %v6643
        %v6690 = vpop.permute.xlu0 %6689
        %6693 = vset.pattern.permute.xlu0 1
        %6694 = vperm.xlu0 %6693, %v6644
        %v6695 = vpop.permute.xlu0 %6694
        %6698 = vset.pattern.permute.xlu0 1
        %6699 = vperm.xlu0 %6698, %v6645
        %v6700 = vpop.permute.xlu0 %6699
        %6703 = vset.pattern.permute.xlu0 1
        %6704 = vperm.xlu0 %6703, %v6646
        %v6705 = vpop.permute.xlu0 %6704
        %6708 = vset.pattern.permute.xlu0 1
        %6709 = vperm.xlu0 %6708, %v6647
        %v6710 = vpop.permute.xlu0 %6709
        %6713 = vset.pattern.permute.xlu0 1
        %6714 = vperm.xlu0 %6713, %v6648
        %v6715 = vpop.permute.xlu0 %6714
        %6718 = vset.pattern.permute.xlu0 1
        %6719 = vperm.xlu0 %6718, %v6649
        %v6720 = vpop.permute.xlu0 %6719
        %6723 = vset.pattern.permute.xlu0 1
        %6724 = vperm.xlu0 %6723, %v6650
        %v6725 = vpop.permute.xlu0 %6724
        %6728 = vset.pattern.permute.xlu0 1
        %6729 = vperm.xlu0 %6728, %v6651
        %v6730 = vpop.permute.xlu0 %6729
        %v6732 = vmul.f32 %v6655, 0.0
        %v6733 = vmul.f32 %v6432, %v6660
        %v6734 = vmul.f32 %v6433, %v6665
        %v6735 = vmul.f32 %v6434, %v6670
        %v6736 = vmul.f32 %v6435, %v6675
        %v6737 = vmul.f32 %v6436, %v6680
        %v6738 = vmul.f32 %v6437, %v6685
        %v6739 = vmul.f32 %v6438, %v6690
        %v6740 = vmul.f32 %v6439, %v6695
        %v6741 = vmul.f32 %v6440, %v6700
        %v6742 = vmul.f32 %v6441, %v6705
        %v6743 = vmul.f32 %v6442, %v6710
        %v6744 = vmul.f32 %v6443, %v6715
        %v6745 = vmul.f32 %v6444, %v6720
        %v6746 = vmul.f32 %v6445, %v6725
        %v6747 = vmul.f32 %v6446, %v6730
        %v6748 = vpack.c.bf16 %v6733, %v6732
        %v6749 = vpack.c.bf16 %v6735, %v6734
        %v6750 = vpack.c.bf16 %v6737, %v6736
        %v6751 = vpack.c.bf16 %v6739, %v6738
        %v6752 = vpack.c.bf16 %v6741, %v6740
        %v6753 = vpack.c.bf16 %v6743, %v6742
        %v6754 = vpack.c.bf16 %v6745, %v6744
        %v6755 = vpack.c.bf16 %v6747, %v6746
        %6756 = vst [vmem:[#allocation2 + $0x8] sm:$0xff] %v6748
        %6757 = vst [vmem:[#allocation2 + $0x50] sm:$0xff] %v6749
        %6758 = vst [vmem:[#allocation2 + $0x98] sm:$0xff] %v6750
        %6759 = vst [vmem:[#allocation2 + $0xe0] sm:$0xff] %v6751
        %6760 = vst [vmem:[#allocation2 + $0x128] sm:$0xff] %v6752
        %6761 = vst [vmem:[#allocation2 + $0x170] sm:$0xff] %v6753
        %6762 = vst [vmem:[#allocation2 + $0x1b8] sm:$0xff] %v6754
        %6763 = vst [vmem:[#allocation2 + $0x200] sm:$0xff] %v6755
        %v6764 = vld [vmem:[%s1] sm:$0xff]
        %v6765 = vld [vmem:[%s1 + $0x8] sm:$0xff]
        %v6766 = vld [vmem:[%s1 + $0x10] sm:$0xff]
        %v6767 = vld [vmem:[%s1 + $0x18] sm:$0xff]
        %v6768 = vld [vmem:[%s1 + $0x20] sm:$0xff]
        %v6769 = vld [vmem:[%s1 + $0x28] sm:$0xff]
        %v6770 = vld [vmem:[%s1 + $0x30] sm:$0xff]
        %v6771 = vld [vmem:[%s1 + $0x38] sm:$0xff]
        %v6772 = vld [vmem:[%s1 + $0x40] sm:$0xff]
        %v6773 = vld [vmem:[%s1 + $0x48] sm:$0xff]
        %v6774 = vld [vmem:[%s1 + $0x50] sm:$0xff]
        %v6775 = vld [vmem:[%s1 + $0x58] sm:$0xff]
        %v6776 = vld [vmem:[%s1 + $0x60] sm:$0xff]
        %v6777 = vld [vmem:[%s1 + $0x68] sm:$0xff]
        %v6778 = vld [vmem:[%s1 + $0x70] sm:$0xff]
        %v6779 = vld [vmem:[%s1 + $0x78] sm:$0xff]
        %v6781 = vrot.slane %v6432, 1
        %v6782 = vrot.slane %v6433, 1
        %v6783 = vsel %vm1834, %v6781, %v6782
        %v6784 = vrot.slane %v6434, 1
        %v6785 = vsel %vm1834, %v6782, %v6784
        %v6786 = vrot.slane %v6435, 1
        %v6787 = vsel %vm1834, %v6784, %v6786
        %v6788 = vrot.slane %v6436, 1
        %v6789 = vsel %vm1834, %v6786, %v6788
        %v6790 = vrot.slane %v6437, 1
        %v6791 = vsel %vm1834, %v6788, %v6790
        %v6792 = vrot.slane %v6438, 1
        %v6793 = vsel %vm1834, %v6790, %v6792
        %v6794 = vrot.slane %v6439, 1
        %v6795 = vsel %vm1834, %v6792, %v6794
        %v6796 = vrot.slane %v6440, 1
        %v6797 = vsel %vm1834, %v6794, %v6796
        %v6798 = vrot.slane %v6441, 1
        %v6799 = vsel %vm1834, %v6796, %v6798
        %v6800 = vrot.slane %v6442, 1
        %v6801 = vsel %vm1834, %v6798, %v6800
        %v6802 = vrot.slane %v6443, 1
        %v6803 = vsel %vm1834, %v6800, %v6802
        %v6804 = vrot.slane %v6444, 1
        %v6805 = vsel %vm1834, %v6802, %v6804
        %v6806 = vrot.slane %v6445, 1
        %v6807 = vsel %vm1834, %v6804, %v6806
        %v6808 = vrot.slane %v6446, 1
        %v6809 = vsel %vm1834, %v6806, %v6808
        %v6810 = vrot.slane %v6447, 1
        %v6811 = vsel %vm1834, %v6808, %v6810
        %v6828 = vsel %vm1834, 0.0, %v6781
        %6830 = vset.pattern.permute.xlu0 2
        %6831 = vperm.xlu0 %6830, %v6764
        %v6832 = vpop.permute.xlu0 %6831
        %6835 = vset.pattern.permute.xlu0 2
        %6836 = vperm.xlu0 %6835, %v6765
        %v6837 = vpop.permute.xlu0 %6836
        %6840 = vset.pattern.permute.xlu0 2
        %6841 = vperm.xlu0 %6840, %v6766
        %v6842 = vpop.permute.xlu0 %6841
        %6845 = vset.pattern.permute.xlu0 2
        %6846 = vperm.xlu0 %6845, %v6767
        %v6847 = vpop.permute.xlu0 %6846
        %6850 = vset.pattern.permute.xlu0 2
        %6851 = vperm.xlu0 %6850, %v6768
        %v6852 = vpop.permute.xlu0 %6851
        %6855 = vset.pattern.permute.xlu0 2
        %6856 = vperm.xlu0 %6855, %v6769
        %v6857 = vpop.permute.xlu0 %6856
        %6860 = vset.pattern.permute.xlu0 2
        %6861 = vperm.xlu0 %6860, %v6770
        %v6862 = vpop.permute.xlu0 %6861
        %6865 = vset.pattern.permute.xlu0 2
        %6866 = vperm.xlu0 %6865, %v6771
        %v6867 = vpop.permute.xlu0 %6866
        %6870 = vset.pattern.permute.xlu0 2
        %6871 = vperm.xlu0 %6870, %v6772
        %v6872 = vpop.permute.xlu0 %6871
        %6875 = vset.pattern.permute.xlu0 2
        %6876 = vperm.xlu0 %6875, %v6773
        %v6877 = vpop.permute.xlu0 %6876
        %6880 = vset.pattern.permute.xlu0 2
        %6881 = vperm.xlu0 %6880, %v6774
        %v6882 = vpop.permute.xlu0 %6881
        %6885 = vset.pattern.permute.xlu0 2
        %6886 = vperm.xlu0 %6885, %v6775
        %v6887 = vpop.permute.xlu0 %6886
        %6890 = vset.pattern.permute.xlu0 2
        %6891 = vperm.xlu0 %6890, %v6776
        %v6892 = vpop.permute.xlu0 %6891
        %6895 = vset.pattern.permute.xlu0 2
        %6896 = vperm.xlu0 %6895, %v6777
        %v6897 = vpop.permute.xlu0 %6896
        %6900 = vset.pattern.permute.xlu0 2
        %6901 = vperm.xlu0 %6900, %v6778
        %v6902 = vpop.permute.xlu0 %6901
        %6905 = vset.pattern.permute.xlu0 2
        %6906 = vperm.xlu0 %6905, %v6779
        %v6907 = vpop.permute.xlu0 %6906
        %v6909 = vmul.f32 %v6828, %v6832
        %v6910 = vmul.f32 %v6783, %v6837
        %v6911 = vmul.f32 %v6785, %v6842
        %v6912 = vmul.f32 %v6787, %v6847
        %v6913 = vmul.f32 %v6789, %v6852
        %v6914 = vmul.f32 %v6791, %v6857
        %v6915 = vmul.f32 %v6793, %v6862
        %v6916 = vmul.f32 %v6795, %v6867
        %v6917 = vmul.f32 %v6797, %v6872
        %v6918 = vmul.f32 %v6799, %v6877
        %v6919 = vmul.f32 %v6801, %v6882
        %v6920 = vmul.f32 %v6803, %v6887
        %v6921 = vmul.f32 %v6805, %v6892
        %v6922 = vmul.f32 %v6807, %v6897
        %v6923 = vmul.f32 %v6809, %v6902
        %v6924 = vmul.f32 %v6811, %v6907
        %v6925 = vpack.c.bf16 %v6910, %v6909
        %v6926 = vpack.c.bf16 %v6912, %v6911
        %v6927 = vpack.c.bf16 %v6914, %v6913
        %v6928 = vpack.c.bf16 %v6916, %v6915
        %v6929 = vpack.c.bf16 %v6918, %v6917
        %v6930 = vpack.c.bf16 %v6920, %v6919
        %v6931 = vpack.c.bf16 %v6922, %v6921
        %v6932 = vpack.c.bf16 %v6924, %v6923
        %6933 = vst [vmem:[#allocation2 + $0x10] sm:$0xff] %v6925
        %6934 = vst [vmem:[#allocation2 + $0x58] sm:$0xff] %v6926
        %6935 = vst [vmem:[#allocation2 + $0xa0] sm:$0xff] %v6927
        %6936 = vst [vmem:[#allocation2 + $0xe8] sm:$0xff] %v6928
        %6937 = vst [vmem:[#allocation2 + $0x130] sm:$0xff] %v6929
        %6938 = vst [vmem:[#allocation2 + $0x178] sm:$0xff] %v6930
        %6939 = vst [vmem:[#allocation2 + $0x1c0] sm:$0xff] %v6931
        %6940 = vst [vmem:[#allocation2 + $0x208] sm:$0xff] %v6932
        %v6941 = vld [vmem:[%s1] sm:$0xff]
        %v6942 = vld [vmem:[%s1 + $0x8] sm:$0xff]
        %v6943 = vld [vmem:[%s1 + $0x10] sm:$0xff]
        %v6944 = vld [vmem:[%s1 + $0x18] sm:$0xff]
        %v6945 = vld [vmem:[%s1 + $0x20] sm:$0xff]
        %v6946 = vld [vmem:[%s1 + $0x28] sm:$0xff]
        %v6947 = vld [vmem:[%s1 + $0x30] sm:$0xff]
        %v6948 = vld [vmem:[%s1 + $0x38] sm:$0xff]
        %v6949 = vld [vmem:[%s1 + $0x40] sm:$0xff]
        %v6950 = vld [vmem:[%s1 + $0x48] sm:$0xff]
        %v6951 = vld [vmem:[%s1 + $0x50] sm:$0xff]
        %v6952 = vld [vmem:[%s1 + $0x58] sm:$0xff]
        %v6953 = vld [vmem:[%s1 + $0x60] sm:$0xff]
        %v6954 = vld [vmem:[%s1 + $0x68] sm:$0xff]
        %v6955 = vld [vmem:[%s1 + $0x70] sm:$0xff]
        %v6956 = vld [vmem:[%s1 + $0x78] sm:$0xff]
        %v6957 = vrot.slane %v6447, 7
        %v6958 = vsel %vm1531, %v6506, %v6957
        %6961 = vset.pattern.permute.xlu0 3
        %6962 = vperm.xlu0 %6961, %v6941
        %v6963 = vpop.permute.xlu0 %6962
        %6966 = vset.pattern.permute.xlu0 3
        %6967 = vperm.xlu0 %6966, %v6942
        %v6968 = vpop.permute.xlu0 %6967
        %6971 = vset.pattern.permute.xlu0 3
        %6972 = vperm.xlu0 %6971, %v6943
        %v6973 = vpop.permute.xlu0 %6972
        %6976 = vset.pattern.permute.xlu0 3
        %6977 = vperm.xlu0 %6976, %v6944
        %v6978 = vpop.permute.xlu0 %6977
        %6981 = vset.pattern.permute.xlu0 3
        %6982 = vperm.xlu0 %6981, %v6945
        %v6983 = vpop.permute.xlu0 %6982
        %6986 = vset.pattern.permute.xlu0 3
        %6987 = vperm.xlu0 %6986, %v6946
        %v6988 = vpop.permute.xlu0 %6987
        %6991 = vset.pattern.permute.xlu0 3
        %6992 = vperm.xlu0 %6991, %v6947
        %v6993 = vpop.permute.xlu0 %6992
        %6996 = vset.pattern.permute.xlu0 3
        %6997 = vperm.xlu0 %6996, %v6948
        %v6998 = vpop.permute.xlu0 %6997
        %7001 = vset.pattern.permute.xlu0 3
        %7002 = vperm.xlu0 %7001, %v6949
        %v7003 = vpop.permute.xlu0 %7002
        %7006 = vset.pattern.permute.xlu0 3
        %7007 = vperm.xlu0 %7006, %v6950
        %v7008 = vpop.permute.xlu0 %7007
        %7011 = vset.pattern.permute.xlu0 3
        %7012 = vperm.xlu0 %7011, %v6951
        %v7013 = vpop.permute.xlu0 %7012
        %7016 = vset.pattern.permute.xlu0 3
        %7017 = vperm.xlu0 %7016, %v6952
        %v7018 = vpop.permute.xlu0 %7017
        %7021 = vset.pattern.permute.xlu0 3
        %7022 = vperm.xlu0 %7021, %v6953
        %v7023 = vpop.permute.xlu0 %7022
        %7026 = vset.pattern.permute.xlu0 3
        %7027 = vperm.xlu0 %7026, %v6954
        %v7028 = vpop.permute.xlu0 %7027
        %7031 = vset.pattern.permute.xlu0 3
        %7032 = vperm.xlu0 %7031, %v6955
        %v7033 = vpop.permute.xlu0 %7032
        %7036 = vset.pattern.permute.xlu0 3
        %7037 = vperm.xlu0 %7036, %v6956
        %v7038 = vpop.permute.xlu0 %7037
        %v7040 = vmul.f32 %v6523, %v6963
        %v7041 = vmul.f32 %v6481, %v6968
        %v7042 = vmul.f32 %v6483, %v6973
        %v7043 = vmul.f32 %v6485, %v6978
        %v7044 = vmul.f32 %v6487, %v6983
        %v7045 = vmul.f32 %v6489, %v6988
        %v7046 = vmul.f32 %v6491, %v6993
        %v7047 = vmul.f32 %v6493, %v6998
        %v7048 = vmul.f32 %v6495, %v7003
        %v7049 = vmul.f32 %v6497, %v7008
        %v7050 = vmul.f32 %v6499, %v7013
        %v7051 = vmul.f32 %v6501, %v7018
        %v7052 = vmul.f32 %v6503, %v7023
        %v7053 = vmul.f32 %v6505, %v7028
        %v7054 = vmul.f32 %v6507, %v7033
        %v7055 = vmul.f32 %v6958, %v7038
        %v7056 = vpack.c.bf16 %v7041, %v7040
        %v7057 = vpack.c.bf16 %v7043, %v7042
        %v7058 = vpack.c.bf16 %v7045, %v7044
        %v7059 = vpack.c.bf16 %v7047, %v7046
        %v7060 = vpack.c.bf16 %v7049, %v7048
        %v7061 = vpack.c.bf16 %v7051, %v7050
        %v7062 = vpack.c.bf16 %v7053, %v7052
        %v7063 = vpack.c.bf16 %v7055, %v7054
        %7064 = vst [vmem:[#allocation2 + $0x18] sm:$0xff] %v7056
        %7065 = vst [vmem:[#allocation2 + $0x60] sm:$0xff] %v7057
        %7066 = vst [vmem:[#allocation2 + $0xa8] sm:$0xff] %v7058
        %7067 = vst [vmem:[#allocation2 + $0xf0] sm:$0xff] %v7059
        %7068 = vst [vmem:[#allocation2 + $0x138] sm:$0xff] %v7060
        %7069 = vst [vmem:[#allocation2 + $0x180] sm:$0xff] %v7061
        %7070 = vst [vmem:[#allocation2 + $0x1c8] sm:$0xff] %v7062
        %7071 = vst [vmem:[#allocation2 + $0x210] sm:$0xff] %v7063
        %v7072 = vld [vmem:[%s1] sm:$0xff]
        %v7073 = vld [vmem:[%s1 + $0x8] sm:$0xff]
        %v7074 = vld [vmem:[%s1 + $0x10] sm:$0xff]
        %v7075 = vld [vmem:[%s1 + $0x18] sm:$0xff]
        %v7076 = vld [vmem:[%s1 + $0x20] sm:$0xff]
        %v7077 = vld [vmem:[%s1 + $0x28] sm:$0xff]
        %v7078 = vld [vmem:[%s1 + $0x30] sm:$0xff]
        %v7079 = vld [vmem:[%s1 + $0x38] sm:$0xff]
        %v7080 = vld [vmem:[%s1 + $0x40] sm:$0xff]
        %v7081 = vld [vmem:[%s1 + $0x48] sm:$0xff]
        %v7082 = vld [vmem:[%s1 + $0x50] sm:$0xff]
        %v7083 = vld [vmem:[%s1 + $0x58] sm:$0xff]
        %v7084 = vld [vmem:[%s1 + $0x60] sm:$0xff]
        %v7085 = vld [vmem:[%s1 + $0x68] sm:$0xff]
        %v7086 = vld [vmem:[%s1 + $0x70] sm:$0xff]
        %v7087 = vld [vmem:[%s1 + $0x78] sm:$0xff]
        %7089 = vset.pattern.permute.xlu0 4
        %7090 = vperm.xlu0 %7089, %v7072
        %v7091 = vpop.permute.xlu0 %7090
        %7094 = vset.pattern.permute.xlu0 4
        %7095 = vperm.xlu0 %7094, %v7073
        %v7096 = vpop.permute.xlu0 %7095
        %7099 = vset.pattern.permute.xlu0 4
        %7100 = vperm.xlu0 %7099, %v7074
        %v7101 = vpop.permute.xlu0 %7100
        %7104 = vset.pattern.permute.xlu0 4
        %7105 = vperm.xlu0 %7104, %v7075
        %v7106 = vpop.permute.xlu0 %7105
        %7109 = vset.pattern.permute.xlu0 4
        %7110 = vperm.xlu0 %7109, %v7076
        %v7111 = vpop.permute.xlu0 %7110
        %7114 = vset.pattern.permute.xlu0 4
        %7115 = vperm.xlu0 %7114, %v7077
        %v7116 = vpop.permute.xlu0 %7115
        %7119 = vset.pattern.permute.xlu0 4
        %7120 = vperm.xlu0 %7119, %v7078
        %v7121 = vpop.permute.xlu0 %7120
        %7124 = vset.pattern.permute.xlu0 4
        %7125 = vperm.xlu0 %7124, %v7079
        %v7126 = vpop.permute.xlu0 %7125
        %7129 = vset.pattern.permute.xlu0 4
        %7130 = vperm.xlu0 %7129, %v7080
        %v7131 = vpop.permute.xlu0 %7130
        %7134 = vset.pattern.permute.xlu0 4
        %7135 = vperm.xlu0 %7134, %v7081
        %v7136 = vpop.permute.xlu0 %7135
        %7139 = vset.pattern.permute.xlu0 4
        %7140 = vperm.xlu0 %7139, %v7082
        %v7141 = vpop.permute.xlu0 %7140
        %7144 = vset.pattern.permute.xlu0 4
        %7145 = vperm.xlu0 %7144, %v7083
        %v7146 = vpop.permute.xlu0 %7145
        %7149 = vset.pattern.permute.xlu0 4
        %7150 = vperm.xlu0 %7149, %v7084
        %v7151 = vpop.permute.xlu0 %7150
        %7154 = vset.pattern.permute.xlu0 4
        %7155 = vperm.xlu0 %7154, %v7085
        %v7156 = vpop.permute.xlu0 %7155
        %7159 = vset.pattern.permute.xlu0 4
        %7160 = vperm.xlu0 %7159, %v7086
        %v7161 = vpop.permute.xlu0 %7160
        %7164 = vset.pattern.permute.xlu0 4
        %7165 = vperm.xlu0 %7164, %v7087
        %v7166 = vpop.permute.xlu0 %7165
        %v7168 = vmul.f32 %v6432, %v7091
        %v7169 = vmul.f32 %v6433, %v7096
        %v7170 = vmul.f32 %v6434, %v7101
        %v7171 = vmul.f32 %v6435, %v7106
        %v7172 = vmul.f32 %v6436, %v7111
        %v7173 = vmul.f32 %v6437, %v7116
        %v7174 = vmul.f32 %v6438, %v7121
        %v7175 = vmul.f32 %v6439, %v7126
        %v7176 = vmul.f32 %v6440, %v7131
        %v7177 = vmul.f32 %v6441, %v7136
        %v7178 = vmul.f32 %v6442, %v7141
        %v7179 = vmul.f32 %v6443, %v7146
        %v7180 = vmul.f32 %v6444, %v7151
        %v7181 = vmul.f32 %v6445, %v7156
        %v7182 = vmul.f32 %v6446, %v7161
        %v7183 = vmul.f32 %v6447, %v7166
        %v7184 = vpack.c.bf16 %v7169, %v7168
        %v7185 = vpack.c.bf16 %v7171, %v7170
        %v7186 = vpack.c.bf16 %v7173, %v7172
        %v7187 = vpack.c.bf16 %v7175, %v7174
        %v7188 = vpack.c.bf16 %v7177, %v7176
        %v7189 = vpack.c.bf16 %v7179, %v7178
        %v7190 = vpack.c.bf16 %v7181, %v7180
        %v7191 = vpack.c.bf16 %v7183, %v7182
        %7192 = vst [vmem:[#allocation2 + $0x20] sm:$0xff] %v7184
        %7193 = vst [vmem:[#allocation2 + $0x68] sm:$0xff] %v7185
        %7194 = vst [vmem:[#allocation2 + $0xb0] sm:$0xff] %v7186
        %7195 = vst [vmem:[#allocation2 + $0xf8] sm:$0xff] %v7187
        %7196 = vst [vmem:[#allocation2 + $0x140] sm:$0xff] %v7188
        %7197 = vst [vmem:[#allocation2 + $0x188] sm:$0xff] %v7189
        %7198 = vst [vmem:[#allocation2 + $0x1d0] sm:$0xff] %v7190
        %7199 = vst [vmem:[#allocation2 + $0x218] sm:$0xff] %v7191
        %v7200 = vld [vmem:[%s1] sm:$0xff]
        %v7201 = vld [vmem:[%s1 + $0x8] sm:$0xff]
        %v7202 = vld [vmem:[%s1 + $0x10] sm:$0xff]
        %v7203 = vld [vmem:[%s1 + $0x18] sm:$0xff]
        %v7204 = vld [vmem:[%s1 + $0x20] sm:$0xff]
        %v7205 = vld [vmem:[%s1 + $0x28] sm:$0xff]
        %v7206 = vld [vmem:[%s1 + $0x30] sm:$0xff]
        %v7207 = vld [vmem:[%s1 + $0x38] sm:$0xff]
        %v7208 = vld [vmem:[%s1 + $0x40] sm:$0xff]
        %v7209 = vld [vmem:[%s1 + $0x48] sm:$0xff]
        %v7210 = vld [vmem:[%s1 + $0x50] sm:$0xff]
        %v7211 = vld [vmem:[%s1 + $0x58] sm:$0xff]
        %v7212 = vld [vmem:[%s1 + $0x60] sm:$0xff]
        %v7213 = vld [vmem:[%s1 + $0x68] sm:$0xff]
        %v7214 = vld [vmem:[%s1 + $0x70] sm:$0xff]
        %v7215 = vld [vmem:[%s1 + $0x78] sm:$0xff]
        %v7217 = vsel %vm1834, %v6810, 0.0
        %7219 = vset.pattern.permute.xlu0 5
        %7220 = vperm.xlu0 %7219, %v7200
        %v7221 = vpop.permute.xlu0 %7220
        %7224 = vset.pattern.permute.xlu0 5
        %7225 = vperm.xlu0 %7224, %v7201
        %v7226 = vpop.permute.xlu0 %7225
        %7229 = vset.pattern.permute.xlu0 5
        %7230 = vperm.xlu0 %7229, %v7202
        %v7231 = vpop.permute.xlu0 %7230
        %7234 = vset.pattern.permute.xlu0 5
        %7235 = vperm.xlu0 %7234, %v7203
        %v7236 = vpop.permute.xlu0 %7235
        %7239 = vset.pattern.permute.xlu0 5
        %7240 = vperm.xlu0 %7239, %v7204
        %v7241 = vpop.permute.xlu0 %7240
        %7244 = vset.pattern.permute.xlu0 5
        %7245 = vperm.xlu0 %7244, %v7205
        %v7246 = vpop.permute.xlu0 %7245
        %7249 = vset.pattern.permute.xlu0 5
        %7250 = vperm.xlu0 %7249, %v7206
        %v7251 = vpop.permute.xlu0 %7250
        %7254 = vset.pattern.permute.xlu0 5
        %7255 = vperm.xlu0 %7254, %v7207
        %v7256 = vpop.permute.xlu0 %7255
        %7259 = vset.pattern.permute.xlu0 5
        %7260 = vperm.xlu0 %7259, %v7208
        %v7261 = vpop.permute.xlu0 %7260
        %7264 = vset.pattern.permute.xlu0 5
        %7265 = vperm.xlu0 %7264, %v7209
        %v7266 = vpop.permute.xlu0 %7265
        %7269 = vset.pattern.permute.xlu0 5
        %7270 = vperm.xlu0 %7269, %v7210
        %v7271 = vpop.permute.xlu0 %7270
        %7274 = vset.pattern.permute.xlu0 5
        %7275 = vperm.xlu0 %7274, %v7211
        %v7276 = vpop.permute.xlu0 %7275
        %7279 = vset.pattern.permute.xlu0 5
        %7280 = vperm.xlu0 %7279, %v7212
        %v7281 = vpop.permute.xlu0 %7280
        %7284 = vset.pattern.permute.xlu0 5
        %7285 = vperm.xlu0 %7284, %v7213
        %v7286 = vpop.permute.xlu0 %7285
        %7289 = vset.pattern.permute.xlu0 5
        %7290 = vperm.xlu0 %7289, %v7214
        %v7291 = vpop.permute.xlu0 %7290
        %7294 = vset.pattern.permute.xlu0 5
        %7295 = vperm.xlu0 %7294, %v7215
        %v7296 = vpop.permute.xlu0 %7295
        %v7298 = vmul.f32 %v6783, %v7221
        %v7299 = vmul.f32 %v6785, %v7226
        %v7300 = vmul.f32 %v6787, %v7231
        %v7301 = vmul.f32 %v6789, %v7236
        %v7302 = vmul.f32 %v6791, %v7241
        %v7303 = vmul.f32 %v6793, %v7246
        %v7304 = vmul.f32 %v6795, %v7251
        %v7305 = vmul.f32 %v6797, %v7256
        %v7306 = vmul.f32 %v6799, %v7261
        %v7307 = vmul.f32 %v6801, %v7266
        %v7308 = vmul.f32 %v6803, %v7271
        %v7309 = vmul.f32 %v6805, %v7276
        %v7310 = vmul.f32 %v6807, %v7281
        %v7311 = vmul.f32 %v6809, %v7286
        %v7312 = vmul.f32 %v6811, %v7291
        %v7313 = vmul.f32 %v7217, %v7296
        %v7314 = vpack.c.bf16 %v7299, %v7298
        %v7315 = vpack.c.bf16 %v7301, %v7300
        %v7316 = vpack.c.bf16 %v7303, %v7302
        %v7317 = vpack.c.bf16 %v7305, %v7304
        %v7318 = vpack.c.bf16 %v7307, %v7306
        %v7319 = vpack.c.bf16 %v7309, %v7308
        %v7320 = vpack.c.bf16 %v7311, %v7310
        %v7321 = vpack.c.bf16 %v7313, %v7312
        %7322 = vst [vmem:[#allocation2 + $0x28] sm:$0xff] %v7314
        %7323 = vst [vmem:[#allocation2 + $0x70] sm:$0xff] %v7315
        %7324 = vst [vmem:[#allocation2 + $0xb8] sm:$0xff] %v7316
        %7325 = vst [vmem:[#allocation2 + $0x100] sm:$0xff] %v7317
        %7326 = vst [vmem:[#allocation2 + $0x148] sm:$0xff] %v7318
        %7327 = vst [vmem:[#allocation2 + $0x190] sm:$0xff] %v7319
        %7328 = vst [vmem:[#allocation2 + $0x1d8] sm:$0xff] %v7320
        %7329 = vst [vmem:[#allocation2 + $0x220] sm:$0xff] %v7321
        %v7330 = vld [vmem:[%s1] sm:$0xff]
        %v7331 = vld [vmem:[%s1 + $0x8] sm:$0xff]
        %v7332 = vld [vmem:[%s1 + $0x10] sm:$0xff]
        %v7333 = vld [vmem:[%s1 + $0x18] sm:$0xff]
        %v7334 = vld [vmem:[%s1 + $0x20] sm:$0xff]
        %v7335 = vld [vmem:[%s1 + $0x28] sm:$0xff]
        %v7336 = vld [vmem:[%s1 + $0x30] sm:$0xff]
        %v7337 = vld [vmem:[%s1 + $0x38] sm:$0xff]
        %v7338 = vld [vmem:[%s1 + $0x40] sm:$0xff]
        %v7339 = vld [vmem:[%s1 + $0x48] sm:$0xff]
        %v7340 = vld [vmem:[%s1 + $0x50] sm:$0xff]
        %v7341 = vld [vmem:[%s1 + $0x58] sm:$0xff]
        %v7342 = vld [vmem:[%s1 + $0x60] sm:$0xff]
        %v7343 = vld [vmem:[%s1 + $0x68] sm:$0xff]
        %v7344 = vld [vmem:[%s1 + $0x70] sm:$0xff]
        %v7345 = vld [vmem:[%s1 + $0x78] sm:$0xff]
        %v7347 = vsel %vm1531, %v6957, 0.0
        %7349 = vset.pattern.permute.xlu0 6
        %7350 = vperm.xlu0 %7349, %v7330
        %v7351 = vpop.permute.xlu0 %7350
        %7354 = vset.pattern.permute.xlu0 6
        %7355 = vperm.xlu0 %7354, %v7331
        %v7356 = vpop.permute.xlu0 %7355
        %7359 = vset.pattern.permute.xlu0 6
        %7360 = vperm.xlu0 %7359, %v7332
        %v7361 = vpop.permute.xlu0 %7360
        %7364 = vset.pattern.permute.xlu0 6
        %7365 = vperm.xlu0 %7364, %v7333
        %v7366 = vpop.permute.xlu0 %7365
        %7369 = vset.pattern.permute.xlu0 6
        %7370 = vperm.xlu0 %7369, %v7334
        %v7371 = vpop.permute.xlu0 %7370
        %7374 = vset.pattern.permute.xlu0 6
        %7375 = vperm.xlu0 %7374, %v7335
        %v7376 = vpop.permute.xlu0 %7375
        %7379 = vset.pattern.permute.xlu0 6
        %7380 = vperm.xlu0 %7379, %v7336
        %v7381 = vpop.permute.xlu0 %7380
        %7384 = vset.pattern.permute.xlu0 6
        %7385 = vperm.xlu0 %7384, %v7337
        %v7386 = vpop.permute.xlu0 %7385
        %7389 = vset.pattern.permute.xlu0 6
        %7390 = vperm.xlu0 %7389, %v7338
        %v7391 = vpop.permute.xlu0 %7390
        %7394 = vset.pattern.permute.xlu0 6
        %7395 = vperm.xlu0 %7394, %v7339
        %v7396 = vpop.permute.xlu0 %7395
        %7399 = vset.pattern.permute.xlu0 6
        %7400 = vperm.xlu0 %7399, %v7340
        %v7401 = vpop.permute.xlu0 %7400
        %7404 = vset.pattern.permute.xlu0 6
        %7405 = vperm.xlu0 %7404, %v7341
        %v7406 = vpop.permute.xlu0 %7405
        %7409 = vset.pattern.permute.xlu0 6
        %7410 = vperm.xlu0 %7409, %v7342
        %v7411 = vpop.permute.xlu0 %7410
        %7414 = vset.pattern.permute.xlu0 6
        %7415 = vperm.xlu0 %7414, %v7343
        %v7416 = vpop.permute.xlu0 %7415
        %7419 = vset.pattern.permute.xlu0 6
        %7420 = vperm.xlu0 %7419, %v7344
        %v7421 = vpop.permute.xlu0 %7420
        %7424 = vset.pattern.permute.xlu0 6
        %7425 = vperm.xlu0 %7424, %v7345
        %v7426 = vpop.permute.xlu0 %7425
        %v7428 = vmul.f32 %v6481, %v7351
        %v7429 = vmul.f32 %v6483, %v7356
        %v7430 = vmul.f32 %v6485, %v7361
        %v7431 = vmul.f32 %v6487, %v7366
        %v7432 = vmul.f32 %v6489, %v7371
        %v7433 = vmul.f32 %v6491, %v7376
        %v7434 = vmul.f32 %v6493, %v7381
        %v7435 = vmul.f32 %v6495, %v7386
        %v7436 = vmul.f32 %v6497, %v7391
        %v7437 = vmul.f32 %v6499, %v7396
        %v7438 = vmul.f32 %v6501, %v7401
        %v7439 = vmul.f32 %v6503, %v7406
        %v7440 = vmul.f32 %v6505, %v7411
        %v7441 = vmul.f32 %v6507, %v7416
        %v7442 = vmul.f32 %v6958, %v7421
        %v7443 = vmul.f32 %v7347, %v7426
        %v7444 = vpack.c.bf16 %v7429, %v7428
        %v7445 = vpack.c.bf16 %v7431, %v7430
        %v7446 = vpack.c.bf16 %v7433, %v7432
        %v7447 = vpack.c.bf16 %v7435, %v7434
        %v7448 = vpack.c.bf16 %v7437, %v7436
        %v7449 = vpack.c.bf16 %v7439, %v7438
        %v7450 = vpack.c.bf16 %v7441, %v7440
        %v7451 = vpack.c.bf16 %v7443, %v7442
        %7452 = vst [vmem:[#allocation2 + $0x30] sm:$0xff] %v7444
        %7453 = vst [vmem:[#allocation2 + $0x78] sm:$0xff] %v7445
        %7454 = vst [vmem:[#allocation2 + $0xc0] sm:$0xff] %v7446
        %7455 = vst [vmem:[#allocation2 + $0x108] sm:$0xff] %v7447
        %7456 = vst [vmem:[#allocation2 + $0x150] sm:$0xff] %v7448
        %7457 = vst [vmem:[#allocation2 + $0x198] sm:$0xff] %v7449
        %7458 = vst [vmem:[#allocation2 + $0x1e0] sm:$0xff] %v7450
        %7459 = vst [vmem:[#allocation2 + $0x228] sm:$0xff] %v7451
        %v7460 = vld [vmem:[%s1] sm:$0xff]
        %v7461 = vld [vmem:[%s1 + $0x8] sm:$0xff]
        %v7462 = vld [vmem:[%s1 + $0x10] sm:$0xff]
        %v7463 = vld [vmem:[%s1 + $0x18] sm:$0xff]
        %v7464 = vld [vmem:[%s1 + $0x20] sm:$0xff]
        %v7465 = vld [vmem:[%s1 + $0x28] sm:$0xff]
        %v7466 = vld [vmem:[%s1 + $0x30] sm:$0xff]
        %v7467 = vld [vmem:[%s1 + $0x38] sm:$0xff]
        %v7468 = vld [vmem:[%s1 + $0x40] sm:$0xff]
        %v7469 = vld [vmem:[%s1 + $0x48] sm:$0xff]
        %v7470 = vld [vmem:[%s1 + $0x50] sm:$0xff]
        %v7471 = vld [vmem:[%s1 + $0x58] sm:$0xff]
        %v7472 = vld [vmem:[%s1 + $0x60] sm:$0xff]
        %v7473 = vld [vmem:[%s1 + $0x68] sm:$0xff]
        %v7474 = vld [vmem:[%s1 + $0x70] sm:$0xff]
        %v7475 = vld [vmem:[%s1 + $0x78] sm:$0xff]
        %7477 = vset.pattern.permute.xlu0 7
        %7478 = vperm.xlu0 %7477, %v7460
        %v7479 = vpop.permute.xlu0 %7478
        %7482 = vset.pattern.permute.xlu0 7
        %7483 = vperm.xlu0 %7482, %v7461
        %v7484 = vpop.permute.xlu0 %7483
        %7487 = vset.pattern.permute.xlu0 7
        %7488 = vperm.xlu0 %7487, %v7462
        %v7489 = vpop.permute.xlu0 %7488
        %7492 = vset.pattern.permute.xlu0 7
        %7493 = vperm.xlu0 %7492, %v7463
        %v7494 = vpop.permute.xlu0 %7493
        %7497 = vset.pattern.permute.xlu0 7
        %7498 = vperm.xlu0 %7497, %v7464
        %v7499 = vpop.permute.xlu0 %7498
        %7502 = vset.pattern.permute.xlu0 7
        %7503 = vperm.xlu0 %7502, %v7465
        %v7504 = vpop.permute.xlu0 %7503
        %7507 = vset.pattern.permute.xlu0 7
        %7508 = vperm.xlu0 %7507, %v7466
        %v7509 = vpop.permute.xlu0 %7508
        %7512 = vset.pattern.permute.xlu0 7
        %7513 = vperm.xlu0 %7512, %v7467
        %v7514 = vpop.permute.xlu0 %7513
        %7517 = vset.pattern.permute.xlu0 7
        %7518 = vperm.xlu0 %7517, %v7468
        %v7519 = vpop.permute.xlu0 %7518
        %7522 = vset.pattern.permute.xlu0 7
        %7523 = vperm.xlu0 %7522, %v7469
        %v7524 = vpop.permute.xlu0 %7523
        %7527 = vset.pattern.permute.xlu0 7
        %7528 = vperm.xlu0 %7527, %v7470
        %v7529 = vpop.permute.xlu0 %7528
        %7532 = vset.pattern.permute.xlu0 7
        %7533 = vperm.xlu0 %7532, %v7471
        %v7534 = vpop.permute.xlu0 %7533
        %7537 = vset.pattern.permute.xlu0 7
        %7538 = vperm.xlu0 %7537, %v7472
        %v7539 = vpop.permute.xlu0 %7538
        %7542 = vset.pattern.permute.xlu0 7
        %7543 = vperm.xlu0 %7542, %v7473
        %v7544 = vpop.permute.xlu0 %7543
        %7547 = vset.pattern.permute.xlu0 7
        %7548 = vperm.xlu0 %7547, %v7474
        %v7549 = vpop.permute.xlu0 %7548
        %7552 = vset.pattern.permute.xlu0 7
        %7553 = vperm.xlu0 %7552, %v7475
        %v7554 = vpop.permute.xlu0 %7553
        %v7556 = vmul.f32 %v6433, %v7479
        %v7557 = vmul.f32 %v6434, %v7484
        %v7558 = vmul.f32 %v6435, %v7489
        %v7559 = vmul.f32 %v6436, %v7494
        %v7560 = vmul.f32 %v6437, %v7499
        %v7561 = vmul.f32 %v6438, %v7504
        %v7562 = vmul.f32 %v6439, %v7509
        %v7563 = vmul.f32 %v6440, %v7514
        %v7564 = vmul.f32 %v6441, %v7519
        %v7565 = vmul.f32 %v6442, %v7524
        %v7566 = vmul.f32 %v6443, %v7529
        %v7567 = vmul.f32 %v6444, %v7534
        %v7568 = vmul.f32 %v6445, %v7539
        %v7569 = vmul.f32 %v6446, %v7544
        %v7570 = vmul.f32 %v6447, %v7549
        %v7571 = vmul.f32 %v7554, 0.0
        %v7572 = vpack.c.bf16 %v7557, %v7556
        %v7573 = vpack.c.bf16 %v7559, %v7558
        %v7574 = vpack.c.bf16 %v7561, %v7560
        %v7575 = vpack.c.bf16 %v7563, %v7562
        %v7576 = vpack.c.bf16 %v7565, %v7564
        %v7577 = vpack.c.bf16 %v7567, %v7566
        %v7578 = vpack.c.bf16 %v7569, %v7568
        %v7579 = vpack.c.bf16 %v7571, %v7570
        %7580 = vst [vmem:[#allocation2 + $0x38] sm:$0xff] %v7572
        %7581 = vst [vmem:[#allocation2 + $0x80] sm:$0xff] %v7573
        %7582 = vst [vmem:[#allocation2 + $0xc8] sm:$0xff] %v7574
        %7583 = vst [vmem:[#allocation2 + $0x110] sm:$0xff] %v7575
        %7584 = vst [vmem:[#allocation2 + $0x158] sm:$0xff] %v7576
        %7585 = vst [vmem:[#allocation2 + $0x1a0] sm:$0xff] %v7577
        %7586 = vst [vmem:[#allocation2 + $0x1e8] sm:$0xff] %v7578
        %7587 = vst [vmem:[#allocation2 + $0x230] sm:$0xff] %v7579
        %v7588 = vld [vmem:[%s1] sm:$0xff]
        %v7589 = vld [vmem:[%s1 + $0x8] sm:$0xff]
        %v7590 = vld [vmem:[%s1 + $0x10] sm:$0xff]
        %v7591 = vld [vmem:[%s1 + $0x18] sm:$0xff]
        %v7592 = vld [vmem:[%s1 + $0x20] sm:$0xff]
        %v7593 = vld [vmem:[%s1 + $0x28] sm:$0xff]
        %v7594 = vld [vmem:[%s1 + $0x30] sm:$0xff]
        %v7595 = vld [vmem:[%s1 + $0x38] sm:$0xff]
        %v7596 = vld [vmem:[%s1 + $0x40] sm:$0xff]
        %v7597 = vld [vmem:[%s1 + $0x48] sm:$0xff]
        %v7598 = vld [vmem:[%s1 + $0x50] sm:$0xff]
        %v7599 = vld [vmem:[%s1 + $0x58] sm:$0xff]
        %v7600 = vld [vmem:[%s1 + $0x60] sm:$0xff]
        %v7601 = vld [vmem:[%s1 + $0x68] sm:$0xff]
        %v7602 = vld [vmem:[%s1 + $0x70] sm:$0xff]
        %v7603 = vld [vmem:[%s1 + $0x78] sm:$0xff]
        %7605 = vset.pattern.permute.xlu0 8
        %7606 = vperm.xlu0 %7605, %v7588
        %v7607 = vpop.permute.xlu0 %7606
        %7610 = vset.pattern.permute.xlu0 8
        %7611 = vperm.xlu0 %7610, %v7589
        %v7612 = vpop.permute.xlu0 %7611
        %7615 = vset.pattern.permute.xlu0 8
        %7616 = vperm.xlu0 %7615, %v7590
        %v7617 = vpop.permute.xlu0 %7616
        %7620 = vset.pattern.permute.xlu0 8
        %7621 = vperm.xlu0 %7620, %v7591
        %v7622 = vpop.permute.xlu0 %7621
        %7625 = vset.pattern.permute.xlu0 8
        %7626 = vperm.xlu0 %7625, %v7592
        %v7627 = vpop.permute.xlu0 %7626
        %7630 = vset.pattern.permute.xlu0 8
        %7631 = vperm.xlu0 %7630, %v7593
        %v7632 = vpop.permute.xlu0 %7631
        %7635 = vset.pattern.permute.xlu0 8
        %7636 = vperm.xlu0 %7635, %v7594
        %v7637 = vpop.permute.xlu0 %7636
        %7640 = vset.pattern.permute.xlu0 8
        %7641 = vperm.xlu0 %7640, %v7595
        %v7642 = vpop.permute.xlu0 %7641
        %7645 = vset.pattern.permute.xlu0 8
        %7646 = vperm.xlu0 %7645, %v7596
        %v7647 = vpop.permute.xlu0 %7646
        %7650 = vset.pattern.permute.xlu0 8
        %7651 = vperm.xlu0 %7650, %v7597
        %v7652 = vpop.permute.xlu0 %7651
        %7655 = vset.pattern.permute.xlu0 8
        %7656 = vperm.xlu0 %7655, %v7598
        %v7657 = vpop.permute.xlu0 %7656
        %7660 = vset.pattern.permute.xlu0 8
        %7661 = vperm.xlu0 %7660, %v7599
        %v7662 = vpop.permute.xlu0 %7661
        %7665 = vset.pattern.permute.xlu0 8
        %7666 = vperm.xlu0 %7665, %v7600
        %v7667 = vpop.permute.xlu0 %7666
        %7670 = vset.pattern.permute.xlu0 8
        %7671 = vperm.xlu0 %7670, %v7601
        %v7672 = vpop.permute.xlu0 %7671
        %7675 = vset.pattern.permute.xlu0 8
        %7676 = vperm.xlu0 %7675, %v7602
        %v7677 = vpop.permute.xlu0 %7676
        %7680 = vset.pattern.permute.xlu0 8
        %7681 = vperm.xlu0 %7680, %v7603
        %v7682 = vpop.permute.xlu0 %7681
        %v7684 = vmul.f32 %v6785, %v7607
        %v7685 = vmul.f32 %v6787, %v7612
        %v7686 = vmul.f32 %v6789, %v7617
        %v7687 = vmul.f32 %v6791, %v7622
        %v7688 = vmul.f32 %v6793, %v7627
        %v7689 = vmul.f32 %v6795, %v7632
        %v7690 = vmul.f32 %v6797, %v7637
        %v7691 = vmul.f32 %v6799, %v7642
        %v7692 = vmul.f32 %v6801, %v7647
        %v7693 = vmul.f32 %v6803, %v7652
        %v7694 = vmul.f32 %v6805, %v7657
        %v7695 = vmul.f32 %v6807, %v7662
        %v7696 = vmul.f32 %v6809, %v7667
        %v7697 = vmul.f32 %v6811, %v7672
        %v7698 = vmul.f32 %v7217, %v7677
        %v7699 = vmul.f32 %v7682, 0.0
        %v7700 = vpack.c.bf16 %v7685, %v7684
        %v7701 = vpack.c.bf16 %v7687, %v7686
        %v7702 = vpack.c.bf16 %v7689, %v7688
        %v7703 = vpack.c.bf16 %v7691, %v7690
        %v7704 = vpack.c.bf16 %v7693, %v7692
        %v7705 = vpack.c.bf16 %v7695, %v7694
        %v7706 = vpack.c.bf16 %v7697, %v7696
        %v7707 = vpack.c.bf16 %v7699, %v7698
        %7708 = vst [vmem:[#allocation2 + $0x40] sm:$0xff] %v7700
        %7709 = vst [vmem:[#allocation2 + $0x88] sm:$0xff] %v7701
        %7710 = vst [vmem:[#allocation2 + $0xd0] sm:$0xff] %v7702
        %7711 = vst [vmem:[#allocation2 + $0x118] sm:$0xff] %v7703
        %7712 = vst [vmem:[#allocation2 + $0x160] sm:$0xff] %v7704
        %7713 = vst [vmem:[#allocation2 + $0x1a8] sm:$0xff] %v7705
        %7714 = vst [vmem:[#allocation2 + $0x1f0] sm:$0xff] %v7706
        %7715 = vst [vmem:[#allocation2 + $0x238] sm:$0xff] %v7707
        %v7716 = vld [vmem:[#allocation2] sm:$0xff]
        %v7717 = vld [vmem:[#allocation2 + $0x8] sm:$0xff]
        %v7718 = vld [vmem:[#allocation2 + $0x10] sm:$0xff]
        %v7719 = vld [vmem:[#allocation2 + $0x18] sm:$0xff]
        %v7720 = vld [vmem:[#allocation2 + $0x20] sm:$0xff]
        %v7721 = vld [vmem:[#allocation2 + $0x28] sm:$0xff]
        %v7722 = vld [vmem:[#allocation2 + $0x30] sm:$0xff]
        %v7723 = vld [vmem:[#allocation2 + $0x38] sm:$0xff]
        %v7724 = vld [vmem:[#allocation2 + $0x40] sm:$0xff]
        %v7725 = vld [vmem:[#allocation2 + $0x48] sm:$0xff]
        %v7726 = vld [vmem:[#allocation2 + $0x50] sm:$0xff]
        %v7727 = vld [vmem:[#allocation2 + $0x58] sm:$0xff]
        %v7728 = vld [vmem:[#allocation2 + $0x60] sm:$0xff]
        %v7729 = vld [vmem:[#allocation2 + $0x68] sm:$0xff]
        %v7730 = vld [vmem:[#allocation2 + $0x70] sm:$0xff]
        %v7731 = vld [vmem:[#allocation2 + $0x78] sm:$0xff]
        %v7732 = vld [vmem:[#allocation2 + $0x80] sm:$0xff]
        %v7733 = vld [vmem:[#allocation2 + $0x88] sm:$0xff]
        %v7734 = vld [vmem:[#allocation2 + $0x90] sm:$0xff]
        %v7735 = vld [vmem:[#allocation2 + $0x98] sm:$0xff]
        %v7736 = vld [vmem:[#allocation2 + $0xa0] sm:$0xff]
        %v7737 = vld [vmem:[#allocation2 + $0xa8] sm:$0xff]
        %v7738 = vld [vmem:[#allocation2 + $0xb0] sm:$0xff]
        %v7739 = vld [vmem:[#allocation2 + $0xb8] sm:$0xff]
        %v7740 = vld [vmem:[#allocation2 + $0xc0] sm:$0xff]
        %v7741 = vld [vmem:[#allocation2 + $0xc8] sm:$0xff]
        %v7742 = vld [vmem:[#allocation2 + $0xd0] sm:$0xff]
        %v7743 = vld [vmem:[#allocation2 + $0xd8] sm:$0xff]
        %v7744 = vld [vmem:[#allocation2 + $0xe0] sm:$0xff]
        %v7745 = vld [vmem:[#allocation2 + $0xe8] sm:$0xff]
        %v7746 = vld [vmem:[#allocation2 + $0xf0] sm:$0xff]
        %v7747 = vld [vmem:[#allocation2 + $0xf8] sm:$0xff]
        %v7748 = vld [vmem:[#allocation2 + $0x100] sm:$0xff]
        %v7749 = vld [vmem:[#allocation2 + $0x108] sm:$0xff]
        %v7750 = vld [vmem:[#allocation2 + $0x110] sm:$0xff]
        %v7751 = vld [vmem:[#allocation2 + $0x118] sm:$0xff]
        %v7752 = vld [vmem:[#allocation2 + $0x120] sm:$0xff]
        %v7753 = vld [vmem:[#allocation2 + $0x128] sm:$0xff]
        %v7754 = vld [vmem:[#allocation2 + $0x130] sm:$0xff]
        %v7755 = vld [vmem:[#allocation2 + $0x138] sm:$0xff]
        %v7756 = vld [vmem:[#allocation2 + $0x140] sm:$0xff]
        %v7757 = vld [vmem:[#allocation2 + $0x148] sm:$0xff]
        %v7758 = vld [vmem:[#allocation2 + $0x150] sm:$0xff]
        %v7759 = vld [vmem:[#allocation2 + $0x158] sm:$0xff]
        %v7760 = vld [vmem:[#allocation2 + $0x160] sm:$0xff]
        %v7761 = vld [vmem:[#allocation2 + $0x168] sm:$0xff]
        %v7762 = vld [vmem:[#allocation2 + $0x170] sm:$0xff]
        %v7763 = vld [vmem:[#allocation2 + $0x178] sm:$0xff]
        %v7764 = vld [vmem:[#allocation2 + $0x180] sm:$0xff]
        %v7765 = vld [vmem:[#allocation2 + $0x188] sm:$0xff]
        %v7766 = vld [vmem:[#allocation2 + $0x190] sm:$0xff]
        %v7767 = vld [vmem:[#allocation2 + $0x198] sm:$0xff]
        %v7768 = vld [vmem:[#allocation2 + $0x1a0] sm:$0xff]
        %v7769 = vld [vmem:[#allocation2 + $0x1a8] sm:$0xff]
        %v7770 = vld [vmem:[#allocation2 + $0x1b0] sm:$0xff]
        %v7771 = vld [vmem:[#allocation2 + $0x1b8] sm:$0xff]
        %v7772 = vld [vmem:[#allocation2 + $0x1c0] sm:$0xff]
        %v7773 = vld [vmem:[#allocation2 + $0x1c8] sm:$0xff]
        %v7774 = vld [vmem:[#allocation2 + $0x1d0] sm:$0xff]
        %v7775 = vld [vmem:[#allocation2 + $0x1d8] sm:$0xff]
        %v7776 = vld [vmem:[#allocation2 + $0x1e0] sm:$0xff]
        %v7777 = vld [vmem:[#allocation2 + $0x1e8] sm:$0xff]
        %v7778 = vld [vmem:[#allocation2 + $0x1f0] sm:$0xff]
        %v7779 = vld [vmem:[#allocation2 + $0x1f8] sm:$0xff]
        %v7780 = vld [vmem:[#allocation2 + $0x200] sm:$0xff]
        %v7781 = vld [vmem:[#allocation2 + $0x208] sm:$0xff]
        %v7782 = vld [vmem:[#allocation2 + $0x210] sm:$0xff]
        %v7783 = vld [vmem:[#allocation2 + $0x218] sm:$0xff]
        %v7784 = vld [vmem:[#allocation2 + $0x220] sm:$0xff]
        %v7785 = vld [vmem:[#allocation2 + $0x228] sm:$0xff]
        %v7786 = vld [vmem:[#allocation2 + $0x230] sm:$0xff]
        %v7787 = vld [vmem:[#allocation2 + $0x238] sm:$0xff]
        %v7788 = vld [vmem:[%s9] sm:$0xf]
        %v7789 = vld [vmem:[%s9 + $0x4] sm:$0xf]
        %v7790 = vld [vmem:[%s9 + $0x8] sm:$0xf]
        %v7791 = vld [vmem:[%s9 + $0xc] sm:$0xf]
        %v7792 = vld [vmem:[%s9 + $0x10] sm:$0xf]
        %v7793 = vld [vmem:[%s9 + $0x14] sm:$0xf]
        %v7794 = vld [vmem:[%s9 + $0x18] sm:$0xf]
        %v7795 = vld [vmem:[%s9 + $0x1c] sm:$0xf]
        %v7796 = vld [vmem:[%s9 + $0x20] sm:$0xf]
        %v7797 = vld [vmem:[%s9 + $0x24] sm:$0xf]
        %v7798 = vld [vmem:[%s9 + $0x28] sm:$0xf]
        %v7799 = vld [vmem:[%s9 + $0x2c] sm:$0xf]
        %v7800 = vld [vmem:[%s9 + $0x30] sm:$0xf]
        %v7801 = vld [vmem:[%s9 + $0x34] sm:$0xf]
        %v7802 = vld [vmem:[%s9 + $0x38] sm:$0xf]
        %v7803 = vld [vmem:[%s9 + $0x3c] sm:$0xf]
        %v7804 = vld [vmem:[%s9 + $0x40] sm:$0xf]
        %v7805 = vld [vmem:[%s9 + $0x44] sm:$0xf]
        %v7806 = vld [vmem:[%s9 + $0x48] sm:$0xf]
        %v7807 = vld [vmem:[%s9 + $0x4c] sm:$0xf]
        %v7808 = vld [vmem:[%s9 + $0x50] sm:$0xf]
        %v7809 = vld [vmem:[%s9 + $0x54] sm:$0xf]
        %v7810 = vld [vmem:[%s9 + $0x58] sm:$0xf]
        %v7811 = vld [vmem:[%s9 + $0x5c] sm:$0xf]
        %v7812 = vld [vmem:[%s9 + $0x60] sm:$0xf]
        %v7813 = vld [vmem:[%s9 + $0x64] sm:$0xf]
        %v7814 = vld [vmem:[%s9 + $0x68] sm:$0xf]
        %v7815 = vld [vmem:[%s9 + $0x6c] sm:$0xf]
        %v7816 = vld [vmem:[%s9 + $0x70] sm:$0xf]
        %v7817 = vld [vmem:[%s9 + $0x74] sm:$0xf]
        %v7818 = vld [vmem:[%s9 + $0x78] sm:$0xf]
        %v7819 = vld [vmem:[%s9 + $0x7c] sm:$0xf]
        %v7820 = vld [vmem:[%s9 + $0x80] sm:$0xf]
        %v7821 = vld [vmem:[%s9 + $0x84] sm:$0xf]
        %v7822 = vld [vmem:[%s9 + $0x88] sm:$0xf]
        %v7823 = vld [vmem:[%s9 + $0x8c] sm:$0xf]
        %v7824 = vld [vmem:[%s9 + $0x90] sm:$0xf]
        %v7825 = vld [vmem:[%s9 + $0x94] sm:$0xf]
        %v7826 = vld [vmem:[%s9 + $0x98] sm:$0xf]
        %v7827 = vld [vmem:[%s9 + $0x9c] sm:$0xf]
        %v7828 = vld [vmem:[%s9 + $0xa0] sm:$0xf]
        %v7829 = vld [vmem:[%s9 + $0xa4] sm:$0xf]
        %v7830 = vld [vmem:[%s9 + $0xa8] sm:$0xf]
        %v7831 = vld [vmem:[%s9 + $0xac] sm:$0xf]
        %v7832 = vld [vmem:[%s9 + $0xb0] sm:$0xf]
        %v7833 = vld [vmem:[%s9 + $0xb4] sm:$0xf]
        %v7834 = vld [vmem:[%s9 + $0xb8] sm:$0xf]
        %v7835 = vld [vmem:[%s9 + $0xbc] sm:$0xf]
        %v7836 = vld [vmem:[%s9 + $0xc0] sm:$0xf]
        %v7837 = vld [vmem:[%s9 + $0xc4] sm:$0xf]
        %v7838 = vld [vmem:[%s9 + $0xc8] sm:$0xf]
        %v7839 = vld [vmem:[%s9 + $0xcc] sm:$0xf]
        %v7840 = vld [vmem:[%s9 + $0xd0] sm:$0xf]
        %v7841 = vld [vmem:[%s9 + $0xd4] sm:$0xf]
        %v7842 = vld [vmem:[%s9 + $0xd8] sm:$0xf]
        %v7843 = vld [vmem:[%s9 + $0xdc] sm:$0xf]
        %v7844 = vld [vmem:[%s9 + $0xe0] sm:$0xf]
        %v7845 = vld [vmem:[%s9 + $0xe4] sm:$0xf]
        %v7846 = vld [vmem:[%s9 + $0xe8] sm:$0xf]
        %v7847 = vld [vmem:[%s9 + $0xec] sm:$0xf]
        %v7848 = vld [vmem:[%s9 + $0xf0] sm:$0xf]
        %v7849 = vld [vmem:[%s9 + $0xf4] sm:$0xf]
        %v7850 = vld [vmem:[%s9 + $0xf8] sm:$0xf]
        %v7851 = vld [vmem:[%s9 + $0xfc] sm:$0xf]
        %v7852 = vld [vmem:[%s9 + $0x100] sm:$0xf]
        %v7853 = vld [vmem:[%s9 + $0x104] sm:$0xf]
        %v7854 = vld [vmem:[%s9 + $0x108] sm:$0xf]
        %v7855 = vld [vmem:[%s9 + $0x10c] sm:$0xf]
        %v7856 = vld [vmem:[%s9 + $0x110] sm:$0xf]
        %v7857 = vld [vmem:[%s9 + $0x114] sm:$0xf]
        %v7858 = vld [vmem:[%s9 + $0x118] sm:$0xf]
        %v7859 = vld [vmem:[%s9 + $0x11c] sm:$0xf]
        %v7860 = vld [vmem:[%s9 + $0x120] sm:$0xf]
        %v7861 = vld [vmem:[%s9 + $0x124] sm:$0xf]
        %v7862 = vld [vmem:[%s9 + $0x128] sm:$0xf]
        %v7863 = vld [vmem:[%s9 + $0x12c] sm:$0xf]
        %v7864 = vld [vmem:[%s9 + $0x130] sm:$0xf]
        %v7865 = vld [vmem:[%s9 + $0x134] sm:$0xf]
        %v7866 = vld [vmem:[%s9 + $0x138] sm:$0xf]
        %v7867 = vld [vmem:[%s9 + $0x13c] sm:$0xf]
        %v7868 = vld [vmem:[%s9 + $0x140] sm:$0xf]
        %v7869 = vld [vmem:[%s9 + $0x144] sm:$0xf]
        %v7870 = vld [vmem:[%s9 + $0x148] sm:$0xf]
        %v7871 = vld [vmem:[%s9 + $0x14c] sm:$0xf]
        %v7872 = vld [vmem:[%s9 + $0x150] sm:$0xf]
        %v7873 = vld [vmem:[%s9 + $0x154] sm:$0xf]
        %v7874 = vld [vmem:[%s9 + $0x158] sm:$0xf]
        %v7875 = vld [vmem:[%s9 + $0x15c] sm:$0xf]
        %v7876 = vld [vmem:[%s9 + $0x160] sm:$0xf]
        %v7877 = vld [vmem:[%s9 + $0x164] sm:$0xf]
        %v7878 = vld [vmem:[%s9 + $0x168] sm:$0xf]
        %v7879 = vld [vmem:[%s9 + $0x16c] sm:$0xf]
        %v7880 = vld [vmem:[%s9 + $0x170] sm:$0xf]
        %v7881 = vld [vmem:[%s9 + $0x174] sm:$0xf]
        %v7882 = vld [vmem:[%s9 + $0x178] sm:$0xf]
        %v7883 = vld [vmem:[%s9 + $0x17c] sm:$0xf]
        %v7884 = vld [vmem:[%s9 + $0x180] sm:$0xf]
        %v7885 = vld [vmem:[%s9 + $0x184] sm:$0xf]
        %v7886 = vld [vmem:[%s9 + $0x188] sm:$0xf]
        %v7887 = vld [vmem:[%s9 + $0x18c] sm:$0xf]
        %v7888 = vld [vmem:[%s9 + $0x190] sm:$0xf]
        %v7889 = vld [vmem:[%s9 + $0x194] sm:$0xf]
        %v7890 = vld [vmem:[%s9 + $0x198] sm:$0xf]
        %v7891 = vld [vmem:[%s9 + $0x19c] sm:$0xf]
        %v7892 = vld [vmem:[%s9 + $0x1a0] sm:$0xf]
        %v7893 = vld [vmem:[%s9 + $0x1a4] sm:$0xf]
        %v7894 = vld [vmem:[%s9 + $0x1a8] sm:$0xf]
        %v7895 = vld [vmem:[%s9 + $0x1ac] sm:$0xf]
        %v7896 = vld [vmem:[%s9 + $0x1b0] sm:$0xf]
        %v7897 = vld [vmem:[%s9 + $0x1b4] sm:$0xf]
        %v7898 = vld [vmem:[%s9 + $0x1b8] sm:$0xf]
        %v7899 = vld [vmem:[%s9 + $0x1bc] sm:$0xf]
        %v7900 = vld [vmem:[%s9 + $0x1c0] sm:$0xf]
        %v7901 = vld [vmem:[%s9 + $0x1c4] sm:$0xf]
        %v7902 = vld [vmem:[%s9 + $0x1c8] sm:$0xf]
        %v7903 = vld [vmem:[%s9 + $0x1cc] sm:$0xf]
        %v7904 = vld [vmem:[%s9 + $0x1d0] sm:$0xf]
        %v7905 = vld [vmem:[%s9 + $0x1d4] sm:$0xf]
        %v7906 = vld [vmem:[%s9 + $0x1d8] sm:$0xf]
        %v7907 = vld [vmem:[%s9 + $0x1dc] sm:$0xf]
        %v7908 = vld [vmem:[%s9 + $0x1e0] sm:$0xf]
        %v7909 = vld [vmem:[%s9 + $0x1e4] sm:$0xf]
        %v7910 = vld [vmem:[%s9 + $0x1e8] sm:$0xf]
        %v7911 = vld [vmem:[%s9 + $0x1ec] sm:$0xf]
        %v7912 = vld [vmem:[%s9 + $0x1f0] sm:$0xf]
        %v7913 = vld [vmem:[%s9 + $0x1f4] sm:$0xf]
        %v7914 = vld [vmem:[%s9 + $0x1f8] sm:$0xf]
        %v7915 = vld [vmem:[%s9 + $0x1fc] sm:$0xf]
        %v7916 = vld [vmem:[%s9 + $0x200] sm:$0xf]
        %v7917 = vld [vmem:[%s9 + $0x204] sm:$0xf]
        %v7918 = vld [vmem:[%s9 + $0x208] sm:$0xf]
        %v7919 = vld [vmem:[%s9 + $0x20c] sm:$0xf]
        %v7920 = vld [vmem:[%s9 + $0x210] sm:$0xf]
        %v7921 = vld [vmem:[%s9 + $0x214] sm:$0xf]
        %v7922 = vld [vmem:[%s9 + $0x218] sm:$0xf]
        %v7923 = vld [vmem:[%s9 + $0x21c] sm:$0xf]
        %v7924 = vld [vmem:[%s9 + $0x220] sm:$0xf]
        %v7925 = vld [vmem:[%s9 + $0x224] sm:$0xf]
        %v7926 = vld [vmem:[%s9 + $0x228] sm:$0xf]
        %v7927 = vld [vmem:[%s9 + $0x22c] sm:$0xf]
        %v7928 = vld [vmem:[%s9 + $0x230] sm:$0xf]
        %v7929 = vld [vmem:[%s9 + $0x234] sm:$0xf]
        %v7930 = vld [vmem:[%s9 + $0x238] sm:$0xf]
        %v7931 = vld [vmem:[%s9 + $0x23c] sm:$0xf]
        %v7932 = vld [vmem:[%s10] sm:$0x1]
        %v7934 = vlaneseq
        %v7935 = vshrl.u32 %v7934, 7
        %v7936 = vsub.s32 0, %v7935
        %v7937 = vrot.slane %v7932, %v7936
        %v8083 = vunpack.c.l.b16 %v7788
        %v8084 = vunpack.c.l.b16 %v7789
        %v8085 = vunpack.c.l.b16 %v7790
        %v8086 = vunpack.c.l.b16 %v7791
        %v8087 = vunpack.c.l.b16 %v7792
        %v8088 = vunpack.c.l.b16 %v7793
        %v8089 = vunpack.c.l.b16 %v7794
        %v8090 = vunpack.c.l.b16 %v7795
        %v8091 = vunpack.c.l.b16 %v7796
        %v8092 = vunpack.c.l.b16 %v7797
        %v8093 = vunpack.c.l.b16 %v7798
        %v8094 = vunpack.c.l.b16 %v7799
        %v8095 = vunpack.c.l.b16 %v7800
        %v8096 = vunpack.c.l.b16 %v7801
        %v8097 = vunpack.c.l.b16 %v7802
        %v8098 = vunpack.c.l.b16 %v7803
        %v8099 = vunpack.c.l.b16 %v7804
        %v8100 = vunpack.c.l.b16 %v7805
        %v8101 = vunpack.c.l.b16 %v7806
        %v8102 = vunpack.c.l.b16 %v7807
        %v8103 = vunpack.c.l.b16 %v7808
        %v8104 = vunpack.c.l.b16 %v7809
        %v8105 = vunpack.c.l.b16 %v7810
        %v8106 = vunpack.c.l.b16 %v7811
        %v8107 = vunpack.c.l.b16 %v7812
        %v8108 = vunpack.c.l.b16 %v7813
        %v8109 = vunpack.c.l.b16 %v7814
        %v8110 = vunpack.c.l.b16 %v7815
        %v8111 = vunpack.c.l.b16 %v7816
        %v8112 = vunpack.c.l.b16 %v7817
        %v8113 = vunpack.c.l.b16 %v7818
        %v8114 = vunpack.c.l.b16 %v7819
        %v8115 = vunpack.c.l.b16 %v7820
        %v8116 = vunpack.c.l.b16 %v7821
        %v8117 = vunpack.c.l.b16 %v7822
        %v8118 = vunpack.c.l.b16 %v7823
        %v8119 = vunpack.c.l.b16 %v7824
        %v8120 = vunpack.c.l.b16 %v7825
        %v8121 = vunpack.c.l.b16 %v7826
        %v8122 = vunpack.c.l.b16 %v7827
        %v8123 = vunpack.c.l.b16 %v7828
        %v8124 = vunpack.c.l.b16 %v7829
        %v8125 = vunpack.c.l.b16 %v7830
        %v8126 = vunpack.c.l.b16 %v7831
        %v8127 = vunpack.c.l.b16 %v7832
        %v8128 = vunpack.c.l.b16 %v7833
        %v8129 = vunpack.c.l.b16 %v7834
        %v8130 = vunpack.c.l.b16 %v7835
        %v8131 = vunpack.c.l.b16 %v7836
        %v8132 = vunpack.c.l.b16 %v7837
        %v8133 = vunpack.c.l.b16 %v7838
        %v8134 = vunpack.c.l.b16 %v7839
        %v8135 = vunpack.c.l.b16 %v7840
        %v8136 = vunpack.c.l.b16 %v7841
        %v8137 = vunpack.c.l.b16 %v7842
        %v8138 = vunpack.c.l.b16 %v7843
        %v8139 = vunpack.c.l.b16 %v7844
        %v8140 = vunpack.c.l.b16 %v7845
        %v8141 = vunpack.c.l.b16 %v7846
        %v8142 = vunpack.c.l.b16 %v7847
        %v8143 = vunpack.c.l.b16 %v7848
        %v8144 = vunpack.c.l.b16 %v7849
        %v8145 = vunpack.c.l.b16 %v7850
        %v8146 = vunpack.c.l.b16 %v7851
        %v8147 = vunpack.c.l.b16 %v7852
        %v8148 = vunpack.c.l.b16 %v7853
        %v8149 = vunpack.c.l.b16 %v7854
        %v8150 = vunpack.c.l.b16 %v7855
        %v8151 = vunpack.c.l.b16 %v7856
        %v8152 = vunpack.c.l.b16 %v7857
        %v8153 = vunpack.c.l.b16 %v7858
        %v8154 = vunpack.c.l.b16 %v7859
        %v8155 = vunpack.c.l.b16 %v7860
        %v8156 = vunpack.c.l.b16 %v7861
        %v8157 = vunpack.c.l.b16 %v7862
        %v8158 = vunpack.c.l.b16 %v7863
        %v8159 = vunpack.c.l.b16 %v7864
        %v8160 = vunpack.c.l.b16 %v7865
        %v8161 = vunpack.c.l.b16 %v7866
        %v8162 = vunpack.c.l.b16 %v7867
        %v8163 = vunpack.c.l.b16 %v7868
        %v8164 = vunpack.c.l.b16 %v7869
        %v8165 = vunpack.c.l.b16 %v7870
        %v8166 = vunpack.c.l.b16 %v7871
        %v8167 = vunpack.c.l.b16 %v7872
        %v8168 = vunpack.c.l.b16 %v7873
        %v8169 = vunpack.c.l.b16 %v7874
        %v8170 = vunpack.c.l.b16 %v7875
        %v8171 = vunpack.c.l.b16 %v7876
        %v8172 = vunpack.c.l.b16 %v7877
        %v8173 = vunpack.c.l.b16 %v7878
        %v8174 = vunpack.c.l.b16 %v7879
        %v8175 = vunpack.c.l.b16 %v7880
        %v8176 = vunpack.c.l.b16 %v7881
        %v8177 = vunpack.c.l.b16 %v7882
        %v8178 = vunpack.c.l.b16 %v7883
        %v8179 = vunpack.c.l.b16 %v7884
        %v8180 = vunpack.c.l.b16 %v7885
        %v8181 = vunpack.c.l.b16 %v7886
        %v8182 = vunpack.c.l.b16 %v7887
        %v8183 = vunpack.c.l.b16 %v7888
        %v8184 = vunpack.c.l.b16 %v7889
        %v8185 = vunpack.c.l.b16 %v7890
        %v8186 = vunpack.c.l.b16 %v7891
        %v8187 = vunpack.c.l.b16 %v7892
        %v8188 = vunpack.c.l.b16 %v7893
        %v8189 = vunpack.c.l.b16 %v7894
        %v8190 = vunpack.c.l.b16 %v7895
        %v8191 = vunpack.c.l.b16 %v7896
        %v8192 = vunpack.c.l.b16 %v7897
        %v8193 = vunpack.c.l.b16 %v7898
        %v8194 = vunpack.c.l.b16 %v7899
        %v8195 = vunpack.c.l.b16 %v7900
        %v8196 = vunpack.c.l.b16 %v7901
        %v8197 = vunpack.c.l.b16 %v7902
        %v8198 = vunpack.c.l.b16 %v7903
        %v8199 = vunpack.c.l.b16 %v7904
        %v8200 = vunpack.c.l.b16 %v7905
        %v8201 = vunpack.c.l.b16 %v7906
        %v8202 = vunpack.c.l.b16 %v7907
        %v8203 = vunpack.c.l.b16 %v7908
        %v8204 = vunpack.c.l.b16 %v7909
        %v8205 = vunpack.c.l.b16 %v7910
        %v8206 = vunpack.c.l.b16 %v7911
        %v8207 = vunpack.c.l.b16 %v7912
        %v8208 = vunpack.c.l.b16 %v7913
        %v8209 = vunpack.c.l.b16 %v7914
        %v8210 = vunpack.c.l.b16 %v7915
        %v8211 = vunpack.c.l.b16 %v7916
        %v8212 = vunpack.c.l.b16 %v7917
        %v8213 = vunpack.c.l.b16 %v7918
        %v8214 = vunpack.c.l.b16 %v7919
        %v8215 = vunpack.c.l.b16 %v7920
        %v8216 = vunpack.c.l.b16 %v7921
        %v8217 = vunpack.c.l.b16 %v7922
        %v8218 = vunpack.c.l.b16 %v7923
        %v8219 = vunpack.c.l.b16 %v7924
        %v8220 = vunpack.c.l.b16 %v7925
        %v8221 = vunpack.c.l.b16 %v7926
        %v8222 = vunpack.c.l.b16 %v7927
        %v8223 = vunpack.c.l.b16 %v7928
        %v8224 = vunpack.c.l.b16 %v7929
        %v8225 = vunpack.c.l.b16 %v7930
        %v8226 = vunpack.c.l.b16 %v7931
        %v8227 = vpack.c.b16 %v8084, %v8083
        %v8228 = vpack.c.b16 %v8086, %v8085
        %v8229 = vpack.c.b16 %v8088, %v8087
        %v8230 = vpack.c.b16 %v8090, %v8089
        %v8231 = vpack.c.b16 %v8092, %v8091
        %v8232 = vpack.c.b16 %v8094, %v8093
        %v8233 = vpack.c.b16 %v8096, %v8095
        %v8234 = vpack.c.b16 %v8098, %v8097
        %v8235 = vpack.c.b16 %v8100, %v8099
        %v8236 = vpack.c.b16 %v8102, %v8101
        %v8237 = vpack.c.b16 %v8104, %v8103
        %v8238 = vpack.c.b16 %v8106, %v8105
        %v8239 = vpack.c.b16 %v8108, %v8107
        %v8240 = vpack.c.b16 %v8110, %v8109
        %v8241 = vpack.c.b16 %v8112, %v8111
        %v8242 = vpack.c.b16 %v8114, %v8113
        %v8243 = vpack.c.b16 %v8116, %v8115
        %v8244 = vpack.c.b16 %v8118, %v8117
        %v8245 = vpack.c.b16 %v8120, %v8119
        %v8246 = vpack.c.b16 %v8122, %v8121
        %v8247 = vpack.c.b16 %v8124, %v8123
        %v8248 = vpack.c.b16 %v8126, %v8125
        %v8249 = vpack.c.b16 %v8128, %v8127
        %v8250 = vpack.c.b16 %v8130, %v8129
        %v8251 = vpack.c.b16 %v8132, %v8131
        %v8252 = vpack.c.b16 %v8134, %v8133
        %v8253 = vpack.c.b16 %v8136, %v8135
        %v8254 = vpack.c.b16 %v8138, %v8137
        %v8255 = vpack.c.b16 %v8140, %v8139
        %v8256 = vpack.c.b16 %v8142, %v8141
        %v8257 = vpack.c.b16 %v8144, %v8143
        %v8258 = vpack.c.b16 %v8146, %v8145
        %v8259 = vpack.c.b16 %v8148, %v8147
        %v8260 = vpack.c.b16 %v8150, %v8149
        %v8261 = vpack.c.b16 %v8152, %v8151
        %v8262 = vpack.c.b16 %v8154, %v8153
        %v8263 = vpack.c.b16 %v8156, %v8155
        %v8264 = vpack.c.b16 %v8158, %v8157
        %v8265 = vpack.c.b16 %v8160, %v8159
        %v8266 = vpack.c.b16 %v8162, %v8161
        %v8267 = vpack.c.b16 %v8164, %v8163
        %v8268 = vpack.c.b16 %v8166, %v8165
        %v8269 = vpack.c.b16 %v8168, %v8167
        %v8270 = vpack.c.b16 %v8170, %v8169
        %v8271 = vpack.c.b16 %v8172, %v8171
        %v8272 = vpack.c.b16 %v8174, %v8173
        %v8273 = vpack.c.b16 %v8176, %v8175
        %v8274 = vpack.c.b16 %v8178, %v8177
        %v8275 = vpack.c.b16 %v8180, %v8179
        %v8276 = vpack.c.b16 %v8182, %v8181
        %v8277 = vpack.c.b16 %v8184, %v8183
        %v8278 = vpack.c.b16 %v8186, %v8185
        %v8279 = vpack.c.b16 %v8188, %v8187
        %v8280 = vpack.c.b16 %v8190, %v8189
        %v8281 = vpack.c.b16 %v8192, %v8191
        %v8282 = vpack.c.b16 %v8194, %v8193
        %v8283 = vpack.c.b16 %v8196, %v8195
        %v8284 = vpack.c.b16 %v8198, %v8197
        %v8285 = vpack.c.b16 %v8200, %v8199
        %v8286 = vpack.c.b16 %v8202, %v8201
        %v8287 = vpack.c.b16 %v8204, %v8203
        %v8288 = vpack.c.b16 %v8206, %v8205
        %v8289 = vpack.c.b16 %v8208, %v8207
        %v8290 = vpack.c.b16 %v8210, %v8209
        %v8291 = vpack.c.b16 %v8212, %v8211
        %v8292 = vpack.c.b16 %v8214, %v8213
        %v8293 = vpack.c.b16 %v8216, %v8215
        %v8294 = vpack.c.b16 %v8218, %v8217
        %v8295 = vpack.c.b16 %v8220, %v8219
        %v8296 = vpack.c.b16 %v8222, %v8221
        %v8297 = vpack.c.b16 %v8224, %v8223
        %v8298 = vpack.c.b16 %v8226, %v8225
        %8371 = vmatprep.subr.bf16.mxu0 0
        %8372 = vmatpush1.bf16.msra.mxu0 %v8227
        %8373 = vmatprep.subr.bf16.mxu0 0
        %8374 = vmatpush1.bf16.msra.mxu0 %v8228
        %8375 = vmatprep.subr.bf16.mxu0 0
        %8376 = vmatpush1.bf16.msra.mxu0 %v8229
        %8377 = vmatprep.subr.bf16.mxu0 0
        %8378 = vmatpush1.bf16.msra.mxu0 %v8230
        %8379 = vmatprep.subr.bf16.mxu0 0
        %8380 = vmatpush1.bf16.msra.mxu0 %v8231
        %8381 = vmatprep.subr.bf16.mxu0 0
        %8382 = vmatpush1.bf16.msra.mxu0 %v8232
        %8383 = vmatprep.subr.bf16.mxu0 0
        %8384 = vmatpush1.bf16.msra.mxu0 %v8233
        %8385 = vmatprep.subr.bf16.mxu0 0
        %8386 = vmatpush1.bf16.msra.mxu0 %v8234
        %8387 = vmatprep.subr.bf16.mxu0 0
        %8388 = vmatpush1.bf16.msra.mxu0 %v8235
        %8389 = vmatprep.subr.bf16.mxu0 0
        %8390 = vmatpush1.bf16.msra.mxu0 %v8236
        %8391 = vmatprep.subr.bf16.mxu0 0
        %8392 = vmatpush1.bf16.msra.mxu0 %v8237
        %8393 = vmatprep.subr.bf16.mxu0 0
        %8394 = vmatpush1.bf16.msra.mxu0 %v8238
        %8395 = vmatprep.subr.bf16.mxu0 0
        %8396 = vmatpush1.bf16.msra.mxu0 %v8239
        %8397 = vmatprep.subr.bf16.mxu0 0
        %8398 = vmatpush1.bf16.msra.mxu0 %v8240
        %8399 = vmatprep.subr.bf16.mxu0 0
        %8400 = vmatpush1.bf16.msra.mxu0 %v8241
        %8401 = vmatprep.subr.bf16.mxu0 0
        %8402 = vmatpush1.bf16.msra.mxu0 %v8242
        %8403 = vmatprep.mubr.bf16.mxu0 %v7717
        %8404 = vmatmul.mubr.bf16.gmra.mrb[0].mxu0 %v7716
        %v8405 = vpop.f32.mrb[0].mxu0
        %v8406 = vadd.f32 %v7937, %v8405
        %v8407 = vpop.f32.mrb[0].mxu0
        %v8408 = vpop.f32.mrb[0].mxu0
        %v8409 = vadd.f32 %v7937, %v8408
        %v8410 = vpop.f32.mrb[0].mxu0
        %8411 = vmatprep.mubr.bf16.mxu0 %v7726
        %8412 = vmatmul.mubr.bf16.gmra.mrb[0].mxu0 %v7725
        %v8413 = vpop.f32.mrb[0].mxu0
        %v8414 = vadd.f32 %v7937, %v8413
        %v8415 = vpop.f32.mrb[0].mxu0
        %v8416 = vpop.f32.mrb[0].mxu0
        %v8417 = vadd.f32 %v7937, %v8416
        %v8418 = vpop.f32.mrb[0].mxu0
        %8419 = vmatprep.mubr.bf16.mxu0 %v7735
        %8420 = vmatmul.mubr.bf16.gmra.mrb[0].mxu0 %v7734
        %v8421 = vpop.f32.mrb[0].mxu0
        %v8422 = vadd.f32 %v7937, %v8421
        %v8423 = vpop.f32.mrb[0].mxu0
        %v8424 = vpop.f32.mrb[0].mxu0
        %v8425 = vadd.f32 %v7937, %v8424
        %v8426 = vpop.f32.mrb[0].mxu0
        %8427 = vmatprep.mubr.bf16.mxu0 %v7744
        %8428 = vmatmul.mubr.bf16.gmra.mrb[0].mxu0 %v7743
        %v8429 = vpop.f32.mrb[0].mxu0
        %v8430 = vadd.f32 %v7937, %v8429
        %v8431 = vpop.f32.mrb[0].mxu0
        %v8432 = vpop.f32.mrb[0].mxu0
        %v8433 = vadd.f32 %v7937, %v8432
        %v8434 = vpop.f32.mrb[0].mxu0
        %8435 = vmatprep.mubr.bf16.mxu0 %v7753
        %8436 = vmatmul.mubr.bf16.gmra.mrb[0].mxu0 %v7752
        %v8437 = vpop.f32.mrb[0].mxu0
        %v8438 = vadd.f32 %v7937, %v8437
        %v8439 = vpop.f32.mrb[0].mxu0
        %v8440 = vpop.f32.mrb[0].mxu0
        %v8441 = vadd.f32 %v7937, %v8440
        %v8442 = vpop.f32.mrb[0].mxu0
        %8443 = vmatprep.mubr.bf16.mxu0 %v7762
        %8444 = vmatmul.mubr.bf16.gmra.mrb[0].mxu0 %v7761
        %v8445 = vpop.f32.mrb[0].mxu0
        %v8446 = vadd.f32 %v7937, %v8445
        %v8447 = vpop.f32.mrb[0].mxu0
        %v8448 = vpop.f32.mrb[0].mxu0
        %v8449 = vadd.f32 %v7937, %v8448
        %v8450 = vpop.f32.mrb[0].mxu0
        %8451 = vmatprep.mubr.bf16.mxu0 %v7771
        %8452 = vmatmul.mubr.bf16.gmra.mrb[0].mxu0 %v7770
        %v8453 = vpop.f32.mrb[0].mxu0
        %v8454 = vadd.f32 %v7937, %v8453
        %v8455 = vpop.f32.mrb[0].mxu0
        %v8456 = vpop.f32.mrb[0].mxu0
        %v8457 = vadd.f32 %v7937, %v8456
        %v8458 = vpop.f32.mrb[0].mxu0
        %8459 = vmatprep.mubr.bf16.mxu0 %v7780
        %8460 = vmatmul.mubr.bf16.gmra.mrb[0].mxu0 %v7779
        %v8461 = vpop.f32.mrb[0].mxu0
        %v8462 = vadd.f32 %v7937, %v8461
        %v8463 = vpop.f32.mrb[0].mxu0
        %v8464 = vpop.f32.mrb[0].mxu0
        %v8465 = vadd.f32 %v7937, %v8464
        %v8466 = vpop.f32.mrb[0].mxu0
        %8467 = vdwg.mxu0
        %8468 = vmatprep.subr.bf16.mxu0 0
        %8469 = vmatpush1.bf16.msra.mxu0 %v8243
        %8470 = vmatprep.subr.bf16.mxu0 0
        %8471 = vmatpush1.bf16.msra.mxu0 %v8244
        %8472 = vmatprep.subr.bf16.mxu0 0
        %8473 = vmatpush1.bf16.msra.mxu0 %v8245
        %8474 = vmatprep.subr.bf16.mxu0 0
        %8475 = vmatpush1.bf16.msra.mxu0 %v8246
        %8476 = vmatprep.subr.bf16.mxu0 0
        %8477 = vmatpush1.bf16.msra.mxu0 %v8247
        %8478 = vmatprep.subr.bf16.mxu0 0
        %8479 = vmatpush1.bf16.msra.mxu0 %v8248
        %8480 = vmatprep.subr.bf16.mxu0 0
        %8481 = vmatpush1.bf16.msra.mxu0 %v8249
        %8482 = vmatprep.subr.bf16.mxu0 0
        %8483 = vmatpush1.bf16.msra.mxu0 %v8250
        %8484 = vmatprep.subr.bf16.mxu0 0
        %8485 = vmatpush1.bf16.msra.mxu0 %v8251
        %8486 = vmatprep.subr.bf16.mxu0 0
        %8487 = vmatpush1.bf16.msra.mxu0 %v8252
        %8488 = vmatprep.subr.bf16.mxu0 0
        %8489 = vmatpush1.bf16.msra.mxu0 %v8253
        %8490 = vmatprep.subr.bf16.mxu0 0
        %8491 = vmatpush1.bf16.msra.mxu0 %v8254
        %8492 = vmatprep.subr.bf16.mxu0 0
        %8493 = vmatpush1.bf16.msra.mxu0 %v8255
        %8494 = vmatprep.subr.bf16.mxu0 0
        %8495 = vmatpush1.bf16.msra.mxu0 %v8256
        %8496 = vmatprep.subr.bf16.mxu0 0
        %8497 = vmatpush1.bf16.msra.mxu0 %v8257
        %8498 = vmatprep.subr.bf16.mxu0 0
        %8499 = vmatpush1.bf16.msra.mxu0 %v8258
        %8500 = vmatprep.mubr.bf16.mxu0 %v7719
        %8501 = vmatmul.mubr.bf16.gmra.mrb[0].mxu0 %v7718
        %v8502 = vpop.f32.mrb[0].mxu0
        %v8503 = vadd.f32 %v8406, %v8502
        %v8504 = vpop.f32.mrb[0].mxu0
        %v8505 = vpop.f32.mrb[0].mxu0
        %v8506 = vadd.f32 %v8409, %v8505
        %v8507 = vpop.f32.mrb[0].mxu0
        %8508 = vmatprep.mubr.bf16.mxu0 %v7728
        %8509 = vmatmul.mubr.bf16.gmra.mrb[0].mxu0 %v7727
        %v8510 = vpop.f32.mrb[0].mxu0
        %v8511 = vadd.f32 %v8414, %v8510
        %v8512 = vpop.f32.mrb[0].mxu0
        %v8513 = vpop.f32.mrb[0].mxu0
        %v8514 = vadd.f32 %v8417, %v8513
        %v8515 = vpop.f32.mrb[0].mxu0
        %8516 = vmatprep.mubr.bf16.mxu0 %v7737
        %8517 = vmatmul.mubr.bf16.gmra.mrb[0].mxu0 %v7736
        %v8518 = vpop.f32.mrb[0].mxu0
        %v8519 = vadd.f32 %v8422, %v8518
        %v8520 = vpop.f32.mrb[0].mxu0
        %v8521 = vpop.f32.mrb[0].mxu0
        %v8522 = vadd.f32 %v8425, %v8521
        %v8523 = vpop.f32.mrb[0].mxu0
        %8524 = vmatprep.mubr.bf16.mxu0 %v7746
        %8525 = vmatmul.mubr.bf16.gmra.mrb[0].mxu0 %v7745
        %v8526 = vpop.f32.mrb[0].mxu0
        %v8527 = vadd.f32 %v8430, %v8526
        %v8528 = vpop.f32.mrb[0].mxu0
        %v8529 = vpop.f32.mrb[0].mxu0
        %v8530 = vadd.f32 %v8433, %v8529
        %v8531 = vpop.f32.mrb[0].mxu0
        %8532 = vmatprep.mubr.bf16.mxu0 %v7755
        %8533 = vmatmul.mubr.bf16.gmra.mrb[0].mxu0 %v7754
        %v8534 = vpop.f32.mrb[0].mxu0
        %v8535 = vadd.f32 %v8438, %v8534
        %v8536 = vpop.f32.mrb[0].mxu0
        %v8537 = vpop.f32.mrb[0].mxu0
        %v8538 = vadd.f32 %v8441, %v8537
        %v8539 = vpop.f32.mrb[0].mxu0
        %8540 = vmatprep.mubr.bf16.mxu0 %v7764
        %8541 = vmatmul.mubr.bf16.gmra.mrb[0].mxu0 %v7763
        %v8542 = vpop.f32.mrb[0].mxu0
        %v8543 = vadd.f32 %v8446, %v8542
        %v8544 = vpop.f32.mrb[0].mxu0
        %v8545 = vpop.f32.mrb[0].mxu0
        %v8546 = vadd.f32 %v8449, %v8545
        %v8547 = vpop.f32.mrb[0].mxu0
        %8548 = vmatprep.mubr.bf16.mxu0 %v7773
        %8549 = vmatmul.mubr.bf16.gmra.mrb[0].mxu0 %v7772
        %v8550 = vpop.f32.mrb[0].mxu0
        %v8551 = vadd.f32 %v8454, %v8550
        %v8552 = vpop.f32.mrb[0].mxu0
        %v8553 = vpop.f32.mrb[0].mxu0
        %v8554 = vadd.f32 %v8457, %v8553
        %v8555 = vpop.f32.mrb[0].mxu0
        %8556 = vmatprep.mubr.bf16.mxu0 %v7782
        %8557 = vmatmul.mubr.bf16.gmra.mrb[0].mxu0 %v7781
        %v8558 = vpop.f32.mrb[0].mxu0
        %v8559 = vadd.f32 %v8462, %v8558
        %v8560 = vpop.f32.mrb[0].mxu0
        %v8561 = vpop.f32.mrb[0].mxu0
        %v8562 = vadd.f32 %v8465, %v8561
        %v8563 = vpop.f32.mrb[0].mxu0
        %8564 = vdwg.mxu0
        %8565 = vmatprep.subr.bf16.mxu0 0
        %8566 = vmatpush1.bf16.msra.mxu0 %v8259
        %8567 = vmatprep.subr.bf16.mxu0 0
        %8568 = vmatpush1.bf16.msra.mxu0 %v8260
        %8569 = vmatprep.subr.bf16.mxu0 0
        %8570 = vmatpush1.bf16.msra.mxu0 %v8261
        %8571 = vmatprep.subr.bf16.mxu0 0
        %8572 = vmatpush1.bf16.msra.mxu0 %v8262
        %8573 = vmatprep.subr.bf16.mxu0 0
        %8574 = vmatpush1.bf16.msra.mxu0 %v8263
        %8575 = vmatprep.subr.bf16.mxu0 0
        %8576 = vmatpush1.bf16.msra.mxu0 %v8264
        %8577 = vmatprep.subr.bf16.mxu0 0
        %8578 = vmatpush1.bf16.msra.mxu0 %v8265
        %8579 = vmatprep.subr.bf16.mxu0 0
        %8580 = vmatpush1.bf16.msra.mxu0 %v8266
        %8581 = vmatprep.subr.bf16.mxu0 0
        %8582 = vmatpush1.bf16.msra.mxu0 %v8267
        %8583 = vmatprep.subr.bf16.mxu0 0
        %8584 = vmatpush1.bf16.msra.mxu0 %v8268
        %8585 = vmatprep.subr.bf16.mxu0 0
        %8586 = vmatpush1.bf16.msra.mxu0 %v8269
        %8587 = vmatprep.subr.bf16.mxu0 0
        %8588 = vmatpush1.bf16.msra.mxu0 %v8270
        %8589 = vmatprep.subr.bf16.mxu0 0
        %8590 = vmatpush1.bf16.msra.mxu0 %v8271
        %8591 = vmatprep.subr.bf16.mxu0 0
        %8592 = vmatpush1.bf16.msra.mxu0 %v8272
        %8593 = vmatprep.subr.bf16.mxu0 0
        %8594 = vmatpush1.bf16.msra.mxu0 %v8273
        %8595 = vmatprep.subr.bf16.mxu0 0
        %8596 = vmatpush1.bf16.msra.mxu0 %v8274
        %8597 = vmatprep.mubr.bf16.mxu0 %v7721
        %8598 = vmatmul.mubr.bf16.gmra.mrb[0].mxu0 %v7720
        %v8599 = vpop.f32.mrb[0].mxu0
        %v8600 = vadd.f32 %v8503, %v8599
        %v8601 = vpop.f32.mrb[0].mxu0
        %v8602 = vpop.f32.mrb[0].mxu0
        %v8603 = vadd.f32 %v8506, %v8602
        %v8604 = vpop.f32.mrb[0].mxu0
        %8605 = vmatprep.mubr.bf16.mxu0 %v7730
        %8606 = vmatmul.mubr.bf16.gmra.mrb[0].mxu0 %v7729
        %v8607 = vpop.f32.mrb[0].mxu0
        %v8608 = vadd.f32 %v8511, %v8607
        %v8609 = vpop.f32.mrb[0].mxu0
        %v8610 = vpop.f32.mrb[0].mxu0
        %v8611 = vadd.f32 %v8514, %v8610
        %v8612 = vpop.f32.mrb[0].mxu0
        %8613 = vmatprep.mubr.bf16.mxu0 %v7739
        %8614 = vmatmul.mubr.bf16.gmra.mrb[0].mxu0 %v7738
        %v8615 = vpop.f32.mrb[0].mxu0
        %v8616 = vadd.f32 %v8519, %v8615
        %v8617 = vpop.f32.mrb[0].mxu0
        %v8618 = vpop.f32.mrb[0].mxu0
        %v8619 = vadd.f32 %v8522, %v8618
        %v8620 = vpop.f32.mrb[0].mxu0
        %8621 = vmatprep.mubr.bf16.mxu0 %v7748
        %8622 = vmatmul.mubr.bf16.gmra.mrb[0].mxu0 %v7747
        %v8623 = vpop.f32.mrb[0].mxu0
        %v8624 = vadd.f32 %v8527, %v8623
        %v8625 = vpop.f32.mrb[0].mxu0
        %v8626 = vpop.f32.mrb[0].mxu0
        %v8627 = vadd.f32 %v8530, %v8626
        %v8628 = vpop.f32.mrb[0].mxu0
        %8629 = vmatprep.mubr.bf16.mxu0 %v7757
        %8630 = vmatmul.mubr.bf16.gmra.mrb[0].mxu0 %v7756
        %v8631 = vpop.f32.mrb[0].mxu0
        %v8632 = vadd.f32 %v8535, %v8631
        %v8633 = vpop.f32.mrb[0].mxu0
        %v8634 = vpop.f32.mrb[0].mxu0
        %v8635 = vadd.f32 %v8538, %v8634
        %v8636 = vpop.f32.mrb[0].mxu0
        %8637 = vmatprep.mubr.bf16.mxu0 %v7766
        %8638 = vmatmul.mubr.bf16.gmra.mrb[0].mxu0 %v7765
        %v8639 = vpop.f32.mrb[0].mxu0
        %v8640 = vadd.f32 %v8543, %v8639
        %v8641 = vpop.f32.mrb[0].mxu0
        %v8642 = vpop.f32.mrb[0].mxu0
        %v8643 = vadd.f32 %v8546, %v8642
        %v8644 = vpop.f32.mrb[0].mxu0
        %8645 = vmatprep.mubr.bf16.mxu0 %v7775
        %8646 = vmatmul.mubr.bf16.gmra.mrb[0].mxu0 %v7774
        %v8647 = vpop.f32.mrb[0].mxu0
        %v8648 = vadd.f32 %v8551, %v8647
        %v8649 = vpop.f32.mrb[0].mxu0
        %v8650 = vpop.f32.mrb[0].mxu0
        %v8651 = vadd.f32 %v8554, %v8650
        %v8652 = vpop.f32.mrb[0].mxu0
        %8653 = vmatprep.mubr.bf16.mxu0 %v7784
        %8654 = vmatmul.mubr.bf16.gmra.mrb[0].mxu0 %v7783
        %v8655 = vpop.f32.mrb[0].mxu0
        %v8656 = vadd.f32 %v8559, %v8655
        %v8657 = vpop.f32.mrb[0].mxu0
        %v8658 = vpop.f32.mrb[0].mxu0
        %v8659 = vadd.f32 %v8562, %v8658
        %v8660 = vpop.f32.mrb[0].mxu0
        %8661 = vdwg.mxu0
        %8662 = vmatprep.subr.bf16.mxu0 0
        %8663 = vmatpush1.bf16.msra.mxu0 %v8275
        %8664 = vmatprep.subr.bf16.mxu0 0
        %8665 = vmatpush1.bf16.msra.mxu0 %v8276
        %8666 = vmatprep.subr.bf16.mxu0 0
        %8667 = vmatpush1.bf16.msra.mxu0 %v8277
        %8668 = vmatprep.subr.bf16.mxu0 0
        %8669 = vmatpush1.bf16.msra.mxu0 %v8278
        %8670 = vmatprep.subr.bf16.mxu0 0
        %8671 = vmatpush1.bf16.msra.mxu0 %v8279
        %8672 = vmatprep.subr.bf16.mxu0 0
        %8673 = vmatpush1.bf16.msra.mxu0 %v8280
        %8674 = vmatprep.subr.bf16.mxu0 0
        %8675 = vmatpush1.bf16.msra.mxu0 %v8281
        %8676 = vmatprep.subr.bf16.mxu0 0
        %8677 = vmatpush1.bf16.msra.mxu0 %v8282
        %8678 = vmatprep.subr.bf16.mxu0 0
        %8679 = vmatpush1.bf16.msra.mxu0 %v8283
        %8680 = vmatprep.subr.bf16.mxu0 0
        %8681 = vmatpush1.bf16.msra.mxu0 %v8284
        %8682 = vmatprep.subr.bf16.mxu0 0
        %8683 = vmatpush1.bf16.msra.mxu0 %v8285
        %8684 = vmatprep.subr.bf16.mxu0 0
        %8685 = vmatpush1.bf16.msra.mxu0 %v8286
        %8686 = vmatprep.subr.bf16.mxu0 0
        %8687 = vmatpush1.bf16.msra.mxu0 %v8287
        %8688 = vmatprep.subr.bf16.mxu0 0
        %8689 = vmatpush1.bf16.msra.mxu0 %v8288
        %8690 = vmatprep.subr.bf16.mxu0 0
        %8691 = vmatpush1.bf16.msra.mxu0 %v8289
        %8692 = vmatprep.subr.bf16.mxu0 0
        %8693 = vmatpush1.bf16.msra.mxu0 %v8290
        %8694 = vmatprep.mubr.bf16.mxu0 %v7723
        %8695 = vmatmul.mubr.bf16.gmra.mrb[0].mxu0 %v7722
        %v8696 = vpop.f32.mrb[0].mxu0
        %v8697 = vadd.f32 %v8600, %v8696
        %v8698 = vpop.f32.mrb[0].mxu0
        %v8699 = vpop.f32.mrb[0].mxu0
        %v8700 = vadd.f32 %v8603, %v8699
        %v8701 = vpop.f32.mrb[0].mxu0
        %8702 = vmatprep.mubr.bf16.mxu0 %v7732
        %8703 = vmatmul.mubr.bf16.gmra.mrb[0].mxu0 %v7731
        %v8704 = vpop.f32.mrb[0].mxu0
        %v8705 = vadd.f32 %v8608, %v8704
        %v8706 = vpop.f32.mrb[0].mxu0
        %v8707 = vpop.f32.mrb[0].mxu0
        %v8708 = vadd.f32 %v8611, %v8707
        %v8709 = vpop.f32.mrb[0].mxu0
        %8710 = vmatprep.mubr.bf16.mxu0 %v7741
        %8711 = vmatmul.mubr.bf16.gmra.mrb[0].mxu0 %v7740
        %v8712 = vpop.f32.mrb[0].mxu0
        %v8713 = vadd.f32 %v8616, %v8712
        %v8714 = vpop.f32.mrb[0].mxu0
        %v8715 = vpop.f32.mrb[0].mxu0
        %v8716 = vadd.f32 %v8619, %v8715
        %v8717 = vpop.f32.mrb[0].mxu0
        %8718 = vmatprep.mubr.bf16.mxu0 %v7750
        %8719 = vmatmul.mubr.bf16.gmra.mrb[0].mxu0 %v7749
        %v8720 = vpop.f32.mrb[0].mxu0
        %v8721 = vadd.f32 %v8624, %v8720
        %v8722 = vpop.f32.mrb[0].mxu0
        %v8723 = vpop.f32.mrb[0].mxu0
        %v8724 = vadd.f32 %v8627, %v8723
        %v8725 = vpop.f32.mrb[0].mxu0
        %8726 = vmatprep.mubr.bf16.mxu0 %v7759
        %8727 = vmatmul.mubr.bf16.gmra.mrb[0].mxu0 %v7758
        %v8728 = vpop.f32.mrb[0].mxu0
        %v8729 = vadd.f32 %v8632, %v8728
        %v8730 = vpop.f32.mrb[0].mxu0
        %v8731 = vpop.f32.mrb[0].mxu0
        %v8732 = vadd.f32 %v8635, %v8731
        %v8733 = vpop.f32.mrb[0].mxu0
        %8734 = vmatprep.mubr.bf16.mxu0 %v7768
        %8735 = vmatmul.mubr.bf16.gmra.mrb[0].mxu0 %v7767
        %v8736 = vpop.f32.mrb[0].mxu0
        %v8737 = vadd.f32 %v8640, %v8736
        %v8738 = vpop.f32.mrb[0].mxu0
        %v8739 = vpop.f32.mrb[0].mxu0
        %v8740 = vadd.f32 %v8643, %v8739
        %v8741 = vpop.f32.mrb[0].mxu0
        %8742 = vmatprep.mubr.bf16.mxu0 %v7777
        %8743 = vmatmul.mubr.bf16.gmra.mrb[0].mxu0 %v7776
        %v8744 = vpop.f32.mrb[0].mxu0
        %v8745 = vadd.f32 %v8648, %v8744
        %v8746 = vpop.f32.mrb[0].mxu0
        %v8747 = vpop.f32.mrb[0].mxu0
        %v8748 = vadd.f32 %v8651, %v8747
        %v8749 = vpop.f32.mrb[0].mxu0
        %8750 = vmatprep.mubr.bf16.mxu0 %v7786
        %8751 = vmatmul.mubr.bf16.gmra.mrb[0].mxu0 %v7785
        %v8752 = vpop.f32.mrb[0].mxu0
        %v8753 = vadd.f32 %v8656, %v8752
        %v8754 = vpop.f32.mrb[0].mxu0
        %v8755 = vpop.f32.mrb[0].mxu0
        %v8756 = vadd.f32 %v8659, %v8755
        %v8757 = vpop.f32.mrb[0].mxu0
        %8758 = vdwg.mxu0
        %8759 = vmatprep.subr.bf16.mxu0 0
        %8760 = vmatpush1.bf16.msra.mxu0 %v8291
        %8761 = vmatprep.subr.bf16.mxu0 0
        %8762 = vmatpush1.bf16.msra.mxu0 %v8292
        %8763 = vmatprep.subr.bf16.mxu0 0
        %8764 = vmatpush1.bf16.msra.mxu0 %v8293
        %8765 = vmatprep.subr.bf16.mxu0 0
        %8766 = vmatpush1.bf16.msra.mxu0 %v8294
        %8767 = vmatprep.subr.bf16.mxu0 0
        %8768 = vmatpush1.bf16.msra.mxu0 %v8295
        %8769 = vmatprep.subr.bf16.mxu0 0
        %8770 = vmatpush1.bf16.msra.mxu0 %v8296
        %8771 = vmatprep.subr.bf16.mxu0 0
        %8772 = vmatpush1.bf16.msra.mxu0 %v8297
        %8773 = vmatprep.subr.bf16.mxu0 0
        %8774 = vmatpush1.bf16.msra.mxu0 %v8298
        %8775 = vmatprep.subr.bf16.mxu0 0
        %8776 = vmatpush1.bf16.msra.mxu0 0
        %8777 = vmatprep.subr.bf16.mxu0 0
        %8778 = vmatpush1.bf16.msra.mxu0 0
        %8779 = vmatprep.subr.bf16.mxu0 0
        %8780 = vmatpush1.bf16.msra.mxu0 0
        %8781 = vmatprep.subr.bf16.mxu0 0
        %8782 = vmatpush1.bf16.msra.mxu0 0
        %8783 = vmatprep.subr.bf16.mxu0 0
        %8784 = vmatpush1.bf16.msra.mxu0 0
        %8785 = vmatprep.subr.bf16.mxu0 0
        %8786 = vmatpush1.bf16.msra.mxu0 0
        %8787 = vmatprep.subr.bf16.mxu0 0
        %8788 = vmatpush1.bf16.msra.mxu0 0
        %8789 = vmatprep.subr.bf16.mxu0 0
        %8790 = vmatpush1.bf16.msra.mxu0 0
        %8791 = vmatprep.mubr.bf16.mxu0 0
        %8792 = vmatmul.mubr.bf16.gmra.mrb[0].mxu0 %v7724
        %v8793 = vpop.f32.mrb[0].mxu0
        %v8794 = vadd.f32 %v8697, %v8793
        %v8795 = vpop.f32.mrb[0].mxu0
        %v8796 = vpop.f32.mrb[0].mxu0
        %v8797 = vadd.f32 %v8700, %v8796
        %v8798 = vpop.f32.mrb[0].mxu0
        %8799 = vmatprep.mubr.bf16.mxu0 0
        %8800 = vmatmul.mubr.bf16.gmra.mrb[0].mxu0 %v7733
        %v8801 = vpop.f32.mrb[0].mxu0
        %v8802 = vadd.f32 %v8705, %v8801
        %v8803 = vpop.f32.mrb[0].mxu0
        %v8804 = vpop.f32.mrb[0].mxu0
        %v8805 = vadd.f32 %v8708, %v8804
        %v8806 = vpop.f32.mrb[0].mxu0
        %8807 = vmatprep.mubr.bf16.mxu0 0
        %8808 = vmatmul.mubr.bf16.gmra.mrb[0].mxu0 %v7742
        %v8809 = vpop.f32.mrb[0].mxu0
        %v8810 = vadd.f32 %v8713, %v8809
        %v8811 = vpop.f32.mrb[0].mxu0
        %v8812 = vpop.f32.mrb[0].mxu0
        %v8813 = vadd.f32 %v8716, %v8812
        %v8814 = vpop.f32.mrb[0].mxu0
        %8815 = vmatprep.mubr.bf16.mxu0 0
        %8816 = vmatmul.mubr.bf16.gmra.mrb[0].mxu0 %v7751
        %v8817 = vpop.f32.mrb[0].mxu0
        %v8818 = vadd.f32 %v8721, %v8817
        %v8819 = vpop.f32.mrb[0].mxu0
        %v8820 = vpop.f32.mrb[0].mxu0
        %v8821 = vadd.f32 %v8724, %v8820
        %v8822 = vpop.f32.mrb[0].mxu0
        %8823 = vmatprep.mubr.bf16.mxu0 0
        %8824 = vmatmul.mubr.bf16.gmra.mrb[0].mxu0 %v7760
        %v8825 = vpop.f32.mrb[0].mxu0
        %v8826 = vadd.f32 %v8729, %v8825
        %v8827 = vpop.f32.mrb[0].mxu0
        %v8828 = vpop.f32.mrb[0].mxu0
        %v8829 = vadd.f32 %v8732, %v8828
        %v8830 = vpop.f32.mrb[0].mxu0
        %8831 = vmatprep.mubr.bf16.mxu0 0
        %8832 = vmatmul.mubr.bf16.gmra.mrb[0].mxu0 %v7769
        %v8833 = vpop.f32.mrb[0].mxu0
        %v8834 = vadd.f32 %v8737, %v8833
        %v8835 = vpop.f32.mrb[0].mxu0
        %v8836 = vpop.f32.mrb[0].mxu0
        %v8837 = vadd.f32 %v8740, %v8836
        %v8838 = vpop.f32.mrb[0].mxu0
        %8839 = vmatprep.mubr.bf16.mxu0 0
        %8840 = vmatmul.mubr.bf16.gmra.mrb[0].mxu0 %v7778
        %v8841 = vpop.f32.mrb[0].mxu0
        %v8842 = vadd.f32 %v8745, %v8841
        %v8843 = vpop.f32.mrb[0].mxu0
        %v8844 = vpop.f32.mrb[0].mxu0
        %v8845 = vadd.f32 %v8748, %v8844
        %v8846 = vpop.f32.mrb[0].mxu0
        %8847 = vmatprep.mubr.bf16.mxu0 0
        %8848 = vmatmul.mubr.bf16.gmra.mrb[0].mxu0 %v7787
        %v8849 = vpop.f32.mrb[0].mxu0
        %v8850 = vadd.f32 %v8753, %v8849
        %v8851 = vpop.f32.mrb[0].mxu0
        %v8852 = vpop.f32.mrb[0].mxu0
        %v8853 = vadd.f32 %v8756, %v8852
        %v8854 = vpop.f32.mrb[0].mxu0
        %8855 = vdwg.mxu0
        %v8856 = vmax.f32 %v8794, 0.0
        %v8857 = vmax.f32 %v8797, 0.0
        %v8858 = vmax.f32 %v8802, 0.0
        %v8859 = vmax.f32 %v8805, 0.0
        %v8860 = vmax.f32 %v8810, 0.0
        %v8861 = vmax.f32 %v8813, 0.0
        %v8862 = vmax.f32 %v8818, 0.0
        %v8863 = vmax.f32 %v8821, 0.0
        %v8864 = vmax.f32 %v8826, 0.0
        %v8865 = vmax.f32 %v8829, 0.0
        %v8866 = vmax.f32 %v8834, 0.0
        %v8867 = vmax.f32 %v8837, 0.0
        %v8868 = vmax.f32 %v8842, 0.0
        %v8869 = vmax.f32 %v8845, 0.0
        %v8870 = vmax.f32 %v8850, 0.0
        %v8871 = vmax.f32 %v8853, 0.0
        %8888 = vrot.lane.b32.xlu0 %v8856, 64
        %v8889 = vpop.permute.xlu0 %8888
        %8890 = vrot.lane.b32.xlu0 %v8857, 64
        %v8891 = vpop.permute.xlu0 %8890
        %8892 = vrot.lane.b32.xlu0 %v8858, 64
        %v8893 = vpop.permute.xlu0 %8892
        %8894 = vrot.lane.b32.xlu0 %v8859, 64
        %v8895 = vpop.permute.xlu0 %8894
        %8896 = vrot.lane.b32.xlu0 %v8860, 64
        %v8897 = vpop.permute.xlu0 %8896
        %8898 = vrot.lane.b32.xlu0 %v8861, 64
        %v8899 = vpop.permute.xlu0 %8898
        %8900 = vrot.lane.b32.xlu0 %v8862, 64
        %v8901 = vpop.permute.xlu0 %8900
        %8902 = vrot.lane.b32.xlu0 %v8863, 64
        %v8903 = vpop.permute.xlu0 %8902
        %8904 = vrot.lane.b32.xlu0 %v8864, 64
        %v8905 = vpop.permute.xlu0 %8904
        %8906 = vrot.lane.b32.xlu0 %v8865, 64
        %v8907 = vpop.permute.xlu0 %8906
        %8908 = vrot.lane.b32.xlu0 %v8866, 64
        %v8909 = vpop.permute.xlu0 %8908
        %8910 = vrot.lane.b32.xlu0 %v8867, 64
        %v8911 = vpop.permute.xlu0 %8910
        %8912 = vrot.lane.b32.xlu0 %v8868, 64
        %v8913 = vpop.permute.xlu0 %8912
        %8914 = vrot.lane.b32.xlu0 %v8869, 64
        %v8915 = vpop.permute.xlu0 %8914
        %8916 = vrot.lane.b32.xlu0 %v8870, 64
        %v8917 = vpop.permute.xlu0 %8916
        %8918 = vrot.lane.b32.xlu0 %v8871, 64
        %v8919 = vpop.permute.xlu0 %8918
        %vm8936 = vcmask 1048064
        %8937 = vst.msk [vmem:[%s436 + $0x8] sm:$0xff] %vm8936, %v8889
        %vm8938 = vcmask 261120
        %8939 = vst.msk [vmem:[%s436 + $0x10] sm:$0xff] %vm8938, %v8889
        %8940 = vst.msk [vmem:[%s436 + $0x20] sm:$0xff] %vm8936, %v8891
        %8941 = vst.msk [vmem:[%s436 + $0x28] sm:$0xff] %vm8938, %v8891
        %8942 = vst.msk [vmem:[%s436 + $0x38] sm:$0xff] %vm8936, %v8893
        %8943 = vst.msk [vmem:[%s436 + $0x40] sm:$0xff] %vm8938, %v8893
        %8944 = vst.msk [vmem:[%s436 + $0x50] sm:$0xff] %vm8936, %v8895
        %8945 = vst.msk [vmem:[%s436 + $0x58] sm:$0xff] %vm8938, %v8895
        %8946 = vst.msk [vmem:[%s436 + $0x68] sm:$0xff] %vm8936, %v8897
        %8947 = vst.msk [vmem:[%s436 + $0x70] sm:$0xff] %vm8938, %v8897
        %8948 = vst.msk [vmem:[%s436 + $0x80] sm:$0xff] %vm8936, %v8899
        %8949 = vst.msk [vmem:[%s436 + $0x88] sm:$0xff] %vm8938, %v8899
        %8950 = vst.msk [vmem:[%s436 + $0x98] sm:$0xff] %vm8936, %v8901
        %8951 = vst.msk [vmem:[%s436 + $0xa0] sm:$0xff] %vm8938, %v8901
        %8952 = vst.msk [vmem:[%s436 + $0xb0] sm:$0xff] %vm8936, %v8903
        %8953 = vst.msk [vmem:[%s436 + $0xb8] sm:$0xff] %vm8938, %v8903
        %8954 = vst.msk [vmem:[%s436 + $0xc8] sm:$0xff] %vm8936, %v8905
        %8955 = vst.msk [vmem:[%s436 + $0xd0] sm:$0xff] %vm8938, %v8905
        %8956 = vst.msk [vmem:[%s436 + $0xe0] sm:$0xff] %vm8936, %v8907
        %8957 = vst.msk [vmem:[%s436 + $0xe8] sm:$0xff] %vm8938, %v8907
        %8958 = vst.msk [vmem:[%s436 + $0xf8] sm:$0xff] %vm8936, %v8909
        %8959 = vst.msk [vmem:[%s436 + $0x100] sm:$0xff] %vm8938, %v8909
        %8960 = vst.msk [vmem:[%s436 + $0x110] sm:$0xff] %vm8936, %v8911
        %8961 = vst.msk [vmem:[%s436 + $0x118] sm:$0xff] %vm8938, %v8911
        %8962 = vst.msk [vmem:[%s436 + $0x128] sm:$0xff] %vm8936, %v8913
        %8963 = vst.msk [vmem:[%s436 + $0x130] sm:$0xff] %vm8938, %v8913
        %8964 = vst.msk [vmem:[%s436 + $0x140] sm:$0xff] %vm8936, %v8915
        %8965 = vst.msk [vmem:[%s436 + $0x148] sm:$0xff] %vm8938, %v8915
        %8966 = vst.msk [vmem:[%s436 + $0x158] sm:$0xff] %vm8936, %v8917
        %8967 = vst.msk [vmem:[%s436 + $0x160] sm:$0xff] %vm8938, %v8917
        %8968 = vst.msk [vmem:[%s436 + $0x170] sm:$0xff] %vm8936, %v8919
        %8969 = vst.msk [vmem:[%s436 + $0x178] sm:$0xff] %vm8938, %v8919
        %v8970 = vld [vmem:[%s442] sm:$0xff]
        %v8971 = vld [vmem:[%s442 + $0x18] sm:$0xff]
        %v8972 = vld [vmem:[%s442 + $0x30] sm:$0xff]
        %v8973 = vld [vmem:[%s442 + $0x48] sm:$0xff]
        %v8974 = vld [vmem:[%s442 + $0x60] sm:$0xff]
        %v8975 = vld [vmem:[%s442 + $0x78] sm:$0xff]
        %v8976 = vld [vmem:[%s442 + $0x90] sm:$0xff]
        %v8977 = vld [vmem:[%s442 + $0xa8] sm:$0xff]
        %v8978 = vld [vmem:[%s442 + $0xc0] sm:$0xff]
        %v8979 = vld [vmem:[%s442 + $0xd8] sm:$0xff]
        %v8980 = vld [vmem:[%s442 + $0xf0] sm:$0xff]
        %v8981 = vld [vmem:[%s442 + $0x108] sm:$0xff]
        %v8982 = vld [vmem:[%s442 + $0x120] sm:$0xff]
        %v8983 = vld [vmem:[%s442 + $0x138] sm:$0xff]
        %v8984 = vld [vmem:[%s442 + $0x150] sm:$0xff]
        %v8985 = vld [vmem:[%s442 + $0x168] sm:$0xff]
        %v9001 = vrot.slane %v8970, 7
        %v9002 = vrot.slane %v8971, 7
        %v9003 = vsel %vm1531, %v9001, %v9002
        %v9004 = vrot.slane %v8972, 7
        %v9005 = vsel %vm1531, %v9002, %v9004
        %v9006 = vrot.slane %v8973, 7
        %v9007 = vsel %vm1531, %v9004, %v9006
        %v9008 = vrot.slane %v8974, 7
        %v9009 = vsel %vm1531, %v9006, %v9008
        %v9010 = vrot.slane %v8975, 7
        %v9011 = vsel %vm1531, %v9008, %v9010
        %v9012 = vrot.slane %v8976, 7
        %v9013 = vsel %vm1531, %v9010, %v9012
        %v9014 = vrot.slane %v8977, 7
        %v9015 = vsel %vm1531, %v9012, %v9014
        %v9016 = vrot.slane %v8978, 7
        %v9017 = vsel %vm1531, %v9014, %v9016
        %v9018 = vrot.slane %v8979, 7
        %v9019 = vsel %vm1531, %v9016, %v9018
        %v9020 = vrot.slane %v8980, 7
        %v9021 = vsel %vm1531, %v9018, %v9020
        %v9022 = vrot.slane %v8981, 7
        %v9023 = vsel %vm1531, %v9020, %v9022
        %v9024 = vrot.slane %v8982, 7
        %v9025 = vsel %vm1531, %v9022, %v9024
        %v9026 = vrot.slane %v8983, 7
        %v9027 = vsel %vm1531, %v9024, %v9026
        %v9028 = vrot.slane %v8984, 7
        %v9029 = vsel %vm1531, %v9026, %v9028
        %v9045 = vsel %vm1531, 0.0, %v9001
        %v9046 = vld [vmem:[%s1] sm:$0xff]
        %v9047 = vld [vmem:[%s1 + $0x8] sm:$0xff]
        %v9048 = vld [vmem:[%s1 + $0x10] sm:$0xff]
        %v9049 = vld [vmem:[%s1 + $0x18] sm:$0xff]
        %v9050 = vld [vmem:[%s1 + $0x20] sm:$0xff]
        %v9051 = vld [vmem:[%s1 + $0x28] sm:$0xff]
        %v9052 = vld [vmem:[%s1 + $0x30] sm:$0xff]
        %v9053 = vld [vmem:[%s1 + $0x38] sm:$0xff]
        %v9054 = vld [vmem:[%s1 + $0x40] sm:$0xff]
        %v9055 = vld [vmem:[%s1 + $0x48] sm:$0xff]
        %v9056 = vld [vmem:[%s1 + $0x50] sm:$0xff]
        %v9057 = vld [vmem:[%s1 + $0x58] sm:$0xff]
        %v9058 = vld [vmem:[%s1 + $0x60] sm:$0xff]
        %v9059 = vld [vmem:[%s1 + $0x68] sm:$0xff]
        %v9060 = vld [vmem:[%s1 + $0x70] sm:$0xff]
        %v9061 = vld [vmem:[%s1 + $0x78] sm:$0xff]
        %9063 = vset.pattern.permute.xlu0 0
        %9064 = vperm.xlu0 %9063, %v9046
        %v9065 = vpop.permute.xlu0 %9064
        %9068 = vset.pattern.permute.xlu0 0
        %9069 = vperm.xlu0 %9068, %v9047
        %v9070 = vpop.permute.xlu0 %9069
        %9073 = vset.pattern.permute.xlu0 0
        %9074 = vperm.xlu0 %9073, %v9048
        %v9075 = vpop.permute.xlu0 %9074
        %9078 = vset.pattern.permute.xlu0 0
        %9079 = vperm.xlu0 %9078, %v9049
        %v9080 = vpop.permute.xlu0 %9079
        %9083 = vset.pattern.permute.xlu0 0
        %9084 = vperm.xlu0 %9083, %v9050
        %v9085 = vpop.permute.xlu0 %9084
        %9088 = vset.pattern.permute.xlu0 0
        %9089 = vperm.xlu0 %9088, %v9051
        %v9090 = vpop.permute.xlu0 %9089
        %9093 = vset.pattern.permute.xlu0 0
        %9094 = vperm.xlu0 %9093, %v9052
        %v9095 = vpop.permute.xlu0 %9094
        %9098 = vset.pattern.permute.xlu0 0
        %9099 = vperm.xlu0 %9098, %v9053
        %v9100 = vpop.permute.xlu0 %9099
        %9103 = vset.pattern.permute.xlu0 0
        %9104 = vperm.xlu0 %9103, %v9054
        %v9105 = vpop.permute.xlu0 %9104
        %9108 = vset.pattern.permute.xlu0 0
        %9109 = vperm.xlu0 %9108, %v9055
        %v9110 = vpop.permute.xlu0 %9109
        %9113 = vset.pattern.permute.xlu0 0
        %9114 = vperm.xlu0 %9113, %v9056
        %v9115 = vpop.permute.xlu0 %9114
        %9118 = vset.pattern.permute.xlu0 0
        %9119 = vperm.xlu0 %9118, %v9057
        %v9120 = vpop.permute.xlu0 %9119
        %9123 = vset.pattern.permute.xlu0 0
        %9124 = vperm.xlu0 %9123, %v9058
        %v9125 = vpop.permute.xlu0 %9124
        %9128 = vset.pattern.permute.xlu0 0
        %9129 = vperm.xlu0 %9128, %v9059
        %v9130 = vpop.permute.xlu0 %9129
        %9133 = vset.pattern.permute.xlu0 0
        %9134 = vperm.xlu0 %9133, %v9060
        %v9135 = vpop.permute.xlu0 %9134
        %9138 = vset.pattern.permute.xlu0 0
        %9139 = vperm.xlu0 %9138, %v9061
        %v9140 = vpop.permute.xlu0 %9139
        %v9142 = vmul.f32 %v9065, 0.0
        %v9143 = vmul.f32 %v9045, %v9070
        %v9144 = vmul.f32 %v9003, %v9075
        %v9145 = vmul.f32 %v9005, %v9080
        %v9146 = vmul.f32 %v9007, %v9085
        %v9147 = vmul.f32 %v9009, %v9090
        %v9148 = vmul.f32 %v9011, %v9095
        %v9149 = vmul.f32 %v9013, %v9100
        %v9150 = vmul.f32 %v9015, %v9105
        %v9151 = vmul.f32 %v9017, %v9110
        %v9152 = vmul.f32 %v9019, %v9115
        %v9153 = vmul.f32 %v9021, %v9120
        %v9154 = vmul.f32 %v9023, %v9125
        %v9155 = vmul.f32 %v9025, %v9130
        %v9156 = vmul.f32 %v9027, %v9135
        %v9157 = vmul.f32 %v9029, %v9140
        %v9158 = vadd.f32 %v9142, 0.0
        %v9159 = vadd.f32 %v9143, 0.0
        %v9160 = vadd.f32 %v9144, 0.0
        %v9161 = vadd.f32 %v9145, 0.0
        %v9162 = vadd.f32 %v9146, 0.0
        %v9163 = vadd.f32 %v9147, 0.0
        %v9164 = vadd.f32 %v9148, 0.0
        %v9165 = vadd.f32 %v9149, 0.0
        %v9166 = vadd.f32 %v9150, 0.0
        %v9167 = vadd.f32 %v9151, 0.0
        %v9168 = vadd.f32 %v9152, 0.0
        %v9169 = vadd.f32 %v9153, 0.0
        %v9170 = vadd.f32 %v9154, 0.0
        %v9171 = vadd.f32 %v9155, 0.0
        %v9172 = vadd.f32 %v9156, 0.0
        %v9173 = vadd.f32 %v9157, 0.0
        %9174 = vset.pattern.permute.xlu0 1
        %9175 = vperm.xlu0 %9174, %v9046
        %v9176 = vpop.permute.xlu0 %9175
        %9178 = vset.pattern.permute.xlu0 1
        %9179 = vperm.xlu0 %9178, %v9047
        %v9180 = vpop.permute.xlu0 %9179
        %9182 = vset.pattern.permute.xlu0 1
        %9183 = vperm.xlu0 %9182, %v9048
        %v9184 = vpop.permute.xlu0 %9183
        %9186 = vset.pattern.permute.xlu0 1
        %9187 = vperm.xlu0 %9186, %v9049
        %v9188 = vpop.permute.xlu0 %9187
        %9190 = vset.pattern.permute.xlu0 1
        %9191 = vperm.xlu0 %9190, %v9050
        %v9192 = vpop.permute.xlu0 %9191
        %9194 = vset.pattern.permute.xlu0 1
        %9195 = vperm.xlu0 %9194, %v9051
        %v9196 = vpop.permute.xlu0 %9195
        %9198 = vset.pattern.permute.xlu0 1
        %9199 = vperm.xlu0 %9198, %v9052
        %v9200 = vpop.permute.xlu0 %9199
        %9202 = vset.pattern.permute.xlu0 1
        %9203 = vperm.xlu0 %9202, %v9053
        %v9204 = vpop.permute.xlu0 %9203
        %9206 = vset.pattern.permute.xlu0 1
        %9207 = vperm.xlu0 %9206, %v9054
        %v9208 = vpop.permute.xlu0 %9207
        %9210 = vset.pattern.permute.xlu0 1
        %9211 = vperm.xlu0 %9210, %v9055
        %v9212 = vpop.permute.xlu0 %9211
        %9214 = vset.pattern.permute.xlu0 1
        %9215 = vperm.xlu0 %9214, %v9056
        %v9216 = vpop.permute.xlu0 %9215
        %9218 = vset.pattern.permute.xlu0 1
        %9219 = vperm.xlu0 %9218, %v9057
        %v9220 = vpop.permute.xlu0 %9219
        %9222 = vset.pattern.permute.xlu0 1
        %9223 = vperm.xlu0 %9222, %v9058
        %v9224 = vpop.permute.xlu0 %9223
        %9226 = vset.pattern.permute.xlu0 1
        %9227 = vperm.xlu0 %9226, %v9059
        %v9228 = vpop.permute.xlu0 %9227
        %9230 = vset.pattern.permute.xlu0 1
        %9231 = vperm.xlu0 %9230, %v9060
        %v9232 = vpop.permute.xlu0 %9231
        %9234 = vset.pattern.permute.xlu0 1
        %9235 = vperm.xlu0 %9234, %v9061
        %v9236 = vpop.permute.xlu0 %9235
        %v9238 = vmul.f32 %v9176, 0.0
        %v9239 = vmul.f32 %v8970, %v9180
        %v9240 = vmul.f32 %v8971, %v9184
        %v9241 = vmul.f32 %v8972, %v9188
        %v9242 = vmul.f32 %v8973, %v9192
        %v9243 = vmul.f32 %v8974, %v9196
        %v9244 = vmul.f32 %v8975, %v9200
        %v9245 = vmul.f32 %v8976, %v9204
        %v9246 = vmul.f32 %v8977, %v9208
        %v9247 = vmul.f32 %v8978, %v9212
        %v9248 = vmul.f32 %v8979, %v9216
        %v9249 = vmul.f32 %v8980, %v9220
        %v9250 = vmul.f32 %v8981, %v9224
        %v9251 = vmul.f32 %v8982, %v9228
        %v9252 = vmul.f32 %v8983, %v9232
        %v9253 = vmul.f32 %v8984, %v9236
        %v9254 = vadd.f32 %v9158, %v9238
        %v9255 = vadd.f32 %v9159, %v9239
        %v9256 = vadd.f32 %v9160, %v9240
        %v9257 = vadd.f32 %v9161, %v9241
        %v9258 = vadd.f32 %v9162, %v9242
        %v9259 = vadd.f32 %v9163, %v9243
        %v9260 = vadd.f32 %v9164, %v9244
        %v9261 = vadd.f32 %v9165, %v9245
        %v9262 = vadd.f32 %v9166, %v9246
        %v9263 = vadd.f32 %v9167, %v9247
        %v9264 = vadd.f32 %v9168, %v9248
        %v9265 = vadd.f32 %v9169, %v9249
        %v9266 = vadd.f32 %v9170, %v9250
        %v9267 = vadd.f32 %v9171, %v9251
        %v9268 = vadd.f32 %v9172, %v9252
        %v9269 = vadd.f32 %v9173, %v9253
        %v9271 = vrot.slane %v8970, 1
        %v9272 = vrot.slane %v8971, 1
        %v9273 = vsel %vm1834, %v9271, %v9272
        %v9274 = vrot.slane %v8972, 1
        %v9275 = vsel %vm1834, %v9272, %v9274
        %v9276 = vrot.slane %v8973, 1
        %v9277 = vsel %vm1834, %v9274, %v9276
        %v9278 = vrot.slane %v8974, 1
        %v9279 = vsel %vm1834, %v9276, %v9278
        %v9280 = vrot.slane %v8975, 1
        %v9281 = vsel %vm1834, %v9278, %v9280
        %v9282 = vrot.slane %v8976, 1
        %v9283 = vsel %vm1834, %v9280, %v9282
        %v9284 = vrot.slane %v8977, 1
        %v9285 = vsel %vm1834, %v9282, %v9284
        %v9286 = vrot.slane %v8978, 1
        %v9287 = vsel %vm1834, %v9284, %v9286
        %v9288 = vrot.slane %v8979, 1
        %v9289 = vsel %vm1834, %v9286, %v9288
        %v9290 = vrot.slane %v8980, 1
        %v9291 = vsel %vm1834, %v9288, %v9290
        %v9292 = vrot.slane %v8981, 1
        %v9293 = vsel %vm1834, %v9290, %v9292
        %v9294 = vrot.slane %v8982, 1
        %v9295 = vsel %vm1834, %v9292, %v9294
        %v9296 = vrot.slane %v8983, 1
        %v9297 = vsel %vm1834, %v9294, %v9296
        %v9298 = vrot.slane %v8984, 1
        %v9299 = vsel %vm1834, %v9296, %v9298
        %v9300 = vrot.slane %v8985, 1
        %v9301 = vsel %vm1834, %v9298, %v9300
        %v9318 = vsel %vm1834, 0.0, %v9271
        %9319 = vset.pattern.permute.xlu0 2
        %9320 = vperm.xlu0 %9319, %v9046
        %v9321 = vpop.permute.xlu0 %9320
        %9323 = vset.pattern.permute.xlu0 2
        %9324 = vperm.xlu0 %9323, %v9047
        %v9325 = vpop.permute.xlu0 %9324
        %9327 = vset.pattern.permute.xlu0 2
        %9328 = vperm.xlu0 %9327, %v9048
        %v9329 = vpop.permute.xlu0 %9328
        %9331 = vset.pattern.permute.xlu0 2
        %9332 = vperm.xlu0 %9331, %v9049
        %v9333 = vpop.permute.xlu0 %9332
        %9335 = vset.pattern.permute.xlu0 2
        %9336 = vperm.xlu0 %9335, %v9050
        %v9337 = vpop.permute.xlu0 %9336
        %9339 = vset.pattern.permute.xlu0 2
        %9340 = vperm.xlu0 %9339, %v9051
        %v9341 = vpop.permute.xlu0 %9340
        %9343 = vset.pattern.permute.xlu0 2
        %9344 = vperm.xlu0 %9343, %v9052
        %v9345 = vpop.permute.xlu0 %9344
        %9347 = vset.pattern.permute.xlu0 2
        %9348 = vperm.xlu0 %9347, %v9053
        %v9349 = vpop.permute.xlu0 %9348
        %9351 = vset.pattern.permute.xlu0 2
        %9352 = vperm.xlu0 %9351, %v9054
        %v9353 = vpop.permute.xlu0 %9352
        %9355 = vset.pattern.permute.xlu0 2
        %9356 = vperm.xlu0 %9355, %v9055
        %v9357 = vpop.permute.xlu0 %9356
        %9359 = vset.pattern.permute.xlu0 2
        %9360 = vperm.xlu0 %9359, %v9056
        %v9361 = vpop.permute.xlu0 %9360
        %9363 = vset.pattern.permute.xlu0 2
        %9364 = vperm.xlu0 %9363, %v9057
        %v9365 = vpop.permute.xlu0 %9364
        %9367 = vset.pattern.permute.xlu0 2
        %9368 = vperm.xlu0 %9367, %v9058
        %v9369 = vpop.permute.xlu0 %9368
        %9371 = vset.pattern.permute.xlu0 2
        %9372 = vperm.xlu0 %9371, %v9059
        %v9373 = vpop.permute.xlu0 %9372
        %9375 = vset.pattern.permute.xlu0 2
        %9376 = vperm.xlu0 %9375, %v9060
        %v9377 = vpop.permute.xlu0 %9376
        %9379 = vset.pattern.permute.xlu0 2
        %9380 = vperm.xlu0 %9379, %v9061
        %v9381 = vpop.permute.xlu0 %9380
        %v9383 = vmul.f32 %v9318, %v9321
        %v9384 = vmul.f32 %v9273, %v9325
        %v9385 = vmul.f32 %v9275, %v9329
        %v9386 = vmul.f32 %v9277, %v9333
        %v9387 = vmul.f32 %v9279, %v9337
        %v9388 = vmul.f32 %v9281, %v9341
        %v9389 = vmul.f32 %v9283, %v9345
        %v9390 = vmul.f32 %v9285, %v9349
        %v9391 = vmul.f32 %v9287, %v9353
        %v9392 = vmul.f32 %v9289, %v9357
        %v9393 = vmul.f32 %v9291, %v9361
        %v9394 = vmul.f32 %v9293, %v9365
        %v9395 = vmul.f32 %v9295, %v9369
        %v9396 = vmul.f32 %v9297, %v9373
        %v9397 = vmul.f32 %v9299, %v9377
        %v9398 = vmul.f32 %v9301, %v9381
        %v9399 = vadd.f32 %v9254, %v9383
        %v9400 = vadd.f32 %v9255, %v9384
        %v9401 = vadd.f32 %v9256, %v9385
        %v9402 = vadd.f32 %v9257, %v9386
        %v9403 = vadd.f32 %v9258, %v9387
        %v9404 = vadd.f32 %v9259, %v9388
        %v9405 = vadd.f32 %v9260, %v9389
        %v9406 = vadd.f32 %v9261, %v9390
        %v9407 = vadd.f32 %v9262, %v9391
        %v9408 = vadd.f32 %v9263, %v9392
        %v9409 = vadd.f32 %v9264, %v9393
        %v9410 = vadd.f32 %v9265, %v9394
        %v9411 = vadd.f32 %v9266, %v9395
        %v9412 = vadd.f32 %v9267, %v9396
        %v9413 = vadd.f32 %v9268, %v9397
        %v9414 = vadd.f32 %v9269, %v9398
        %v9415 = vrot.slane %v8985, 7
        %v9416 = vsel %vm1531, %v9028, %v9415
        %9418 = vset.pattern.permute.xlu0 3
        %9419 = vperm.xlu0 %9418, %v9046
        %v9420 = vpop.permute.xlu0 %9419
        %9422 = vset.pattern.permute.xlu0 3
        %9423 = vperm.xlu0 %9422, %v9047
        %v9424 = vpop.permute.xlu0 %9423
        %9426 = vset.pattern.permute.xlu0 3
        %9427 = vperm.xlu0 %9426, %v9048
        %v9428 = vpop.permute.xlu0 %9427
        %9430 = vset.pattern.permute.xlu0 3
        %9431 = vperm.xlu0 %9430, %v9049
        %v9432 = vpop.permute.xlu0 %9431
        %9434 = vset.pattern.permute.xlu0 3
        %9435 = vperm.xlu0 %9434, %v9050
        %v9436 = vpop.permute.xlu0 %9435
        %9438 = vset.pattern.permute.xlu0 3
        %9439 = vperm.xlu0 %9438, %v9051
        %v9440 = vpop.permute.xlu0 %9439
        %9442 = vset.pattern.permute.xlu0 3
        %9443 = vperm.xlu0 %9442, %v9052
        %v9444 = vpop.permute.xlu0 %9443
        %9446 = vset.pattern.permute.xlu0 3
        %9447 = vperm.xlu0 %9446, %v9053
        %v9448 = vpop.permute.xlu0 %9447
        %9450 = vset.pattern.permute.xlu0 3
        %9451 = vperm.xlu0 %9450, %v9054
        %v9452 = vpop.permute.xlu0 %9451
        %9454 = vset.pattern.permute.xlu0 3
        %9455 = vperm.xlu0 %9454, %v9055
        %v9456 = vpop.permute.xlu0 %9455
        %9458 = vset.pattern.permute.xlu0 3
        %9459 = vperm.xlu0 %9458, %v9056
        %v9460 = vpop.permute.xlu0 %9459
        %9462 = vset.pattern.permute.xlu0 3
        %9463 = vperm.xlu0 %9462, %v9057
        %v9464 = vpop.permute.xlu0 %9463
        %9466 = vset.pattern.permute.xlu0 3
        %9467 = vperm.xlu0 %9466, %v9058
        %v9468 = vpop.permute.xlu0 %9467
        %9470 = vset.pattern.permute.xlu0 3
        %9471 = vperm.xlu0 %9470, %v9059
        %v9472 = vpop.permute.xlu0 %9471
        %9474 = vset.pattern.permute.xlu0 3
        %9475 = vperm.xlu0 %9474, %v9060
        %v9476 = vpop.permute.xlu0 %9475
        %9478 = vset.pattern.permute.xlu0 3
        %9479 = vperm.xlu0 %9478, %v9061
        %v9480 = vpop.permute.xlu0 %9479
        %v9482 = vmul.f32 %v9045, %v9420
        %v9483 = vmul.f32 %v9003, %v9424
        %v9484 = vmul.f32 %v9005, %v9428
        %v9485 = vmul.f32 %v9007, %v9432
        %v9486 = vmul.f32 %v9009, %v9436
        %v9487 = vmul.f32 %v9011, %v9440
        %v9488 = vmul.f32 %v9013, %v9444
        %v9489 = vmul.f32 %v9015, %v9448
        %v9490 = vmul.f32 %v9017, %v9452
        %v9491 = vmul.f32 %v9019, %v9456
        %v9492 = vmul.f32 %v9021, %v9460
        %v9493 = vmul.f32 %v9023, %v9464
        %v9494 = vmul.f32 %v9025, %v9468
        %v9495 = vmul.f32 %v9027, %v9472
        %v9496 = vmul.f32 %v9029, %v9476
        %v9497 = vmul.f32 %v9416, %v9480
        %v9498 = vadd.f32 %v9399, %v9482
        %v9499 = vadd.f32 %v9400, %v9483
        %v9500 = vadd.f32 %v9401, %v9484
        %v9501 = vadd.f32 %v9402, %v9485
        %v9502 = vadd.f32 %v9403, %v9486
        %v9503 = vadd.f32 %v9404, %v9487
        %v9504 = vadd.f32 %v9405, %v9488
        %v9505 = vadd.f32 %v9406, %v9489
        %v9506 = vadd.f32 %v9407, %v9490
        %v9507 = vadd.f32 %v9408, %v9491
        %v9508 = vadd.f32 %v9409, %v9492
        %v9509 = vadd.f32 %v9410, %v9493
        %v9510 = vadd.f32 %v9411, %v9494
        %v9511 = vadd.f32 %v9412, %v9495
        %v9512 = vadd.f32 %v9413, %v9496
        %v9513 = vadd.f32 %v9414, %v9497
        %9514 = vset.pattern.permute.xlu0 4
        %9515 = vperm.xlu0 %9514, %v9046
        %v9516 = vpop.permute.xlu0 %9515
        %9518 = vset.pattern.permute.xlu0 4
        %9519 = vperm.xlu0 %9518, %v9047
        %v9520 = vpop.permute.xlu0 %9519
        %9522 = vset.pattern.permute.xlu0 4
        %9523 = vperm.xlu0 %9522, %v9048
        %v9524 = vpop.permute.xlu0 %9523
        %9526 = vset.pattern.permute.xlu0 4
        %9527 = vperm.xlu0 %9526, %v9049
        %v9528 = vpop.permute.xlu0 %9527
        %9530 = vset.pattern.permute.xlu0 4
        %9531 = vperm.xlu0 %9530, %v9050
        %v9532 = vpop.permute.xlu0 %9531
        %9534 = vset.pattern.permute.xlu0 4
        %9535 = vperm.xlu0 %9534, %v9051
        %v9536 = vpop.permute.xlu0 %9535
        %9538 = vset.pattern.permute.xlu0 4
        %9539 = vperm.xlu0 %9538, %v9052
        %v9540 = vpop.permute.xlu0 %9539
        %9542 = vset.pattern.permute.xlu0 4
        %9543 = vperm.xlu0 %9542, %v9053
        %v9544 = vpop.permute.xlu0 %9543
        %9546 = vset.pattern.permute.xlu0 4
        %9547 = vperm.xlu0 %9546, %v9054
        %v9548 = vpop.permute.xlu0 %9547
        %9550 = vset.pattern.permute.xlu0 4
        %9551 = vperm.xlu0 %9550, %v9055
        %v9552 = vpop.permute.xlu0 %9551
        %9554 = vset.pattern.permute.xlu0 4
        %9555 = vperm.xlu0 %9554, %v9056
        %v9556 = vpop.permute.xlu0 %9555
        %9558 = vset.pattern.permute.xlu0 4
        %9559 = vperm.xlu0 %9558, %v9057
        %v9560 = vpop.permute.xlu0 %9559
        %9562 = vset.pattern.permute.xlu0 4
        %9563 = vperm.xlu0 %9562, %v9058
        %v9564 = vpop.permute.xlu0 %9563
        %9566 = vset.pattern.permute.xlu0 4
        %9567 = vperm.xlu0 %9566, %v9059
        %v9568 = vpop.permute.xlu0 %9567
        %9570 = vset.pattern.permute.xlu0 4
        %9571 = vperm.xlu0 %9570, %v9060
        %v9572 = vpop.permute.xlu0 %9571
        %9574 = vset.pattern.permute.xlu0 4
        %9575 = vperm.xlu0 %9574, %v9061
        %v9576 = vpop.permute.xlu0 %9575
        %v9578 = vmul.f32 %v8970, %v9516
        %v9579 = vmul.f32 %v8971, %v9520
        %v9580 = vmul.f32 %v8972, %v9524
        %v9581 = vmul.f32 %v8973, %v9528
        %v9582 = vmul.f32 %v8974, %v9532
        %v9583 = vmul.f32 %v8975, %v9536
        %v9584 = vmul.f32 %v8976, %v9540
        %v9585 = vmul.f32 %v8977, %v9544
        %v9586 = vmul.f32 %v8978, %v9548
        %v9587 = vmul.f32 %v8979, %v9552
        %v9588 = vmul.f32 %v8980, %v9556
        %v9589 = vmul.f32 %v8981, %v9560
        %v9590 = vmul.f32 %v8982, %v9564
        %v9591 = vmul.f32 %v8983, %v9568
        %v9592 = vmul.f32 %v8984, %v9572
        %v9593 = vmul.f32 %v8985, %v9576
        %v9594 = vadd.f32 %v9498, %v9578
        %v9595 = vadd.f32 %v9499, %v9579
        %v9596 = vadd.f32 %v9500, %v9580
        %v9597 = vadd.f32 %v9501, %v9581
        %v9598 = vadd.f32 %v9502, %v9582
        %v9599 = vadd.f32 %v9503, %v9583
        %v9600 = vadd.f32 %v9504, %v9584
        %v9601 = vadd.f32 %v9505, %v9585
        %v9602 = vadd.f32 %v9506, %v9586
        %v9603 = vadd.f32 %v9507, %v9587
        %v9604 = vadd.f32 %v9508, %v9588
        %v9605 = vadd.f32 %v9509, %v9589
        %v9606 = vadd.f32 %v9510, %v9590
        %v9607 = vadd.f32 %v9511, %v9591
        %v9608 = vadd.f32 %v9512, %v9592
        %v9609 = vadd.f32 %v9513, %v9593
        %v9611 = vsel %vm1834, %v9300, 0.0
        %9612 = vset.pattern.permute.xlu0 5
        %9613 = vperm.xlu0 %9612, %v9046
        %v9614 = vpop.permute.xlu0 %9613
        %9616 = vset.pattern.permute.xlu0 5
        %9617 = vperm.xlu0 %9616, %v9047
        %v9618 = vpop.permute.xlu0 %9617
        %9620 = vset.pattern.permute.xlu0 5
        %9621 = vperm.xlu0 %9620, %v9048
        %v9622 = vpop.permute.xlu0 %9621
        %9624 = vset.pattern.permute.xlu0 5
        %9625 = vperm.xlu0 %9624, %v9049
        %v9626 = vpop.permute.xlu0 %9625
        %9628 = vset.pattern.permute.xlu0 5
        %9629 = vperm.xlu0 %9628, %v9050
        %v9630 = vpop.permute.xlu0 %9629
        %9632 = vset.pattern.permute.xlu0 5
        %9633 = vperm.xlu0 %9632, %v9051
        %v9634 = vpop.permute.xlu0 %9633
        %9636 = vset.pattern.permute.xlu0 5
        %9637 = vperm.xlu0 %9636, %v9052
        %v9638 = vpop.permute.xlu0 %9637
        %9640 = vset.pattern.permute.xlu0 5
        %9641 = vperm.xlu0 %9640, %v9053
        %v9642 = vpop.permute.xlu0 %9641
        %9644 = vset.pattern.permute.xlu0 5
        %9645 = vperm.xlu0 %9644, %v9054
        %v9646 = vpop.permute.xlu0 %9645
        %9648 = vset.pattern.permute.xlu0 5
        %9649 = vperm.xlu0 %9648, %v9055
        %v9650 = vpop.permute.xlu0 %9649
        %9652 = vset.pattern.permute.xlu0 5
        %9653 = vperm.xlu0 %9652, %v9056
        %v9654 = vpop.permute.xlu0 %9653
        %9656 = vset.pattern.permute.xlu0 5
        %9657 = vperm.xlu0 %9656, %v9057
        %v9658 = vpop.permute.xlu0 %9657
        %9660 = vset.pattern.permute.xlu0 5
        %9661 = vperm.xlu0 %9660, %v9058
        %v9662 = vpop.permute.xlu0 %9661
        %9664 = vset.pattern.permute.xlu0 5
        %9665 = vperm.xlu0 %9664, %v9059
        %v9666 = vpop.permute.xlu0 %9665
        %9668 = vset.pattern.permute.xlu0 5
        %9669 = vperm.xlu0 %9668, %v9060
        %v9670 = vpop.permute.xlu0 %9669
        %9672 = vset.pattern.permute.xlu0 5
        %9673 = vperm.xlu0 %9672, %v9061
        %v9674 = vpop.permute.xlu0 %9673
        %v9676 = vmul.f32 %v9273, %v9614
        %v9677 = vmul.f32 %v9275, %v9618
        %v9678 = vmul.f32 %v9277, %v9622
        %v9679 = vmul.f32 %v9279, %v9626
        %v9680 = vmul.f32 %v9281, %v9630
        %v9681 = vmul.f32 %v9283, %v9634
        %v9682 = vmul.f32 %v9285, %v9638
        %v9683 = vmul.f32 %v9287, %v9642
        %v9684 = vmul.f32 %v9289, %v9646
        %v9685 = vmul.f32 %v9291, %v9650
        %v9686 = vmul.f32 %v9293, %v9654
        %v9687 = vmul.f32 %v9295, %v9658
        %v9688 = vmul.f32 %v9297, %v9662
        %v9689 = vmul.f32 %v9299, %v9666
        %v9690 = vmul.f32 %v9301, %v9670
        %v9691 = vmul.f32 %v9611, %v9674
        %v9692 = vadd.f32 %v9594, %v9676
        %v9693 = vadd.f32 %v9595, %v9677
        %v9694 = vadd.f32 %v9596, %v9678
        %v9695 = vadd.f32 %v9597, %v9679
        %v9696 = vadd.f32 %v9598, %v9680
        %v9697 = vadd.f32 %v9599, %v9681
        %v9698 = vadd.f32 %v9600, %v9682
        %v9699 = vadd.f32 %v9601, %v9683
        %v9700 = vadd.f32 %v9602, %v9684
        %v9701 = vadd.f32 %v9603, %v9685
        %v9702 = vadd.f32 %v9604, %v9686
        %v9703 = vadd.f32 %v9605, %v9687
        %v9704 = vadd.f32 %v9606, %v9688
        %v9705 = vadd.f32 %v9607, %v9689
        %v9706 = vadd.f32 %v9608, %v9690
        %v9707 = vadd.f32 %v9609, %v9691
        %v9709 = vsel %vm1531, %v9415, 0.0
        %9710 = vset.pattern.permute.xlu0 6
        %9711 = vperm.xlu0 %9710, %v9046
        %v9712 = vpop.permute.xlu0 %9711
        %9714 = vset.pattern.permute.xlu0 6
        %9715 = vperm.xlu0 %9714, %v9047
        %v9716 = vpop.permute.xlu0 %9715
        %9718 = vset.pattern.permute.xlu0 6
        %9719 = vperm.xlu0 %9718, %v9048
        %v9720 = vpop.permute.xlu0 %9719
        %9722 = vset.pattern.permute.xlu0 6
        %9723 = vperm.xlu0 %9722, %v9049
        %v9724 = vpop.permute.xlu0 %9723
        %9726 = vset.pattern.permute.xlu0 6
        %9727 = vperm.xlu0 %9726, %v9050
        %v9728 = vpop.permute.xlu0 %9727
        %9730 = vset.pattern.permute.xlu0 6
        %9731 = vperm.xlu0 %9730, %v9051
        %v9732 = vpop.permute.xlu0 %9731
        %9734 = vset.pattern.permute.xlu0 6
        %9735 = vperm.xlu0 %9734, %v9052
        %v9736 = vpop.permute.xlu0 %9735
        %9738 = vset.pattern.permute.xlu0 6
        %9739 = vperm.xlu0 %9738, %v9053
        %v9740 = vpop.permute.xlu0 %9739
        %9742 = vset.pattern.permute.xlu0 6
        %9743 = vperm.xlu0 %9742, %v9054
        %v9744 = vpop.permute.xlu0 %9743
        %9746 = vset.pattern.permute.xlu0 6
        %9747 = vperm.xlu0 %9746, %v9055
        %v9748 = vpop.permute.xlu0 %9747
        %9750 = vset.pattern.permute.xlu0 6
        %9751 = vperm.xlu0 %9750, %v9056
        %v9752 = vpop.permute.xlu0 %9751
        %9754 = vset.pattern.permute.xlu0 6
        %9755 = vperm.xlu0 %9754, %v9057
        %v9756 = vpop.permute.xlu0 %9755
        %9758 = vset.pattern.permute.xlu0 6
        %9759 = vperm.xlu0 %9758, %v9058
        %v9760 = vpop.permute.xlu0 %9759
        %9762 = vset.pattern.permute.xlu0 6
        %9763 = vperm.xlu0 %9762, %v9059
        %v9764 = vpop.permute.xlu0 %9763
        %9766 = vset.pattern.permute.xlu0 6
        %9767 = vperm.xlu0 %9766, %v9060
        %v9768 = vpop.permute.xlu0 %9767
        %9770 = vset.pattern.permute.xlu0 6
        %9771 = vperm.xlu0 %9770, %v9061
        %v9772 = vpop.permute.xlu0 %9771
        %v9774 = vmul.f32 %v9003, %v9712
        %v9775 = vmul.f32 %v9005, %v9716
        %v9776 = vmul.f32 %v9007, %v9720
        %v9777 = vmul.f32 %v9009, %v9724
        %v9778 = vmul.f32 %v9011, %v9728
        %v9779 = vmul.f32 %v9013, %v9732
        %v9780 = vmul.f32 %v9015, %v9736
        %v9781 = vmul.f32 %v9017, %v9740
        %v9782 = vmul.f32 %v9019, %v9744
        %v9783 = vmul.f32 %v9021, %v9748
        %v9784 = vmul.f32 %v9023, %v9752
        %v9785 = vmul.f32 %v9025, %v9756
        %v9786 = vmul.f32 %v9027, %v9760
        %v9787 = vmul.f32 %v9029, %v9764
        %v9788 = vmul.f32 %v9416, %v9768
        %v9789 = vmul.f32 %v9709, %v9772
        %v9790 = vadd.f32 %v9692, %v9774
        %v9791 = vadd.f32 %v9693, %v9775
        %v9792 = vadd.f32 %v9694, %v9776
        %v9793 = vadd.f32 %v9695, %v9777
        %v9794 = vadd.f32 %v9696, %v9778
        %v9795 = vadd.f32 %v9697, %v9779
        %v9796 = vadd.f32 %v9698, %v9780
        %v9797 = vadd.f32 %v9699, %v9781
        %v9798 = vadd.f32 %v9700, %v9782
        %v9799 = vadd.f32 %v9701, %v9783
        %v9800 = vadd.f32 %v9702, %v9784
        %v9801 = vadd.f32 %v9703, %v9785
        %v9802 = vadd.f32 %v9704, %v9786
        %v9803 = vadd.f32 %v9705, %v9787
        %v9804 = vadd.f32 %v9706, %v9788
        %v9805 = vadd.f32 %v9707, %v9789
        %9806 = vset.pattern.permute.xlu0 7
        %9807 = vperm.xlu0 %9806, %v9046
        %v9808 = vpop.permute.xlu0 %9807
        %9810 = vset.pattern.permute.xlu0 7
        %9811 = vperm.xlu0 %9810, %v9047
        %v9812 = vpop.permute.xlu0 %9811
        %9814 = vset.pattern.permute.xlu0 7
        %9815 = vperm.xlu0 %9814, %v9048
        %v9816 = vpop.permute.xlu0 %9815
        %9818 = vset.pattern.permute.xlu0 7
        %9819 = vperm.xlu0 %9818, %v9049
        %v9820 = vpop.permute.xlu0 %9819
        %9822 = vset.pattern.permute.xlu0 7
        %9823 = vperm.xlu0 %9822, %v9050
        %v9824 = vpop.permute.xlu0 %9823
        %9826 = vset.pattern.permute.xlu0 7
        %9827 = vperm.xlu0 %9826, %v9051
        %v9828 = vpop.permute.xlu0 %9827
        %9830 = vset.pattern.permute.xlu0 7
        %9831 = vperm.xlu0 %9830, %v9052
        %v9832 = vpop.permute.xlu0 %9831
        %9834 = vset.pattern.permute.xlu0 7
        %9835 = vperm.xlu0 %9834, %v9053
        %v9836 = vpop.permute.xlu0 %9835
        %9838 = vset.pattern.permute.xlu0 7
        %9839 = vperm.xlu0 %9838, %v9054
        %v9840 = vpop.permute.xlu0 %9839
        %9842 = vset.pattern.permute.xlu0 7
        %9843 = vperm.xlu0 %9842, %v9055
        %v9844 = vpop.permute.xlu0 %9843
        %9846 = vset.pattern.permute.xlu0 7
        %9847 = vperm.xlu0 %9846, %v9056
        %v9848 = vpop.permute.xlu0 %9847
        %9850 = vset.pattern.permute.xlu0 7
        %9851 = vperm.xlu0 %9850, %v9057
        %v9852 = vpop.permute.xlu0 %9851
        %9854 = vset.pattern.permute.xlu0 7
        %9855 = vperm.xlu0 %9854, %v9058
        %v9856 = vpop.permute.xlu0 %9855
        %9858 = vset.pattern.permute.xlu0 7
        %9859 = vperm.xlu0 %9858, %v9059
        %v9860 = vpop.permute.xlu0 %9859
        %9862 = vset.pattern.permute.xlu0 7
        %9863 = vperm.xlu0 %9862, %v9060
        %v9864 = vpop.permute.xlu0 %9863
        %9866 = vset.pattern.permute.xlu0 7
        %9867 = vperm.xlu0 %9866, %v9061
        %v9868 = vpop.permute.xlu0 %9867
        %v9870 = vmul.f32 %v8971, %v9808
        %v9871 = vmul.f32 %v8972, %v9812
        %v9872 = vmul.f32 %v8973, %v9816
        %v9873 = vmul.f32 %v8974, %v9820
        %v9874 = vmul.f32 %v8975, %v9824
        %v9875 = vmul.f32 %v8976, %v9828
        %v9876 = vmul.f32 %v8977, %v9832
        %v9877 = vmul.f32 %v8978, %v9836
        %v9878 = vmul.f32 %v8979, %v9840
        %v9879 = vmul.f32 %v8980, %v9844
        %v9880 = vmul.f32 %v8981, %v9848
        %v9881 = vmul.f32 %v8982, %v9852
        %v9882 = vmul.f32 %v8983, %v9856
        %v9883 = vmul.f32 %v8984, %v9860
        %v9884 = vmul.f32 %v8985, %v9864
        %v9885 = vmul.f32 %v9868, 0.0
        %v9886 = vadd.f32 %v9790, %v9870
        %v9887 = vadd.f32 %v9791, %v9871
        %v9888 = vadd.f32 %v9792, %v9872
        %v9889 = vadd.f32 %v9793, %v9873
        %v9890 = vadd.f32 %v9794, %v9874
        %v9891 = vadd.f32 %v9795, %v9875
        %v9892 = vadd.f32 %v9796, %v9876
        %v9893 = vadd.f32 %v9797, %v9877
        %v9894 = vadd.f32 %v9798, %v9878
        %v9895 = vadd.f32 %v9799, %v9879
        %v9896 = vadd.f32 %v9800, %v9880
        %v9897 = vadd.f32 %v9801, %v9881
        %v9898 = vadd.f32 %v9802, %v9882
        %v9899 = vadd.f32 %v9803, %v9883
        %v9900 = vadd.f32 %v9804, %v9884
        %v9901 = vadd.f32 %v9805, %v9885
        %9902 = vset.pattern.permute.xlu0 8
        %9903 = vperm.xlu0 %9902, %v9046
        %v9904 = vpop.permute.xlu0 %9903
        %9906 = vset.pattern.permute.xlu0 8
        %9907 = vperm.xlu0 %9906, %v9047
        %v9908 = vpop.permute.xlu0 %9907
        %9910 = vset.pattern.permute.xlu0 8
        %9911 = vperm.xlu0 %9910, %v9048
        %v9912 = vpop.permute.xlu0 %9911
        %9914 = vset.pattern.permute.xlu0 8
        %9915 = vperm.xlu0 %9914, %v9049
        %v9916 = vpop.permute.xlu0 %9915
        %9918 = vset.pattern.permute.xlu0 8
        %9919 = vperm.xlu0 %9918, %v9050
        %v9920 = vpop.permute.xlu0 %9919
        %9922 = vset.pattern.permute.xlu0 8
        %9923 = vperm.xlu0 %9922, %v9051
        %v9924 = vpop.permute.xlu0 %9923
        %9926 = vset.pattern.permute.xlu0 8
        %9927 = vperm.xlu0 %9926, %v9052
        %v9928 = vpop.permute.xlu0 %9927
        %9930 = vset.pattern.permute.xlu0 8
        %9931 = vperm.xlu0 %9930, %v9053
        %v9932 = vpop.permute.xlu0 %9931
        %9934 = vset.pattern.permute.xlu0 8
        %9935 = vperm.xlu0 %9934, %v9054
        %v9936 = vpop.permute.xlu0 %9935
        %9938 = vset.pattern.permute.xlu0 8
        %9939 = vperm.xlu0 %9938, %v9055
        %v9940 = vpop.permute.xlu0 %9939
        %9942 = vset.pattern.permute.xlu0 8
        %9943 = vperm.xlu0 %9942, %v9056
        %v9944 = vpop.permute.xlu0 %9943
        %9946 = vset.pattern.permute.xlu0 8
        %9947 = vperm.xlu0 %9946, %v9057
        %v9948 = vpop.permute.xlu0 %9947
        %9950 = vset.pattern.permute.xlu0 8
        %9951 = vperm.xlu0 %9950, %v9058
        %v9952 = vpop.permute.xlu0 %9951
        %9954 = vset.pattern.permute.xlu0 8
        %9955 = vperm.xlu0 %9954, %v9059
        %v9956 = vpop.permute.xlu0 %9955
        %9958 = vset.pattern.permute.xlu0 8
        %9959 = vperm.xlu0 %9958, %v9060
        %v9960 = vpop.permute.xlu0 %9959
        %9962 = vset.pattern.permute.xlu0 8
        %9963 = vperm.xlu0 %9962, %v9061
        %v9964 = vpop.permute.xlu0 %9963
        %v9966 = vmul.f32 %v9275, %v9904
        %v9967 = vmul.f32 %v9277, %v9908
        %v9968 = vmul.f32 %v9279, %v9912
        %v9969 = vmul.f32 %v9281, %v9916
        %v9970 = vmul.f32 %v9283, %v9920
        %v9971 = vmul.f32 %v9285, %v9924
        %v9972 = vmul.f32 %v9287, %v9928
        %v9973 = vmul.f32 %v9289, %v9932
        %v9974 = vmul.f32 %v9291, %v9936
        %v9975 = vmul.f32 %v9293, %v9940
        %v9976 = vmul.f32 %v9295, %v9944
        %v9977 = vmul.f32 %v9297, %v9948
        %v9978 = vmul.f32 %v9299, %v9952
        %v9979 = vmul.f32 %v9301, %v9956
        %v9980 = vmul.f32 %v9611, %v9960
        %v9981 = vmul.f32 %v9964, 0.0
        %v9982 = vadd.f32 %v9886, %v9966
        %v9983 = vadd.f32 %v9887, %v9967
        %v9984 = vadd.f32 %v9888, %v9968
        %v9985 = vadd.f32 %v9889, %v9969
        %v9986 = vadd.f32 %v9890, %v9970
        %v9987 = vadd.f32 %v9891, %v9971
        %v9988 = vadd.f32 %v9892, %v9972
        %v9989 = vadd.f32 %v9893, %v9973
        %v9990 = vadd.f32 %v9894, %v9974
        %v9991 = vadd.f32 %v9895, %v9975
        %v9992 = vadd.f32 %v9896, %v9976
        %v9993 = vadd.f32 %v9897, %v9977
        %v9994 = vadd.f32 %v9898, %v9978
        %v9995 = vadd.f32 %v9899, %v9979
        %v9996 = vadd.f32 %v9900, %v9980
        %v9997 = vadd.f32 %v9901, %v9981
        %v9998 = vpack.c.bf16 %v9983, %v9982
        %v9999 = vpack.c.bf16 %v9985, %v9984
        %v10000 = vpack.c.bf16 %v9987, %v9986
        %v10001 = vpack.c.bf16 %v9989, %v9988
        %v10002 = vpack.c.bf16 %v9991, %v9990
        %v10003 = vpack.c.bf16 %v9993, %v9992
        %v10004 = vpack.c.bf16 %v9995, %v9994
        %v10005 = vpack.c.bf16 %v9997, %v9996
        %v10006 = vld [vmem:[%s11] sm:$0xf]
        %v10007 = vld [vmem:[%s11 + $0x4] sm:$0xf]
        %v10008 = vld [vmem:[%s11 + $0x8] sm:$0xf]
        %v10009 = vld [vmem:[%s11 + $0xc] sm:$0xf]
        %v10010 = vld [vmem:[%s11 + $0x10] sm:$0xf]
        %v10011 = vld [vmem:[%s11 + $0x14] sm:$0xf]
        %v10012 = vld [vmem:[%s11 + $0x18] sm:$0xf]
        %v10013 = vld [vmem:[%s11 + $0x1c] sm:$0xf]
        %v10014 = vld [vmem:[%s11 + $0x20] sm:$0xf]
        %v10015 = vld [vmem:[%s11 + $0x24] sm:$0xf]
        %v10016 = vld [vmem:[%s11 + $0x28] sm:$0xf]
        %v10017 = vld [vmem:[%s11 + $0x2c] sm:$0xf]
        %v10018 = vld [vmem:[%s11 + $0x30] sm:$0xf]
        %v10019 = vld [vmem:[%s11 + $0x34] sm:$0xf]
        %v10020 = vld [vmem:[%s11 + $0x38] sm:$0xf]
        %v10021 = vld [vmem:[%s11 + $0x3c] sm:$0xf]
        %v10022 = vld [vmem:[%s442 + $0x8] sm:$0xff]
        %v10023 = vld [vmem:[%s442 + $0x20] sm:$0xff]
        %v10024 = vld [vmem:[%s442 + $0x38] sm:$0xff]
        %v10025 = vld [vmem:[%s442 + $0x50] sm:$0xff]
        %v10026 = vld [vmem:[%s442 + $0x68] sm:$0xff]
        %v10027 = vld [vmem:[%s442 + $0x80] sm:$0xff]
        %v10028 = vld [vmem:[%s442 + $0x98] sm:$0xff]
        %v10029 = vld [vmem:[%s442 + $0xb0] sm:$0xff]
        %v10030 = vld [vmem:[%s442 + $0xc8] sm:$0xff]
        %v10031 = vld [vmem:[%s442 + $0xe0] sm:$0xff]
        %v10032 = vld [vmem:[%s442 + $0xf8] sm:$0xff]
        %v10033 = vld [vmem:[%s442 + $0x110] sm:$0xff]
        %v10034 = vld [vmem:[%s442 + $0x128] sm:$0xff]
        %v10035 = vld [vmem:[%s442 + $0x140] sm:$0xff]
        %v10036 = vld [vmem:[%s442 + $0x158] sm:$0xff]
        %v10037 = vld [vmem:[%s442 + $0x170] sm:$0xff]
        %v10053 = vrot.slane %v10022, 7
        %v10054 = vrot.slane %v10023, 7
        %v10055 = vsel %vm1531, %v10053, %v10054
        %v10056 = vrot.slane %v10024, 7
        %v10057 = vsel %vm1531, %v10054, %v10056
        %v10058 = vrot.slane %v10025, 7
        %v10059 = vsel %vm1531, %v10056, %v10058
        %v10060 = vrot.slane %v10026, 7
        %v10061 = vsel %vm1531, %v10058, %v10060
        %v10062 = vrot.slane %v10027, 7
        %v10063 = vsel %vm1531, %v10060, %v10062
        %v10064 = vrot.slane %v10028, 7
        %v10065 = vsel %vm1531, %v10062, %v10064
        %v10066 = vrot.slane %v10029, 7
        %v10067 = vsel %vm1531, %v10064, %v10066
        %v10068 = vrot.slane %v10030, 7
        %v10069 = vsel %vm1531, %v10066, %v10068
        %v10070 = vrot.slane %v10031, 7
        %v10071 = vsel %vm1531, %v10068, %v10070
        %v10072 = vrot.slane %v10032, 7
        %v10073 = vsel %vm1531, %v10070, %v10072
        %v10074 = vrot.slane %v10033, 7
        %v10075 = vsel %vm1531, %v10072, %v10074
        %v10076 = vrot.slane %v10034, 7
        %v10077 = vsel %vm1531, %v10074, %v10076
        %v10078 = vrot.slane %v10035, 7
        %v10079 = vsel %vm1531, %v10076, %v10078
        %v10080 = vrot.slane %v10036, 7
        %v10081 = vsel %vm1531, %v10078, %v10080
        %v10097 = vsel %vm1531, 0.0, %v10053
        %v10098 = vmul.f32 %v10097, %v9070
        %v10099 = vmul.f32 %v10055, %v9075
        %v10100 = vmul.f32 %v10057, %v9080
        %v10101 = vmul.f32 %v10059, %v9085
        %v10102 = vmul.f32 %v10061, %v9090
        %v10103 = vmul.f32 %v10063, %v9095
        %v10104 = vmul.f32 %v10065, %v9100
        %v10105 = vmul.f32 %v10067, %v9105
        %v10106 = vmul.f32 %v10069, %v9110
        %v10107 = vmul.f32 %v10071, %v9115
        %v10108 = vmul.f32 %v10073, %v9120
        %v10109 = vmul.f32 %v10075, %v9125
        %v10110 = vmul.f32 %v10077, %v9130
        %v10111 = vmul.f32 %v10079, %v9135
        %v10112 = vmul.f32 %v10081, %v9140
        %v10113 = vadd.f32 %v10098, 0.0
        %v10114 = vadd.f32 %v10099, 0.0
        %v10115 = vadd.f32 %v10100, 0.0
        %v10116 = vadd.f32 %v10101, 0.0
        %v10117 = vadd.f32 %v10102, 0.0
        %v10118 = vadd.f32 %v10103, 0.0
        %v10119 = vadd.f32 %v10104, 0.0
        %v10120 = vadd.f32 %v10105, 0.0
        %v10121 = vadd.f32 %v10106, 0.0
        %v10122 = vadd.f32 %v10107, 0.0
        %v10123 = vadd.f32 %v10108, 0.0
        %v10124 = vadd.f32 %v10109, 0.0
        %v10125 = vadd.f32 %v10110, 0.0
        %v10126 = vadd.f32 %v10111, 0.0
        %v10127 = vadd.f32 %v10112, 0.0
        %v10128 = vmul.f32 %v10022, %v9180
        %v10129 = vmul.f32 %v10023, %v9184
        %v10130 = vmul.f32 %v10024, %v9188
        %v10131 = vmul.f32 %v10025, %v9192
        %v10132 = vmul.f32 %v10026, %v9196
        %v10133 = vmul.f32 %v10027, %v9200
        %v10134 = vmul.f32 %v10028, %v9204
        %v10135 = vmul.f32 %v10029, %v9208
        %v10136 = vmul.f32 %v10030, %v9212
        %v10137 = vmul.f32 %v10031, %v9216
        %v10138 = vmul.f32 %v10032, %v9220
        %v10139 = vmul.f32 %v10033, %v9224
        %v10140 = vmul.f32 %v10034, %v9228
        %v10141 = vmul.f32 %v10035, %v9232
        %v10142 = vmul.f32 %v10036, %v9236
        %v10143 = vadd.f32 %v10113, %v10128
        %v10144 = vadd.f32 %v10114, %v10129
        %v10145 = vadd.f32 %v10115, %v10130
        %v10146 = vadd.f32 %v10116, %v10131
        %v10147 = vadd.f32 %v10117, %v10132
        %v10148 = vadd.f32 %v10118, %v10133
        %v10149 = vadd.f32 %v10119, %v10134
        %v10150 = vadd.f32 %v10120, %v10135
        %v10151 = vadd.f32 %v10121, %v10136
        %v10152 = vadd.f32 %v10122, %v10137
        %v10153 = vadd.f32 %v10123, %v10138
        %v10154 = vadd.f32 %v10124, %v10139
        %v10155 = vadd.f32 %v10125, %v10140
        %v10156 = vadd.f32 %v10126, %v10141
        %v10157 = vadd.f32 %v10127, %v10142
        %v10159 = vrot.slane %v10022, 1
        %v10160 = vrot.slane %v10023, 1
        %v10161 = vsel %vm1834, %v10159, %v10160
        %v10162 = vrot.slane %v10024, 1
        %v10163 = vsel %vm1834, %v10160, %v10162
        %v10164 = vrot.slane %v10025, 1
        %v10165 = vsel %vm1834, %v10162, %v10164
        %v10166 = vrot.slane %v10026, 1
        %v10167 = vsel %vm1834, %v10164, %v10166
        %v10168 = vrot.slane %v10027, 1
        %v10169 = vsel %vm1834, %v10166, %v10168
        %v10170 = vrot.slane %v10028, 1
        %v10171 = vsel %vm1834, %v10168, %v10170
        %v10172 = vrot.slane %v10029, 1
        %v10173 = vsel %vm1834, %v10170, %v10172
        %v10174 = vrot.slane %v10030, 1
        %v10175 = vsel %vm1834, %v10172, %v10174
        %v10176 = vrot.slane %v10031, 1
        %v10177 = vsel %vm1834, %v10174, %v10176
        %v10178 = vrot.slane %v10032, 1
        %v10179 = vsel %vm1834, %v10176, %v10178
        %v10180 = vrot.slane %v10033, 1
        %v10181 = vsel %vm1834, %v10178, %v10180
        %v10182 = vrot.slane %v10034, 1
        %v10183 = vsel %vm1834, %v10180, %v10182
        %v10184 = vrot.slane %v10035, 1
        %v10185 = vsel %vm1834, %v10182, %v10184
        %v10186 = vrot.slane %v10036, 1
        %v10187 = vsel %vm1834, %v10184, %v10186
        %v10188 = vrot.slane %v10037, 1
        %v10189 = vsel %vm1834, %v10186, %v10188
        %v10206 = vsel %vm1834, 0.0, %v10159
        %v10207 = vmul.f32 %v10206, %v9321
        %v10208 = vmul.f32 %v10161, %v9325
        %v10209 = vmul.f32 %v10163, %v9329
        %v10210 = vmul.f32 %v10165, %v9333
        %v10211 = vmul.f32 %v10167, %v9337
        %v10212 = vmul.f32 %v10169, %v9341
        %v10213 = vmul.f32 %v10171, %v9345
        %v10214 = vmul.f32 %v10173, %v9349
        %v10215 = vmul.f32 %v10175, %v9353
        %v10216 = vmul.f32 %v10177, %v9357
        %v10217 = vmul.f32 %v10179, %v9361
        %v10218 = vmul.f32 %v10181, %v9365
        %v10219 = vmul.f32 %v10183, %v9369
        %v10220 = vmul.f32 %v10185, %v9373
        %v10221 = vmul.f32 %v10187, %v9377
        %v10222 = vmul.f32 %v10189, %v9381
        %v10223 = vadd.f32 %v9254, %v10207
        %v10224 = vadd.f32 %v10143, %v10208
        %v10225 = vadd.f32 %v10144, %v10209
        %v10226 = vadd.f32 %v10145, %v10210
        %v10227 = vadd.f32 %v10146, %v10211
        %v10228 = vadd.f32 %v10147, %v10212
        %v10229 = vadd.f32 %v10148, %v10213
        %v10230 = vadd.f32 %v10149, %v10214
        %v10231 = vadd.f32 %v10150, %v10215
        %v10232 = vadd.f32 %v10151, %v10216
        %v10233 = vadd.f32 %v10152, %v10217
        %v10234 = vadd.f32 %v10153, %v10218
        %v10235 = vadd.f32 %v10154, %v10219
        %v10236 = vadd.f32 %v10155, %v10220
        %v10237 = vadd.f32 %v10156, %v10221
        %v10238 = vadd.f32 %v10157, %v10222
        %v10239 = vrot.slane %v10037, 7
        %v10240 = vsel %vm1531, %v10080, %v10239
        %v10242 = vmul.f32 %v10097, %v9420
        %v10243 = vmul.f32 %v10055, %v9424
        %v10244 = vmul.f32 %v10057, %v9428
        %v10245 = vmul.f32 %v10059, %v9432
        %v10246 = vmul.f32 %v10061, %v9436
        %v10247 = vmul.f32 %v10063, %v9440
        %v10248 = vmul.f32 %v10065, %v9444
        %v10249 = vmul.f32 %v10067, %v9448
        %v10250 = vmul.f32 %v10069, %v9452
        %v10251 = vmul.f32 %v10071, %v9456
        %v10252 = vmul.f32 %v10073, %v9460
        %v10253 = vmul.f32 %v10075, %v9464
        %v10254 = vmul.f32 %v10077, %v9468
        %v10255 = vmul.f32 %v10079, %v9472
        %v10256 = vmul.f32 %v10081, %v9476
        %v10257 = vmul.f32 %v10240, %v9480
        %v10258 = vadd.f32 %v10223, %v10242
        %v10259 = vadd.f32 %v10224, %v10243
        %v10260 = vadd.f32 %v10225, %v10244
        %v10261 = vadd.f32 %v10226, %v10245
        %v10262 = vadd.f32 %v10227, %v10246
        %v10263 = vadd.f32 %v10228, %v10247
        %v10264 = vadd.f32 %v10229, %v10248
        %v10265 = vadd.f32 %v10230, %v10249
        %v10266 = vadd.f32 %v10231, %v10250
        %v10267 = vadd.f32 %v10232, %v10251
        %v10268 = vadd.f32 %v10233, %v10252
        %v10269 = vadd.f32 %v10234, %v10253
        %v10270 = vadd.f32 %v10235, %v10254
        %v10271 = vadd.f32 %v10236, %v10255
        %v10272 = vadd.f32 %v10237, %v10256
        %v10273 = vadd.f32 %v10238, %v10257
        %v10274 = vmul.f32 %v10022, %v9516
        %v10275 = vmul.f32 %v10023, %v9520
        %v10276 = vmul.f32 %v10024, %v9524
        %v10277 = vmul.f32 %v10025, %v9528
        %v10278 = vmul.f32 %v10026, %v9532
        %v10279 = vmul.f32 %v10027, %v9536
        %v10280 = vmul.f32 %v10028, %v9540
        %v10281 = vmul.f32 %v10029, %v9544
        %v10282 = vmul.f32 %v10030, %v9548
        %v10283 = vmul.f32 %v10031, %v9552
        %v10284 = vmul.f32 %v10032, %v9556
        %v10285 = vmul.f32 %v10033, %v9560
        %v10286 = vmul.f32 %v10034, %v9564
        %v10287 = vmul.f32 %v10035, %v9568
        %v10288 = vmul.f32 %v10036, %v9572
        %v10289 = vmul.f32 %v10037, %v9576
        %v10290 = vadd.f32 %v10258, %v10274
        %v10291 = vadd.f32 %v10259, %v10275
        %v10292 = vadd.f32 %v10260, %v10276
        %v10293 = vadd.f32 %v10261, %v10277
        %v10294 = vadd.f32 %v10262, %v10278
        %v10295 = vadd.f32 %v10263, %v10279
        %v10296 = vadd.f32 %v10264, %v10280
        %v10297 = vadd.f32 %v10265, %v10281
        %v10298 = vadd.f32 %v10266, %v10282
        %v10299 = vadd.f32 %v10267, %v10283
        %v10300 = vadd.f32 %v10268, %v10284
        %v10301 = vadd.f32 %v10269, %v10285
        %v10302 = vadd.f32 %v10270, %v10286
        %v10303 = vadd.f32 %v10271, %v10287
        %v10304 = vadd.f32 %v10272, %v10288
        %v10305 = vadd.f32 %v10273, %v10289
        %v10307 = vsel %vm1834, %v10188, 0.0
        %v10308 = vmul.f32 %v10161, %v9614
        %v10309 = vmul.f32 %v10163, %v9618
        %v10310 = vmul.f32 %v10165, %v9622
        %v10311 = vmul.f32 %v10167, %v9626
        %v10312 = vmul.f32 %v10169, %v9630
        %v10313 = vmul.f32 %v10171, %v9634
        %v10314 = vmul.f32 %v10173, %v9638
        %v10315 = vmul.f32 %v10175, %v9642
        %v10316 = vmul.f32 %v10177, %v9646
        %v10317 = vmul.f32 %v10179, %v9650
        %v10318 = vmul.f32 %v10181, %v9654
        %v10319 = vmul.f32 %v10183, %v9658
        %v10320 = vmul.f32 %v10185, %v9662
        %v10321 = vmul.f32 %v10187, %v9666
        %v10322 = vmul.f32 %v10189, %v9670
        %v10323 = vmul.f32 %v10307, %v9674
        %v10324 = vadd.f32 %v10290, %v10308
        %v10325 = vadd.f32 %v10291, %v10309
        %v10326 = vadd.f32 %v10292, %v10310
        %v10327 = vadd.f32 %v10293, %v10311
        %v10328 = vadd.f32 %v10294, %v10312
        %v10329 = vadd.f32 %v10295, %v10313
        %v10330 = vadd.f32 %v10296, %v10314
        %v10331 = vadd.f32 %v10297, %v10315
        %v10332 = vadd.f32 %v10298, %v10316
        %v10333 = vadd.f32 %v10299, %v10317
        %v10334 = vadd.f32 %v10300, %v10318
        %v10335 = vadd.f32 %v10301, %v10319
        %v10336 = vadd.f32 %v10302, %v10320
        %v10337 = vadd.f32 %v10303, %v10321
        %v10338 = vadd.f32 %v10304, %v10322
        %v10339 = vadd.f32 %v10305, %v10323
        %v10341 = vsel %vm1531, %v10239, 0.0
        %v10342 = vmul.f32 %v10055, %v9712
        %v10343 = vmul.f32 %v10057, %v9716
        %v10344 = vmul.f32 %v10059, %v9720
        %v10345 = vmul.f32 %v10061, %v9724
        %v10346 = vmul.f32 %v10063, %v9728
        %v10347 = vmul.f32 %v10065, %v9732
        %v10348 = vmul.f32 %v10067, %v9736
        %v10349 = vmul.f32 %v10069, %v9740
        %v10350 = vmul.f32 %v10071, %v9744
        %v10351 = vmul.f32 %v10073, %v9748
        %v10352 = vmul.f32 %v10075, %v9752
        %v10353 = vmul.f32 %v10077, %v9756
        %v10354 = vmul.f32 %v10079, %v9760
        %v10355 = vmul.f32 %v10081, %v9764
        %v10356 = vmul.f32 %v10240, %v9768
        %v10357 = vmul.f32 %v10341, %v9772
        %v10358 = vadd.f32 %v10324, %v10342
        %v10359 = vadd.f32 %v10325, %v10343
        %v10360 = vadd.f32 %v10326, %v10344
        %v10361 = vadd.f32 %v10327, %v10345
        %v10362 = vadd.f32 %v10328, %v10346
        %v10363 = vadd.f32 %v10329, %v10347
        %v10364 = vadd.f32 %v10330, %v10348
        %v10365 = vadd.f32 %v10331, %v10349
        %v10366 = vadd.f32 %v10332, %v10350
        %v10367 = vadd.f32 %v10333, %v10351
        %v10368 = vadd.f32 %v10334, %v10352
        %v10369 = vadd.f32 %v10335, %v10353
        %v10370 = vadd.f32 %v10336, %v10354
        %v10371 = vadd.f32 %v10337, %v10355
        %v10372 = vadd.f32 %v10338, %v10356
        %v10373 = vadd.f32 %v10339, %v10357
        %v10374 = vmul.f32 %v10023, %v9808
        %v10375 = vmul.f32 %v10024, %v9812
        %v10376 = vmul.f32 %v10025, %v9816
        %v10377 = vmul.f32 %v10026, %v9820
        %v10378 = vmul.f32 %v10027, %v9824
        %v10379 = vmul.f32 %v10028, %v9828
        %v10380 = vmul.f32 %v10029, %v9832
        %v10381 = vmul.f32 %v10030, %v9836
        %v10382 = vmul.f32 %v10031, %v9840
        %v10383 = vmul.f32 %v10032, %v9844
        %v10384 = vmul.f32 %v10033, %v9848
        %v10385 = vmul.f32 %v10034, %v9852
        %v10386 = vmul.f32 %v10035, %v9856
        %v10387 = vmul.f32 %v10036, %v9860
        %v10388 = vmul.f32 %v10037, %v9864
        %v10389 = vadd.f32 %v10358, %v10374
        %v10390 = vadd.f32 %v10359, %v10375
        %v10391 = vadd.f32 %v10360, %v10376
        %v10392 = vadd.f32 %v10361, %v10377
        %v10393 = vadd.f32 %v10362, %v10378
        %v10394 = vadd.f32 %v10363, %v10379
        %v10395 = vadd.f32 %v10364, %v10380
        %v10396 = vadd.f32 %v10365, %v10381
        %v10397 = vadd.f32 %v10366, %v10382
        %v10398 = vadd.f32 %v10367, %v10383
        %v10399 = vadd.f32 %v10368, %v10384
        %v10400 = vadd.f32 %v10369, %v10385
        %v10401 = vadd.f32 %v10370, %v10386
        %v10402 = vadd.f32 %v10371, %v10387
        %v10403 = vadd.f32 %v10372, %v10388
        %v10404 = vadd.f32 %v10373, %v9885
        %v10405 = vmul.f32 %v10163, %v9904
        %v10406 = vmul.f32 %v10165, %v9908
        %v10407 = vmul.f32 %v10167, %v9912
        %v10408 = vmul.f32 %v10169, %v9916
        %v10409 = vmul.f32 %v10171, %v9920
        %v10410 = vmul.f32 %v10173, %v9924
        %v10411 = vmul.f32 %v10175, %v9928
        %v10412 = vmul.f32 %v10177, %v9932
        %v10413 = vmul.f32 %v10179, %v9936
        %v10414 = vmul.f32 %v10181, %v9940
        %v10415 = vmul.f32 %v10183, %v9944
        %v10416 = vmul.f32 %v10185, %v9948
        %v10417 = vmul.f32 %v10187, %v9952
        %v10418 = vmul.f32 %v10189, %v9956
        %v10419 = vmul.f32 %v10307, %v9960
        %v10420 = vadd.f32 %v10389, %v10405
        %v10421 = vadd.f32 %v10390, %v10406
        %v10422 = vadd.f32 %v10391, %v10407
        %v10423 = vadd.f32 %v10392, %v10408
        %v10424 = vadd.f32 %v10393, %v10409
        %v10425 = vadd.f32 %v10394, %v10410
        %v10426 = vadd.f32 %v10395, %v10411
        %v10427 = vadd.f32 %v10396, %v10412
        %v10428 = vadd.f32 %v10397, %v10413
        %v10429 = vadd.f32 %v10398, %v10414
        %v10430 = vadd.f32 %v10399, %v10415
        %v10431 = vadd.f32 %v10400, %v10416
        %v10432 = vadd.f32 %v10401, %v10417
        %v10433 = vadd.f32 %v10402, %v10418
        %v10434 = vadd.f32 %v10403, %v10419
        %v10435 = vadd.f32 %v10404, %v9981
        %v10436 = vpack.c.bf16 %v10421, %v10420
        %v10437 = vpack.c.bf16 %v10423, %v10422
        %v10438 = vpack.c.bf16 %v10425, %v10424
        %v10439 = vpack.c.bf16 %v10427, %v10426
        %v10440 = vpack.c.bf16 %v10429, %v10428
        %v10441 = vpack.c.bf16 %v10431, %v10430
        %v10442 = vpack.c.bf16 %v10433, %v10432
        %v10443 = vpack.c.bf16 %v10435, %v10434
        %v10444 = vld [vmem:[%s11 + $0x40] sm:$0xf]
        %v10445 = vld [vmem:[%s11 + $0x44] sm:$0xf]
        %v10446 = vld [vmem:[%s11 + $0x48] sm:$0xf]
        %v10447 = vld [vmem:[%s11 + $0x4c] sm:$0xf]
        %v10448 = vld [vmem:[%s11 + $0x50] sm:$0xf]
        %v10449 = vld [vmem:[%s11 + $0x54] sm:$0xf]
        %v10450 = vld [vmem:[%s11 + $0x58] sm:$0xf]
        %v10451 = vld [vmem:[%s11 + $0x5c] sm:$0xf]
        %v10452 = vld [vmem:[%s11 + $0x60] sm:$0xf]
        %v10453 = vld [vmem:[%s11 + $0x64] sm:$0xf]
        %v10454 = vld [vmem:[%s11 + $0x68] sm:$0xf]
        %v10455 = vld [vmem:[%s11 + $0x6c] sm:$0xf]
        %v10456 = vld [vmem:[%s11 + $0x70] sm:$0xf]
        %v10457 = vld [vmem:[%s11 + $0x74] sm:$0xf]
        %v10458 = vld [vmem:[%s11 + $0x78] sm:$0xf]
        %v10459 = vld [vmem:[%s11 + $0x7c] sm:$0xf]
        %v10476 = vunpack.c.l.b16 %v10444
        %v10477 = vunpack.c.l.b16 %v10445
        %v10478 = vunpack.c.l.b16 %v10446
        %v10479 = vunpack.c.l.b16 %v10447
        %v10480 = vunpack.c.l.b16 %v10448
        %v10481 = vunpack.c.l.b16 %v10449
        %v10482 = vunpack.c.l.b16 %v10450
        %v10483 = vunpack.c.l.b16 %v10451
        %v10484 = vunpack.c.l.b16 %v10452
        %v10485 = vunpack.c.l.b16 %v10453
        %v10486 = vunpack.c.l.b16 %v10454
        %v10487 = vunpack.c.l.b16 %v10455
        %v10488 = vunpack.c.l.b16 %v10456
        %v10489 = vunpack.c.l.b16 %v10457
        %v10490 = vunpack.c.l.b16 %v10458
        %v10491 = vunpack.c.l.b16 %v10459
        %v10492 = vpack.c.b16 %v10477, %v10476
        %v10493 = vpack.c.b16 %v10479, %v10478
        %v10494 = vpack.c.b16 %v10481, %v10480
        %v10495 = vpack.c.b16 %v10483, %v10482
        %v10496 = vpack.c.b16 %v10485, %v10484
        %v10497 = vpack.c.b16 %v10487, %v10486
        %v10498 = vpack.c.b16 %v10489, %v10488
        %v10499 = vpack.c.b16 %v10491, %v10490
        %10508 = vmatprep.subr.bf16.mxu0 0
        %10509 = vmatpush1.bf16.msra.mxu0 %v10492
        %10510 = vmatprep.subr.bf16.mxu0 0
        %10511 = vmatpush1.bf16.msra.mxu0 %v10493
        %10512 = vmatprep.subr.bf16.mxu0 0
        %10513 = vmatpush1.bf16.msra.mxu0 %v10494
        %10514 = vmatprep.subr.bf16.mxu0 0
        %10515 = vmatpush1.bf16.msra.mxu0 %v10495
        %10516 = vmatprep.subr.bf16.mxu0 0
        %10517 = vmatpush1.bf16.msra.mxu0 %v10496
        %10518 = vmatprep.subr.bf16.mxu0 0
        %10519 = vmatpush1.bf16.msra.mxu0 %v10497
        %10520 = vmatprep.subr.bf16.mxu0 0
        %10521 = vmatpush1.bf16.msra.mxu0 %v10498
        %10522 = vmatprep.subr.bf16.mxu0 0
        %10523 = vmatpush1.bf16.msra.mxu0 %v10499
        %10524 = vmatprep.subr.bf16.mxu0 0
        %10525 = vmatpush1.bf16.msra.mxu0 0
        %10526 = vmatprep.subr.bf16.mxu0 0
        %10527 = vmatpush1.bf16.msra.mxu0 0
        %10528 = vmatprep.subr.bf16.mxu0 0
        %10529 = vmatpush1.bf16.msra.mxu0 0
        %10530 = vmatprep.subr.bf16.mxu0 0
        %10531 = vmatpush1.bf16.msra.mxu0 0
        %10532 = vmatprep.subr.bf16.mxu0 0
        %10533 = vmatpush1.bf16.msra.mxu0 0
        %10534 = vmatprep.subr.bf16.mxu0 0
        %10535 = vmatpush1.bf16.msra.mxu0 0
        %10536 = vmatprep.subr.bf16.mxu0 0
        %10537 = vmatpush1.bf16.msra.mxu0 0
        %10538 = vmatprep.subr.bf16.mxu0 0
        %10539 = vmatpush1.bf16.msra.mxu0 0
        %10540 = vmatprep.mubr.bf16.mxu0 0
        %10541 = vmatmul.mubr.bf16.gmra.mrb[0].mxu0 %v10436
        %v10542 = vpop.f32.mrb[0].mxu0
        %v10543 = vadd.f32 0.0, %v10542
        %v10544 = vpop.f32.mrb[0].mxu0
        %v10545 = vpop.f32.mrb[0].mxu0
        %v10546 = vadd.f32 0.0, %v10545
        %v10547 = vpop.f32.mrb[0].mxu0
        %10548 = vmatprep.mubr.bf16.mxu0 0
        %10549 = vmatmul.mubr.bf16.gmra.mrb[0].mxu0 %v10437
        %v10550 = vpop.f32.mrb[0].mxu0
        %v10551 = vadd.f32 0.0, %v10550
        %v10552 = vpop.f32.mrb[0].mxu0
        %v10553 = vpop.f32.mrb[0].mxu0
        %v10554 = vadd.f32 0.0, %v10553
        %v10555 = vpop.f32.mrb[0].mxu0
        %10556 = vmatprep.mubr.bf16.mxu0 0
        %10557 = vmatmul.mubr.bf16.gmra.mrb[0].mxu0 %v10438
        %v10558 = vpop.f32.mrb[0].mxu0
        %v10559 = vadd.f32 0.0, %v10558
        %v10560 = vpop.f32.mrb[0].mxu0
        %v10561 = vpop.f32.mrb[0].mxu0
        %v10562 = vadd.f32 0.0, %v10561
        %v10563 = vpop.f32.mrb[0].mxu0
        %10564 = vmatprep.mubr.bf16.mxu0 0
        %10565 = vmatmul.mubr.bf16.gmra.mrb[0].mxu0 %v10439
        %v10566 = vpop.f32.mrb[0].mxu0
        %v10567 = vadd.f32 0.0, %v10566
        %v10568 = vpop.f32.mrb[0].mxu0
        %v10569 = vpop.f32.mrb[0].mxu0
        %v10570 = vadd.f32 0.0, %v10569
        %v10571 = vpop.f32.mrb[0].mxu0
        %10572 = vmatprep.mubr.bf16.mxu0 0
        %10573 = vmatmul.mubr.bf16.gmra.mrb[0].mxu0 %v10440
        %v10574 = vpop.f32.mrb[0].mxu0
        %v10575 = vadd.f32 0.0, %v10574
        %v10576 = vpop.f32.mrb[0].mxu0
        %v10577 = vpop.f32.mrb[0].mxu0
        %v10578 = vadd.f32 0.0, %v10577
        %v10579 = vpop.f32.mrb[0].mxu0
        %10580 = vmatprep.mubr.bf16.mxu0 0
        %10581 = vmatmul.mubr.bf16.gmra.mrb[0].mxu0 %v10441
        %v10582 = vpop.f32.mrb[0].mxu0
        %v10583 = vadd.f32 0.0, %v10582
        %v10584 = vpop.f32.mrb[0].mxu0
        %v10585 = vpop.f32.mrb[0].mxu0
        %v10586 = vadd.f32 0.0, %v10585
        %v10587 = vpop.f32.mrb[0].mxu0
        %10588 = vmatprep.mubr.bf16.mxu0 0
        %10589 = vmatmul.mubr.bf16.gmra.mrb[0].mxu0 %v10442
        %v10590 = vpop.f32.mrb[0].mxu0
        %v10591 = vadd.f32 0.0, %v10590
        %v10592 = vpop.f32.mrb[0].mxu0
        %v10593 = vpop.f32.mrb[0].mxu0
        %v10594 = vadd.f32 0.0, %v10593
        %v10595 = vpop.f32.mrb[0].mxu0
        %10596 = vmatprep.mubr.bf16.mxu0 0
        %10597 = vmatmul.mubr.bf16.gmra.mrb[0].mxu0 %v10443
        %v10598 = vpop.f32.mrb[0].mxu0
        %v10599 = vadd.f32 0.0, %v10598
        %v10600 = vpop.f32.mrb[0].mxu0
        %v10601 = vpop.f32.mrb[0].mxu0
        %v10602 = vadd.f32 0.0, %v10601
        %v10603 = vpop.f32.mrb[0].mxu0
        %10604 = vdwg.mxu0
        %v10621 = vunpack.c.l.b16 %v10006
        %v10622 = vunpack.c.l.b16 %v10007
        %v10623 = vunpack.c.l.b16 %v10008
        %v10624 = vunpack.c.l.b16 %v10009
        %v10625 = vunpack.c.l.b16 %v10010
        %v10626 = vunpack.c.l.b16 %v10011
        %v10627 = vunpack.c.l.b16 %v10012
        %v10628 = vunpack.c.l.b16 %v10013
        %v10629 = vunpack.c.l.b16 %v10014
        %v10630 = vunpack.c.l.b16 %v10015
        %v10631 = vunpack.c.l.b16 %v10016
        %v10632 = vunpack.c.l.b16 %v10017
        %v10633 = vunpack.c.l.b16 %v10018
        %v10634 = vunpack.c.l.b16 %v10019
        %v10635 = vunpack.c.l.b16 %v10020
        %v10636 = vunpack.c.l.b16 %v10021
        %v10637 = vpack.c.b16 %v10622, %v10621
        %v10638 = vpack.c.b16 %v10624, %v10623
        %v10639 = vpack.c.b16 %v10626, %v10625
        %v10640 = vpack.c.b16 %v10628, %v10627
        %v10641 = vpack.c.b16 %v10630, %v10629
        %v10642 = vpack.c.b16 %v10632, %v10631
        %v10643 = vpack.c.b16 %v10634, %v10633
        %v10644 = vpack.c.b16 %v10636, %v10635
        %10653 = vmatprep.subr.bf16.mxu0 0
        %10654 = vmatpush1.bf16.msra.mxu0 %v10637
        %10655 = vmatprep.subr.bf16.mxu0 0
        %10656 = vmatpush1.bf16.msra.mxu0 %v10638
        %10657 = vmatprep.subr.bf16.mxu0 0
        %10658 = vmatpush1.bf16.msra.mxu0 %v10639
        %10659 = vmatprep.subr.bf16.mxu0 0
        %10660 = vmatpush1.bf16.msra.mxu0 %v10640
        %10661 = vmatprep.subr.bf16.mxu0 0
        %10662 = vmatpush1.bf16.msra.mxu0 %v10641
        %10663 = vmatprep.subr.bf16.mxu0 0
        %10664 = vmatpush1.bf16.msra.mxu0 %v10642
        %10665 = vmatprep.subr.bf16.mxu0 0
        %10666 = vmatpush1.bf16.msra.mxu0 %v10643
        %10667 = vmatprep.subr.bf16.mxu0 0
        %10668 = vmatpush1.bf16.msra.mxu0 %v10644
        %10669 = vmatprep.subr.bf16.mxu0 0
        %10670 = vmatpush1.bf16.msra.mxu0 0
        %10671 = vmatprep.subr.bf16.mxu0 0
        %10672 = vmatpush1.bf16.msra.mxu0 0
        %10673 = vmatprep.subr.bf16.mxu0 0
        %10674 = vmatpush1.bf16.msra.mxu0 0
        %10675 = vmatprep.subr.bf16.mxu0 0
        %10676 = vmatpush1.bf16.msra.mxu0 0
        %10677 = vmatprep.subr.bf16.mxu0 0
        %10678 = vmatpush1.bf16.msra.mxu0 0
        %10679 = vmatprep.subr.bf16.mxu0 0
        %10680 = vmatpush1.bf16.msra.mxu0 0
        %10681 = vmatprep.subr.bf16.mxu0 0
        %10682 = vmatpush1.bf16.msra.mxu0 0
        %10683 = vmatprep.subr.bf16.mxu0 0
        %10684 = vmatpush1.bf16.msra.mxu0 0
        %10685 = vmatprep.mubr.bf16.mxu0 0
        %10686 = vmatmul.mubr.bf16.gmra.mrb[0].mxu0 %v9998
        %v10687 = vpop.f32.mrb[0].mxu0
        %v10688 = vadd.f32 %v10543, %v10687
        %v10689 = vpop.f32.mrb[0].mxu0
        %v10690 = vpop.f32.mrb[0].mxu0
        %v10691 = vadd.f32 %v10546, %v10690
        %v10692 = vpop.f32.mrb[0].mxu0
        %10693 = vmatprep.mubr.bf16.mxu0 0
        %10694 = vmatmul.mubr.bf16.gmra.mrb[0].mxu0 %v9999
        %v10695 = vpop.f32.mrb[0].mxu0
        %v10696 = vadd.f32 %v10551, %v10695
        %v10697 = vpop.f32.mrb[0].mxu0
        %v10698 = vpop.f32.mrb[0].mxu0
        %v10699 = vadd.f32 %v10554, %v10698
        %v10700 = vpop.f32.mrb[0].mxu0
        %10701 = vmatprep.mubr.bf16.mxu0 0
        %10702 = vmatmul.mubr.bf16.gmra.mrb[0].mxu0 %v10000
        %v10703 = vpop.f32.mrb[0].mxu0
        %v10704 = vadd.f32 %v10559, %v10703
        %v10705 = vpop.f32.mrb[0].mxu0
        %v10706 = vpop.f32.mrb[0].mxu0
        %v10707 = vadd.f32 %v10562, %v10706
        %v10708 = vpop.f32.mrb[0].mxu0
        %10709 = vmatprep.mubr.bf16.mxu0 0
        %10710 = vmatmul.mubr.bf16.gmra.mrb[0].mxu0 %v10001
        %v10711 = vpop.f32.mrb[0].mxu0
        %v10712 = vadd.f32 %v10567, %v10711
        %v10713 = vpop.f32.mrb[0].mxu0
        %v10714 = vpop.f32.mrb[0].mxu0
        %v10715 = vadd.f32 %v10570, %v10714
        %v10716 = vpop.f32.mrb[0].mxu0
        %10717 = vmatprep.mubr.bf16.mxu0 0
        %10718 = vmatmul.mubr.bf16.gmra.mrb[0].mxu0 %v10002
        %v10719 = vpop.f32.mrb[0].mxu0
        %v10720 = vadd.f32 %v10575, %v10719
        %v10721 = vpop.f32.mrb[0].mxu0
        %v10722 = vpop.f32.mrb[0].mxu0
        %v10723 = vadd.f32 %v10578, %v10722
        %v10724 = vpop.f32.mrb[0].mxu0
        %10725 = vmatprep.mubr.bf16.mxu0 0
        %10726 = vmatmul.mubr.bf16.gmra.mrb[0].mxu0 %v10003
        %v10727 = vpop.f32.mrb[0].mxu0
        %v10728 = vadd.f32 %v10583, %v10727
        %v10729 = vpop.f32.mrb[0].mxu0
        %v10730 = vpop.f32.mrb[0].mxu0
        %v10731 = vadd.f32 %v10586, %v10730
        %v10732 = vpop.f32.mrb[0].mxu0
        %10733 = vmatprep.mubr.bf16.mxu0 0
        %10734 = vmatmul.mubr.bf16.gmra.mrb[0].mxu0 %v10004
        %v10735 = vpop.f32.mrb[0].mxu0
        %v10736 = vadd.f32 %v10591, %v10735
        %v10737 = vpop.f32.mrb[0].mxu0
        %v10738 = vpop.f32.mrb[0].mxu0
        %v10739 = vadd.f32 %v10594, %v10738
        %v10740 = vpop.f32.mrb[0].mxu0
        %10741 = vmatprep.mubr.bf16.mxu0 0
        %10742 = vmatmul.mubr.bf16.gmra.mrb[0].mxu0 %v10005
        %v10743 = vpop.f32.mrb[0].mxu0
        %v10744 = vadd.f32 %v10599, %v10743
        %v10745 = vpop.f32.mrb[0].mxu0
        %v10746 = vpop.f32.mrb[0].mxu0
        %v10747 = vadd.f32 %v10602, %v10746
        %v10748 = vpop.f32.mrb[0].mxu0
        %10749 = vdwg.mxu0
        %v10750 = vld [vmem:[%s442 + $0x10] sm:$0xff]
        %v10751 = vld [vmem:[%s442 + $0x28] sm:$0xff]
        %v10752 = vld [vmem:[%s442 + $0x40] sm:$0xff]
        %v10753 = vld [vmem:[%s442 + $0x58] sm:$0xff]
        %v10754 = vld [vmem:[%s442 + $0x70] sm:$0xff]
        %v10755 = vld [vmem:[%s442 + $0x88] sm:$0xff]
        %v10756 = vld [vmem:[%s442 + $0xa0] sm:$0xff]
        %v10757 = vld [vmem:[%s442 + $0xb8] sm:$0xff]
        %v10758 = vld [vmem:[%s442 + $0xd0] sm:$0xff]
        %v10759 = vld [vmem:[%s442 + $0xe8] sm:$0xff]
        %v10760 = vld [vmem:[%s442 + $0x100] sm:$0xff]
        %v10761 = vld [vmem:[%s442 + $0x118] sm:$0xff]
        %v10762 = vld [vmem:[%s442 + $0x130] sm:$0xff]
        %v10763 = vld [vmem:[%s442 + $0x148] sm:$0xff]
        %v10764 = vld [vmem:[%s442 + $0x160] sm:$0xff]
        %v10765 = vld [vmem:[%s442 + $0x178] sm:$0xff]
        %v10781 = vrot.slane %v10750, 7
        %v10782 = vrot.slane %v10751, 7
        %v10783 = vsel %vm1531, %v10781, %v10782
        %v10784 = vrot.slane %v10752, 7
        %v10785 = vsel %vm1531, %v10782, %v10784
        %v10786 = vrot.slane %v10753, 7
        %v10787 = vsel %vm1531, %v10784, %v10786
        %v10788 = vrot.slane %v10754, 7
        %v10789 = vsel %vm1531, %v10786, %v10788
        %v10790 = vrot.slane %v10755, 7
        %v10791 = vsel %vm1531, %v10788, %v10790
        %v10792 = vrot.slane %v10756, 7
        %v10793 = vsel %vm1531, %v10790, %v10792
        %v10794 = vrot.slane %v10757, 7
        %v10795 = vsel %vm1531, %v10792, %v10794
        %v10796 = vrot.slane %v10758, 7
        %v10797 = vsel %vm1531, %v10794, %v10796
        %v10798 = vrot.slane %v10759, 7
        %v10799 = vsel %vm1531, %v10796, %v10798
        %v10800 = vrot.slane %v10760, 7
        %v10801 = vsel %vm1531, %v10798, %v10800
        %v10802 = vrot.slane %v10761, 7
        %v10803 = vsel %vm1531, %v10800, %v10802
        %v10804 = vrot.slane %v10762, 7
        %v10805 = vsel %vm1531, %v10802, %v10804
        %v10806 = vrot.slane %v10763, 7
        %v10807 = vsel %vm1531, %v10804, %v10806
        %v10808 = vrot.slane %v10764, 7
        %v10809 = vsel %vm1531, %v10806, %v10808
        %v10825 = vsel %vm1531, 0.0, %v10781
        %v10826 = vmul.f32 %v10825, %v9070
        %v10827 = vmul.f32 %v10783, %v9075
        %v10828 = vmul.f32 %v10785, %v9080
        %v10829 = vmul.f32 %v10787, %v9085
        %v10830 = vmul.f32 %v10789, %v9090
        %v10831 = vmul.f32 %v10791, %v9095
        %v10832 = vmul.f32 %v10793, %v9100
        %v10833 = vmul.f32 %v10795, %v9105
        %v10834 = vmul.f32 %v10797, %v9110
        %v10835 = vmul.f32 %v10799, %v9115
        %v10836 = vmul.f32 %v10801, %v9120
        %v10837 = vmul.f32 %v10803, %v9125
        %v10838 = vmul.f32 %v10805, %v9130
        %v10839 = vmul.f32 %v10807, %v9135
        %v10840 = vmul.f32 %v10809, %v9140
        %v10841 = vadd.f32 %v10826, 0.0
        %v10842 = vadd.f32 %v10827, 0.0
        %v10843 = vadd.f32 %v10828, 0.0
        %v10844 = vadd.f32 %v10829, 0.0
        %v10845 = vadd.f32 %v10830, 0.0
        %v10846 = vadd.f32 %v10831, 0.0
        %v10847 = vadd.f32 %v10832, 0.0
        %v10848 = vadd.f32 %v10833, 0.0
        %v10849 = vadd.f32 %v10834, 0.0
        %v10850 = vadd.f32 %v10835, 0.0
        %v10851 = vadd.f32 %v10836, 0.0
        %v10852 = vadd.f32 %v10837, 0.0
        %v10853 = vadd.f32 %v10838, 0.0
        %v10854 = vadd.f32 %v10839, 0.0
        %v10855 = vadd.f32 %v10840, 0.0
        %v10856 = vmul.f32 %v10750, %v9180
        %v10857 = vmul.f32 %v10751, %v9184
        %v10858 = vmul.f32 %v10752, %v9188
        %v10859 = vmul.f32 %v10753, %v9192
        %v10860 = vmul.f32 %v10754, %v9196
        %v10861 = vmul.f32 %v10755, %v9200
        %v10862 = vmul.f32 %v10756, %v9204
        %v10863 = vmul.f32 %v10757, %v9208
        %v10864 = vmul.f32 %v10758, %v9212
        %v10865 = vmul.f32 %v10759, %v9216
        %v10866 = vmul.f32 %v10760, %v9220
        %v10867 = vmul.f32 %v10761, %v9224
        %v10868 = vmul.f32 %v10762, %v9228
        %v10869 = vmul.f32 %v10763, %v9232
        %v10870 = vmul.f32 %v10764, %v9236
        %v10871 = vadd.f32 %v10841, %v10856
        %v10872 = vadd.f32 %v10842, %v10857
        %v10873 = vadd.f32 %v10843, %v10858
        %v10874 = vadd.f32 %v10844, %v10859
        %v10875 = vadd.f32 %v10845, %v10860
        %v10876 = vadd.f32 %v10846, %v10861
        %v10877 = vadd.f32 %v10847, %v10862
        %v10878 = vadd.f32 %v10848, %v10863
        %v10879 = vadd.f32 %v10849, %v10864
        %v10880 = vadd.f32 %v10850, %v10865
        %v10881 = vadd.f32 %v10851, %v10866
        %v10882 = vadd.f32 %v10852, %v10867
        %v10883 = vadd.f32 %v10853, %v10868
        %v10884 = vadd.f32 %v10854, %v10869
        %v10885 = vadd.f32 %v10855, %v10870
        %v10887 = vrot.slane %v10750, 1
        %v10888 = vrot.slane %v10751, 1
        %v10889 = vsel %vm1834, %v10887, %v10888
        %v10890 = vrot.slane %v10752, 1
        %v10891 = vsel %vm1834, %v10888, %v10890
        %v10892 = vrot.slane %v10753, 1
        %v10893 = vsel %vm1834, %v10890, %v10892
        %v10894 = vrot.slane %v10754, 1
        %v10895 = vsel %vm1834, %v10892, %v10894
        %v10896 = vrot.slane %v10755, 1
        %v10897 = vsel %vm1834, %v10894, %v10896
        %v10898 = vrot.slane %v10756, 1
        %v10899 = vsel %vm1834, %v10896, %v10898
        %v10900 = vrot.slane %v10757, 1
        %v10901 = vsel %vm1834, %v10898, %v10900
        %v10902 = vrot.slane %v10758, 1
        %v10903 = vsel %vm1834, %v10900, %v10902
        %v10904 = vrot.slane %v10759, 1
        %v10905 = vsel %vm1834, %v10902, %v10904
        %v10906 = vrot.slane %v10760, 1
        %v10907 = vsel %vm1834, %v10904, %v10906
        %v10908 = vrot.slane %v10761, 1
        %v10909 = vsel %vm1834, %v10906, %v10908
        %v10910 = vrot.slane %v10762, 1
        %v10911 = vsel %vm1834, %v10908, %v10910
        %v10912 = vrot.slane %v10763, 1
        %v10913 = vsel %vm1834, %v10910, %v10912
        %v10914 = vrot.slane %v10764, 1
        %v10915 = vsel %vm1834, %v10912, %v10914
        %v10916 = vrot.slane %v10765, 1
        %v10917 = vsel %vm1834, %v10914, %v10916
        %v10934 = vsel %vm1834, 0.0, %v10887
        %v10935 = vmul.f32 %v10934, %v9321
        %v10936 = vmul.f32 %v10889, %v9325
        %v10937 = vmul.f32 %v10891, %v9329
        %v10938 = vmul.f32 %v10893, %v9333
        %v10939 = vmul.f32 %v10895, %v9337
        %v10940 = vmul.f32 %v10897, %v9341
        %v10941 = vmul.f32 %v10899, %v9345
        %v10942 = vmul.f32 %v10901, %v9349
        %v10943 = vmul.f32 %v10903, %v9353
        %v10944 = vmul.f32 %v10905, %v9357
        %v10945 = vmul.f32 %v10907, %v9361
        %v10946 = vmul.f32 %v10909, %v9365
        %v10947 = vmul.f32 %v10911, %v9369
        %v10948 = vmul.f32 %v10913, %v9373
        %v10949 = vmul.f32 %v10915, %v9377
        %v10950 = vmul.f32 %v10917, %v9381
        %v10951 = vadd.f32 %v9254, %v10935
        %v10952 = vadd.f32 %v10871, %v10936
        %v10953 = vadd.f32 %v10872, %v10937
        %v10954 = vadd.f32 %v10873, %v10938
        %v10955 = vadd.f32 %v10874, %v10939
        %v10956 = vadd.f32 %v10875, %v10940
        %v10957 = vadd.f32 %v10876, %v10941
        %v10958 = vadd.f32 %v10877, %v10942
        %v10959 = vadd.f32 %v10878, %v10943
        %v10960 = vadd.f32 %v10879, %v10944
        %v10961 = vadd.f32 %v10880, %v10945
        %v10962 = vadd.f32 %v10881, %v10946
        %v10963 = vadd.f32 %v10882, %v10947
        %v10964 = vadd.f32 %v10883, %v10948
        %v10965 = vadd.f32 %v10884, %v10949
        %v10966 = vadd.f32 %v10885, %v10950
        %v10967 = vrot.slane %v10765, 7
        %v10968 = vsel %vm1531, %v10808, %v10967
        %v10970 = vmul.f32 %v10825, %v9420
        %v10971 = vmul.f32 %v10783, %v9424
        %v10972 = vmul.f32 %v10785, %v9428
        %v10973 = vmul.f32 %v10787, %v9432
        %v10974 = vmul.f32 %v10789, %v9436
        %v10975 = vmul.f32 %v10791, %v9440
        %v10976 = vmul.f32 %v10793, %v9444
        %v10977 = vmul.f32 %v10795, %v9448
        %v10978 = vmul.f32 %v10797, %v9452
        %v10979 = vmul.f32 %v10799, %v9456
        %v10980 = vmul.f32 %v10801, %v9460
        %v10981 = vmul.f32 %v10803, %v9464
        %v10982 = vmul.f32 %v10805, %v9468
        %v10983 = vmul.f32 %v10807, %v9472
        %v10984 = vmul.f32 %v10809, %v9476
        %v10985 = vmul.f32 %v10968, %v9480
        %v10986 = vadd.f32 %v10951, %v10970
        %v10987 = vadd.f32 %v10952, %v10971
        %v10988 = vadd.f32 %v10953, %v10972
        %v10989 = vadd.f32 %v10954, %v10973
        %v10990 = vadd.f32 %v10955, %v10974
        %v10991 = vadd.f32 %v10956, %v10975
        %v10992 = vadd.f32 %v10957, %v10976
        %v10993 = vadd.f32 %v10958, %v10977
        %v10994 = vadd.f32 %v10959, %v10978
        %v10995 = vadd.f32 %v10960, %v10979
        %v10996 = vadd.f32 %v10961, %v10980
        %v10997 = vadd.f32 %v10962, %v10981
        %v10998 = vadd.f32 %v10963, %v10982
        %v10999 = vadd.f32 %v10964, %v10983
        %v11000 = vadd.f32 %v10965, %v10984
        %v11001 = vadd.f32 %v10966, %v10985
        %v11002 = vmul.f32 %v10750, %v9516
        %v11003 = vmul.f32 %v10751, %v9520
        %v11004 = vmul.f32 %v10752, %v9524
        %v11005 = vmul.f32 %v10753, %v9528
        %v11006 = vmul.f32 %v10754, %v9532
        %v11007 = vmul.f32 %v10755, %v9536
        %v11008 = vmul.f32 %v10756, %v9540
        %v11009 = vmul.f32 %v10757, %v9544
        %v11010 = vmul.f32 %v10758, %v9548
        %v11011 = vmul.f32 %v10759, %v9552
        %v11012 = vmul.f32 %v10760, %v9556
        %v11013 = vmul.f32 %v10761, %v9560
        %v11014 = vmul.f32 %v10762, %v9564
        %v11015 = vmul.f32 %v10763, %v9568
        %v11016 = vmul.f32 %v10764, %v9572
        %v11017 = vmul.f32 %v10765, %v9576
        %v11018 = vadd.f32 %v10986, %v11002
        %v11019 = vadd.f32 %v10987, %v11003
        %v11020 = vadd.f32 %v10988, %v11004
        %v11021 = vadd.f32 %v10989, %v11005
        %v11022 = vadd.f32 %v10990, %v11006
        %v11023 = vadd.f32 %v10991, %v11007
        %v11024 = vadd.f32 %v10992, %v11008
        %v11025 = vadd.f32 %v10993, %v11009
        %v11026 = vadd.f32 %v10994, %v11010
        %v11027 = vadd.f32 %v10995, %v11011
        %v11028 = vadd.f32 %v10996, %v11012
        %v11029 = vadd.f32 %v10997, %v11013
        %v11030 = vadd.f32 %v10998, %v11014
        %v11031 = vadd.f32 %v10999, %v11015
        %v11032 = vadd.f32 %v11000, %v11016
        %v11033 = vadd.f32 %v11001, %v11017
        %v11035 = vsel %vm1834, %v10916, 0.0
        %v11036 = vmul.f32 %v10889, %v9614
        %v11037 = vmul.f32 %v10891, %v9618
        %v11038 = vmul.f32 %v10893, %v9622
        %v11039 = vmul.f32 %v10895, %v9626
        %v11040 = vmul.f32 %v10897, %v9630
        %v11041 = vmul.f32 %v10899, %v9634
        %v11042 = vmul.f32 %v10901, %v9638
        %v11043 = vmul.f32 %v10903, %v9642
        %v11044 = vmul.f32 %v10905, %v9646
        %v11045 = vmul.f32 %v10907, %v9650
        %v11046 = vmul.f32 %v10909, %v9654
        %v11047 = vmul.f32 %v10911, %v9658
        %v11048 = vmul.f32 %v10913, %v9662
        %v11049 = vmul.f32 %v10915, %v9666
        %v11050 = vmul.f32 %v10917, %v9670
        %v11051 = vmul.f32 %v11035, %v9674
        %v11052 = vadd.f32 %v11018, %v11036
        %v11053 = vadd.f32 %v11019, %v11037
        %v11054 = vadd.f32 %v11020, %v11038
        %v11055 = vadd.f32 %v11021, %v11039
        %v11056 = vadd.f32 %v11022, %v11040
        %v11057 = vadd.f32 %v11023, %v11041
        %v11058 = vadd.f32 %v11024, %v11042
        %v11059 = vadd.f32 %v11025, %v11043
        %v11060 = vadd.f32 %v11026, %v11044
        %v11061 = vadd.f32 %v11027, %v11045
        %v11062 = vadd.f32 %v11028, %v11046
        %v11063 = vadd.f32 %v11029, %v11047
        %v11064 = vadd.f32 %v11030, %v11048
        %v11065 = vadd.f32 %v11031, %v11049
        %v11066 = vadd.f32 %v11032, %v11050
        %v11067 = vadd.f32 %v11033, %v11051
        %v11069 = vsel %vm1531, %v10967, 0.0
        %v11070 = vmul.f32 %v10783, %v9712
        %v11071 = vmul.f32 %v10785, %v9716
        %v11072 = vmul.f32 %v10787, %v9720
        %v11073 = vmul.f32 %v10789, %v9724
        %v11074 = vmul.f32 %v10791, %v9728
        %v11075 = vmul.f32 %v10793, %v9732
        %v11076 = vmul.f32 %v10795, %v9736
        %v11077 = vmul.f32 %v10797, %v9740
        %v11078 = vmul.f32 %v10799, %v9744
        %v11079 = vmul.f32 %v10801, %v9748
        %v11080 = vmul.f32 %v10803, %v9752
        %v11081 = vmul.f32 %v10805, %v9756
        %v11082 = vmul.f32 %v10807, %v9760
        %v11083 = vmul.f32 %v10809, %v9764
        %v11084 = vmul.f32 %v10968, %v9768
        %v11085 = vmul.f32 %v11069, %v9772
        %v11086 = vadd.f32 %v11052, %v11070
        %v11087 = vadd.f32 %v11053, %v11071
        %v11088 = vadd.f32 %v11054, %v11072
        %v11089 = vadd.f32 %v11055, %v11073
        %v11090 = vadd.f32 %v11056, %v11074
        %v11091 = vadd.f32 %v11057, %v11075
        %v11092 = vadd.f32 %v11058, %v11076
        %v11093 = vadd.f32 %v11059, %v11077
        %v11094 = vadd.f32 %v11060, %v11078
        %v11095 = vadd.f32 %v11061, %v11079
        %v11096 = vadd.f32 %v11062, %v11080
        %v11097 = vadd.f32 %v11063, %v11081
        %v11098 = vadd.f32 %v11064, %v11082
        %v11099 = vadd.f32 %v11065, %v11083
        %v11100 = vadd.f32 %v11066, %v11084
        %v11101 = vadd.f32 %v11067, %v11085
        %v11102 = vmul.f32 %v10751, %v9808
        %v11103 = vmul.f32 %v10752, %v9812
        %v11104 = vmul.f32 %v10753, %v9816
        %v11105 = vmul.f32 %v10754, %v9820
        %v11106 = vmul.f32 %v10755, %v9824
        %v11107 = vmul.f32 %v10756, %v9828
        %v11108 = vmul.f32 %v10757, %v9832
        %v11109 = vmul.f32 %v10758, %v9836
        %v11110 = vmul.f32 %v10759, %v9840
        %v11111 = vmul.f32 %v10760, %v9844
        %v11112 = vmul.f32 %v10761, %v9848
        %v11113 = vmul.f32 %v10762, %v9852
        %v11114 = vmul.f32 %v10763, %v9856
        %v11115 = vmul.f32 %v10764, %v9860
        %v11116 = vmul.f32 %v10765, %v9864
        %v11117 = vadd.f32 %v11086, %v11102
        %v11118 = vadd.f32 %v11087, %v11103
        %v11119 = vadd.f32 %v11088, %v11104
        %v11120 = vadd.f32 %v11089, %v11105
        %v11121 = vadd.f32 %v11090, %v11106
        %v11122 = vadd.f32 %v11091, %v11107
        %v11123 = vadd.f32 %v11092, %v11108
        %v11124 = vadd.f32 %v11093, %v11109
        %v11125 = vadd.f32 %v11094, %v11110
        %v11126 = vadd.f32 %v11095, %v11111
        %v11127 = vadd.f32 %v11096, %v11112
        %v11128 = vadd.f32 %v11097, %v11113
        %v11129 = vadd.f32 %v11098, %v11114
        %v11130 = vadd.f32 %v11099, %v11115
        %v11131 = vadd.f32 %v11100, %v11116
        %v11132 = vadd.f32 %v11101, %v9885
        %v11133 = vmul.f32 %v10891, %v9904
        %v11134 = vmul.f32 %v10893, %v9908
        %v11135 = vmul.f32 %v10895, %v9912
        %v11136 = vmul.f32 %v10897, %v9916
        %v11137 = vmul.f32 %v10899, %v9920
        %v11138 = vmul.f32 %v10901, %v9924
        %v11139 = vmul.f32 %v10903, %v9928
        %v11140 = vmul.f32 %v10905, %v9932
        %v11141 = vmul.f32 %v10907, %v9936
        %v11142 = vmul.f32 %v10909, %v9940
        %v11143 = vmul.f32 %v10911, %v9944
        %v11144 = vmul.f32 %v10913, %v9948
        %v11145 = vmul.f32 %v10915, %v9952
        %v11146 = vmul.f32 %v10917, %v9956
        %v11147 = vmul.f32 %v11035, %v9960
        %v11148 = vadd.f32 %v11117, %v11133
        %v11149 = vadd.f32 %v11118, %v11134
        %v11150 = vadd.f32 %v11119, %v11135
        %v11151 = vadd.f32 %v11120, %v11136
        %v11152 = vadd.f32 %v11121, %v11137
        %v11153 = vadd.f32 %v11122, %v11138
        %v11154 = vadd.f32 %v11123, %v11139
        %v11155 = vadd.f32 %v11124, %v11140
        %v11156 = vadd.f32 %v11125, %v11141
        %v11157 = vadd.f32 %v11126, %v11142
        %v11158 = vadd.f32 %v11127, %v11143
        %v11159 = vadd.f32 %v11128, %v11144
        %v11160 = vadd.f32 %v11129, %v11145
        %v11161 = vadd.f32 %v11130, %v11146
        %v11162 = vadd.f32 %v11131, %v11147
        %v11163 = vadd.f32 %v11132, %v9981
        %v11164 = vpack.c.bf16 %v11149, %v11148
        %v11165 = vpack.c.bf16 %v11151, %v11150
        %v11166 = vpack.c.bf16 %v11153, %v11152
        %v11167 = vpack.c.bf16 %v11155, %v11154
        %v11168 = vpack.c.bf16 %v11157, %v11156
        %v11169 = vpack.c.bf16 %v11159, %v11158
        %v11170 = vpack.c.bf16 %v11161, %v11160
        %v11171 = vpack.c.bf16 %v11163, %v11162
        %v11172 = vld [vmem:[%s11 + $0x80] sm:$0xf]
        %v11173 = vld [vmem:[%s11 + $0x84] sm:$0xf]
        %v11174 = vld [vmem:[%s11 + $0x88] sm:$0xf]
        %v11175 = vld [vmem:[%s11 + $0x8c] sm:$0xf]
        %v11176 = vld [vmem:[%s11 + $0x90] sm:$0xf]
        %v11177 = vld [vmem:[%s11 + $0x94] sm:$0xf]
        %v11178 = vld [vmem:[%s11 + $0x98] sm:$0xf]
        %v11179 = vld [vmem:[%s11 + $0x9c] sm:$0xf]
        %v11180 = vld [vmem:[%s11 + $0xa0] sm:$0xf]
        %v11181 = vld [vmem:[%s11 + $0xa4] sm:$0xf]
        %v11182 = vld [vmem:[%s11 + $0xa8] sm:$0xf]
        %v11183 = vld [vmem:[%s11 + $0xac] sm:$0xf]
        %v11184 = vld [vmem:[%s11 + $0xb0] sm:$0xf]
        %v11185 = vld [vmem:[%s11 + $0xb4] sm:$0xf]
        %v11186 = vld [vmem:[%s11 + $0xb8] sm:$0xf]
        %v11187 = vld [vmem:[%s11 + $0xbc] sm:$0xf]
        %v11204 = vunpack.c.l.b16 %v11172
        %v11205 = vunpack.c.l.b16 %v11173
        %v11206 = vunpack.c.l.b16 %v11174
        %v11207 = vunpack.c.l.b16 %v11175
        %v11208 = vunpack.c.l.b16 %v11176
        %v11209 = vunpack.c.l.b16 %v11177
        %v11210 = vunpack.c.l.b16 %v11178
        %v11211 = vunpack.c.l.b16 %v11179
        %v11212 = vunpack.c.l.b16 %v11180
        %v11213 = vunpack.c.l.b16 %v11181
        %v11214 = vunpack.c.l.b16 %v11182
        %v11215 = vunpack.c.l.b16 %v11183
        %v11216 = vunpack.c.l.b16 %v11184
        %v11217 = vunpack.c.l.b16 %v11185
        %v11218 = vunpack.c.l.b16 %v11186
        %v11219 = vunpack.c.l.b16 %v11187
        %v11220 = vpack.c.b16 %v11205, %v11204
        %v11221 = vpack.c.b16 %v11207, %v11206
        %v11222 = vpack.c.b16 %v11209, %v11208
        %v11223 = vpack.c.b16 %v11211, %v11210
        %v11224 = vpack.c.b16 %v11213, %v11212
        %v11225 = vpack.c.b16 %v11215, %v11214
        %v11226 = vpack.c.b16 %v11217, %v11216
        %v11227 = vpack.c.b16 %v11219, %v11218
        %11236 = vmatprep.subr.bf16.mxu0 0
        %11237 = vmatpush1.bf16.msra.mxu0 %v11220
        %11238 = vmatprep.subr.bf16.mxu0 0
        %11239 = vmatpush1.bf16.msra.mxu0 %v11221
        %11240 = vmatprep.subr.bf16.mxu0 0
        %11241 = vmatpush1.bf16.msra.mxu0 %v11222
        %11242 = vmatprep.subr.bf16.mxu0 0
        %11243 = vmatpush1.bf16.msra.mxu0 %v11223
        %11244 = vmatprep.subr.bf16.mxu0 0
        %11245 = vmatpush1.bf16.msra.mxu0 %v11224
        %11246 = vmatprep.subr.bf16.mxu0 0
        %11247 = vmatpush1.bf16.msra.mxu0 %v11225
        %11248 = vmatprep.subr.bf16.mxu0 0
        %11249 = vmatpush1.bf16.msra.mxu0 %v11226
        %11250 = vmatprep.subr.bf16.mxu0 0
        %11251 = vmatpush1.bf16.msra.mxu0 %v11227
        %11252 = vmatprep.subr.bf16.mxu0 0
        %11253 = vmatpush1.bf16.msra.mxu0 0
        %11254 = vmatprep.subr.bf16.mxu0 0
        %11255 = vmatpush1.bf16.msra.mxu0 0
        %11256 = vmatprep.subr.bf16.mxu0 0
        %11257 = vmatpush1.bf16.msra.mxu0 0
        %11258 = vmatprep.subr.bf16.mxu0 0
        %11259 = vmatpush1.bf16.msra.mxu0 0
        %11260 = vmatprep.subr.bf16.mxu0 0
        %11261 = vmatpush1.bf16.msra.mxu0 0
        %11262 = vmatprep.subr.bf16.mxu0 0
        %11263 = vmatpush1.bf16.msra.mxu0 0
        %11264 = vmatprep.subr.bf16.mxu0 0
        %11265 = vmatpush1.bf16.msra.mxu0 0
        %11266 = vmatprep.subr.bf16.mxu0 0
        %11267 = vmatpush1.bf16.msra.mxu0 0
        %11268 = vmatprep.mubr.bf16.mxu0 0
        %11269 = vmatmul.mubr.bf16.gmra.mrb[0].mxu0 %v11164
        %v11270 = vpop.f32.mrb[0].mxu0
        %v11271 = vadd.f32 0.0, %v11270
        %v11272 = vpop.f32.mrb[0].mxu0
        %v11273 = vpop.f32.mrb[0].mxu0
        %v11274 = vadd.f32 0.0, %v11273
        %v11275 = vpop.f32.mrb[0].mxu0
        %11276 = vmatprep.mubr.bf16.mxu0 0
        %11277 = vmatmul.mubr.bf16.gmra.mrb[0].mxu0 %v11165
        %v11278 = vpop.f32.mrb[0].mxu0
        %v11279 = vadd.f32 0.0, %v11278
        %v11280 = vpop.f32.mrb[0].mxu0
        %v11281 = vpop.f32.mrb[0].mxu0
        %v11282 = vadd.f32 0.0, %v11281
        %v11283 = vpop.f32.mrb[0].mxu0
        %11284 = vmatprep.mubr.bf16.mxu0 0
        %11285 = vmatmul.mubr.bf16.gmra.mrb[0].mxu0 %v11166
        %v11286 = vpop.f32.mrb[0].mxu0
        %v11287 = vadd.f32 0.0, %v11286
        %v11288 = vpop.f32.mrb[0].mxu0
        %v11289 = vpop.f32.mrb[0].mxu0
        %v11290 = vadd.f32 0.0, %v11289
        %v11291 = vpop.f32.mrb[0].mxu0
        %11292 = vmatprep.mubr.bf16.mxu0 0
        %11293 = vmatmul.mubr.bf16.gmra.mrb[0].mxu0 %v11167
        %v11294 = vpop.f32.mrb[0].mxu0
        %v11295 = vadd.f32 0.0, %v11294
        %v11296 = vpop.f32.mrb[0].mxu0
        %v11297 = vpop.f32.mrb[0].mxu0
        %v11298 = vadd.f32 0.0, %v11297
        %v11299 = vpop.f32.mrb[0].mxu0
        %11300 = vmatprep.mubr.bf16.mxu0 0
        %11301 = vmatmul.mubr.bf16.gmra.mrb[0].mxu0 %v11168
        %v11302 = vpop.f32.mrb[0].mxu0
        %v11303 = vadd.f32 0.0, %v11302
        %v11304 = vpop.f32.mrb[0].mxu0
        %v11305 = vpop.f32.mrb[0].mxu0
        %v11306 = vadd.f32 0.0, %v11305
        %v11307 = vpop.f32.mrb[0].mxu0
        %11308 = vmatprep.mubr.bf16.mxu0 0
        %11309 = vmatmul.mubr.bf16.gmra.mrb[0].mxu0 %v11169
        %v11310 = vpop.f32.mrb[0].mxu0
        %v11311 = vadd.f32 0.0, %v11310
        %v11312 = vpop.f32.mrb[0].mxu0
        %v11313 = vpop.f32.mrb[0].mxu0
        %v11314 = vadd.f32 0.0, %v11313
        %v11315 = vpop.f32.mrb[0].mxu0
        %11316 = vmatprep.mubr.bf16.mxu0 0
        %11317 = vmatmul.mubr.bf16.gmra.mrb[0].mxu0 %v11170
        %v11318 = vpop.f32.mrb[0].mxu0
        %v11319 = vadd.f32 0.0, %v11318
        %v11320 = vpop.f32.mrb[0].mxu0
        %v11321 = vpop.f32.mrb[0].mxu0
        %v11322 = vadd.f32 0.0, %v11321
        %v11323 = vpop.f32.mrb[0].mxu0
        %11324 = vmatprep.mubr.bf16.mxu0 0
        %11325 = vmatmul.mubr.bf16.gmra.mrb[0].mxu0 %v11171
        %v11326 = vpop.f32.mrb[0].mxu0
        %v11327 = vadd.f32 0.0, %v11326
        %v11328 = vpop.f32.mrb[0].mxu0
        %v11329 = vpop.f32.mrb[0].mxu0
        %v11330 = vadd.f32 0.0, %v11329
        %v11331 = vpop.f32.mrb[0].mxu0
        %11332 = vdwg.mxu0
        %v11333 = vadd.f32 %v10688, %v11271
        %v11334 = vadd.f32 %v10691, %v11274
        %v11335 = vadd.f32 %v10696, %v11279
        %v11336 = vadd.f32 %v10699, %v11282
        %v11337 = vadd.f32 %v10704, %v11287
        %v11338 = vadd.f32 %v10707, %v11290
        %v11339 = vadd.f32 %v10712, %v11295
        %v11340 = vadd.f32 %v10715, %v11298
        %v11341 = vadd.f32 %v10720, %v11303
        %v11342 = vadd.f32 %v10723, %v11306
        %v11343 = vadd.f32 %v10728, %v11311
        %v11344 = vadd.f32 %v10731, %v11314
        %v11345 = vadd.f32 %v10736, %v11319
        %v11346 = vadd.f32 %v10739, %v11322
        %v11347 = vadd.f32 %v10744, %v11327
        %v11348 = vadd.f32 %v10747, %v11330
        %v11349 = vld [vmem:[%s2] sm:$0xff]
        %v11350 = vld [vmem:[%s2 + $0x8] sm:$0xff]
        %v11351 = vld [vmem:[%s2 + $0x10] sm:$0xff]
        %v11352 = vld [vmem:[%s2 + $0x18] sm:$0xff]
        %v11353 = vld [vmem:[%s2 + $0x20] sm:$0xff]
        %v11354 = vld [vmem:[%s2 + $0x28] sm:$0xff]
        %v11355 = vld [vmem:[%s2 + $0x30] sm:$0xff]
        %v11356 = vld [vmem:[%s2 + $0x38] sm:$0xff]
        %v11357 = vld [vmem:[%s2 + $0x40] sm:$0xff]
        %v11358 = vld [vmem:[%s2 + $0x48] sm:$0xff]
        %v11359 = vld [vmem:[%s2 + $0x50] sm:$0xff]
        %v11360 = vld [vmem:[%s2 + $0x58] sm:$0xff]
        %v11361 = vld [vmem:[%s2 + $0x60] sm:$0xff]
        %v11362 = vld [vmem:[%s2 + $0x68] sm:$0xff]
        %v11363 = vld [vmem:[%s2 + $0x70] sm:$0xff]
        %v11364 = vld [vmem:[%s2 + $0x78] sm:$0xff]
        %11366 = vset.pattern.permute.xlu0 0
        %11367 = vperm.xlu0 %11366, %v11349
        %v11368 = vpop.permute.xlu0 %11367
        %11371 = vset.pattern.permute.xlu0 0
        %11372 = vperm.xlu0 %11371, %v11350
        %v11373 = vpop.permute.xlu0 %11372
        %11376 = vset.pattern.permute.xlu0 0
        %11377 = vperm.xlu0 %11376, %v11351
        %v11378 = vpop.permute.xlu0 %11377
        %11381 = vset.pattern.permute.xlu0 0
        %11382 = vperm.xlu0 %11381, %v11352
        %v11383 = vpop.permute.xlu0 %11382
        %11386 = vset.pattern.permute.xlu0 0
        %11387 = vperm.xlu0 %11386, %v11353
        %v11388 = vpop.permute.xlu0 %11387
        %11391 = vset.pattern.permute.xlu0 0
        %11392 = vperm.xlu0 %11391, %v11354
        %v11393 = vpop.permute.xlu0 %11392
        %11396 = vset.pattern.permute.xlu0 0
        %11397 = vperm.xlu0 %11396, %v11355
        %v11398 = vpop.permute.xlu0 %11397
        %11401 = vset.pattern.permute.xlu0 0
        %11402 = vperm.xlu0 %11401, %v11356
        %v11403 = vpop.permute.xlu0 %11402
        %11406 = vset.pattern.permute.xlu0 0
        %11407 = vperm.xlu0 %11406, %v11357
        %v11408 = vpop.permute.xlu0 %11407
        %11411 = vset.pattern.permute.xlu0 0
        %11412 = vperm.xlu0 %11411, %v11358
        %v11413 = vpop.permute.xlu0 %11412
        %11416 = vset.pattern.permute.xlu0 0
        %11417 = vperm.xlu0 %11416, %v11359
        %v11418 = vpop.permute.xlu0 %11417
        %11421 = vset.pattern.permute.xlu0 0
        %11422 = vperm.xlu0 %11421, %v11360
        %v11423 = vpop.permute.xlu0 %11422
        %11426 = vset.pattern.permute.xlu0 0
        %11427 = vperm.xlu0 %11426, %v11361
        %v11428 = vpop.permute.xlu0 %11427
        %11431 = vset.pattern.permute.xlu0 0
        %11432 = vperm.xlu0 %11431, %v11362
        %v11433 = vpop.permute.xlu0 %11432
        %11436 = vset.pattern.permute.xlu0 0
        %11437 = vperm.xlu0 %11436, %v11363
        %v11438 = vpop.permute.xlu0 %11437
        %11441 = vset.pattern.permute.xlu0 0
        %11442 = vperm.xlu0 %11441, %v11364
        %v11443 = vpop.permute.xlu0 %11442
        %v11445 = vmul.f32 %v11333, %v11368
        %v11446 = vmul.f32 %v11334, %v11373
        %v11447 = vmul.f32 %v11335, %v11378
        %v11448 = vmul.f32 %v11336, %v11383
        %v11449 = vmul.f32 %v11337, %v11388
        %v11450 = vmul.f32 %v11338, %v11393
        %v11451 = vmul.f32 %v11339, %v11398
        %v11452 = vmul.f32 %v11340, %v11403
        %v11453 = vmul.f32 %v11341, %v11408
        %v11454 = vmul.f32 %v11342, %v11413
        %v11455 = vmul.f32 %v11343, %v11418
        %v11456 = vmul.f32 %v11344, %v11423
        %v11457 = vmul.f32 %v11345, %v11428
        %v11458 = vmul.f32 %v11346, %v11433
        %v11459 = vmul.f32 %v11347, %v11438
        %v11460 = vmul.f32 %v11348, %v11443
        %v11461 = vld [vmem:[%s12] sm:$0x1]
        %v11463 = vlaneseq
        %v11464 = vshrl.u32 %v11463, 7
        %v11465 = vsub.s32 0, %v11464
        %v11466 = vrot.slane %v11461, %v11465
        %v11468 = vadd.f32 %v11445, %v11466
        %v11469 = vadd.f32 %v11446, %v11466
        %v11470 = vadd.f32 %v11447, %v11466
        %v11471 = vadd.f32 %v11448, %v11466
        %v11472 = vadd.f32 %v11449, %v11466
        %v11473 = vadd.f32 %v11450, %v11466
        %v11474 = vadd.f32 %v11451, %v11466
        %v11475 = vadd.f32 %v11452, %v11466
        %v11476 = vadd.f32 %v11453, %v11466
        %v11477 = vadd.f32 %v11454, %v11466
        %v11478 = vadd.f32 %v11455, %v11466
        %v11479 = vadd.f32 %v11456, %v11466
        %v11480 = vadd.f32 %v11457, %v11466
        %v11481 = vadd.f32 %v11458, %v11466
        %v11482 = vadd.f32 %v11459, %v11466
        %v11483 = vadd.f32 %v11460, %v11466
        %v11484 = vmax.f32 %v11468, 0.0
        %v11485 = vmax.f32 %v11469, 0.0
        %v11486 = vmax.f32 %v11470, 0.0
        %v11487 = vmax.f32 %v11471, 0.0
        %v11488 = vmax.f32 %v11472, 0.0
        %v11489 = vmax.f32 %v11473, 0.0
        %v11490 = vmax.f32 %v11474, 0.0
        %v11491 = vmax.f32 %v11475, 0.0
        %v11492 = vmax.f32 %v11476, 0.0
        %v11493 = vmax.f32 %v11477, 0.0
        %v11494 = vmax.f32 %v11478, 0.0
        %v11495 = vmax.f32 %v11479, 0.0
        %v11496 = vmax.f32 %v11480, 0.0
        %v11497 = vmax.f32 %v11481, 0.0
        %v11498 = vmax.f32 %v11482, 0.0
        %v11499 = vmax.f32 %v11483, 0.0
        %11516 = vrot.lane.b32.xlu0 %v11484, 32
        %v11517 = vpop.permute.xlu0 %11516
        %11518 = vrot.lane.b32.xlu0 %v11485, 32
        %v11519 = vpop.permute.xlu0 %11518
        %11520 = vrot.lane.b32.xlu0 %v11486, 32
        %v11521 = vpop.permute.xlu0 %11520
        %11522 = vrot.lane.b32.xlu0 %v11487, 32
        %v11523 = vpop.permute.xlu0 %11522
        %11524 = vrot.lane.b32.xlu0 %v11488, 32
        %v11525 = vpop.permute.xlu0 %11524
        %11526 = vrot.lane.b32.xlu0 %v11489, 32
        %v11527 = vpop.permute.xlu0 %11526
        %11528 = vrot.lane.b32.xlu0 %v11490, 32
        %v11529 = vpop.permute.xlu0 %11528
        %11530 = vrot.lane.b32.xlu0 %v11491, 32
        %v11531 = vpop.permute.xlu0 %11530
        %11532 = vrot.lane.b32.xlu0 %v11492, 32
        %v11533 = vpop.permute.xlu0 %11532
        %11534 = vrot.lane.b32.xlu0 %v11493, 32
        %v11535 = vpop.permute.xlu0 %11534
        %11536 = vrot.lane.b32.xlu0 %v11494, 32
        %v11537 = vpop.permute.xlu0 %11536
        %11538 = vrot.lane.b32.xlu0 %v11495, 32
        %v11539 = vpop.permute.xlu0 %11538
        %11540 = vrot.lane.b32.xlu0 %v11496, 32
        %v11541 = vpop.permute.xlu0 %11540
        %11542 = vrot.lane.b32.xlu0 %v11497, 32
        %v11543 = vpop.permute.xlu0 %11542
        %11544 = vrot.lane.b32.xlu0 %v11498, 32
        %v11545 = vpop.permute.xlu0 %11544
        %11546 = vrot.lane.b32.xlu0 %v11499, 32
        %v11547 = vpop.permute.xlu0 %11546
        %vm11564 = vcmask 1047808
        %11565 = vst.msk [vmem:[%s436 + $0x10] sm:$0xff] %vm11564, %v11517
        %11566 = vst.msk [vmem:[%s436 + $0x28] sm:$0xff] %vm11564, %v11519
        %11567 = vst.msk [vmem:[%s436 + $0x40] sm:$0xff] %vm11564, %v11521
        %11568 = vst.msk [vmem:[%s436 + $0x58] sm:$0xff] %vm11564, %v11523
        %11569 = vst.msk [vmem:[%s436 + $0x70] sm:$0xff] %vm11564, %v11525
        %11570 = vst.msk [vmem:[%s436 + $0x88] sm:$0xff] %vm11564, %v11527
        %11571 = vst.msk [vmem:[%s436 + $0xa0] sm:$0xff] %vm11564, %v11529
        %11572 = vst.msk [vmem:[%s436 + $0xb8] sm:$0xff] %vm11564, %v11531
        %11573 = vst.msk [vmem:[%s436 + $0xd0] sm:$0xff] %vm11564, %v11533
        %11574 = vst.msk [vmem:[%s436 + $0xe8] sm:$0xff] %vm11564, %v11535
        %11575 = vst.msk [vmem:[%s436 + $0x100] sm:$0xff] %vm11564, %v11537
        %11576 = vst.msk [vmem:[%s436 + $0x118] sm:$0xff] %vm11564, %v11539
        %11577 = vst.msk [vmem:[%s436 + $0x130] sm:$0xff] %vm11564, %v11541
        %11578 = vst.msk [vmem:[%s436 + $0x148] sm:$0xff] %vm11564, %v11543
        %11579 = vst.msk [vmem:[%s436 + $0x160] sm:$0xff] %vm11564, %v11545
        %11580 = vst.msk [vmem:[%s436 + $0x178] sm:$0xff] %vm11564, %v11547
        %s11581 = sand.u32 %s313, 1
        %s11582 = scalar_lea.sflag [#allocation4], %s11581
        %s11583 = sand.u32 %s313, 1
        %s11584 = smul.addr %s11583, 384
        %s11585 = scalar_lea.vmem [#allocation3], %s11584
        // Predicated region
        $region73: #{tpu_custom_call.1} parent=71 // pred_check
          %p11586 = pneg %p323
        $region74: #{tpu_custom_call.1} parent=71 // pred_check_branch
          %11588 = sbr.rel (%p11586) target = $region76
        $region75: #{tpu_custom_call.1} parent=71 // pred_region
          %s11589 = smul.u32 16, %s27
          %s11591 = ssub.s32 6144, 6144
          %11592 = vsyncadd %s11582, %s11591
          %s11593 = smul.addr %s11589, 3
          %s11594 = smul.addr %s11593, 128
          %s11595 = scalar_lea.hbm %s13, %s11594
          %s11596 = sshll.u32 %s11585, 4
          %s11597 = int_to_ptr.vmem [resolvable:$true] %s11596
          %11602 = dma.vmem_to_hbm [thread:$0]  %s11597, 6144, %s11595, %s11582, 384, 384, 24
        $region76: #{tpu_custom_call.1} parent=71 // pred_fallthru
          _
      $region72: #{tpu_custom_call.1} parent=5 // pred_fallthru
        _
      %p11603 = scmp.le.s32.totalorder 2, %s22
      // Predicated region
      $region77: #{tpu_custom_call.1} parent=5 // pred_check
        %p11604 = pneg %p11603
      $region78: #{tpu_custom_call.1} parent=5 // pred_check_branch
        %11606 = sbr.rel (%p11604) target = $region80
      $region79: #{tpu_custom_call.1} parent=5 // pred_region
        %s11607 = ssub.s32 %s22, 2
        // Predicated region
        $region81: #{tpu_custom_call.1} parent=79 // pred_check
          %p11608 = pneg %p329
        $region82: #{tpu_custom_call.1} parent=79 // pred_check_branch
          %11610 = sbr.rel (%p11608) target = $region84
        $region83: #{tpu_custom_call.1} parent=79 // pred_region
          %s11611 = sand.u32 %s314, 1
          %s11612 = scalar_lea.sflag [#allocation4], %s11611
          %s11613 = sand.u32 %s314, 1
          %s11614 = smul.addr %s11613, 384
          %s11615 = scalar_lea.vmem [#allocation3], %s11614
          %11616 = dma.done %s11612, 6144
        $region84: #{tpu_custom_call.1} parent=79 // pred_fallthru
          _
      $region80: #{tpu_custom_call.1} parent=5 // pred_fallthru
        _
    $region6: #{tpu_custom_call.1} parent=1 // loop_footer
      %s26 = sadd.s32 1, %s22
    $region7: #{tpu_custom_call.1} parent=1 // loop_footer_branch
      %21 = sbr.rel target = $region3
    $region8: #{tpu_custom_call.1} parent=1 // loop_exit
      _
    %11617 = vsyncpa [#allocation4], 1
    %s11618 = scalar_lea.sflag [#allocation4], 1
    %11619 = vsyncpa %s11618, 1

</llo_original>
